<compile_context>
chip_gen: v7x
topology: tpu7x:2x2x1
jax: 0.10.0
libtpu: 0.0.40
codegen_flags: <defaults>
</compile_context>

<pallas_src>
import functools
import math

import jax
import jax.numpy as jnp
from jax.experimental import pallas as pl
from jax.experimental.pallas import tpu as pltpu

LN_EPS = 1e-5  # PyTorch nn.Transformer layer_norm_eps default

# canonical ordering of stacked per-layer parameters (kept in sync between the
# wrapper's argument list and the kernel's unpacking)
_ENC_KEYS = ("wqkv", "bqkv", "wo", "bo", "g1", "b1",
             "w1", "bb1", "w2", "bb2", "g2", "b2")
_DEC_KEYS = ("wqkv", "bqkv", "wos", "bos", "g1", "b1",
             "wqc", "bqc", "wkvc", "bkvc", "woc", "boc", "g2", "b2",
             "w1", "bb1", "w2", "bb2", "g3", "b3")


# ----------------------------- in-kernel helpers ---------------------------- #

def _ln(x, g, b, eps=LN_EPS):
    """LayerNorm over the last axis (biased variance, PyTorch semantics)."""
    mean = jnp.mean(x, axis=-1, keepdims=True)
    c = x - mean
    var = jnp.mean(c * c, axis=-1, keepdims=True)
    return c * jax.lax.rsqrt(var + eps) * g + b


def _mha_heads(q, k, v, nhead):
    """Multi-head softmax(q k^T) v on packed (rows, E) operands.

    The 1/sqrt(head_dim) scale is already folded into the Q projection.
    Heads are sliced along the lane dim; loop is unrolled at trace time.
    """
    E = q.shape[-1]
    D = E // nhead
    outs = []
    for h in range(nhead):
        sl = slice(h * D, (h + 1) * D)
        qh, kh, vh = q[:, sl], k[:, sl], v[:, sl]
        s = jax.lax.dot_general(qh, kh, (((1,), (1,)), ((), ())),
                                preferred_element_type=jnp.float32)
        s = s - jnp.max(s, axis=-1, keepdims=True)
        p = jnp.exp(s)
        p = p * pl.reciprocal(jnp.sum(p, axis=-1, keepdims=True), approx=True)
        outs.append(jnp.dot(p, vh, preferred_element_type=jnp.float32))
    return jnp.concatenate(outs, axis=-1)


def _onehot_embed(idx2d, table):
    """Embedding lookup as one-hot @ table (MXU-friendly in-kernel gather).

    idx2d: (R, 1) int32 indices; table: (V, E) float32 -> (R, E) float32.
    """
    R = idx2d.shape[0]
    V = table.shape[0]
    oh = (idx2d == jax.lax.broadcasted_iota(jnp.int32, (R, V), 1)).astype(jnp.float32)
    return jnp.dot(oh, table, preferred_element_type=jnp.float32)


# ------------------------------- fused kernel ------------------------------- #

def _model_kernel(*refs, nhead, n_enc, n_dec):
    # ---- unpack refs (order fixed by the wrapper) ----
    src_seq_ref, src_pos_ref, trg_seq_ref, trg_pos_ref = refs[:4]
    o_ref = refs[-1]
    w = refs[4:-1]
    emb_ref, pos_enc_ref, pos_dec_ref = w[0], w[1], w[2]
    e = dict(zip(_ENC_KEYS, w[3:15]))          # stacked encoder params
    enc_g, enc_b = w[15], w[16]                # final encoder norm
    d = dict(zip(_DEC_KEYS, w[17:37]))         # stacked decoder params
    dec_g, dec_b = w[37], w[38]                # final decoder norm
    fc_w, fc_b = w[39], w[40]                  # output head

    emb = emb_ref[...]
    E = emb.shape[-1]

    # ---- embeddings (token + positional), fused in-kernel ----
    x = _onehot_embed(src_seq_ref[...], emb) + \
        _onehot_embed(src_pos_ref[...], pos_enc_ref[...])
    y = _onehot_embed(trg_seq_ref[...], emb) + \
        _onehot_embed(trg_pos_ref[...], pos_dec_ref[...])

    # ---- encoder stack (post-LN, ReLU FFN, no masks) ----
    for l in range(n_enc):
        qkv = jnp.dot(x, e["wqkv"][l], preferred_element_type=jnp.float32) + e["bqkv"][l]
        q, k_, v = qkv[:, :E], qkv[:, E:2 * E], qkv[:, 2 * E:]
        a = _mha_heads(q, k_, v, nhead)
        a = jnp.dot(a, e["wo"][l], preferred_element_type=jnp.float32) + e["bo"][l]
        x1 = _ln(x + a, e["g1"][l], e["b1"][l])
        h = jnp.maximum(
            jnp.dot(x1, e["w1"][l], preferred_element_type=jnp.float32) + e["bb1"][l], 0.0)
        f = jnp.dot(h, e["w2"][l], preferred_element_type=jnp.float32) + e["bb2"][l]
        x = _ln(x1 + f, e["g2"][l], e["b2"][l])
    mem = _ln(x, enc_g[...], enc_b[...])       # final encoder norm (stays in VMEM)

    # ---- decoder stack ----
    for l in range(n_dec):
        # self attention (no mask: matches nn.Transformer called without tgt_mask)
        qkv = jnp.dot(y, d["wqkv"][l], preferred_element_type=jnp.float32) + d["bqkv"][l]
        q, k_, v = qkv[:, :E], qkv[:, E:2 * E], qkv[:, 2 * E:]
        a = _mha_heads(q, k_, v, nhead)
        a = jnp.dot(a, d["wos"][l], preferred_element_type=jnp.float32) + d["bos"][l]
        y1 = _ln(y + a, d["g1"][l], d["b1"][l])

        # cross attention (query from decoder, key/value from encoder memory)
        qc = jnp.dot(y1, d["wqc"][l], preferred_element_type=jnp.float32) + d["bqc"][l]
        kvc = jnp.dot(mem, d["wkvc"][l], preferred_element_type=jnp.float32) + d["bkvc"][l]
        kc, vc = kvc[:, :E], kvc[:, E:]
        c = _mha_heads(qc, kc, vc, nhead)
        c = jnp.dot(c, d["woc"][l], preferred_element_type=jnp.float32) + d["boc"][l]
        y2 = _ln(y1 + c, d["g2"][l], d["b2"][l])

        # feed-forward
        h = jnp.maximum(
            jnp.dot(y2, d["w1"][l], preferred_element_type=jnp.float32) + d["bb1"][l], 0.0)
        f = jnp.dot(h, d["w2"][l], preferred_element_type=jnp.float32) + d["bb2"][l]
        y = _ln(y2 + f, d["g3"][l], d["b3"][l])

    # ---- final decoder norm fused with fc_out (lane-dense output) ----
    y = _ln(y, dec_g[...], dec_b[...])
    o_ref[...] = (jnp.dot(y, fc_w[...], preferred_element_type=jnp.float32)
                  + fc_b[...]).astype(o_ref.dtype)


# -------------------------------- wrapper ----------------------------------- #

def _const_spec(shape):
    """Full-array block with a constant block index (DMA'd once, reused)."""
    ndim = len(shape)

    def idx_map(b):
        return (0,) * ndim

    return pl.BlockSpec(shape, idx_map)


def transformer_forward(params, src_seq, src_pos, trg_seq, trg_pos, nhead):
    # TODO(synk): dropout is a no-op here (inference / eval semantics).
    B, S = src_seq.shape
    T = trg_seq.shape[1]
    E = params["input_embedding"].shape[1]
    L = params["fc_w"].shape[1]
    n_enc = params["enc"]["wqkv"].shape[0]
    n_dec = params["dec"]["wqkv"].shape[0]

    weight_args = (
        [params["input_embedding"], params["pos_encoder"], params["pos_decoder"]]
        + [params["enc"][k] for k in _ENC_KEYS]
        + [params["enc_norm_g"], params["enc_norm_b"]]
        + [params["dec"][k] for k in _DEC_KEYS]
        + [params["dec_norm_g"], params["dec_norm_b"]]
        + [params["fc_w"], params["fc_b"]]
    )

    idx_specs = [
        pl.BlockSpec((S, 1), lambda b: (b, 0)),   # src_seq
        pl.BlockSpec((S, 1), lambda b: (b, 0)),   # src_pos
        pl.BlockSpec((T, 1), lambda b: (b, 0)),   # trg_seq
        pl.BlockSpec((T, 1), lambda b: (b, 0)),   # trg_pos
    ]
    weight_specs = [_const_spec(a.shape) for a in weight_args]

    out = pl.pallas_call(
        functools.partial(_model_kernel, nhead=nhead, n_enc=n_enc, n_dec=n_dec),
        out_shape=jax.ShapeDtypeStruct((B * T, L), jnp.float32),
        grid=(B,),
        in_specs=idx_specs + weight_specs,
        out_specs=pl.BlockSpec((T, L), lambda b: (b, 0)),
        compiler_params=pltpu.CompilerParams(dimension_semantics=("parallel",)),
    )(src_seq.reshape(B * S, 1).astype(jnp.int32),
      src_pos.reshape(B * S, 1).astype(jnp.int32),
      trg_seq.reshape(B * T, 1).astype(jnp.int32),
      trg_pos.reshape(B * T, 1).astype(jnp.int32),
      *weight_args)
    return out.reshape(B, T, L)


# ------------------------------ parameter init ------------------------------ #

def init_params(key, loc_size, time_in, time_out, E, nhead, n_enc, n_dec, F):
    D = E // nhead
    scale = 1.0 / math.sqrt(D)       # folded into the Q projections
    keys = iter(jax.random.split(key, 4096))

    def nrm(shape, s=0.02):
        return jax.random.normal(next(keys), shape, jnp.float32) * s

    def ones(shape):
        return jnp.ones(shape, jnp.float32)

    def zeros(shape):
        return jnp.zeros(shape, jnp.float32)

    def enc_layer():
        wq, wk, wv, wo = nrm((E, E)), nrm((E, E)), nrm((E, E)), nrm((E, E))
        return {
            "wqkv": jnp.concatenate([wq * scale, wk, wv], axis=1),
            "bqkv": zeros((1, 3 * E)),
            "wo": wo, "bo": zeros((1, E)),
            "g1": ones((1, E)), "b1": zeros((1, E)),
            "w1": nrm((E, F)), "bb1": zeros((1, F)),
            "w2": nrm((F, E)), "bb2": zeros((1, E)),
            "g2": ones((1, E)), "b2": zeros((1, E)),
        }

    def dec_layer():
        wq, wk, wv, wo = nrm((E, E)), nrm((E, E)), nrm((E, E)), nrm((E, E))
        wqc, wkc, wvc, woc = nrm((E, E)), nrm((E, E)), nrm((E, E)), nrm((E, E))
        return {
            "wqkv": jnp.concatenate([wq * scale, wk, wv], axis=1),
            "bqkv": zeros((1, 3 * E)),
            "wos": wo, "bos": zeros((1, E)),
            "g1": ones((1, E)), "b1": zeros((1, E)),
            "wqc": wqc * scale, "bqc": zeros((1, E)),
            "wkvc": jnp.concatenate([wkc, wvc], axis=1),
            "bkvc": zeros((1, 2 * E)),
            "woc": woc, "boc": zeros((1, E)),
            "g2": ones((1, E)), "b2": zeros((1, E)),
            "w1": nrm((E, F)), "bb1": zeros((1, F)),
            "w2": nrm((F, E)), "bb2": zeros((1, E)),
            "g3": ones((1, E)), "b3": zeros((1, E)),
        }

    enc_layers = [enc_layer() for _ in range(n_enc)]
    dec_layers = [dec_layer() for _ in range(n_dec)]

    def stack(layers, key_order):
        return {k: jnp.stack([lay[k] for lay in layers], axis=0) for k in key_order}

    return {
        "input_embedding": nrm((loc_size, E), 1.0),
        "pos_encoder": nrm((time_in, E), 1.0),
        "pos_decoder": nrm((time_out, E), 1.0),
        "enc": stack(enc_layers, _ENC_KEYS),
        "enc_norm_g": ones((1, E)), "enc_norm_b": zeros((1, E)),
        "dec": stack(dec_layers, _DEC_KEYS),
        "dec_norm_g": ones((1, E)), "dec_norm_b": zeros((1, E)),
        "fc_out_unused": None,  # placeholder to keep dict readable
        "fc_w": nrm((E, loc_size)), "fc_b": zeros((1, loc_size)),
    }


# ----------------------------------- main ----------------------------------- #

if __name__ == "__main__":
    # small shapes consistent with the module
    loc_size, time_size_input, time_size_output = 128, 16, 16
    embed_dim, nhead, num_enc, num_dec, dim_ff = 32, 4, 2, 2, 64
    B, S_src, S_trg = 2, 8, 8

    key = jax.random.PRNGKey(0)
    kp, k1, k2, k3, k4 = jax.random.split(key, 5)

    params = init_params(kp, loc_size, time_size_input, time_size_output,
                         embed_dim, nhead, num_enc, num_dec, dim_ff)
    params.pop("fc_out_unused")

    src_seq = jax.random.randint(k1, (B, S_src), 0, loc_size, dtype=jnp.int32)
    src_pos = jax.random.randint(k2, (B, S_src), 0, time_size_input, dtype=jnp.int32)
    trg_seq = jax.random.randint(k3, (B, S_trg), 0, loc_size, dtype=jnp.int32)
    trg_pos = jax.random.randint(k4, (B, S_trg), 0, time_size_output, dtype=jnp.int32)

    fwd = jax.jit(functools.partial(transformer_forward, nhead=nhead))
    out = fwd(params, src_seq, src_pos, trg_seq, trg_pos)
    out = jax.block_until_ready(out)

    assert out.shape == (B, S_trg, loc_size), out.shape
    assert out.dtype == jnp.float32
    assert bool(jnp.all(jnp.isfinite(out)))
    print("KERNEL_OK")
</pallas_src>

<mosaic_0001>
module attributes {stable_mosaic.version = 11 : i64} {
  func.func @_model_kernel(%arg0: i32, %arg1: memref<8x1xi32, #tpu.memory_space<vmem>>, %arg2: memref<8x1xi32, #tpu.memory_space<vmem>>, %arg3: memref<8x1xi32, #tpu.memory_space<vmem>>, %arg4: memref<8x1xi32, #tpu.memory_space<vmem>>, %arg5: memref<128x32xf32, #tpu.memory_space<vmem>>, %arg6: memref<16x32xf32, #tpu.memory_space<vmem>>, %arg7: memref<16x32xf32, #tpu.memory_space<vmem>>, %arg8: memref<2x32x96xf32, #tpu.memory_space<vmem>>, %arg9: memref<2x1x96xf32, #tpu.memory_space<vmem>>, %arg10: memref<2x32x32xf32, #tpu.memory_space<vmem>>, %arg11: memref<2x1x32xf32, #tpu.memory_space<vmem>>, %arg12: memref<2x1x32xf32, #tpu.memory_space<vmem>>, %arg13: memref<2x1x32xf32, #tpu.memory_space<vmem>>, %arg14: memref<2x32x64xf32, #tpu.memory_space<vmem>>, %arg15: memref<2x1x64xf32, #tpu.memory_space<vmem>>, %arg16: memref<2x64x32xf32, #tpu.memory_space<vmem>>, %arg17: memref<2x1x32xf32, #tpu.memory_space<vmem>>, %arg18: memref<2x1x32xf32, #tpu.memory_space<vmem>>, %arg19: memref<2x1x32xf32, #tpu.memory_space<vmem>>, %arg20: memref<1x32xf32, #tpu.memory_space<vmem>>, %arg21: memref<1x32xf32, #tpu.memory_space<vmem>>, %arg22: memref<2x32x96xf32, #tpu.memory_space<vmem>>, %arg23: memref<2x1x96xf32, #tpu.memory_space<vmem>>, %arg24: memref<2x32x32xf32, #tpu.memory_space<vmem>>, %arg25: memref<2x1x32xf32, #tpu.memory_space<vmem>>, %arg26: memref<2x1x32xf32, #tpu.memory_space<vmem>>, %arg27: memref<2x1x32xf32, #tpu.memory_space<vmem>>, %arg28: memref<2x32x32xf32, #tpu.memory_space<vmem>>, %arg29: memref<2x1x32xf32, #tpu.memory_space<vmem>>, %arg30: memref<2x32x64xf32, #tpu.memory_space<vmem>>, %arg31: memref<2x1x64xf32, #tpu.memory_space<vmem>>, %arg32: memref<2x32x32xf32, #tpu.memory_space<vmem>>, %arg33: memref<2x1x32xf32, #tpu.memory_space<vmem>>, %arg34: memref<2x1x32xf32, #tpu.memory_space<vmem>>, %arg35: memref<2x1x32xf32, #tpu.memory_space<vmem>>, %arg36: memref<2x32x64xf32, #tpu.memory_space<vmem>>, %arg37: memref<2x1x64xf32, #tpu.memory_space<vmem>>, %arg38: memref<2x64x32xf32, #tpu.memory_space<vmem>>, %arg39: memref<2x1x32xf32, #tpu.memory_space<vmem>>, %arg40: memref<2x1x32xf32, #tpu.memory_space<vmem>>, %arg41: memref<2x1x32xf32, #tpu.memory_space<vmem>>, %arg42: memref<1x32xf32, #tpu.memory_space<vmem>>, %arg43: memref<1x32xf32, #tpu.memory_space<vmem>>, %arg44: memref<32x128xf32, #tpu.memory_space<vmem>>, %arg45: memref<1x128xf32, #tpu.memory_space<vmem>>, %arg46: memref<8x128xf32, #tpu.memory_space<vmem>>) attributes {dimension_semantics = [#tpu.dimension_semantics<parallel>], iteration_bounds = array<i64: 2>, scalar_prefetch = 0 : i64, scratch_operands = 0 : i64, tpu.core_type = #tpu.core_type<tc>, window_params = [{transform_indices = @transform_0, window_bounds = array<i64: 8, 1>}, {transform_indices = @transform_1, window_bounds = array<i64: 8, 1>}, {transform_indices = @transform_2, window_bounds = array<i64: 8, 1>}, {transform_indices = @transform_3, window_bounds = array<i64: 8, 1>}, {pipeline_mode = #tpu.pipeline_mode<synchronous>, transform_indices = @transform_4, window_bounds = array<i64: 128, 32>}, {pipeline_mode = #tpu.pipeline_mode<synchronous>, transform_indices = @transform_5, window_bounds = array<i64: 16, 32>}, {pipeline_mode = #tpu.pipeline_mode<synchronous>, transform_indices = @transform_6, window_bounds = array<i64: 16, 32>}, {pipeline_mode = #tpu.pipeline_mode<synchronous>, transform_indices = @transform_7, window_bounds = array<i64: 2, 32, 96>}, {pipeline_mode = #tpu.pipeline_mode<synchronous>, transform_indices = @transform_8, window_bounds = array<i64: 2, 1, 96>}, {pipeline_mode = #tpu.pipeline_mode<synchronous>, transform_indices = @transform_9, window_bounds = array<i64: 2, 32, 32>}, {pipeline_mode = #tpu.pipeline_mode<synchronous>, transform_indices = @transform_10, window_bounds = array<i64: 2, 1, 32>}, {pipeline_mode = #tpu.pipeline_mode<synchronous>, transform_indices = @transform_11, window_bounds = array<i64: 2, 1, 32>}, {pipeline_mode = #tpu.pipeline_mode<synchronous>, transform_indices = @transform_12, window_bounds = array<i64: 2, 1, 32>}, {pipeline_mode = #tpu.pipeline_mode<synchronous>, transform_indices = @transform_13, window_bounds = array<i64: 2, 32, 64>}, {pipeline_mode = #tpu.pipeline_mode<synchronous>, transform_indices = @transform_14, window_bounds = array<i64: 2, 1, 64>}, {pipeline_mode = #tpu.pipeline_mode<synchronous>, transform_indices = @transform_15, window_bounds = array<i64: 2, 64, 32>}, {pipeline_mode = #tpu.pipeline_mode<synchronous>, transform_indices = @transform_16, window_bounds = array<i64: 2, 1, 32>}, {pipeline_mode = #tpu.pipeline_mode<synchronous>, transform_indices = @transform_17, window_bounds = array<i64: 2, 1, 32>}, {pipeline_mode = #tpu.pipeline_mode<synchronous>, transform_indices = @transform_18, window_bounds = array<i64: 2, 1, 32>}, {pipeline_mode = #tpu.pipeline_mode<synchronous>, transform_indices = @transform_19, window_bounds = array<i64: 1, 32>}, {pipeline_mode = #tpu.pipeline_mode<synchronous>, transform_indices = @transform_20, window_bounds = array<i64: 1, 32>}, {pipeline_mode = #tpu.pipeline_mode<synchronous>, transform_indices = @transform_21, window_bounds = array<i64: 2, 32, 96>}, {pipeline_mode = #tpu.pipeline_mode<synchronous>, transform_indices = @transform_22, window_bounds = array<i64: 2, 1, 96>}, {pipeline_mode = #tpu.pipeline_mode<synchronous>, transform_indices = @transform_23, window_bounds = array<i64: 2, 32, 32>}, {pipeline_mode = #tpu.pipeline_mode<synchronous>, transform_indices = @transform_24, window_bounds = array<i64: 2, 1, 32>}, {pipeline_mode = #tpu.pipeline_mode<synchronous>, transform_indices = @transform_25, window_bounds = array<i64: 2, 1, 32>}, {pipeline_mode = #tpu.pipeline_mode<synchronous>, transform_indices = @transform_26, window_bounds = array<i64: 2, 1, 32>}, {pipeline_mode = #tpu.pipeline_mode<synchronous>, transform_indices = @transform_27, window_bounds = array<i64: 2, 32, 32>}, {pipeline_mode = #tpu.pipeline_mode<synchronous>, transform_indices = @transform_28, window_bounds = array<i64: 2, 1, 32>}, {pipeline_mode = #tpu.pipeline_mode<synchronous>, transform_indices = @transform_29, window_bounds = array<i64: 2, 32, 64>}, {pipeline_mode = #tpu.pipeline_mode<synchronous>, transform_indices = @transform_30, window_bounds = array<i64: 2, 1, 64>}, {pipeline_mode = #tpu.pipeline_mode<synchronous>, transform_indices = @transform_31, window_bounds = array<i64: 2, 32, 32>}, {pipeline_mode = #tpu.pipeline_mode<synchronous>, transform_indices = @transform_32, window_bounds = array<i64: 2, 1, 32>}, {pipeline_mode = #tpu.pipeline_mode<synchronous>, transform_indices = @transform_33, window_bounds = array<i64: 2, 1, 32>}, {pipeline_mode = #tpu.pipeline_mode<synchronous>, transform_indices = @transform_34, window_bounds = array<i64: 2, 1, 32>}, {pipeline_mode = #tpu.pipeline_mode<synchronous>, transform_indices = @transform_35, window_bounds = array<i64: 2, 32, 64>}, {pipeline_mode = #tpu.pipeline_mode<synchronous>, transform_indices = @transform_36, window_bounds = array<i64: 2, 1, 64>}, {pipeline_mode = #tpu.pipeline_mode<synchronous>, transform_indices = @transform_37, window_bounds = array<i64: 2, 64, 32>}, {pipeline_mode = #tpu.pipeline_mode<synchronous>, transform_indices = @transform_38, window_bounds = array<i64: 2, 1, 32>}, {pipeline_mode = #tpu.pipeline_mode<synchronous>, transform_indices = @transform_39, window_bounds = array<i64: 2, 1, 32>}, {pipeline_mode = #tpu.pipeline_mode<synchronous>, transform_indices = @transform_40, window_bounds = array<i64: 2, 1, 32>}, {pipeline_mode = #tpu.pipeline_mode<synchronous>, transform_indices = @transform_41, window_bounds = array<i64: 1, 32>}, {pipeline_mode = #tpu.pipeline_mode<synchronous>, transform_indices = @transform_42, window_bounds = array<i64: 1, 32>}, {pipeline_mode = #tpu.pipeline_mode<synchronous>, transform_indices = @transform_43, window_bounds = array<i64: 32, 128>}, {pipeline_mode = #tpu.pipeline_mode<synchronous>, transform_indices = @transform_44, window_bounds = array<i64: 1, 128>}, {transform_indices = @transform_45, window_bounds = array<i64: 8, 128>}]} {
    %c0 = arith.constant 0 : index
    %c0_0 = arith.constant 0 : index
    %0 = vector.load %arg5[%c0, %c0_0] : memref<128x32xf32, #tpu.memory_space<vmem>>, vector<128x32xf32>
    %c0_1 = arith.constant 0 : index
    %c0_2 = arith.constant 0 : index
    %1 = vector.load %arg1[%c0_1, %c0_2] : memref<8x1xi32, #tpu.memory_space<vmem>>, vector<8x1xi32>
    %2 = tpu.iota {dimensions = array<i32: 1>} : vector<8x128xi32>
    %3 = vector.broadcast %1 : vector<8x1xi32> to vector<8x128xi32>
    %4 = arith.cmpi eq, %3, %2 : vector<8x128xi32>
    %5 = arith.extui %4 : vector<8x128xi1> to vector<8x128xi32>
    %6 = arith.sitofp %5 : vector<8x128xi32> to vector<8x128xf32>
    %cst = arith.constant dense<0.000000e+00> : vector<8x32xf32>
    %7 = tpu.matmul %6, %0, %cst {dimension_numbers = #tpu.dot_dimension_numbers<[1], [0], [0], [1], [0, 0, 1, 1], [], []>} : vector<8x128xf32>, vector<128x32xf32>, vector<8x32xf32> -> vector<8x32xf32>
    %c0_3 = arith.constant 0 : index
    %c0_4 = arith.constant 0 : index
    %8 = vector.load %arg2[%c0_3, %c0_4] : memref<8x1xi32, #tpu.memory_space<vmem>>, vector<8x1xi32>
    %c0_5 = arith.constant 0 : index
    %c0_6 = arith.constant 0 : index
    %9 = vector.load %arg6[%c0_5, %c0_6] : memref<16x32xf32, #tpu.memory_space<vmem>>, vector<16x32xf32>
    %10 = tpu.iota {dimensions = array<i32: 1>} : vector<8x16xi32>
    %11 = vector.broadcast %8 : vector<8x1xi32> to vector<8x16xi32>
    %12 = arith.cmpi eq, %11, %10 : vector<8x16xi32>
    %13 = arith.extui %12 : vector<8x16xi1> to vector<8x16xi32>
    %14 = arith.sitofp %13 : vector<8x16xi32> to vector<8x16xf32>
    %cst_7 = arith.constant dense<0.000000e+00> : vector<8x32xf32>
    %15 = tpu.matmul %14, %9, %cst_7 {dimension_numbers = #tpu.dot_dimension_numbers<[1], [0], [0], [1], [0, 0, 1, 1], [], []>} : vector<8x16xf32>, vector<16x32xf32>, vector<8x32xf32> -> vector<8x32xf32>
    %16 = arith.addf %7, %15 : vector<8x32xf32>
    %c0_8 = arith.constant 0 : index
    %c0_9 = arith.constant 0 : index
    %17 = vector.load %arg3[%c0_8, %c0_9] : memref<8x1xi32, #tpu.memory_space<vmem>>, vector<8x1xi32>
    %18 = tpu.iota {dimensions = array<i32: 1>} : vector<8x128xi32>
    %19 = vector.broadcast %17 : vector<8x1xi32> to vector<8x128xi32>
    %20 = arith.cmpi eq, %19, %18 : vector<8x128xi32>
    %21 = arith.extui %20 : vector<8x128xi1> to vector<8x128xi32>
    %22 = arith.sitofp %21 : vector<8x128xi32> to vector<8x128xf32>
    %cst_10 = arith.constant dense<0.000000e+00> : vector<8x32xf32>
    %23 = tpu.matmul %22, %0, %cst_10 {dimension_numbers = #tpu.dot_dimension_numbers<[1], [0], [0], [1], [0, 0, 1, 1], [], []>} : vector<8x128xf32>, vector<128x32xf32>, vector<8x32xf32> -> vector<8x32xf32>
    %c0_11 = arith.constant 0 : index
    %c0_12 = arith.constant 0 : index
    %24 = vector.load %arg4[%c0_11, %c0_12] : memref<8x1xi32, #tpu.memory_space<vmem>>, vector<8x1xi32>
    %c0_13 = arith.constant 0 : index
    %c0_14 = arith.constant 0 : index
    %25 = vector.load %arg7[%c0_13, %c0_14] : memref<16x32xf32, #tpu.memory_space<vmem>>, vector<16x32xf32>
    %26 = tpu.iota {dimensions = array<i32: 1>} : vector<8x16xi32>
    %27 = vector.broadcast %24 : vector<8x1xi32> to vector<8x16xi32>
    %28 = arith.cmpi eq, %27, %26 : vector<8x16xi32>
    %29 = arith.extui %28 : vector<8x16xi1> to vector<8x16xi32>
    %30 = arith.sitofp %29 : vector<8x16xi32> to vector<8x16xf32>
    %cst_15 = arith.constant dense<0.000000e+00> : vector<8x32xf32>
    %31 = tpu.matmul %30, %25, %cst_15 {dimension_numbers = #tpu.dot_dimension_numbers<[1], [0], [0], [1], [0, 0, 1, 1], [], []>} : vector<8x16xf32>, vector<16x32xf32>, vector<8x32xf32> -> vector<8x32xf32>
    %32 = arith.addf %23, %31 : vector<8x32xf32>
    %c0_16 = arith.constant 0 : index
    %c0_17 = arith.constant 0 : index
    %c0_18 = arith.constant 0 : index
    %33 = vector.load %arg8[%c0_16, %c0_17, %c0_18] : memref<2x32x96xf32, #tpu.memory_space<vmem>>, vector<1x32x96xf32>
    %34 = vector.shape_cast %33 : vector<1x32x96xf32> to vector<32x96xf32>
    %cst_19 = arith.constant dense<0.000000e+00> : vector<8x96xf32>
    %35 = tpu.matmul %16, %34, %cst_19 {dimension_numbers = #tpu.dot_dimension_numbers<[1], [0], [0], [1], [0, 0, 1, 1], [], []>} : vector<8x32xf32>, vector<32x96xf32>, vector<8x96xf32> -> vector<8x96xf32>
    %c0_20 = arith.constant 0 : index
    %c0_21 = arith.constant 0 : index
    %c0_22 = arith.constant 0 : index
    %36 = vector.load %arg9[%c0_20, %c0_21, %c0_22] : memref<2x1x96xf32, #tpu.memory_space<vmem>>, vector<1x1x96xf32>
    %37 = vector.shape_cast %36 : vector<1x1x96xf32> to vector<1x96xf32>
    %38 = vector.broadcast %37 : vector<1x96xf32> to vector<8x96xf32>
    %39 = arith.addf %35, %38 : vector<8x96xf32>
    %40 = vector.extract_strided_slice %39 {offsets = [0, 0], sizes = [8, 32], strides = [1, 1]} : vector<8x96xf32> to vector<8x32xf32>
    %41 = vector.extract_strided_slice %39 {offsets = [0, 32], sizes = [8, 32], strides = [1, 1]} : vector<8x96xf32> to vector<8x32xf32>
    %42 = vector.extract_strided_slice %39 {offsets = [0, 64], sizes = [8, 32], strides = [1, 1]} : vector<8x96xf32> to vector<8x32xf32>
    %43 = vector.extract_strided_slice %40 {offsets = [0, 0], sizes = [8, 8], strides = [1, 1]} : vector<8x32xf32> to vector<8x8xf32>
    %44 = vector.extract_strided_slice %41 {offsets = [0, 0], sizes = [8, 8], strides = [1, 1]} : vector<8x32xf32> to vector<8x8xf32>
    %45 = vector.extract_strided_slice %42 {offsets = [0, 0], sizes = [8, 8], strides = [1, 1]} : vector<8x32xf32> to vector<8x8xf32>
    %cst_23 = arith.constant dense<0.000000e+00> : vector<8x8xf32>
    %46 = tpu.matmul %43, %44, %cst_23 {dimension_numbers = #tpu.dot_dimension_numbers<[1], [1], [0], [0], [0, 0, 1, 0], [], []>} : vector<8x8xf32>, vector<8x8xf32>, vector<8x8xf32> -> vector<8x8xf32>
    %cst_24 = arith.constant dense<0xFF800000> : vector<8xf32>
    %47 = vector.multi_reduction <maximumf>, %46, %cst_24 [1] : vector<8x8xf32> to vector<8xf32>
    %48 = vector.shape_cast %47 : vector<8xf32> to vector<8x1xf32>
    %49 = vector.broadcast %48 : vector<8x1xf32> to vector<8x8xf32>
    %50 = arith.subf %46, %49 : vector<8x8xf32>
    %51 = math.exp %50 : vector<8x8xf32>
    %cst_25 = arith.constant dense<0.000000e+00> : vector<8xf32>
    %52 = vector.multi_reduction <add>, %51, %cst_25 [1] : vector<8x8xf32> to vector<8xf32>
    %53 = vector.shape_cast %52 : vector<8xf32> to vector<8x1xf32>
    %54 = tpu.reciprocal %53 {approx = true} : vector<8x1xf32> -> vector<8x1xf32>
    %55 = vector.broadcast %54 : vector<8x1xf32> to vector<8x8xf32>
    %56 = arith.mulf %51, %55 : vector<8x8xf32>
    %cst_26 = arith.constant dense<0.000000e+00> : vector<8x8xf32>
    %57 = tpu.matmul %56, %45, %cst_26 {dimension_numbers = #tpu.dot_dimension_numbers<[1], [0], [0], [1], [0, 0, 1, 1], [], []>} : vector<8x8xf32>, vector<8x8xf32>, vector<8x8xf32> -> vector<8x8xf32>
    %58 = vector.extract_strided_slice %40 {offsets = [0, 8], sizes = [8, 8], strides = [1, 1]} : vector<8x32xf32> to vector<8x8xf32>
    %59 = vector.extract_strided_slice %41 {offsets = [0, 8], sizes = [8, 8], strides = [1, 1]} : vector<8x32xf32> to vector<8x8xf32>
    %60 = vector.extract_strided_slice %42 {offsets = [0, 8], sizes = [8, 8], strides = [1, 1]} : vector<8x32xf32> to vector<8x8xf32>
    %cst_27 = arith.constant dense<0.000000e+00> : vector<8x8xf32>
    %61 = tpu.matmul %58, %59, %cst_27 {dimension_numbers = #tpu.dot_dimension_numbers<[1], [1], [0], [0], [0, 0, 1, 0], [], []>} : vector<8x8xf32>, vector<8x8xf32>, vector<8x8xf32> -> vector<8x8xf32>
    %cst_28 = arith.constant dense<0xFF800000> : vector<8xf32>
    %62 = vector.multi_reduction <maximumf>, %61, %cst_28 [1] : vector<8x8xf32> to vector<8xf32>
    %63 = vector.shape_cast %62 : vector<8xf32> to vector<8x1xf32>
    %64 = vector.broadcast %63 : vector<8x1xf32> to vector<8x8xf32>
    %65 = arith.subf %61, %64 : vector<8x8xf32>
    %66 = math.exp %65 : vector<8x8xf32>
    %cst_29 = arith.constant dense<0.000000e+00> : vector<8xf32>
    %67 = vector.multi_reduction <add>, %66, %cst_29 [1] : vector<8x8xf32> to vector<8xf32>
    %68 = vector.shape_cast %67 : vector<8xf32> to vector<8x1xf32>
    %69 = tpu.reciprocal %68 {approx = true} : vector<8x1xf32> -> vector<8x1xf32>
    %70 = vector.broadcast %69 : vector<8x1xf32> to vector<8x8xf32>
    %71 = arith.mulf %66, %70 : vector<8x8xf32>
    %cst_30 = arith.constant dense<0.000000e+00> : vector<8x8xf32>
    %72 = tpu.matmul %71, %60, %cst_30 {dimension_numbers = #tpu.dot_dimension_numbers<[1], [0], [0], [1], [0, 0, 1, 1], [], []>} : vector<8x8xf32>, vector<8x8xf32>, vector<8x8xf32> -> vector<8x8xf32>
    %73 = vector.extract_strided_slice %40 {offsets = [0, 16], sizes = [8, 8], strides = [1, 1]} : vector<8x32xf32> to vector<8x8xf32>
    %74 = vector.extract_strided_slice %41 {offsets = [0, 16], sizes = [8, 8], strides = [1, 1]} : vector<8x32xf32> to vector<8x8xf32>
    %75 = vector.extract_strided_slice %42 {offsets = [0, 16], sizes = [8, 8], strides = [1, 1]} : vector<8x32xf32> to vector<8x8xf32>
    %cst_31 = arith.constant dense<0.000000e+00> : vector<8x8xf32>
    %76 = tpu.matmul %73, %74, %cst_31 {dimension_numbers = #tpu.dot_dimension_numbers<[1], [1], [0], [0], [0, 0, 1, 0], [], []>} : vector<8x8xf32>, vector<8x8xf32>, vector<8x8xf32> -> vector<8x8xf32>
    %cst_32 = arith.constant dense<0xFF800000> : vector<8xf32>
    %77 = vector.multi_reduction <maximumf>, %76, %cst_32 [1] : vector<8x8xf32> to vector<8xf32>
    %78 = vector.shape_cast %77 : vector<8xf32> to vector<8x1xf32>
    %79 = vector.broadcast %78 : vector<8x1xf32> to vector<8x8xf32>
    %80 = arith.subf %76, %79 : vector<8x8xf32>
    %81 = math.exp %80 : vector<8x8xf32>
    %cst_33 = arith.constant dense<0.000000e+00> : vector<8xf32>
    %82 = vector.multi_reduction <add>, %81, %cst_33 [1] : vector<8x8xf32> to vector<8xf32>
    %83 = vector.shape_cast %82 : vector<8xf32> to vector<8x1xf32>
    %84 = tpu.reciprocal %83 {approx = true} : vector<8x1xf32> -> vector<8x1xf32>
    %85 = vector.broadcast %84 : vector<8x1xf32> to vector<8x8xf32>
    %86 = arith.mulf %81, %85 : vector<8x8xf32>
    %cst_34 = arith.constant dense<0.000000e+00> : vector<8x8xf32>
    %87 = tpu.matmul %86, %75, %cst_34 {dimension_numbers = #tpu.dot_dimension_numbers<[1], [0], [0], [1], [0, 0, 1, 1], [], []>} : vector<8x8xf32>, vector<8x8xf32>, vector<8x8xf32> -> vector<8x8xf32>
    %88 = vector.extract_strided_slice %40 {offsets = [0, 24], sizes = [8, 8], strides = [1, 1]} : vector<8x32xf32> to vector<8x8xf32>
    %89 = vector.extract_strided_slice %41 {offsets = [0, 24], sizes = [8, 8], strides = [1, 1]} : vector<8x32xf32> to vector<8x8xf32>
    %90 = vector.extract_strided_slice %42 {offsets = [0, 24], sizes = [8, 8], strides = [1, 1]} : vector<8x32xf32> to vector<8x8xf32>
    %cst_35 = arith.constant dense<0.000000e+00> : vector<8x8xf32>
    %91 = tpu.matmul %88, %89, %cst_35 {dimension_numbers = #tpu.dot_dimension_numbers<[1], [1], [0], [0], [0, 0, 1, 0], [], []>} : vector<8x8xf32>, vector<8x8xf32>, vector<8x8xf32> -> vector<8x8xf32>
    %cst_36 = arith.constant dense<0xFF800000> : vector<8xf32>
    %92 = vector.multi_reduction <maximumf>, %91, %cst_36 [1] : vector<8x8xf32> to vector<8xf32>
    %93 = vector.shape_cast %92 : vector<8xf32> to vector<8x1xf32>
    %94 = vector.broadcast %93 : vector<8x1xf32> to vector<8x8xf32>
    %95 = arith.subf %91, %94 : vector<8x8xf32>
    %96 = math.exp %95 : vector<8x8xf32>
    %cst_37 = arith.constant dense<0.000000e+00> : vector<8xf32>
    %97 = vector.multi_reduction <add>, %96, %cst_37 [1] : vector<8x8xf32> to vector<8xf32>
    %98 = vector.shape_cast %97 : vector<8xf32> to vector<8x1xf32>
    %99 = tpu.reciprocal %98 {approx = true} : vector<8x1xf32> -> vector<8x1xf32>
    %100 = vector.broadcast %99 : vector<8x1xf32> to vector<8x8xf32>
    %101 = arith.mulf %96, %100 : vector<8x8xf32>
    %cst_38 = arith.constant dense<0.000000e+00> : vector<8x8xf32>
    %102 = tpu.matmul %101, %90, %cst_38 {dimension_numbers = #tpu.dot_dimension_numbers<[1], [0], [0], [1], [0, 0, 1, 1], [], []>} : vector<8x8xf32>, vector<8x8xf32>, vector<8x8xf32> -> vector<8x8xf32>
    %103 = tpu.concatenate %57, %72, %87, %102 in 1 : vector<8x8xf32>, vector<8x8xf32>, vector<8x8xf32>, vector<8x8xf32> -> vector<8x32xf32>
    %c0_39 = arith.constant 0 : index
    %c0_40 = arith.constant 0 : index
    %c0_41 = arith.constant 0 : index
    %104 = vector.load %arg10[%c0_39, %c0_40, %c0_41] : memref<2x32x32xf32, #tpu.memory_space<vmem>>, vector<1x32x32xf32>
    %105 = vector.shape_cast %104 : vector<1x32x32xf32> to vector<32x32xf32>
    %cst_42 = arith.constant dense<0.000000e+00> : vector<8x32xf32>
    %106 = tpu.matmul %103, %105, %cst_42 {dimension_numbers = #tpu.dot_dimension_numbers<[1], [0], [0], [1], [0, 0, 1, 1], [], []>} : vector<8x32xf32>, vector<32x32xf32>, vector<8x32xf32> -> vector<8x32xf32>
    %c0_43 = arith.constant 0 : index
    %c0_44 = arith.constant 0 : index
    %c0_45 = arith.constant 0 : index
    %107 = vector.load %arg11[%c0_43, %c0_44, %c0_45] : memref<2x1x32xf32, #tpu.memory_space<vmem>>, vector<1x1x32xf32>
    %108 = vector.shape_cast %107 : vector<1x1x32xf32> to vector<1x32xf32>
    %109 = vector.broadcast %108 : vector<1x32xf32> to vector<8x32xf32>
    %110 = arith.addf %106, %109 : vector<8x32xf32>
    %111 = arith.addf %16, %110 : vector<8x32xf32>
    %c0_46 = arith.constant 0 : index
    %c0_47 = arith.constant 0 : index
    %c0_48 = arith.constant 0 : index
    %112 = vector.load %arg12[%c0_46, %c0_47, %c0_48] : memref<2x1x32xf32, #tpu.memory_space<vmem>>, vector<1x1x32xf32>
    %113 = vector.shape_cast %112 : vector<1x1x32xf32> to vector<1x32xf32>
    %c0_49 = arith.constant 0 : index
    %c0_50 = arith.constant 0 : index
    %c0_51 = arith.constant 0 : index
    %114 = vector.load %arg13[%c0_49, %c0_50, %c0_51] : memref<2x1x32xf32, #tpu.memory_space<vmem>>, vector<1x1x32xf32>
    %115 = vector.shape_cast %114 : vector<1x1x32xf32> to vector<1x32xf32>
    %cst_52 = arith.constant dense<0.000000e+00> : vector<8xf32>
    %116 = vector.multi_reduction <add>, %111, %cst_52 [1] : vector<8x32xf32> to vector<8xf32>
    %117 = vector.shape_cast %116 : vector<8xf32> to vector<8x1xf32>
    %cst_53 = arith.constant 3.200000e+01 : f32
    %118 = vector.broadcast %cst_53 : f32 to vector<8x1xf32>
    %119 = arith.divf %117, %118 : vector<8x1xf32>
    %120 = vector.broadcast %119 : vector<8x1xf32> to vector<8x32xf32>
    %121 = arith.subf %111, %120 : vector<8x32xf32>
    %122 = arith.mulf %121, %121 : vector<8x32xf32>
    %cst_54 = arith.constant dense<0.000000e+00> : vector<8xf32>
    %123 = vector.multi_reduction <add>, %122, %cst_54 [1] : vector<8x32xf32> to vector<8xf32>
    %124 = vector.shape_cast %123 : vector<8xf32> to vector<8x1xf32>
    %cst_55 = arith.constant 3.200000e+01 : f32
    %125 = vector.broadcast %cst_55 : f32 to vector<8x1xf32>
    %126 = arith.divf %124, %125 : vector<8x1xf32>
    %cst_56 = arith.constant 9.99999974E-6 : f32
    %127 = vector.broadcast %cst_56 : f32 to vector<8x1xf32>
    %128 = arith.addf %126, %127 : vector<8x1xf32>
    %129 = math.rsqrt %128 : vector<8x1xf32>
    %130 = vector.broadcast %129 : vector<8x1xf32> to vector<8x32xf32>
    %131 = arith.mulf %121, %130 : vector<8x32xf32>
    %132 = vector.broadcast %113 : vector<1x32xf32> to vector<8x32xf32>
    %133 = arith.mulf %131, %132 : vector<8x32xf32>
    %134 = vector.broadcast %115 : vector<1x32xf32> to vector<8x32xf32>
    %135 = arith.addf %133, %134 : vector<8x32xf32>
    %c0_57 = arith.constant 0 : index
    %c0_58 = arith.constant 0 : index
    %c0_59 = arith.constant 0 : index
    %136 = vector.load %arg14[%c0_57, %c0_58, %c0_59] : memref<2x32x64xf32, #tpu.memory_space<vmem>>, vector<1x32x64xf32>
    %137 = vector.shape_cast %136 : vector<1x32x64xf32> to vector<32x64xf32>
    %cst_60 = arith.constant dense<0.000000e+00> : vector<8x64xf32>
    %138 = tpu.matmul %135, %137, %cst_60 {dimension_numbers = #tpu.dot_dimension_numbers<[1], [0], [0], [1], [0, 0, 1, 1], [], []>} : vector<8x32xf32>, vector<32x64xf32>, vector<8x64xf32> -> vector<8x64xf32>
    %c0_61 = arith.constant 0 : index
    %c0_62 = arith.constant 0 : index
    %c0_63 = arith.constant 0 : index
    %139 = vector.load %arg15[%c0_61, %c0_62, %c0_63] : memref<2x1x64xf32, #tpu.memory_space<vmem>>, vector<1x1x64xf32>
    %140 = vector.shape_cast %139 : vector<1x1x64xf32> to vector<1x64xf32>
    %141 = vector.broadcast %140 : vector<1x64xf32> to vector<8x64xf32>
    %142 = arith.addf %138, %141 : vector<8x64xf32>
    %cst_64 = arith.constant 0.000000e+00 : f32
    %143 = vector.broadcast %cst_64 : f32 to vector<8x64xf32>
    %144 = arith.maximumf %142, %143 : vector<8x64xf32>
    %c0_65 = arith.constant 0 : index
    %c0_66 = arith.constant 0 : index
    %c0_67 = arith.constant 0 : index
    %145 = vector.load %arg16[%c0_65, %c0_66, %c0_67] : memref<2x64x32xf32, #tpu.memory_space<vmem>>, vector<1x64x32xf32>
    %146 = vector.shape_cast %145 : vector<1x64x32xf32> to vector<64x32xf32>
    %cst_68 = arith.constant dense<0.000000e+00> : vector<8x32xf32>
    %147 = tpu.matmul %144, %146, %cst_68 {dimension_numbers = #tpu.dot_dimension_numbers<[1], [0], [0], [1], [0, 0, 1, 1], [], []>} : vector<8x64xf32>, vector<64x32xf32>, vector<8x32xf32> -> vector<8x32xf32>
    %c0_69 = arith.constant 0 : index
    %c0_70 = arith.constant 0 : index
    %c0_71 = arith.constant 0 : index
    %148 = vector.load %arg17[%c0_69, %c0_70, %c0_71] : memref<2x1x32xf32, #tpu.memory_space<vmem>>, vector<1x1x32xf32>
    %149 = vector.shape_cast %148 : vector<1x1x32xf32> to vector<1x32xf32>
    %150 = vector.broadcast %149 : vector<1x32xf32> to vector<8x32xf32>
    %151 = arith.addf %147, %150 : vector<8x32xf32>
    %152 = arith.addf %135, %151 : vector<8x32xf32>
    %c0_72 = arith.constant 0 : index
    %c0_73 = arith.constant 0 : index
    %c0_74 = arith.constant 0 : index
    %153 = vector.load %arg18[%c0_72, %c0_73, %c0_74] : memref<2x1x32xf32, #tpu.memory_space<vmem>>, vector<1x1x32xf32>
    %154 = vector.shape_cast %153 : vector<1x1x32xf32> to vector<1x32xf32>
    %c0_75 = arith.constant 0 : index
    %c0_76 = arith.constant 0 : index
    %c0_77 = arith.constant 0 : index
    %155 = vector.load %arg19[%c0_75, %c0_76, %c0_77] : memref<2x1x32xf32, #tpu.memory_space<vmem>>, vector<1x1x32xf32>
    %156 = vector.shape_cast %155 : vector<1x1x32xf32> to vector<1x32xf32>
    %cst_78 = arith.constant dense<0.000000e+00> : vector<8xf32>
    %157 = vector.multi_reduction <add>, %152, %cst_78 [1] : vector<8x32xf32> to vector<8xf32>
    %158 = vector.shape_cast %157 : vector<8xf32> to vector<8x1xf32>
    %cst_79 = arith.constant 3.200000e+01 : f32
    %159 = vector.broadcast %cst_79 : f32 to vector<8x1xf32>
    %160 = arith.divf %158, %159 : vector<8x1xf32>
    %161 = vector.broadcast %160 : vector<8x1xf32> to vector<8x32xf32>
    %162 = arith.subf %152, %161 : vector<8x32xf32>
    %163 = arith.mulf %162, %162 : vector<8x32xf32>
    %cst_80 = arith.constant dense<0.000000e+00> : vector<8xf32>
    %164 = vector.multi_reduction <add>, %163, %cst_80 [1] : vector<8x32xf32> to vector<8xf32>
    %165 = vector.shape_cast %164 : vector<8xf32> to vector<8x1xf32>
    %cst_81 = arith.constant 3.200000e+01 : f32
    %166 = vector.broadcast %cst_81 : f32 to vector<8x1xf32>
    %167 = arith.divf %165, %166 : vector<8x1xf32>
    %cst_82 = arith.constant 9.99999974E-6 : f32
    %168 = vector.broadcast %cst_82 : f32 to vector<8x1xf32>
    %169 = arith.addf %167, %168 : vector<8x1xf32>
    %170 = math.rsqrt %169 : vector<8x1xf32>
    %171 = vector.broadcast %170 : vector<8x1xf32> to vector<8x32xf32>
    %172 = arith.mulf %162, %171 : vector<8x32xf32>
    %173 = vector.broadcast %154 : vector<1x32xf32> to vector<8x32xf32>
    %174 = arith.mulf %172, %173 : vector<8x32xf32>
    %175 = vector.broadcast %156 : vector<1x32xf32> to vector<8x32xf32>
    %176 = arith.addf %174, %175 : vector<8x32xf32>
    %c1 = arith.constant 1 : index
    %c0_83 = arith.constant 0 : index
    %c0_84 = arith.constant 0 : index
    %177 = vector.load %arg8[%c1, %c0_83, %c0_84] : memref<2x32x96xf32, #tpu.memory_space<vmem>>, vector<1x32x96xf32>
    %178 = vector.shape_cast %177 : vector<1x32x96xf32> to vector<32x96xf32>
    %cst_85 = arith.constant dense<0.000000e+00> : vector<8x96xf32>
    %179 = tpu.matmul %176, %178, %cst_85 {dimension_numbers = #tpu.dot_dimension_numbers<[1], [0], [0], [1], [0, 0, 1, 1], [], []>} : vector<8x32xf32>, vector<32x96xf32>, vector<8x96xf32> -> vector<8x96xf32>
    %c1_86 = arith.constant 1 : index
    %c0_87 = arith.constant 0 : index
    %c0_88 = arith.constant 0 : index
    %180 = vector.load %arg9[%c1_86, %c0_87, %c0_88] : memref<2x1x96xf32, #tpu.memory_space<vmem>>, vector<1x1x96xf32>
    %181 = vector.shape_cast %180 : vector<1x1x96xf32> to vector<1x96xf32>
    %182 = vector.broadcast %181 : vector<1x96xf32> to vector<8x96xf32>
    %183 = arith.addf %179, %182 : vector<8x96xf32>
    %184 = vector.extract_strided_slice %183 {offsets = [0, 0], sizes = [8, 32], strides = [1, 1]} : vector<8x96xf32> to vector<8x32xf32>
    %185 = vector.extract_strided_slice %183 {offsets = [0, 32], sizes = [8, 32], strides = [1, 1]} : vector<8x96xf32> to vector<8x32xf32>
    %186 = vector.extract_strided_slice %183 {offsets = [0, 64], sizes = [8, 32], strides = [1, 1]} : vector<8x96xf32> to vector<8x32xf32>
    %187 = vector.extract_strided_slice %184 {offsets = [0, 0], sizes = [8, 8], strides = [1, 1]} : vector<8x32xf32> to vector<8x8xf32>
    %188 = vector.extract_strided_slice %185 {offsets = [0, 0], sizes = [8, 8], strides = [1, 1]} : vector<8x32xf32> to vector<8x8xf32>
    %189 = vector.extract_strided_slice %186 {offsets = [0, 0], sizes = [8, 8], strides = [1, 1]} : vector<8x32xf32> to vector<8x8xf32>
    %cst_89 = arith.constant dense<0.000000e+00> : vector<8x8xf32>
    %190 = tpu.matmul %187, %188, %cst_89 {dimension_numbers = #tpu.dot_dimension_numbers<[1], [1], [0], [0], [0, 0, 1, 0], [], []>} : vector<8x8xf32>, vector<8x8xf32>, vector<8x8xf32> -> vector<8x8xf32>
    %cst_90 = arith.constant dense<0xFF800000> : vector<8xf32>
    %191 = vector.multi_reduction <maximumf>, %190, %cst_90 [1] : vector<8x8xf32> to vector<8xf32>
    %192 = vector.shape_cast %191 : vector<8xf32> to vector<8x1xf32>
    %193 = vector.broadcast %192 : vector<8x1xf32> to vector<8x8xf32>
    %194 = arith.subf %190, %193 : vector<8x8xf32>
    %195 = math.exp %194 : vector<8x8xf32>
    %cst_91 = arith.constant dense<0.000000e+00> : vector<8xf32>
    %196 = vector.multi_reduction <add>, %195, %cst_91 [1] : vector<8x8xf32> to vector<8xf32>
    %197 = vector.shape_cast %196 : vector<8xf32> to vector<8x1xf32>
    %198 = tpu.reciprocal %197 {approx = true} : vector<8x1xf32> -> vector<8x1xf32>
    %199 = vector.broadcast %198 : vector<8x1xf32> to vector<8x8xf32>
    %200 = arith.mulf %195, %199 : vector<8x8xf32>
    %cst_92 = arith.constant dense<0.000000e+00> : vector<8x8xf32>
    %201 = tpu.matmul %200, %189, %cst_92 {dimension_numbers = #tpu.dot_dimension_numbers<[1], [0], [0], [1], [0, 0, 1, 1], [], []>} : vector<8x8xf32>, vector<8x8xf32>, vector<8x8xf32> -> vector<8x8xf32>
    %202 = vector.extract_strided_slice %184 {offsets = [0, 8], sizes = [8, 8], strides = [1, 1]} : vector<8x32xf32> to vector<8x8xf32>
    %203 = vector.extract_strided_slice %185 {offsets = [0, 8], sizes = [8, 8], strides = [1, 1]} : vector<8x32xf32> to vector<8x8xf32>
    %204 = vector.extract_strided_slice %186 {offsets = [0, 8], sizes = [8, 8], strides = [1, 1]} : vector<8x32xf32> to vector<8x8xf32>
    %cst_93 = arith.constant dense<0.000000e+00> : vector<8x8xf32>
    %205 = tpu.matmul %202, %203, %cst_93 {dimension_numbers = #tpu.dot_dimension_numbers<[1], [1], [0], [0], [0, 0, 1, 0], [], []>} : vector<8x8xf32>, vector<8x8xf32>, vector<8x8xf32> -> vector<8x8xf32>
    %cst_94 = arith.constant dense<0xFF800000> : vector<8xf32>
    %206 = vector.multi_reduction <maximumf>, %205, %cst_94 [1] : vector<8x8xf32> to vector<8xf32>
    %207 = vector.shape_cast %206 : vector<8xf32> to vector<8x1xf32>
    %208 = vector.broadcast %207 : vector<8x1xf32> to vector<8x8xf32>
    %209 = arith.subf %205, %208 : vector<8x8xf32>
    %210 = math.exp %209 : vector<8x8xf32>
    %cst_95 = arith.constant dense<0.000000e+00> : vector<8xf32>
    %211 = vector.multi_reduction <add>, %210, %cst_95 [1] : vector<8x8xf32> to vector<8xf32>
    %212 = vector.shape_cast %211 : vector<8xf32> to vector<8x1xf32>
    %213 = tpu.reciprocal %212 {approx = true} : vector<8x1xf32> -> vector<8x1xf32>
    %214 = vector.broadcast %213 : vector<8x1xf32> to vector<8x8xf32>
    %215 = arith.mulf %210, %214 : vector<8x8xf32>
    %cst_96 = arith.constant dense<0.000000e+00> : vector<8x8xf32>
    %216 = tpu.matmul %215, %204, %cst_96 {dimension_numbers = #tpu.dot_dimension_numbers<[1], [0], [0], [1], [0, 0, 1, 1], [], []>} : vector<8x8xf32>, vector<8x8xf32>, vector<8x8xf32> -> vector<8x8xf32>
    %217 = vector.extract_strided_slice %184 {offsets = [0, 16], sizes = [8, 8], strides = [1, 1]} : vector<8x32xf32> to vector<8x8xf32>
    %218 = vector.extract_strided_slice %185 {offsets = [0, 16], sizes = [8, 8], strides = [1, 1]} : vector<8x32xf32> to vector<8x8xf32>
    %219 = vector.extract_strided_slice %186 {offsets = [0, 16], sizes = [8, 8], strides = [1, 1]} : vector<8x32xf32> to vector<8x8xf32>
    %cst_97 = arith.constant dense<0.000000e+00> : vector<8x8xf32>
    %220 = tpu.matmul %217, %218, %cst_97 {dimension_numbers = #tpu.dot_dimension_numbers<[1], [1], [0], [0], [0, 0, 1, 0], [], []>} : vector<8x8xf32>, vector<8x8xf32>, vector<8x8xf32> -> vector<8x8xf32>
    %cst_98 = arith.constant dense<0xFF800000> : vector<8xf32>
    %221 = vector.multi_reduction <maximumf>, %220, %cst_98 [1] : vector<8x8xf32> to vector<8xf32>
    %222 = vector.shape_cast %221 : vector<8xf32> to vector<8x1xf32>
    %223 = vector.broadcast %222 : vector<8x1xf32> to vector<8x8xf32>
    %224 = arith.subf %220, %223 : vector<8x8xf32>
    %225 = math.exp %224 : vector<8x8xf32>
    %cst_99 = arith.constant dense<0.000000e+00> : vector<8xf32>
    %226 = vector.multi_reduction <add>, %225, %cst_99 [1] : vector<8x8xf32> to vector<8xf32>
    %227 = vector.shape_cast %226 : vector<8xf32> to vector<8x1xf32>
    %228 = tpu.reciprocal %227 {approx = true} : vector<8x1xf32> -> vector<8x1xf32>
    %229 = vector.broadcast %228 : vector<8x1xf32> to vector<8x8xf32>
    %230 = arith.mulf %225, %229 : vector<8x8xf32>
    %cst_100 = arith.constant dense<0.000000e+00> : vector<8x8xf32>
    %231 = tpu.matmul %230, %219, %cst_100 {dimension_numbers = #tpu.dot_dimension_numbers<[1], [0], [0], [1], [0, 0, 1, 1], [], []>} : vector<8x8xf32>, vector<8x8xf32>, vector<8x8xf32> -> vector<8x8xf32>
    %232 = vector.extract_strided_slice %184 {offsets = [0, 24], sizes = [8, 8], strides = [1, 1]} : vector<8x32xf32> to vector<8x8xf32>
    %233 = vector.extract_strided_slice %185 {offsets = [0, 24], sizes = [8, 8], strides = [1, 1]} : vector<8x32xf32> to vector<8x8xf32>
    %234 = vector.extract_strided_slice %186 {offsets = [0, 24], sizes = [8, 8], strides = [1, 1]} : vector<8x32xf32> to vector<8x8xf32>
    %cst_101 = arith.constant dense<0.000000e+00> : vector<8x8xf32>
    %235 = tpu.matmul %232, %233, %cst_101 {dimension_numbers = #tpu.dot_dimension_numbers<[1], [1], [0], [0], [0, 0, 1, 0], [], []>} : vector<8x8xf32>, vector<8x8xf32>, vector<8x8xf32> -> vector<8x8xf32>
    %cst_102 = arith.constant dense<0xFF800000> : vector<8xf32>
    %236 = vector.multi_reduction <maximumf>, %235, %cst_102 [1] : vector<8x8xf32> to vector<8xf32>
    %237 = vector.shape_cast %236 : vector<8xf32> to vector<8x1xf32>
    %238 = vector.broadcast %237 : vector<8x1xf32> to vector<8x8xf32>
    %239 = arith.subf %235, %238 : vector<8x8xf32>
    %240 = math.exp %239 : vector<8x8xf32>
    %cst_103 = arith.constant dense<0.000000e+00> : vector<8xf32>
    %241 = vector.multi_reduction <add>, %240, %cst_103 [1] : vector<8x8xf32> to vector<8xf32>
    %242 = vector.shape_cast %241 : vector<8xf32> to vector<8x1xf32>
    %243 = tpu.reciprocal %242 {approx = true} : vector<8x1xf32> -> vector<8x1xf32>
    %244 = vector.broadcast %243 : vector<8x1xf32> to vector<8x8xf32>
    %245 = arith.mulf %240, %244 : vector<8x8xf32>
    %cst_104 = arith.constant dense<0.000000e+00> : vector<8x8xf32>
    %246 = tpu.matmul %245, %234, %cst_104 {dimension_numbers = #tpu.dot_dimension_numbers<[1], [0], [0], [1], [0, 0, 1, 1], [], []>} : vector<8x8xf32>, vector<8x8xf32>, vector<8x8xf32> -> vector<8x8xf32>
    %247 = tpu.concatenate %201, %216, %231, %246 in 1 : vector<8x8xf32>, vector<8x8xf32>, vector<8x8xf32>, vector<8x8xf32> -> vector<8x32xf32>
    %c1_105 = arith.constant 1 : index
    %c0_106 = arith.constant 0 : index
    %c0_107 = arith.constant 0 : index
    %248 = vector.load %arg10[%c1_105, %c0_106, %c0_107] : memref<2x32x32xf32, #tpu.memory_space<vmem>>, vector<1x32x32xf32>
    %249 = vector.shape_cast %248 : vector<1x32x32xf32> to vector<32x32xf32>
    %cst_108 = arith.constant dense<0.000000e+00> : vector<8x32xf32>
    %250 = tpu.matmul %247, %249, %cst_108 {dimension_numbers = #tpu.dot_dimension_numbers<[1], [0], [0], [1], [0, 0, 1, 1], [], []>} : vector<8x32xf32>, vector<32x32xf32>, vector<8x32xf32> -> vector<8x32xf32>
    %c1_109 = arith.constant 1 : index
    %c0_110 = arith.constant 0 : index
    %c0_111 = arith.constant 0 : index
    %251 = vector.load %arg11[%c1_109, %c0_110, %c0_111] : memref<2x1x32xf32, #tpu.memory_space<vmem>>, vector<1x1x32xf32>
    %252 = vector.shape_cast %251 : vector<1x1x32xf32> to vector<1x32xf32>
    %253 = vector.broadcast %252 : vector<1x32xf32> to vector<8x32xf32>
    %254 = arith.addf %250, %253 : vector<8x32xf32>
    %255 = arith.addf %176, %254 : vector<8x32xf32>
    %c1_112 = arith.constant 1 : index
    %c0_113 = arith.constant 0 : index
    %c0_114 = arith.constant 0 : index
    %256 = vector.load %arg12[%c1_112, %c0_113, %c0_114] : memref<2x1x32xf32, #tpu.memory_space<vmem>>, vector<1x1x32xf32>
    %257 = vector.shape_cast %256 : vector<1x1x32xf32> to vector<1x32xf32>
    %c1_115 = arith.constant 1 : index
    %c0_116 = arith.constant 0 : index
    %c0_117 = arith.constant 0 : index
    %258 = vector.load %arg13[%c1_115, %c0_116, %c0_117] : memref<2x1x32xf32, #tpu.memory_space<vmem>>, vector<1x1x32xf32>
    %259 = vector.shape_cast %258 : vector<1x1x32xf32> to vector<1x32xf32>
    %cst_118 = arith.constant dense<0.000000e+00> : vector<8xf32>
    %260 = vector.multi_reduction <add>, %255, %cst_118 [1] : vector<8x32xf32> to vector<8xf32>
    %261 = vector.shape_cast %260 : vector<8xf32> to vector<8x1xf32>
    %cst_119 = arith.constant 3.200000e+01 : f32
    %262 = vector.broadcast %cst_119 : f32 to vector<8x1xf32>
    %263 = arith.divf %261, %262 : vector<8x1xf32>
    %264 = vector.broadcast %263 : vector<8x1xf32> to vector<8x32xf32>
    %265 = arith.subf %255, %264 : vector<8x32xf32>
    %266 = arith.mulf %265, %265 : vector<8x32xf32>
    %cst_120 = arith.constant dense<0.000000e+00> : vector<8xf32>
    %267 = vector.multi_reduction <add>, %266, %cst_120 [1] : vector<8x32xf32> to vector<8xf32>
    %268 = vector.shape_cast %267 : vector<8xf32> to vector<8x1xf32>
    %cst_121 = arith.constant 3.200000e+01 : f32
    %269 = vector.broadcast %cst_121 : f32 to vector<8x1xf32>
    %270 = arith.divf %268, %269 : vector<8x1xf32>
    %cst_122 = arith.constant 9.99999974E-6 : f32
    %271 = vector.broadcast %cst_122 : f32 to vector<8x1xf32>
    %272 = arith.addf %270, %271 : vector<8x1xf32>
    %273 = math.rsqrt %272 : vector<8x1xf32>
    %274 = vector.broadcast %273 : vector<8x1xf32> to vector<8x32xf32>
    %275 = arith.mulf %265, %274 : vector<8x32xf32>
    %276 = vector.broadcast %257 : vector<1x32xf32> to vector<8x32xf32>
    %277 = arith.mulf %275, %276 : vector<8x32xf32>
    %278 = vector.broadcast %259 : vector<1x32xf32> to vector<8x32xf32>
    %279 = arith.addf %277, %278 : vector<8x32xf32>
    %c1_123 = arith.constant 1 : index
    %c0_124 = arith.constant 0 : index
    %c0_125 = arith.constant 0 : index
    %280 = vector.load %arg14[%c1_123, %c0_124, %c0_125] : memref<2x32x64xf32, #tpu.memory_space<vmem>>, vector<1x32x64xf32>
    %281 = vector.shape_cast %280 : vector<1x32x64xf32> to vector<32x64xf32>
    %cst_126 = arith.constant dense<0.000000e+00> : vector<8x64xf32>
    %282 = tpu.matmul %279, %281, %cst_126 {dimension_numbers = #tpu.dot_dimension_numbers<[1], [0], [0], [1], [0, 0, 1, 1], [], []>} : vector<8x32xf32>, vector<32x64xf32>, vector<8x64xf32> -> vector<8x64xf32>
    %c1_127 = arith.constant 1 : index
    %c0_128 = arith.constant 0 : index
    %c0_129 = arith.constant 0 : index
    %283 = vector.load %arg15[%c1_127, %c0_128, %c0_129] : memref<2x1x64xf32, #tpu.memory_space<vmem>>, vector<1x1x64xf32>
    %284 = vector.shape_cast %283 : vector<1x1x64xf32> to vector<1x64xf32>
    %285 = vector.broadcast %284 : vector<1x64xf32> to vector<8x64xf32>
    %286 = arith.addf %282, %285 : vector<8x64xf32>
    %cst_130 = arith.constant 0.000000e+00 : f32
    %287 = vector.broadcast %cst_130 : f32 to vector<8x64xf32>
    %288 = arith.maximumf %286, %287 : vector<8x64xf32>
    %c1_131 = arith.constant 1 : index
    %c0_132 = arith.constant 0 : index
    %c0_133 = arith.constant 0 : index
    %289 = vector.load %arg16[%c1_131, %c0_132, %c0_133] : memref<2x64x32xf32, #tpu.memory_space<vmem>>, vector<1x64x32xf32>
    %290 = vector.shape_cast %289 : vector<1x64x32xf32> to vector<64x32xf32>
    %cst_134 = arith.constant dense<0.000000e+00> : vector<8x32xf32>
    %291 = tpu.matmul %288, %290, %cst_134 {dimension_numbers = #tpu.dot_dimension_numbers<[1], [0], [0], [1], [0, 0, 1, 1], [], []>} : vector<8x64xf32>, vector<64x32xf32>, vector<8x32xf32> -> vector<8x32xf32>
    %c1_135 = arith.constant 1 : index
    %c0_136 = arith.constant 0 : index
    %c0_137 = arith.constant 0 : index
    %292 = vector.load %arg17[%c1_135, %c0_136, %c0_137] : memref<2x1x32xf32, #tpu.memory_space<vmem>>, vector<1x1x32xf32>
    %293 = vector.shape_cast %292 : vector<1x1x32xf32> to vector<1x32xf32>
    %294 = vector.broadcast %293 : vector<1x32xf32> to vector<8x32xf32>
    %295 = arith.addf %291, %294 : vector<8x32xf32>
    %296 = arith.addf %279, %295 : vector<8x32xf32>
    %c1_138 = arith.constant 1 : index
    %c0_139 = arith.constant 0 : index
    %c0_140 = arith.constant 0 : index
    %297 = vector.load %arg18[%c1_138, %c0_139, %c0_140] : memref<2x1x32xf32, #tpu.memory_space<vmem>>, vector<1x1x32xf32>
    %298 = vector.shape_cast %297 : vector<1x1x32xf32> to vector<1x32xf32>
    %c1_141 = arith.constant 1 : index
    %c0_142 = arith.constant 0 : index
    %c0_143 = arith.constant 0 : index
    %299 = vector.load %arg19[%c1_141, %c0_142, %c0_143] : memref<2x1x32xf32, #tpu.memory_space<vmem>>, vector<1x1x32xf32>
    %300 = vector.shape_cast %299 : vector<1x1x32xf32> to vector<1x32xf32>
    %cst_144 = arith.constant dense<0.000000e+00> : vector<8xf32>
    %301 = vector.multi_reduction <add>, %296, %cst_144 [1] : vector<8x32xf32> to vector<8xf32>
    %302 = vector.shape_cast %301 : vector<8xf32> to vector<8x1xf32>
    %cst_145 = arith.constant 3.200000e+01 : f32
    %303 = vector.broadcast %cst_145 : f32 to vector<8x1xf32>
    %304 = arith.divf %302, %303 : vector<8x1xf32>
    %305 = vector.broadcast %304 : vector<8x1xf32> to vector<8x32xf32>
    %306 = arith.subf %296, %305 : vector<8x32xf32>
    %307 = arith.mulf %306, %306 : vector<8x32xf32>
    %cst_146 = arith.constant dense<0.000000e+00> : vector<8xf32>
    %308 = vector.multi_reduction <add>, %307, %cst_146 [1] : vector<8x32xf32> to vector<8xf32>
    %309 = vector.shape_cast %308 : vector<8xf32> to vector<8x1xf32>
    %cst_147 = arith.constant 3.200000e+01 : f32
    %310 = vector.broadcast %cst_147 : f32 to vector<8x1xf32>
    %311 = arith.divf %309, %310 : vector<8x1xf32>
    %cst_148 = arith.constant 9.99999974E-6 : f32
    %312 = vector.broadcast %cst_148 : f32 to vector<8x1xf32>
    %313 = arith.addf %311, %312 : vector<8x1xf32>
    %314 = math.rsqrt %313 : vector<8x1xf32>
    %315 = vector.broadcast %314 : vector<8x1xf32> to vector<8x32xf32>
    %316 = arith.mulf %306, %315 : vector<8x32xf32>
    %317 = vector.broadcast %298 : vector<1x32xf32> to vector<8x32xf32>
    %318 = arith.mulf %316, %317 : vector<8x32xf32>
    %319 = vector.broadcast %300 : vector<1x32xf32> to vector<8x32xf32>
    %320 = arith.addf %318, %319 : vector<8x32xf32>
    %c0_149 = arith.constant 0 : index
    %c0_150 = arith.constant 0 : index
    %321 = vector.load %arg20[%c0_149, %c0_150] : memref<1x32xf32, #tpu.memory_space<vmem>>, vector<1x32xf32>
    %c0_151 = arith.constant 0 : index
    %c0_152 = arith.constant 0 : index
    %322 = vector.load %arg21[%c0_151, %c0_152] : memref<1x32xf32, #tpu.memory_space<vmem>>, vector<1x32xf32>
    %cst_153 = arith.constant dense<0.000000e+00> : vector<8xf32>
    %323 = vector.multi_reduction <add>, %320, %cst_153 [1] : vector<8x32xf32> to vector<8xf32>
    %324 = vector.shape_cast %323 : vector<8xf32> to vector<8x1xf32>
    %cst_154 = arith.constant 3.200000e+01 : f32
    %325 = vector.broadcast %cst_154 : f32 to vector<8x1xf32>
    %326 = arith.divf %324, %325 : vector<8x1xf32>
    %327 = vector.broadcast %326 : vector<8x1xf32> to vector<8x32xf32>
    %328 = arith.subf %320, %327 : vector<8x32xf32>
    %329 = arith.mulf %328, %328 : vector<8x32xf32>
    %cst_155 = arith.constant dense<0.000000e+00> : vector<8xf32>
    %330 = vector.multi_reduction <add>, %329, %cst_155 [1] : vector<8x32xf32> to vector<8xf32>
    %331 = vector.shape_cast %330 : vector<8xf32> to vector<8x1xf32>
    %cst_156 = arith.constant 3.200000e+01 : f32
    %332 = vector.broadcast %cst_156 : f32 to vector<8x1xf32>
    %333 = arith.divf %331, %332 : vector<8x1xf32>
    %cst_157 = arith.constant 9.99999974E-6 : f32
    %334 = vector.broadcast %cst_157 : f32 to vector<8x1xf32>
    %335 = arith.addf %333, %334 : vector<8x1xf32>
    %336 = math.rsqrt %335 : vector<8x1xf32>
    %337 = vector.broadcast %336 : vector<8x1xf32> to vector<8x32xf32>
    %338 = arith.mulf %328, %337 : vector<8x32xf32>
    %339 = vector.broadcast %321 : vector<1x32xf32> to vector<8x32xf32>
    %340 = arith.mulf %338, %339 : vector<8x32xf32>
    %341 = vector.broadcast %322 : vector<1x32xf32> to vector<8x32xf32>
    %342 = arith.addf %340, %341 : vector<8x32xf32>
    %c0_158 = arith.constant 0 : index
    %c0_159 = arith.constant 0 : index
    %c0_160 = arith.constant 0 : index
    %343 = vector.load %arg22[%c0_158, %c0_159, %c0_160] : memref<2x32x96xf32, #tpu.memory_space<vmem>>, vector<1x32x96xf32>
    %344 = vector.shape_cast %343 : vector<1x32x96xf32> to vector<32x96xf32>
    %cst_161 = arith.constant dense<0.000000e+00> : vector<8x96xf32>
    %345 = tpu.matmul %32, %344, %cst_161 {dimension_numbers = #tpu.dot_dimension_numbers<[1], [0], [0], [1], [0, 0, 1, 1], [], []>} : vector<8x32xf32>, vector<32x96xf32>, vector<8x96xf32> -> vector<8x96xf32>
    %c0_162 = arith.constant 0 : index
    %c0_163 = arith.constant 0 : index
    %c0_164 = arith.constant 0 : index
    %346 = vector.load %arg23[%c0_162, %c0_163, %c0_164] : memref<2x1x96xf32, #tpu.memory_space<vmem>>, vector<1x1x96xf32>
    %347 = vector.shape_cast %346 : vector<1x1x96xf32> to vector<1x96xf32>
    %348 = vector.broadcast %347 : vector<1x96xf32> to vector<8x96xf32>
    %349 = arith.addf %345, %348 : vector<8x96xf32>
    %350 = vector.extract_strided_slice %349 {offsets = [0, 0], sizes = [8, 32], strides = [1, 1]} : vector<8x96xf32> to vector<8x32xf32>
    %351 = vector.extract_strided_slice %349 {offsets = [0, 32], sizes = [8, 32], strides = [1, 1]} : vector<8x96xf32> to vector<8x32xf32>
    %352 = vector.extract_strided_slice %349 {offsets = [0, 64], sizes = [8, 32], strides = [1, 1]} : vector<8x96xf32> to vector<8x32xf32>
    %353 = vector.extract_strided_slice %350 {offsets = [0, 0], sizes = [8, 8], strides = [1, 1]} : vector<8x32xf32> to vector<8x8xf32>
    %354 = vector.extract_strided_slice %351 {offsets = [0, 0], sizes = [8, 8], strides = [1, 1]} : vector<8x32xf32> to vector<8x8xf32>
    %355 = vector.extract_strided_slice %352 {offsets = [0, 0], sizes = [8, 8], strides = [1, 1]} : vector<8x32xf32> to vector<8x8xf32>
    %cst_165 = arith.constant dense<0.000000e+00> : vector<8x8xf32>
    %356 = tpu.matmul %353, %354, %cst_165 {dimension_numbers = #tpu.dot_dimension_numbers<[1], [1], [0], [0], [0, 0, 1, 0], [], []>} : vector<8x8xf32>, vector<8x8xf32>, vector<8x8xf32> -> vector<8x8xf32>
    %cst_166 = arith.constant dense<0xFF800000> : vector<8xf32>
    %357 = vector.multi_reduction <maximumf>, %356, %cst_166 [1] : vector<8x8xf32> to vector<8xf32>
    %358 = vector.shape_cast %357 : vector<8xf32> to vector<8x1xf32>
    %359 = vector.broadcast %358 : vector<8x1xf32> to vector<8x8xf32>
    %360 = arith.subf %356, %359 : vector<8x8xf32>
    %361 = math.exp %360 : vector<8x8xf32>
    %cst_167 = arith.constant dense<0.000000e+00> : vector<8xf32>
    %362 = vector.multi_reduction <add>, %361, %cst_167 [1] : vector<8x8xf32> to vector<8xf32>
    %363 = vector.shape_cast %362 : vector<8xf32> to vector<8x1xf32>
    %364 = tpu.reciprocal %363 {approx = true} : vector<8x1xf32> -> vector<8x1xf32>
    %365 = vector.broadcast %364 : vector<8x1xf32> to vector<8x8xf32>
    %366 = arith.mulf %361, %365 : vector<8x8xf32>
    %cst_168 = arith.constant dense<0.000000e+00> : vector<8x8xf32>
    %367 = tpu.matmul %366, %355, %cst_168 {dimension_numbers = #tpu.dot_dimension_numbers<[1], [0], [0], [1], [0, 0, 1, 1], [], []>} : vector<8x8xf32>, vector<8x8xf32>, vector<8x8xf32> -> vector<8x8xf32>
    %368 = vector.extract_strided_slice %350 {offsets = [0, 8], sizes = [8, 8], strides = [1, 1]} : vector<8x32xf32> to vector<8x8xf32>
    %369 = vector.extract_strided_slice %351 {offsets = [0, 8], sizes = [8, 8], strides = [1, 1]} : vector<8x32xf32> to vector<8x8xf32>
    %370 = vector.extract_strided_slice %352 {offsets = [0, 8], sizes = [8, 8], strides = [1, 1]} : vector<8x32xf32> to vector<8x8xf32>
    %cst_169 = arith.constant dense<0.000000e+00> : vector<8x8xf32>
    %371 = tpu.matmul %368, %369, %cst_169 {dimension_numbers = #tpu.dot_dimension_numbers<[1], [1], [0], [0], [0, 0, 1, 0], [], []>} : vector<8x8xf32>, vector<8x8xf32>, vector<8x8xf32> -> vector<8x8xf32>
    %cst_170 = arith.constant dense<0xFF800000> : vector<8xf32>
    %372 = vector.multi_reduction <maximumf>, %371, %cst_170 [1] : vector<8x8xf32> to vector<8xf32>
    %373 = vector.shape_cast %372 : vector<8xf32> to vector<8x1xf32>
    %374 = vector.broadcast %373 : vector<8x1xf32> to vector<8x8xf32>
    %375 = arith.subf %371, %374 : vector<8x8xf32>
    %376 = math.exp %375 : vector<8x8xf32>
    %cst_171 = arith.constant dense<0.000000e+00> : vector<8xf32>
    %377 = vector.multi_reduction <add>, %376, %cst_171 [1] : vector<8x8xf32> to vector<8xf32>
    %378 = vector.shape_cast %377 : vector<8xf32> to vector<8x1xf32>
    %379 = tpu.reciprocal %378 {approx = true} : vector<8x1xf32> -> vector<8x1xf32>
    %380 = vector.broadcast %379 : vector<8x1xf32> to vector<8x8xf32>
    %381 = arith.mulf %376, %380 : vector<8x8xf32>
    %cst_172 = arith.constant dense<0.000000e+00> : vector<8x8xf32>
    %382 = tpu.matmul %381, %370, %cst_172 {dimension_numbers = #tpu.dot_dimension_numbers<[1], [0], [0], [1], [0, 0, 1, 1], [], []>} : vector<8x8xf32>, vector<8x8xf32>, vector<8x8xf32> -> vector<8x8xf32>
    %383 = vector.extract_strided_slice %350 {offsets = [0, 16], sizes = [8, 8], strides = [1, 1]} : vector<8x32xf32> to vector<8x8xf32>
    %384 = vector.extract_strided_slice %351 {offsets = [0, 16], sizes = [8, 8], strides = [1, 1]} : vector<8x32xf32> to vector<8x8xf32>
    %385 = vector.extract_strided_slice %352 {offsets = [0, 16], sizes = [8, 8], strides = [1, 1]} : vector<8x32xf32> to vector<8x8xf32>
    %cst_173 = arith.constant dense<0.000000e+00> : vector<8x8xf32>
    %386 = tpu.matmul %383, %384, %cst_173 {dimension_numbers = #tpu.dot_dimension_numbers<[1], [1], [0], [0], [0, 0, 1, 0], [], []>} : vector<8x8xf32>, vector<8x8xf32>, vector<8x8xf32> -> vector<8x8xf32>
    %cst_174 = arith.constant dense<0xFF800000> : vector<8xf32>
    %387 = vector.multi_reduction <maximumf>, %386, %cst_174 [1] : vector<8x8xf32> to vector<8xf32>
    %388 = vector.shape_cast %387 : vector<8xf32> to vector<8x1xf32>
    %389 = vector.broadcast %388 : vector<8x1xf32> to vector<8x8xf32>
    %390 = arith.subf %386, %389 : vector<8x8xf32>
    %391 = math.exp %390 : vector<8x8xf32>
    %cst_175 = arith.constant dense<0.000000e+00> : vector<8xf32>
    %392 = vector.multi_reduction <add>, %391, %cst_175 [1] : vector<8x8xf32> to vector<8xf32>
    %393 = vector.shape_cast %392 : vector<8xf32> to vector<8x1xf32>
    %394 = tpu.reciprocal %393 {approx = true} : vector<8x1xf32> -> vector<8x1xf32>
    %395 = vector.broadcast %394 : vector<8x1xf32> to vector<8x8xf32>
    %396 = arith.mulf %391, %395 : vector<8x8xf32>
    %cst_176 = arith.constant dense<0.000000e+00> : vector<8x8xf32>
    %397 = tpu.matmul %396, %385, %cst_176 {dimension_numbers = #tpu.dot_dimension_numbers<[1], [0], [0], [1], [0, 0, 1, 1], [], []>} : vector<8x8xf32>, vector<8x8xf32>, vector<8x8xf32> -> vector<8x8xf32>
    %398 = vector.extract_strided_slice %350 {offsets = [0, 24], sizes = [8, 8], strides = [1, 1]} : vector<8x32xf32> to vector<8x8xf32>
    %399 = vector.extract_strided_slice %351 {offsets = [0, 24], sizes = [8, 8], strides = [1, 1]} : vector<8x32xf32> to vector<8x8xf32>
    %400 = vector.extract_strided_slice %352 {offsets = [0, 24], sizes = [8, 8], strides = [1, 1]} : vector<8x32xf32> to vector<8x8xf32>
    %cst_177 = arith.constant dense<0.000000e+00> : vector<8x8xf32>
    %401 = tpu.matmul %398, %399, %cst_177 {dimension_numbers = #tpu.dot_dimension_numbers<[1], [1], [0], [0], [0, 0, 1, 0], [], []>} : vector<8x8xf32>, vector<8x8xf32>, vector<8x8xf32> -> vector<8x8xf32>
    %cst_178 = arith.constant dense<0xFF800000> : vector<8xf32>
    %402 = vector.multi_reduction <maximumf>, %401, %cst_178 [1] : vector<8x8xf32> to vector<8xf32>
    %403 = vector.shape_cast %402 : vector<8xf32> to vector<8x1xf32>
    %404 = vector.broadcast %403 : vector<8x1xf32> to vector<8x8xf32>
    %405 = arith.subf %401, %404 : vector<8x8xf32>
    %406 = math.exp %405 : vector<8x8xf32>
    %cst_179 = arith.constant dense<0.000000e+00> : vector<8xf32>
    %407 = vector.multi_reduction <add>, %406, %cst_179 [1] : vector<8x8xf32> to vector<8xf32>
    %408 = vector.shape_cast %407 : vector<8xf32> to vector<8x1xf32>
    %409 = tpu.reciprocal %408 {approx = true} : vector<8x1xf32> -> vector<8x1xf32>
    %410 = vector.broadcast %409 : vector<8x1xf32> to vector<8x8xf32>
    %411 = arith.mulf %406, %410 : vector<8x8xf32>
    %cst_180 = arith.constant dense<0.000000e+00> : vector<8x8xf32>
    %412 = tpu.matmul %411, %400, %cst_180 {dimension_numbers = #tpu.dot_dimension_numbers<[1], [0], [0], [1], [0, 0, 1, 1], [], []>} : vector<8x8xf32>, vector<8x8xf32>, vector<8x8xf32> -> vector<8x8xf32>
    %413 = tpu.concatenate %367, %382, %397, %412 in 1 : vector<8x8xf32>, vector<8x8xf32>, vector<8x8xf32>, vector<8x8xf32> -> vector<8x32xf32>
    %c0_181 = arith.constant 0 : index
    %c0_182 = arith.constant 0 : index
    %c0_183 = arith.constant 0 : index
    %414 = vector.load %arg24[%c0_181, %c0_182, %c0_183] : memref<2x32x32xf32, #tpu.memory_space<vmem>>, vector<1x32x32xf32>
    %415 = vector.shape_cast %414 : vector<1x32x32xf32> to vector<32x32xf32>
    %cst_184 = arith.constant dense<0.000000e+00> : vector<8x32xf32>
    %416 = tpu.matmul %413, %415, %cst_184 {dimension_numbers = #tpu.dot_dimension_numbers<[1], [0], [0], [1], [0, 0, 1, 1], [], []>} : vector<8x32xf32>, vector<32x32xf32>, vector<8x32xf32> -> vector<8x32xf32>
    %c0_185 = arith.constant 0 : index
    %c0_186 = arith.constant 0 : index
    %c0_187 = arith.constant 0 : index
    %417 = vector.load %arg25[%c0_185, %c0_186, %c0_187] : memref<2x1x32xf32, #tpu.memory_space<vmem>>, vector<1x1x32xf32>
    %418 = vector.shape_cast %417 : vector<1x1x32xf32> to vector<1x32xf32>
    %419 = vector.broadcast %418 : vector<1x32xf32> to vector<8x32xf32>
    %420 = arith.addf %416, %419 : vector<8x32xf32>
    %421 = arith.addf %32, %420 : vector<8x32xf32>
    %c0_188 = arith.constant 0 : index
    %c0_189 = arith.constant 0 : index
    %c0_190 = arith.constant 0 : index
    %422 = vector.load %arg26[%c0_188, %c0_189, %c0_190] : memref<2x1x32xf32, #tpu.memory_space<vmem>>, vector<1x1x32xf32>
    %423 = vector.shape_cast %422 : vector<1x1x32xf32> to vector<1x32xf32>
    %c0_191 = arith.constant 0 : index
    %c0_192 = arith.constant 0 : index
    %c0_193 = arith.constant 0 : index
    %424 = vector.load %arg27[%c0_191, %c0_192, %c0_193] : memref<2x1x32xf32, #tpu.memory_space<vmem>>, vector<1x1x32xf32>
    %425 = vector.shape_cast %424 : vector<1x1x32xf32> to vector<1x32xf32>
    %cst_194 = arith.constant dense<0.000000e+00> : vector<8xf32>
    %426 = vector.multi_reduction <add>, %421, %cst_194 [1] : vector<8x32xf32> to vector<8xf32>
    %427 = vector.shape_cast %426 : vector<8xf32> to vector<8x1xf32>
    %cst_195 = arith.constant 3.200000e+01 : f32
    %428 = vector.broadcast %cst_195 : f32 to vector<8x1xf32>
    %429 = arith.divf %427, %428 : vector<8x1xf32>
    %430 = vector.broadcast %429 : vector<8x1xf32> to vector<8x32xf32>
    %431 = arith.subf %421, %430 : vector<8x32xf32>
    %432 = arith.mulf %431, %431 : vector<8x32xf32>
    %cst_196 = arith.constant dense<0.000000e+00> : vector<8xf32>
    %433 = vector.multi_reduction <add>, %432, %cst_196 [1] : vector<8x32xf32> to vector<8xf32>
    %434 = vector.shape_cast %433 : vector<8xf32> to vector<8x1xf32>
    %cst_197 = arith.constant 3.200000e+01 : f32
    %435 = vector.broadcast %cst_197 : f32 to vector<8x1xf32>
    %436 = arith.divf %434, %435 : vector<8x1xf32>
    %cst_198 = arith.constant 9.99999974E-6 : f32
    %437 = vector.broadcast %cst_198 : f32 to vector<8x1xf32>
    %438 = arith.addf %436, %437 : vector<8x1xf32>
    %439 = math.rsqrt %438 : vector<8x1xf32>
    %440 = vector.broadcast %439 : vector<8x1xf32> to vector<8x32xf32>
    %441 = arith.mulf %431, %440 : vector<8x32xf32>
    %442 = vector.broadcast %423 : vector<1x32xf32> to vector<8x32xf32>
    %443 = arith.mulf %441, %442 : vector<8x32xf32>
    %444 = vector.broadcast %425 : vector<1x32xf32> to vector<8x32xf32>
    %445 = arith.addf %443, %444 : vector<8x32xf32>
    %c0_199 = arith.constant 0 : index
    %c0_200 = arith.constant 0 : index
    %c0_201 = arith.constant 0 : index
    %446 = vector.load %arg28[%c0_199, %c0_200, %c0_201] : memref<2x32x32xf32, #tpu.memory_space<vmem>>, vector<1x32x32xf32>
    %447 = vector.shape_cast %446 : vector<1x32x32xf32> to vector<32x32xf32>
    %cst_202 = arith.constant dense<0.000000e+00> : vector<8x32xf32>
    %448 = tpu.matmul %445, %447, %cst_202 {dimension_numbers = #tpu.dot_dimension_numbers<[1], [0], [0], [1], [0, 0, 1, 1], [], []>} : vector<8x32xf32>, vector<32x32xf32>, vector<8x32xf32> -> vector<8x32xf32>
    %c0_203 = arith.constant 0 : index
    %c0_204 = arith.constant 0 : index
    %c0_205 = arith.constant 0 : index
    %449 = vector.load %arg29[%c0_203, %c0_204, %c0_205] : memref<2x1x32xf32, #tpu.memory_space<vmem>>, vector<1x1x32xf32>
    %450 = vector.shape_cast %449 : vector<1x1x32xf32> to vector<1x32xf32>
    %451 = vector.broadcast %450 : vector<1x32xf32> to vector<8x32xf32>
    %452 = arith.addf %448, %451 : vector<8x32xf32>
    %c0_206 = arith.constant 0 : index
    %c0_207 = arith.constant 0 : index
    %c0_208 = arith.constant 0 : index
    %453 = vector.load %arg30[%c0_206, %c0_207, %c0_208] : memref<2x32x64xf32, #tpu.memory_space<vmem>>, vector<1x32x64xf32>
    %454 = vector.shape_cast %453 : vector<1x32x64xf32> to vector<32x64xf32>
    %cst_209 = arith.constant dense<0.000000e+00> : vector<8x64xf32>
    %455 = tpu.matmul %342, %454, %cst_209 {dimension_numbers = #tpu.dot_dimension_numbers<[1], [0], [0], [1], [0, 0, 1, 1], [], []>} : vector<8x32xf32>, vector<32x64xf32>, vector<8x64xf32> -> vector<8x64xf32>
    %c0_210 = arith.constant 0 : index
    %c0_211 = arith.constant 0 : index
    %c0_212 = arith.constant 0 : index
    %456 = vector.load %arg31[%c0_210, %c0_211, %c0_212] : memref<2x1x64xf32, #tpu.memory_space<vmem>>, vector<1x1x64xf32>
    %457 = vector.shape_cast %456 : vector<1x1x64xf32> to vector<1x64xf32>
    %458 = vector.broadcast %457 : vector<1x64xf32> to vector<8x64xf32>
    %459 = arith.addf %455, %458 : vector<8x64xf32>
    %460 = vector.extract_strided_slice %459 {offsets = [0, 0], sizes = [8, 32], strides = [1, 1]} : vector<8x64xf32> to vector<8x32xf32>
    %461 = vector.extract_strided_slice %459 {offsets = [0, 32], sizes = [8, 32], strides = [1, 1]} : vector<8x64xf32> to vector<8x32xf32>
    %462 = vector.extract_strided_slice %452 {offsets = [0, 0], sizes = [8, 8], strides = [1, 1]} : vector<8x32xf32> to vector<8x8xf32>
    %463 = vector.extract_strided_slice %460 {offsets = [0, 0], sizes = [8, 8], strides = [1, 1]} : vector<8x32xf32> to vector<8x8xf32>
    %464 = vector.extract_strided_slice %461 {offsets = [0, 0], sizes = [8, 8], strides = [1, 1]} : vector<8x32xf32> to vector<8x8xf32>
    %cst_213 = arith.constant dense<0.000000e+00> : vector<8x8xf32>
    %465 = tpu.matmul %462, %463, %cst_213 {dimension_numbers = #tpu.dot_dimension_numbers<[1], [1], [0], [0], [0, 0, 1, 0], [], []>} : vector<8x8xf32>, vector<8x8xf32>, vector<8x8xf32> -> vector<8x8xf32>
    %cst_214 = arith.constant dense<0xFF800000> : vector<8xf32>
    %466 = vector.multi_reduction <maximumf>, %465, %cst_214 [1] : vector<8x8xf32> to vector<8xf32>
    %467 = vector.shape_cast %466 : vector<8xf32> to vector<8x1xf32>
    %468 = vector.broadcast %467 : vector<8x1xf32> to vector<8x8xf32>
    %469 = arith.subf %465, %468 : vector<8x8xf32>
    %470 = math.exp %469 : vector<8x8xf32>
    %cst_215 = arith.constant dense<0.000000e+00> : vector<8xf32>
    %471 = vector.multi_reduction <add>, %470, %cst_215 [1] : vector<8x8xf32> to vector<8xf32>
    %472 = vector.shape_cast %471 : vector<8xf32> to vector<8x1xf32>
    %473 = tpu.reciprocal %472 {approx = true} : vector<8x1xf32> -> vector<8x1xf32>
    %474 = vector.broadcast %473 : vector<8x1xf32> to vector<8x8xf32>
    %475 = arith.mulf %470, %474 : vector<8x8xf32>
    %cst_216 = arith.constant dense<0.000000e+00> : vector<8x8xf32>
    %476 = tpu.matmul %475, %464, %cst_216 {dimension_numbers = #tpu.dot_dimension_numbers<[1], [0], [0], [1], [0, 0, 1, 1], [], []>} : vector<8x8xf32>, vector<8x8xf32>, vector<8x8xf32> -> vector<8x8xf32>
    %477 = vector.extract_strided_slice %452 {offsets = [0, 8], sizes = [8, 8], strides = [1, 1]} : vector<8x32xf32> to vector<8x8xf32>
    %478 = vector.extract_strided_slice %460 {offsets = [0, 8], sizes = [8, 8], strides = [1, 1]} : vector<8x32xf32> to vector<8x8xf32>
    %479 = vector.extract_strided_slice %461 {offsets = [0, 8], sizes = [8, 8], strides = [1, 1]} : vector<8x32xf32> to vector<8x8xf32>
    %cst_217 = arith.constant dense<0.000000e+00> : vector<8x8xf32>
    %480 = tpu.matmul %477, %478, %cst_217 {dimension_numbers = #tpu.dot_dimension_numbers<[1], [1], [0], [0], [0, 0, 1, 0], [], []>} : vector<8x8xf32>, vector<8x8xf32>, vector<8x8xf32> -> vector<8x8xf32>
    %cst_218 = arith.constant dense<0xFF800000> : vector<8xf32>
    %481 = vector.multi_reduction <maximumf>, %480, %cst_218 [1] : vector<8x8xf32> to vector<8xf32>
    %482 = vector.shape_cast %481 : vector<8xf32> to vector<8x1xf32>
    %483 = vector.broadcast %482 : vector<8x1xf32> to vector<8x8xf32>
    %484 = arith.subf %480, %483 : vector<8x8xf32>
    %485 = math.exp %484 : vector<8x8xf32>
    %cst_219 = arith.constant dense<0.000000e+00> : vector<8xf32>
    %486 = vector.multi_reduction <add>, %485, %cst_219 [1] : vector<8x8xf32> to vector<8xf32>
    %487 = vector.shape_cast %486 : vector<8xf32> to vector<8x1xf32>
    %488 = tpu.reciprocal %487 {approx = true} : vector<8x1xf32> -> vector<8x1xf32>
    %489 = vector.broadcast %488 : vector<8x1xf32> to vector<8x8xf32>
    %490 = arith.mulf %485, %489 : vector<8x8xf32>
    %cst_220 = arith.constant dense<0.000000e+00> : vector<8x8xf32>
    %491 = tpu.matmul %490, %479, %cst_220 {dimension_numbers = #tpu.dot_dimension_numbers<[1], [0], [0], [1], [0, 0, 1, 1], [], []>} : vector<8x8xf32>, vector<8x8xf32>, vector<8x8xf32> -> vector<8x8xf32>
    %492 = vector.extract_strided_slice %452 {offsets = [0, 16], sizes = [8, 8], strides = [1, 1]} : vector<8x32xf32> to vector<8x8xf32>
    %493 = vector.extract_strided_slice %460 {offsets = [0, 16], sizes = [8, 8], strides = [1, 1]} : vector<8x32xf32> to vector<8x8xf32>
    %494 = vector.extract_strided_slice %461 {offsets = [0, 16], sizes = [8, 8], strides = [1, 1]} : vector<8x32xf32> to vector<8x8xf32>
    %cst_221 = arith.constant dense<0.000000e+00> : vector<8x8xf32>
    %495 = tpu.matmul %492, %493, %cst_221 {dimension_numbers = #tpu.dot_dimension_numbers<[1], [1], [0], [0], [0, 0, 1, 0], [], []>} : vector<8x8xf32>, vector<8x8xf32>, vector<8x8xf32> -> vector<8x8xf32>
    %cst_222 = arith.constant dense<0xFF800000> : vector<8xf32>
    %496 = vector.multi_reduction <maximumf>, %495, %cst_222 [1] : vector<8x8xf32> to vector<8xf32>
    %497 = vector.shape_cast %496 : vector<8xf32> to vector<8x1xf32>
    %498 = vector.broadcast %497 : vector<8x1xf32> to vector<8x8xf32>
    %499 = arith.subf %495, %498 : vector<8x8xf32>
    %500 = math.exp %499 : vector<8x8xf32>
    %cst_223 = arith.constant dense<0.000000e+00> : vector<8xf32>
    %501 = vector.multi_reduction <add>, %500, %cst_223 [1] : vector<8x8xf32> to vector<8xf32>
    %502 = vector.shape_cast %501 : vector<8xf32> to vector<8x1xf32>
    %503 = tpu.reciprocal %502 {approx = true} : vector<8x1xf32> -> vector<8x1xf32>
    %504 = vector.broadcast %503 : vector<8x1xf32> to vector<8x8xf32>
    %505 = arith.mulf %500, %504 : vector<8x8xf32>
    %cst_224 = arith.constant dense<0.000000e+00> : vector<8x8xf32>
    %506 = tpu.matmul %505, %494, %cst_224 {dimension_numbers = #tpu.dot_dimension_numbers<[1], [0], [0], [1], [0, 0, 1, 1], [], []>} : vector<8x8xf32>, vector<8x8xf32>, vector<8x8xf32> -> vector<8x8xf32>
    %507 = vector.extract_strided_slice %452 {offsets = [0, 24], sizes = [8, 8], strides = [1, 1]} : vector<8x32xf32> to vector<8x8xf32>
    %508 = vector.extract_strided_slice %460 {offsets = [0, 24], sizes = [8, 8], strides = [1, 1]} : vector<8x32xf32> to vector<8x8xf32>
    %509 = vector.extract_strided_slice %461 {offsets = [0, 24], sizes = [8, 8], strides = [1, 1]} : vector<8x32xf32> to vector<8x8xf32>
    %cst_225 = arith.constant dense<0.000000e+00> : vector<8x8xf32>
    %510 = tpu.matmul %507, %508, %cst_225 {dimension_numbers = #tpu.dot_dimension_numbers<[1], [1], [0], [0], [0, 0, 1, 0], [], []>} : vector<8x8xf32>, vector<8x8xf32>, vector<8x8xf32> -> vector<8x8xf32>
    %cst_226 = arith.constant dense<0xFF800000> : vector<8xf32>
    %511 = vector.multi_reduction <maximumf>, %510, %cst_226 [1] : vector<8x8xf32> to vector<8xf32>
    %512 = vector.shape_cast %511 : vector<8xf32> to vector<8x1xf32>
    %513 = vector.broadcast %512 : vector<8x1xf32> to vector<8x8xf32>
    %514 = arith.subf %510, %513 : vector<8x8xf32>
    %515 = math.exp %514 : vector<8x8xf32>
    %cst_227 = arith.constant dense<0.000000e+00> : vector<8xf32>
    %516 = vector.multi_reduction <add>, %515, %cst_227 [1] : vector<8x8xf32> to vector<8xf32>
    %517 = vector.shape_cast %516 : vector<8xf32> to vector<8x1xf32>
    %518 = tpu.reciprocal %517 {approx = true} : vector<8x1xf32> -> vector<8x1xf32>
    %519 = vector.broadcast %518 : vector<8x1xf32> to vector<8x8xf32>
    %520 = arith.mulf %515, %519 : vector<8x8xf32>
    %cst_228 = arith.constant dense<0.000000e+00> : vector<8x8xf32>
    %521 = tpu.matmul %520, %509, %cst_228 {dimension_numbers = #tpu.dot_dimension_numbers<[1], [0], [0], [1], [0, 0, 1, 1], [], []>} : vector<8x8xf32>, vector<8x8xf32>, vector<8x8xf32> -> vector<8x8xf32>
    %522 = tpu.concatenate %476, %491, %506, %521 in 1 : vector<8x8xf32>, vector<8x8xf32>, vector<8x8xf32>, vector<8x8xf32> -> vector<8x32xf32>
    %c0_229 = arith.constant 0 : index
    %c0_230 = arith.constant 0 : index
    %c0_231 = arith.constant 0 : index
    %523 = vector.load %arg32[%c0_229, %c0_230, %c0_231] : memref<2x32x32xf32, #tpu.memory_space<vmem>>, vector<1x32x32xf32>
    %524 = vector.shape_cast %523 : vector<1x32x32xf32> to vector<32x32xf32>
    %cst_232 = arith.constant dense<0.000000e+00> : vector<8x32xf32>
    %525 = tpu.matmul %522, %524, %cst_232 {dimension_numbers = #tpu.dot_dimension_numbers<[1], [0], [0], [1], [0, 0, 1, 1], [], []>} : vector<8x32xf32>, vector<32x32xf32>, vector<8x32xf32> -> vector<8x32xf32>
    %c0_233 = arith.constant 0 : index
    %c0_234 = arith.constant 0 : index
    %c0_235 = arith.constant 0 : index
    %526 = vector.load %arg33[%c0_233, %c0_234, %c0_235] : memref<2x1x32xf32, #tpu.memory_space<vmem>>, vector<1x1x32xf32>
    %527 = vector.shape_cast %526 : vector<1x1x32xf32> to vector<1x32xf32>
    %528 = vector.broadcast %527 : vector<1x32xf32> to vector<8x32xf32>
    %529 = arith.addf %525, %528 : vector<8x32xf32>
    %530 = arith.addf %445, %529 : vector<8x32xf32>
    %c0_236 = arith.constant 0 : index
    %c0_237 = arith.constant 0 : index
    %c0_238 = arith.constant 0 : index
    %531 = vector.load %arg34[%c0_236, %c0_237, %c0_238] : memref<2x1x32xf32, #tpu.memory_space<vmem>>, vector<1x1x32xf32>
    %532 = vector.shape_cast %531 : vector<1x1x32xf32> to vector<1x32xf32>
    %c0_239 = arith.constant 0 : index
    %c0_240 = arith.constant 0 : index
    %c0_241 = arith.constant 0 : index
    %533 = vector.load %arg35[%c0_239, %c0_240, %c0_241] : memref<2x1x32xf32, #tpu.memory_space<vmem>>, vector<1x1x32xf32>
    %534 = vector.shape_cast %533 : vector<1x1x32xf32> to vector<1x32xf32>
    %cst_242 = arith.constant dense<0.000000e+00> : vector<8xf32>
    %535 = vector.multi_reduction <add>, %530, %cst_242 [1] : vector<8x32xf32> to vector<8xf32>
    %536 = vector.shape_cast %535 : vector<8xf32> to vector<8x1xf32>
    %cst_243 = arith.constant 3.200000e+01 : f32
    %537 = vector.broadcast %cst_243 : f32 to vector<8x1xf32>
    %538 = arith.divf %536, %537 : vector<8x1xf32>
    %539 = vector.broadcast %538 : vector<8x1xf32> to vector<8x32xf32>
    %540 = arith.subf %530, %539 : vector<8x32xf32>
    %541 = arith.mulf %540, %540 : vector<8x32xf32>
    %cst_244 = arith.constant dense<0.000000e+00> : vector<8xf32>
    %542 = vector.multi_reduction <add>, %541, %cst_244 [1] : vector<8x32xf32> to vector<8xf32>
    %543 = vector.shape_cast %542 : vector<8xf32> to vector<8x1xf32>
    %cst_245 = arith.constant 3.200000e+01 : f32
    %544 = vector.broadcast %cst_245 : f32 to vector<8x1xf32>
    %545 = arith.divf %543, %544 : vector<8x1xf32>
    %cst_246 = arith.constant 9.99999974E-6 : f32
    %546 = vector.broadcast %cst_246 : f32 to vector<8x1xf32>
    %547 = arith.addf %545, %546 : vector<8x1xf32>
    %548 = math.rsqrt %547 : vector<8x1xf32>
    %549 = vector.broadcast %548 : vector<8x1xf32> to vector<8x32xf32>
    %550 = arith.mulf %540, %549 : vector<8x32xf32>
    %551 = vector.broadcast %532 : vector<1x32xf32> to vector<8x32xf32>
    %552 = arith.mulf %550, %551 : vector<8x32xf32>
    %553 = vector.broadcast %534 : vector<1x32xf32> to vector<8x32xf32>
    %554 = arith.addf %552, %553 : vector<8x32xf32>
    %c0_247 = arith.constant 0 : index
    %c0_248 = arith.constant 0 : index
    %c0_249 = arith.constant 0 : index
    %555 = vector.load %arg36[%c0_247, %c0_248, %c0_249] : memref<2x32x64xf32, #tpu.memory_space<vmem>>, vector<1x32x64xf32>
    %556 = vector.shape_cast %555 : vector<1x32x64xf32> to vector<32x64xf32>
    %cst_250 = arith.constant dense<0.000000e+00> : vector<8x64xf32>
    %557 = tpu.matmul %554, %556, %cst_250 {dimension_numbers = #tpu.dot_dimension_numbers<[1], [0], [0], [1], [0, 0, 1, 1], [], []>} : vector<8x32xf32>, vector<32x64xf32>, vector<8x64xf32> -> vector<8x64xf32>
    %c0_251 = arith.constant 0 : index
    %c0_252 = arith.constant 0 : index
    %c0_253 = arith.constant 0 : index
    %558 = vector.load %arg37[%c0_251, %c0_252, %c0_253] : memref<2x1x64xf32, #tpu.memory_space<vmem>>, vector<1x1x64xf32>
    %559 = vector.shape_cast %558 : vector<1x1x64xf32> to vector<1x64xf32>
    %560 = vector.broadcast %559 : vector<1x64xf32> to vector<8x64xf32>
    %561 = arith.addf %557, %560 : vector<8x64xf32>
    %cst_254 = arith.constant 0.000000e+00 : f32
    %562 = vector.broadcast %cst_254 : f32 to vector<8x64xf32>
    %563 = arith.maximumf %561, %562 : vector<8x64xf32>
    %c0_255 = arith.constant 0 : index
    %c0_256 = arith.constant 0 : index
    %c0_257 = arith.constant 0 : index
    %564 = vector.load %arg38[%c0_255, %c0_256, %c0_257] : memref<2x64x32xf32, #tpu.memory_space<vmem>>, vector<1x64x32xf32>
    %565 = vector.shape_cast %564 : vector<1x64x32xf32> to vector<64x32xf32>
    %cst_258 = arith.constant dense<0.000000e+00> : vector<8x32xf32>
    %566 = tpu.matmul %563, %565, %cst_258 {dimension_numbers = #tpu.dot_dimension_numbers<[1], [0], [0], [1], [0, 0, 1, 1], [], []>} : vector<8x64xf32>, vector<64x32xf32>, vector<8x32xf32> -> vector<8x32xf32>
    %c0_259 = arith.constant 0 : index
    %c0_260 = arith.constant 0 : index
    %c0_261 = arith.constant 0 : index
    %567 = vector.load %arg39[%c0_259, %c0_260, %c0_261] : memref<2x1x32xf32, #tpu.memory_space<vmem>>, vector<1x1x32xf32>
    %568 = vector.shape_cast %567 : vector<1x1x32xf32> to vector<1x32xf32>
    %569 = vector.broadcast %568 : vector<1x32xf32> to vector<8x32xf32>
    %570 = arith.addf %566, %569 : vector<8x32xf32>
    %571 = arith.addf %554, %570 : vector<8x32xf32>
    %c0_262 = arith.constant 0 : index
    %c0_263 = arith.constant 0 : index
    %c0_264 = arith.constant 0 : index
    %572 = vector.load %arg40[%c0_262, %c0_263, %c0_264] : memref<2x1x32xf32, #tpu.memory_space<vmem>>, vector<1x1x32xf32>
    %573 = vector.shape_cast %572 : vector<1x1x32xf32> to vector<1x32xf32>
    %c0_265 = arith.constant 0 : index
    %c0_266 = arith.constant 0 : index
    %c0_267 = arith.constant 0 : index
    %574 = vector.load %arg41[%c0_265, %c0_266, %c0_267] : memref<2x1x32xf32, #tpu.memory_space<vmem>>, vector<1x1x32xf32>
    %575 = vector.shape_cast %574 : vector<1x1x32xf32> to vector<1x32xf32>
    %cst_268 = arith.constant dense<0.000000e+00> : vector<8xf32>
    %576 = vector.multi_reduction <add>, %571, %cst_268 [1] : vector<8x32xf32> to vector<8xf32>
    %577 = vector.shape_cast %576 : vector<8xf32> to vector<8x1xf32>
    %cst_269 = arith.constant 3.200000e+01 : f32
    %578 = vector.broadcast %cst_269 : f32 to vector<8x1xf32>
    %579 = arith.divf %577, %578 : vector<8x1xf32>
    %580 = vector.broadcast %579 : vector<8x1xf32> to vector<8x32xf32>
    %581 = arith.subf %571, %580 : vector<8x32xf32>
    %582 = arith.mulf %581, %581 : vector<8x32xf32>
    %cst_270 = arith.constant dense<0.000000e+00> : vector<8xf32>
    %583 = vector.multi_reduction <add>, %582, %cst_270 [1] : vector<8x32xf32> to vector<8xf32>
    %584 = vector.shape_cast %583 : vector<8xf32> to vector<8x1xf32>
    %cst_271 = arith.constant 3.200000e+01 : f32
    %585 = vector.broadcast %cst_271 : f32 to vector<8x1xf32>
    %586 = arith.divf %584, %585 : vector<8x1xf32>
    %cst_272 = arith.constant 9.99999974E-6 : f32
    %587 = vector.broadcast %cst_272 : f32 to vector<8x1xf32>
    %588 = arith.addf %586, %587 : vector<8x1xf32>
    %589 = math.rsqrt %588 : vector<8x1xf32>
    %590 = vector.broadcast %589 : vector<8x1xf32> to vector<8x32xf32>
    %591 = arith.mulf %581, %590 : vector<8x32xf32>
    %592 = vector.broadcast %573 : vector<1x32xf32> to vector<8x32xf32>
    %593 = arith.mulf %591, %592 : vector<8x32xf32>
    %594 = vector.broadcast %575 : vector<1x32xf32> to vector<8x32xf32>
    %595 = arith.addf %593, %594 : vector<8x32xf32>
    %c1_273 = arith.constant 1 : index
    %c0_274 = arith.constant 0 : index
    %c0_275 = arith.constant 0 : index
    %596 = vector.load %arg22[%c1_273, %c0_274, %c0_275] : memref<2x32x96xf32, #tpu.memory_space<vmem>>, vector<1x32x96xf32>
    %597 = vector.shape_cast %596 : vector<1x32x96xf32> to vector<32x96xf32>
    %cst_276 = arith.constant dense<0.000000e+00> : vector<8x96xf32>
    %598 = tpu.matmul %595, %597, %cst_276 {dimension_numbers = #tpu.dot_dimension_numbers<[1], [0], [0], [1], [0, 0, 1, 1], [], []>} : vector<8x32xf32>, vector<32x96xf32>, vector<8x96xf32> -> vector<8x96xf32>
    %c1_277 = arith.constant 1 : index
    %c0_278 = arith.constant 0 : index
    %c0_279 = arith.constant 0 : index
    %599 = vector.load %arg23[%c1_277, %c0_278, %c0_279] : memref<2x1x96xf32, #tpu.memory_space<vmem>>, vector<1x1x96xf32>
    %600 = vector.shape_cast %599 : vector<1x1x96xf32> to vector<1x96xf32>
    %601 = vector.broadcast %600 : vector<1x96xf32> to vector<8x96xf32>
    %602 = arith.addf %598, %601 : vector<8x96xf32>
    %603 = vector.extract_strided_slice %602 {offsets = [0, 0], sizes = [8, 32], strides = [1, 1]} : vector<8x96xf32> to vector<8x32xf32>
    %604 = vector.extract_strided_slice %602 {offsets = [0, 32], sizes = [8, 32], strides = [1, 1]} : vector<8x96xf32> to vector<8x32xf32>
    %605 = vector.extract_strided_slice %602 {offsets = [0, 64], sizes = [8, 32], strides = [1, 1]} : vector<8x96xf32> to vector<8x32xf32>
    %606 = vector.extract_strided_slice %603 {offsets = [0, 0], sizes = [8, 8], strides = [1, 1]} : vector<8x32xf32> to vector<8x8xf32>
    %607 = vector.extract_strided_slice %604 {offsets = [0, 0], sizes = [8, 8], strides = [1, 1]} : vector<8x32xf32> to vector<8x8xf32>
    %608 = vector.extract_strided_slice %605 {offsets = [0, 0], sizes = [8, 8], strides = [1, 1]} : vector<8x32xf32> to vector<8x8xf32>
    %cst_280 = arith.constant dense<0.000000e+00> : vector<8x8xf32>
    %609 = tpu.matmul %606, %607, %cst_280 {dimension_numbers = #tpu.dot_dimension_numbers<[1], [1], [0], [0], [0, 0, 1, 0], [], []>} : vector<8x8xf32>, vector<8x8xf32>, vector<8x8xf32> -> vector<8x8xf32>
    %cst_281 = arith.constant dense<0xFF800000> : vector<8xf32>
    %610 = vector.multi_reduction <maximumf>, %609, %cst_281 [1] : vector<8x8xf32> to vector<8xf32>
    %611 = vector.shape_cast %610 : vector<8xf32> to vector<8x1xf32>
    %612 = vector.broadcast %611 : vector<8x1xf32> to vector<8x8xf32>
    %613 = arith.subf %609, %612 : vector<8x8xf32>
    %614 = math.exp %613 : vector<8x8xf32>
    %cst_282 = arith.constant dense<0.000000e+00> : vector<8xf32>
    %615 = vector.multi_reduction <add>, %614, %cst_282 [1] : vector<8x8xf32> to vector<8xf32>
    %616 = vector.shape_cast %615 : vector<8xf32> to vector<8x1xf32>
    %617 = tpu.reciprocal %616 {approx = true} : vector<8x1xf32> -> vector<8x1xf32>
    %618 = vector.broadcast %617 : vector<8x1xf32> to vector<8x8xf32>
    %619 = arith.mulf %614, %618 : vector<8x8xf32>
    %cst_283 = arith.constant dense<0.000000e+00> : vector<8x8xf32>
    %620 = tpu.matmul %619, %608, %cst_283 {dimension_numbers = #tpu.dot_dimension_numbers<[1], [0], [0], [1], [0, 0, 1, 1], [], []>} : vector<8x8xf32>, vector<8x8xf32>, vector<8x8xf32> -> vector<8x8xf32>
    %621 = vector.extract_strided_slice %603 {offsets = [0, 8], sizes = [8, 8], strides = [1, 1]} : vector<8x32xf32> to vector<8x8xf32>
    %622 = vector.extract_strided_slice %604 {offsets = [0, 8], sizes = [8, 8], strides = [1, 1]} : vector<8x32xf32> to vector<8x8xf32>
    %623 = vector.extract_strided_slice %605 {offsets = [0, 8], sizes = [8, 8], strides = [1, 1]} : vector<8x32xf32> to vector<8x8xf32>
    %cst_284 = arith.constant dense<0.000000e+00> : vector<8x8xf32>
    %624 = tpu.matmul %621, %622, %cst_284 {dimension_numbers = #tpu.dot_dimension_numbers<[1], [1], [0], [0], [0, 0, 1, 0], [], []>} : vector<8x8xf32>, vector<8x8xf32>, vector<8x8xf32> -> vector<8x8xf32>
    %cst_285 = arith.constant dense<0xFF800000> : vector<8xf32>
    %625 = vector.multi_reduction <maximumf>, %624, %cst_285 [1] : vector<8x8xf32> to vector<8xf32>
    %626 = vector.shape_cast %625 : vector<8xf32> to vector<8x1xf32>
    %627 = vector.broadcast %626 : vector<8x1xf32> to vector<8x8xf32>
    %628 = arith.subf %624, %627 : vector<8x8xf32>
    %629 = math.exp %628 : vector<8x8xf32>
    %cst_286 = arith.constant dense<0.000000e+00> : vector<8xf32>
    %630 = vector.multi_reduction <add>, %629, %cst_286 [1] : vector<8x8xf32> to vector<8xf32>
    %631 = vector.shape_cast %630 : vector<8xf32> to vector<8x1xf32>
    %632 = tpu.reciprocal %631 {approx = true} : vector<8x1xf32> -> vector<8x1xf32>
    %633 = vector.broadcast %632 : vector<8x1xf32> to vector<8x8xf32>
    %634 = arith.mulf %629, %633 : vector<8x8xf32>
    %cst_287 = arith.constant dense<0.000000e+00> : vector<8x8xf32>
    %635 = tpu.matmul %634, %623, %cst_287 {dimension_numbers = #tpu.dot_dimension_numbers<[1], [0], [0], [1], [0, 0, 1, 1], [], []>} : vector<8x8xf32>, vector<8x8xf32>, vector<8x8xf32> -> vector<8x8xf32>
    %636 = vector.extract_strided_slice %603 {offsets = [0, 16], sizes = [8, 8], strides = [1, 1]} : vector<8x32xf32> to vector<8x8xf32>
    %637 = vector.extract_strided_slice %604 {offsets = [0, 16], sizes = [8, 8], strides = [1, 1]} : vector<8x32xf32> to vector<8x8xf32>
    %638 = vector.extract_strided_slice %605 {offsets = [0, 16], sizes = [8, 8], strides = [1, 1]} : vector<8x32xf32> to vector<8x8xf32>
    %cst_288 = arith.constant dense<0.000000e+00> : vector<8x8xf32>
    %639 = tpu.matmul %636, %637, %cst_288 {dimension_numbers = #tpu.dot_dimension_numbers<[1], [1], [0], [0], [0, 0, 1, 0], [], []>} : vector<8x8xf32>, vector<8x8xf32>, vector<8x8xf32> -> vector<8x8xf32>
    %cst_289 = arith.constant dense<0xFF800000> : vector<8xf32>
    %640 = vector.multi_reduction <maximumf>, %639, %cst_289 [1] : vector<8x8xf32> to vector<8xf32>
    %641 = vector.shape_cast %640 : vector<8xf32> to vector<8x1xf32>
    %642 = vector.broadcast %641 : vector<8x1xf32> to vector<8x8xf32>
    %643 = arith.subf %639, %642 : vector<8x8xf32>
    %644 = math.exp %643 : vector<8x8xf32>
    %cst_290 = arith.constant dense<0.000000e+00> : vector<8xf32>
    %645 = vector.multi_reduction <add>, %644, %cst_290 [1] : vector<8x8xf32> to vector<8xf32>
    %646 = vector.shape_cast %645 : vector<8xf32> to vector<8x1xf32>
    %647 = tpu.reciprocal %646 {approx = true} : vector<8x1xf32> -> vector<8x1xf32>
    %648 = vector.broadcast %647 : vector<8x1xf32> to vector<8x8xf32>
    %649 = arith.mulf %644, %648 : vector<8x8xf32>
    %cst_291 = arith.constant dense<0.000000e+00> : vector<8x8xf32>
    %650 = tpu.matmul %649, %638, %cst_291 {dimension_numbers = #tpu.dot_dimension_numbers<[1], [0], [0], [1], [0, 0, 1, 1], [], []>} : vector<8x8xf32>, vector<8x8xf32>, vector<8x8xf32> -> vector<8x8xf32>
    %651 = vector.extract_strided_slice %603 {offsets = [0, 24], sizes = [8, 8], strides = [1, 1]} : vector<8x32xf32> to vector<8x8xf32>
    %652 = vector.extract_strided_slice %604 {offsets = [0, 24], sizes = [8, 8], strides = [1, 1]} : vector<8x32xf32> to vector<8x8xf32>
    %653 = vector.extract_strided_slice %605 {offsets = [0, 24], sizes = [8, 8], strides = [1, 1]} : vector<8x32xf32> to vector<8x8xf32>
    %cst_292 = arith.constant dense<0.000000e+00> : vector<8x8xf32>
    %654 = tpu.matmul %651, %652, %cst_292 {dimension_numbers = #tpu.dot_dimension_numbers<[1], [1], [0], [0], [0, 0, 1, 0], [], []>} : vector<8x8xf32>, vector<8x8xf32>, vector<8x8xf32> -> vector<8x8xf32>
    %cst_293 = arith.constant dense<0xFF800000> : vector<8xf32>
    %655 = vector.multi_reduction <maximumf>, %654, %cst_293 [1] : vector<8x8xf32> to vector<8xf32>
    %656 = vector.shape_cast %655 : vector<8xf32> to vector<8x1xf32>
    %657 = vector.broadcast %656 : vector<8x1xf32> to vector<8x8xf32>
    %658 = arith.subf %654, %657 : vector<8x8xf32>
    %659 = math.exp %658 : vector<8x8xf32>
    %cst_294 = arith.constant dense<0.000000e+00> : vector<8xf32>
    %660 = vector.multi_reduction <add>, %659, %cst_294 [1] : vector<8x8xf32> to vector<8xf32>
    %661 = vector.shape_cast %660 : vector<8xf32> to vector<8x1xf32>
    %662 = tpu.reciprocal %661 {approx = true} : vector<8x1xf32> -> vector<8x1xf32>
    %663 = vector.broadcast %662 : vector<8x1xf32> to vector<8x8xf32>
    %664 = arith.mulf %659, %663 : vector<8x8xf32>
    %cst_295 = arith.constant dense<0.000000e+00> : vector<8x8xf32>
    %665 = tpu.matmul %664, %653, %cst_295 {dimension_numbers = #tpu.dot_dimension_numbers<[1], [0], [0], [1], [0, 0, 1, 1], [], []>} : vector<8x8xf32>, vector<8x8xf32>, vector<8x8xf32> -> vector<8x8xf32>
    %666 = tpu.concatenate %620, %635, %650, %665 in 1 : vector<8x8xf32>, vector<8x8xf32>, vector<8x8xf32>, vector<8x8xf32> -> vector<8x32xf32>
    %c1_296 = arith.constant 1 : index
    %c0_297 = arith.constant 0 : index
    %c0_298 = arith.constant 0 : index
    %667 = vector.load %arg24[%c1_296, %c0_297, %c0_298] : memref<2x32x32xf32, #tpu.memory_space<vmem>>, vector<1x32x32xf32>
    %668 = vector.shape_cast %667 : vector<1x32x32xf32> to vector<32x32xf32>
    %cst_299 = arith.constant dense<0.000000e+00> : vector<8x32xf32>
    %669 = tpu.matmul %666, %668, %cst_299 {dimension_numbers = #tpu.dot_dimension_numbers<[1], [0], [0], [1], [0, 0, 1, 1], [], []>} : vector<8x32xf32>, vector<32x32xf32>, vector<8x32xf32> -> vector<8x32xf32>
    %c1_300 = arith.constant 1 : index
    %c0_301 = arith.constant 0 : index
    %c0_302 = arith.constant 0 : index
    %670 = vector.load %arg25[%c1_300, %c0_301, %c0_302] : memref<2x1x32xf32, #tpu.memory_space<vmem>>, vector<1x1x32xf32>
    %671 = vector.shape_cast %670 : vector<1x1x32xf32> to vector<1x32xf32>
    %672 = vector.broadcast %671 : vector<1x32xf32> to vector<8x32xf32>
    %673 = arith.addf %669, %672 : vector<8x32xf32>
    %674 = arith.addf %595, %673 : vector<8x32xf32>
    %c1_303 = arith.constant 1 : index
    %c0_304 = arith.constant 0 : index
    %c0_305 = arith.constant 0 : index
    %675 = vector.load %arg26[%c1_303, %c0_304, %c0_305] : memref<2x1x32xf32, #tpu.memory_space<vmem>>, vector<1x1x32xf32>
    %676 = vector.shape_cast %675 : vector<1x1x32xf32> to vector<1x32xf32>
    %c1_306 = arith.constant 1 : index
    %c0_307 = arith.constant 0 : index
    %c0_308 = arith.constant 0 : index
    %677 = vector.load %arg27[%c1_306, %c0_307, %c0_308] : memref<2x1x32xf32, #tpu.memory_space<vmem>>, vector<1x1x32xf32>
    %678 = vector.shape_cast %677 : vector<1x1x32xf32> to vector<1x32xf32>
    %cst_309 = arith.constant dense<0.000000e+00> : vector<8xf32>
    %679 = vector.multi_reduction <add>, %674, %cst_309 [1] : vector<8x32xf32> to vector<8xf32>
    %680 = vector.shape_cast %679 : vector<8xf32> to vector<8x1xf32>
    %cst_310 = arith.constant 3.200000e+01 : f32
    %681 = vector.broadcast %cst_310 : f32 to vector<8x1xf32>
    %682 = arith.divf %680, %681 : vector<8x1xf32>
    %683 = vector.broadcast %682 : vector<8x1xf32> to vector<8x32xf32>
    %684 = arith.subf %674, %683 : vector<8x32xf32>
    %685 = arith.mulf %684, %684 : vector<8x32xf32>
    %cst_311 = arith.constant dense<0.000000e+00> : vector<8xf32>
    %686 = vector.multi_reduction <add>, %685, %cst_311 [1] : vector<8x32xf32> to vector<8xf32>
    %687 = vector.shape_cast %686 : vector<8xf32> to vector<8x1xf32>
    %cst_312 = arith.constant 3.200000e+01 : f32
    %688 = vector.broadcast %cst_312 : f32 to vector<8x1xf32>
    %689 = arith.divf %687, %688 : vector<8x1xf32>
    %cst_313 = arith.constant 9.99999974E-6 : f32
    %690 = vector.broadcast %cst_313 : f32 to vector<8x1xf32>
    %691 = arith.addf %689, %690 : vector<8x1xf32>
    %692 = math.rsqrt %691 : vector<8x1xf32>
    %693 = vector.broadcast %692 : vector<8x1xf32> to vector<8x32xf32>
    %694 = arith.mulf %684, %693 : vector<8x32xf32>
    %695 = vector.broadcast %676 : vector<1x32xf32> to vector<8x32xf32>
    %696 = arith.mulf %694, %695 : vector<8x32xf32>
    %697 = vector.broadcast %678 : vector<1x32xf32> to vector<8x32xf32>
    %698 = arith.addf %696, %697 : vector<8x32xf32>
    %c1_314 = arith.constant 1 : index
    %c0_315 = arith.constant 0 : index
    %c0_316 = arith.constant 0 : index
    %699 = vector.load %arg28[%c1_314, %c0_315, %c0_316] : memref<2x32x32xf32, #tpu.memory_space<vmem>>, vector<1x32x32xf32>
    %700 = vector.shape_cast %699 : vector<1x32x32xf32> to vector<32x32xf32>
    %cst_317 = arith.constant dense<0.000000e+00> : vector<8x32xf32>
    %701 = tpu.matmul %698, %700, %cst_317 {dimension_numbers = #tpu.dot_dimension_numbers<[1], [0], [0], [1], [0, 0, 1, 1], [], []>} : vector<8x32xf32>, vector<32x32xf32>, vector<8x32xf32> -> vector<8x32xf32>
    %c1_318 = arith.constant 1 : index
    %c0_319 = arith.constant 0 : index
    %c0_320 = arith.constant 0 : index
    %702 = vector.load %arg29[%c1_318, %c0_319, %c0_320] : memref<2x1x32xf32, #tpu.memory_space<vmem>>, vector<1x1x32xf32>
    %703 = vector.shape_cast %702 : vector<1x1x32xf32> to vector<1x32xf32>
    %704 = vector.broadcast %703 : vector<1x32xf32> to vector<8x32xf32>
    %705 = arith.addf %701, %704 : vector<8x32xf32>
    %c1_321 = arith.constant 1 : index
    %c0_322 = arith.constant 0 : index
    %c0_323 = arith.constant 0 : index
    %706 = vector.load %arg30[%c1_321, %c0_322, %c0_323] : memref<2x32x64xf32, #tpu.memory_space<vmem>>, vector<1x32x64xf32>
    %707 = vector.shape_cast %706 : vector<1x32x64xf32> to vector<32x64xf32>
    %cst_324 = arith.constant dense<0.000000e+00> : vector<8x64xf32>
    %708 = tpu.matmul %342, %707, %cst_324 {dimension_numbers = #tpu.dot_dimension_numbers<[1], [0], [0], [1], [0, 0, 1, 1], [], []>} : vector<8x32xf32>, vector<32x64xf32>, vector<8x64xf32> -> vector<8x64xf32>
    %c1_325 = arith.constant 1 : index
    %c0_326 = arith.constant 0 : index
    %c0_327 = arith.constant 0 : index
    %709 = vector.load %arg31[%c1_325, %c0_326, %c0_327] : memref<2x1x64xf32, #tpu.memory_space<vmem>>, vector<1x1x64xf32>
    %710 = vector.shape_cast %709 : vector<1x1x64xf32> to vector<1x64xf32>
    %711 = vector.broadcast %710 : vector<1x64xf32> to vector<8x64xf32>
    %712 = arith.addf %708, %711 : vector<8x64xf32>
    %713 = vector.extract_strided_slice %712 {offsets = [0, 0], sizes = [8, 32], strides = [1, 1]} : vector<8x64xf32> to vector<8x32xf32>
    %714 = vector.extract_strided_slice %712 {offsets = [0, 32], sizes = [8, 32], strides = [1, 1]} : vector<8x64xf32> to vector<8x32xf32>
    %715 = vector.extract_strided_slice %705 {offsets = [0, 0], sizes = [8, 8], strides = [1, 1]} : vector<8x32xf32> to vector<8x8xf32>
    %716 = vector.extract_strided_slice %713 {offsets = [0, 0], sizes = [8, 8], strides = [1, 1]} : vector<8x32xf32> to vector<8x8xf32>
    %717 = vector.extract_strided_slice %714 {offsets = [0, 0], sizes = [8, 8], strides = [1, 1]} : vector<8x32xf32> to vector<8x8xf32>
    %cst_328 = arith.constant dense<0.000000e+00> : vector<8x8xf32>
    %718 = tpu.matmul %715, %716, %cst_328 {dimension_numbers = #tpu.dot_dimension_numbers<[1], [1], [0], [0], [0, 0, 1, 0], [], []>} : vector<8x8xf32>, vector<8x8xf32>, vector<8x8xf32> -> vector<8x8xf32>
    %cst_329 = arith.constant dense<0xFF800000> : vector<8xf32>
    %719 = vector.multi_reduction <maximumf>, %718, %cst_329 [1] : vector<8x8xf32> to vector<8xf32>
    %720 = vector.shape_cast %719 : vector<8xf32> to vector<8x1xf32>
    %721 = vector.broadcast %720 : vector<8x1xf32> to vector<8x8xf32>
    %722 = arith.subf %718, %721 : vector<8x8xf32>
    %723 = math.exp %722 : vector<8x8xf32>
    %cst_330 = arith.constant dense<0.000000e+00> : vector<8xf32>
    %724 = vector.multi_reduction <add>, %723, %cst_330 [1] : vector<8x8xf32> to vector<8xf32>
    %725 = vector.shape_cast %724 : vector<8xf32> to vector<8x1xf32>
    %726 = tpu.reciprocal %725 {approx = true} : vector<8x1xf32> -> vector<8x1xf32>
    %727 = vector.broadcast %726 : vector<8x1xf32> to vector<8x8xf32>
    %728 = arith.mulf %723, %727 : vector<8x8xf32>
    %cst_331 = arith.constant dense<0.000000e+00> : vector<8x8xf32>
    %729 = tpu.matmul %728, %717, %cst_331 {dimension_numbers = #tpu.dot_dimension_numbers<[1], [0], [0], [1], [0, 0, 1, 1], [], []>} : vector<8x8xf32>, vector<8x8xf32>, vector<8x8xf32> -> vector<8x8xf32>
    %730 = vector.extract_strided_slice %705 {offsets = [0, 8], sizes = [8, 8], strides = [1, 1]} : vector<8x32xf32> to vector<8x8xf32>
    %731 = vector.extract_strided_slice %713 {offsets = [0, 8], sizes = [8, 8], strides = [1, 1]} : vector<8x32xf32> to vector<8x8xf32>
    %732 = vector.extract_strided_slice %714 {offsets = [0, 8], sizes = [8, 8], strides = [1, 1]} : vector<8x32xf32> to vector<8x8xf32>
    %cst_332 = arith.constant dense<0.000000e+00> : vector<8x8xf32>
    %733 = tpu.matmul %730, %731, %cst_332 {dimension_numbers = #tpu.dot_dimension_numbers<[1], [1], [0], [0], [0, 0, 1, 0], [], []>} : vector<8x8xf32>, vector<8x8xf32>, vector<8x8xf32> -> vector<8x8xf32>
    %cst_333 = arith.constant dense<0xFF800000> : vector<8xf32>
    %734 = vector.multi_reduction <maximumf>, %733, %cst_333 [1] : vector<8x8xf32> to vector<8xf32>
    %735 = vector.shape_cast %734 : vector<8xf32> to vector<8x1xf32>
    %736 = vector.broadcast %735 : vector<8x1xf32> to vector<8x8xf32>
    %737 = arith.subf %733, %736 : vector<8x8xf32>
    %738 = math.exp %737 : vector<8x8xf32>
    %cst_334 = arith.constant dense<0.000000e+00> : vector<8xf32>
    %739 = vector.multi_reduction <add>, %738, %cst_334 [1] : vector<8x8xf32> to vector<8xf32>
    %740 = vector.shape_cast %739 : vector<8xf32> to vector<8x1xf32>
    %741 = tpu.reciprocal %740 {approx = true} : vector<8x1xf32> -> vector<8x1xf32>
    %742 = vector.broadcast %741 : vector<8x1xf32> to vector<8x8xf32>
    %743 = arith.mulf %738, %742 : vector<8x8xf32>
    %cst_335 = arith.constant dense<0.000000e+00> : vector<8x8xf32>
    %744 = tpu.matmul %743, %732, %cst_335 {dimension_numbers = #tpu.dot_dimension_numbers<[1], [0], [0], [1], [0, 0, 1, 1], [], []>} : vector<8x8xf32>, vector<8x8xf32>, vector<8x8xf32> -> vector<8x8xf32>
    %745 = vector.extract_strided_slice %705 {offsets = [0, 16], sizes = [8, 8], strides = [1, 1]} : vector<8x32xf32> to vector<8x8xf32>
    %746 = vector.extract_strided_slice %713 {offsets = [0, 16], sizes = [8, 8], strides = [1, 1]} : vector<8x32xf32> to vector<8x8xf32>
    %747 = vector.extract_strided_slice %714 {offsets = [0, 16], sizes = [8, 8], strides = [1, 1]} : vector<8x32xf32> to vector<8x8xf32>
    %cst_336 = arith.constant dense<0.000000e+00> : vector<8x8xf32>
    %748 = tpu.matmul %745, %746, %cst_336 {dimension_numbers = #tpu.dot_dimension_numbers<[1], [1], [0], [0], [0, 0, 1, 0], [], []>} : vector<8x8xf32>, vector<8x8xf32>, vector<8x8xf32> -> vector<8x8xf32>
    %cst_337 = arith.constant dense<0xFF800000> : vector<8xf32>
    %749 = vector.multi_reduction <maximumf>, %748, %cst_337 [1] : vector<8x8xf32> to vector<8xf32>
    %750 = vector.shape_cast %749 : vector<8xf32> to vector<8x1xf32>
    %751 = vector.broadcast %750 : vector<8x1xf32> to vector<8x8xf32>
    %752 = arith.subf %748, %751 : vector<8x8xf32>
    %753 = math.exp %752 : vector<8x8xf32>
    %cst_338 = arith.constant dense<0.000000e+00> : vector<8xf32>
    %754 = vector.multi_reduction <add>, %753, %cst_338 [1] : vector<8x8xf32> to vector<8xf32>
    %755 = vector.shape_cast %754 : vector<8xf32> to vector<8x1xf32>
    %756 = tpu.reciprocal %755 {approx = true} : vector<8x1xf32> -> vector<8x1xf32>
    %757 = vector.broadcast %756 : vector<8x1xf32> to vector<8x8xf32>
    %758 = arith.mulf %753, %757 : vector<8x8xf32>
    %cst_339 = arith.constant dense<0.000000e+00> : vector<8x8xf32>
    %759 = tpu.matmul %758, %747, %cst_339 {dimension_numbers = #tpu.dot_dimension_numbers<[1], [0], [0], [1], [0, 0, 1, 1], [], []>} : vector<8x8xf32>, vector<8x8xf32>, vector<8x8xf32> -> vector<8x8xf32>
    %760 = vector.extract_strided_slice %705 {offsets = [0, 24], sizes = [8, 8], strides = [1, 1]} : vector<8x32xf32> to vector<8x8xf32>
    %761 = vector.extract_strided_slice %713 {offsets = [0, 24], sizes = [8, 8], strides = [1, 1]} : vector<8x32xf32> to vector<8x8xf32>
    %762 = vector.extract_strided_slice %714 {offsets = [0, 24], sizes = [8, 8], strides = [1, 1]} : vector<8x32xf32> to vector<8x8xf32>
    %cst_340 = arith.constant dense<0.000000e+00> : vector<8x8xf32>
    %763 = tpu.matmul %760, %761, %cst_340 {dimension_numbers = #tpu.dot_dimension_numbers<[1], [1], [0], [0], [0, 0, 1, 0], [], []>} : vector<8x8xf32>, vector<8x8xf32>, vector<8x8xf32> -> vector<8x8xf32>
    %cst_341 = arith.constant dense<0xFF800000> : vector<8xf32>
    %764 = vector.multi_reduction <maximumf>, %763, %cst_341 [1] : vector<8x8xf32> to vector<8xf32>
    %765 = vector.shape_cast %764 : vector<8xf32> to vector<8x1xf32>
    %766 = vector.broadcast %765 : vector<8x1xf32> to vector<8x8xf32>
    %767 = arith.subf %763, %766 : vector<8x8xf32>
    %768 = math.exp %767 : vector<8x8xf32>
    %cst_342 = arith.constant dense<0.000000e+00> : vector<8xf32>
    %769 = vector.multi_reduction <add>, %768, %cst_342 [1] : vector<8x8xf32> to vector<8xf32>
    %770 = vector.shape_cast %769 : vector<8xf32> to vector<8x1xf32>
    %771 = tpu.reciprocal %770 {approx = true} : vector<8x1xf32> -> vector<8x1xf32>
    %772 = vector.broadcast %771 : vector<8x1xf32> to vector<8x8xf32>
    %773 = arith.mulf %768, %772 : vector<8x8xf32>
    %cst_343 = arith.constant dense<0.000000e+00> : vector<8x8xf32>
    %774 = tpu.matmul %773, %762, %cst_343 {dimension_numbers = #tpu.dot_dimension_numbers<[1], [0], [0], [1], [0, 0, 1, 1], [], []>} : vector<8x8xf32>, vector<8x8xf32>, vector<8x8xf32> -> vector<8x8xf32>
    %775 = tpu.concatenate %729, %744, %759, %774 in 1 : vector<8x8xf32>, vector<8x8xf32>, vector<8x8xf32>, vector<8x8xf32> -> vector<8x32xf32>
    %c1_344 = arith.constant 1 : index
    %c0_345 = arith.constant 0 : index
    %c0_346 = arith.constant 0 : index
    %776 = vector.load %arg32[%c1_344, %c0_345, %c0_346] : memref<2x32x32xf32, #tpu.memory_space<vmem>>, vector<1x32x32xf32>
    %777 = vector.shape_cast %776 : vector<1x32x32xf32> to vector<32x32xf32>
    %cst_347 = arith.constant dense<0.000000e+00> : vector<8x32xf32>
    %778 = tpu.matmul %775, %777, %cst_347 {dimension_numbers = #tpu.dot_dimension_numbers<[1], [0], [0], [1], [0, 0, 1, 1], [], []>} : vector<8x32xf32>, vector<32x32xf32>, vector<8x32xf32> -> vector<8x32xf32>
    %c1_348 = arith.constant 1 : index
    %c0_349 = arith.constant 0 : index
    %c0_350 = arith.constant 0 : index
    %779 = vector.load %arg33[%c1_348, %c0_349, %c0_350] : memref<2x1x32xf32, #tpu.memory_space<vmem>>, vector<1x1x32xf32>
    %780 = vector.shape_cast %779 : vector<1x1x32xf32> to vector<1x32xf32>
    %781 = vector.broadcast %780 : vector<1x32xf32> to vector<8x32xf32>
    %782 = arith.addf %778, %781 : vector<8x32xf32>
    %783 = arith.addf %698, %782 : vector<8x32xf32>
    %c1_351 = arith.constant 1 : index
    %c0_352 = arith.constant 0 : index
    %c0_353 = arith.constant 0 : index
    %784 = vector.load %arg34[%c1_351, %c0_352, %c0_353] : memref<2x1x32xf32, #tpu.memory_space<vmem>>, vector<1x1x32xf32>
    %785 = vector.shape_cast %784 : vector<1x1x32xf32> to vector<1x32xf32>
    %c1_354 = arith.constant 1 : index
    %c0_355 = arith.constant 0 : index
    %c0_356 = arith.constant 0 : index
    %786 = vector.load %arg35[%c1_354, %c0_355, %c0_356] : memref<2x1x32xf32, #tpu.memory_space<vmem>>, vector<1x1x32xf32>
    %787 = vector.shape_cast %786 : vector<1x1x32xf32> to vector<1x32xf32>
    %cst_357 = arith.constant dense<0.000000e+00> : vector<8xf32>
    %788 = vector.multi_reduction <add>, %783, %cst_357 [1] : vector<8x32xf32> to vector<8xf32>
    %789 = vector.shape_cast %788 : vector<8xf32> to vector<8x1xf32>
    %cst_358 = arith.constant 3.200000e+01 : f32
    %790 = vector.broadcast %cst_358 : f32 to vector<8x1xf32>
    %791 = arith.divf %789, %790 : vector<8x1xf32>
    %792 = vector.broadcast %791 : vector<8x1xf32> to vector<8x32xf32>
    %793 = arith.subf %783, %792 : vector<8x32xf32>
    %794 = arith.mulf %793, %793 : vector<8x32xf32>
    %cst_359 = arith.constant dense<0.000000e+00> : vector<8xf32>
    %795 = vector.multi_reduction <add>, %794, %cst_359 [1] : vector<8x32xf32> to vector<8xf32>
    %796 = vector.shape_cast %795 : vector<8xf32> to vector<8x1xf32>
    %cst_360 = arith.constant 3.200000e+01 : f32
    %797 = vector.broadcast %cst_360 : f32 to vector<8x1xf32>
    %798 = arith.divf %796, %797 : vector<8x1xf32>
    %cst_361 = arith.constant 9.99999974E-6 : f32
    %799 = vector.broadcast %cst_361 : f32 to vector<8x1xf32>
    %800 = arith.addf %798, %799 : vector<8x1xf32>
    %801 = math.rsqrt %800 : vector<8x1xf32>
    %802 = vector.broadcast %801 : vector<8x1xf32> to vector<8x32xf32>
    %803 = arith.mulf %793, %802 : vector<8x32xf32>
    %804 = vector.broadcast %785 : vector<1x32xf32> to vector<8x32xf32>
    %805 = arith.mulf %803, %804 : vector<8x32xf32>
    %806 = vector.broadcast %787 : vector<1x32xf32> to vector<8x32xf32>
    %807 = arith.addf %805, %806 : vector<8x32xf32>
    %c1_362 = arith.constant 1 : index
    %c0_363 = arith.constant 0 : index
    %c0_364 = arith.constant 0 : index
    %808 = vector.load %arg36[%c1_362, %c0_363, %c0_364] : memref<2x32x64xf32, #tpu.memory_space<vmem>>, vector<1x32x64xf32>
    %809 = vector.shape_cast %808 : vector<1x32x64xf32> to vector<32x64xf32>
    %cst_365 = arith.constant dense<0.000000e+00> : vector<8x64xf32>
    %810 = tpu.matmul %807, %809, %cst_365 {dimension_numbers = #tpu.dot_dimension_numbers<[1], [0], [0], [1], [0, 0, 1, 1], [], []>} : vector<8x32xf32>, vector<32x64xf32>, vector<8x64xf32> -> vector<8x64xf32>
    %c1_366 = arith.constant 1 : index
    %c0_367 = arith.constant 0 : index
    %c0_368 = arith.constant 0 : index
    %811 = vector.load %arg37[%c1_366, %c0_367, %c0_368] : memref<2x1x64xf32, #tpu.memory_space<vmem>>, vector<1x1x64xf32>
    %812 = vector.shape_cast %811 : vector<1x1x64xf32> to vector<1x64xf32>
    %813 = vector.broadcast %812 : vector<1x64xf32> to vector<8x64xf32>
    %814 = arith.addf %810, %813 : vector<8x64xf32>
    %cst_369 = arith.constant 0.000000e+00 : f32
    %815 = vector.broadcast %cst_369 : f32 to vector<8x64xf32>
    %816 = arith.maximumf %814, %815 : vector<8x64xf32>
    %c1_370 = arith.constant 1 : index
    %c0_371 = arith.constant 0 : index
    %c0_372 = arith.constant 0 : index
    %817 = vector.load %arg38[%c1_370, %c0_371, %c0_372] : memref<2x64x32xf32, #tpu.memory_space<vmem>>, vector<1x64x32xf32>
    %818 = vector.shape_cast %817 : vector<1x64x32xf32> to vector<64x32xf32>
    %cst_373 = arith.constant dense<0.000000e+00> : vector<8x32xf32>
    %819 = tpu.matmul %816, %818, %cst_373 {dimension_numbers = #tpu.dot_dimension_numbers<[1], [0], [0], [1], [0, 0, 1, 1], [], []>} : vector<8x64xf32>, vector<64x32xf32>, vector<8x32xf32> -> vector<8x32xf32>
    %c1_374 = arith.constant 1 : index
    %c0_375 = arith.constant 0 : index
    %c0_376 = arith.constant 0 : index
    %820 = vector.load %arg39[%c1_374, %c0_375, %c0_376] : memref<2x1x32xf32, #tpu.memory_space<vmem>>, vector<1x1x32xf32>
    %821 = vector.shape_cast %820 : vector<1x1x32xf32> to vector<1x32xf32>
    %822 = vector.broadcast %821 : vector<1x32xf32> to vector<8x32xf32>
    %823 = arith.addf %819, %822 : vector<8x32xf32>
    %824 = arith.addf %807, %823 : vector<8x32xf32>
    %c1_377 = arith.constant 1 : index
    %c0_378 = arith.constant 0 : index
    %c0_379 = arith.constant 0 : index
    %825 = vector.load %arg40[%c1_377, %c0_378, %c0_379] : memref<2x1x32xf32, #tpu.memory_space<vmem>>, vector<1x1x32xf32>
    %826 = vector.shape_cast %825 : vector<1x1x32xf32> to vector<1x32xf32>
    %c1_380 = arith.constant 1 : index
    %c0_381 = arith.constant 0 : index
    %c0_382 = arith.constant 0 : index
    %827 = vector.load %arg41[%c1_380, %c0_381, %c0_382] : memref<2x1x32xf32, #tpu.memory_space<vmem>>, vector<1x1x32xf32>
    %828 = vector.shape_cast %827 : vector<1x1x32xf32> to vector<1x32xf32>
    %cst_383 = arith.constant dense<0.000000e+00> : vector<8xf32>
    %829 = vector.multi_reduction <add>, %824, %cst_383 [1] : vector<8x32xf32> to vector<8xf32>
    %830 = vector.shape_cast %829 : vector<8xf32> to vector<8x1xf32>
    %cst_384 = arith.constant 3.200000e+01 : f32
    %831 = vector.broadcast %cst_384 : f32 to vector<8x1xf32>
    %832 = arith.divf %830, %831 : vector<8x1xf32>
    %833 = vector.broadcast %832 : vector<8x1xf32> to vector<8x32xf32>
    %834 = arith.subf %824, %833 : vector<8x32xf32>
    %835 = arith.mulf %834, %834 : vector<8x32xf32>
    %cst_385 = arith.constant dense<0.000000e+00> : vector<8xf32>
    %836 = vector.multi_reduction <add>, %835, %cst_385 [1] : vector<8x32xf32> to vector<8xf32>
    %837 = vector.shape_cast %836 : vector<8xf32> to vector<8x1xf32>
    %cst_386 = arith.constant 3.200000e+01 : f32
    %838 = vector.broadcast %cst_386 : f32 to vector<8x1xf32>
    %839 = arith.divf %837, %838 : vector<8x1xf32>
    %cst_387 = arith.constant 9.99999974E-6 : f32
    %840 = vector.broadcast %cst_387 : f32 to vector<8x1xf32>
    %841 = arith.addf %839, %840 : vector<8x1xf32>
    %842 = math.rsqrt %841 : vector<8x1xf32>
    %843 = vector.broadcast %842 : vector<8x1xf32> to vector<8x32xf32>
    %844 = arith.mulf %834, %843 : vector<8x32xf32>
    %845 = vector.broadcast %826 : vector<1x32xf32> to vector<8x32xf32>
    %846 = arith.mulf %844, %845 : vector<8x32xf32>
    %847 = vector.broadcast %828 : vector<1x32xf32> to vector<8x32xf32>
    %848 = arith.addf %846, %847 : vector<8x32xf32>
    %c0_388 = arith.constant 0 : index
    %c0_389 = arith.constant 0 : index
    %849 = vector.load %arg42[%c0_388, %c0_389] : memref<1x32xf32, #tpu.memory_space<vmem>>, vector<1x32xf32>
    %c0_390 = arith.constant 0 : index
    %c0_391 = arith.constant 0 : index
    %850 = vector.load %arg43[%c0_390, %c0_391] : memref<1x32xf32, #tpu.memory_space<vmem>>, vector<1x32xf32>
    %cst_392 = arith.constant dense<0.000000e+00> : vector<8xf32>
    %851 = vector.multi_reduction <add>, %848, %cst_392 [1] : vector<8x32xf32> to vector<8xf32>
    %852 = vector.shape_cast %851 : vector<8xf32> to vector<8x1xf32>
    %cst_393 = arith.constant 3.200000e+01 : f32
    %853 = vector.broadcast %cst_393 : f32 to vector<8x1xf32>
    %854 = arith.divf %852, %853 : vector<8x1xf32>
    %855 = vector.broadcast %854 : vector<8x1xf32> to vector<8x32xf32>
    %856 = arith.subf %848, %855 : vector<8x32xf32>
    %857 = arith.mulf %856, %856 : vector<8x32xf32>
    %cst_394 = arith.constant dense<0.000000e+00> : vector<8xf32>
    %858 = vector.multi_reduction <add>, %857, %cst_394 [1] : vector<8x32xf32> to vector<8xf32>
    %859 = vector.shape_cast %858 : vector<8xf32> to vector<8x1xf32>
    %cst_395 = arith.constant 3.200000e+01 : f32
    %860 = vector.broadcast %cst_395 : f32 to vector<8x1xf32>
    %861 = arith.divf %859, %860 : vector<8x1xf32>
    %cst_396 = arith.constant 9.99999974E-6 : f32
    %862 = vector.broadcast %cst_396 : f32 to vector<8x1xf32>
    %863 = arith.addf %861, %862 : vector<8x1xf32>
    %864 = math.rsqrt %863 : vector<8x1xf32>
    %865 = vector.broadcast %864 : vector<8x1xf32> to vector<8x32xf32>
    %866 = arith.mulf %856, %865 : vector<8x32xf32>
    %867 = vector.broadcast %849 : vector<1x32xf32> to vector<8x32xf32>
    %868 = arith.mulf %866, %867 : vector<8x32xf32>
    %869 = vector.broadcast %850 : vector<1x32xf32> to vector<8x32xf32>
    %870 = arith.addf %868, %869 : vector<8x32xf32>
    %c0_397 = arith.constant 0 : index
    %c0_398 = arith.constant 0 : index
    %871 = vector.load %arg44[%c0_397, %c0_398] : memref<32x128xf32, #tpu.memory_space<vmem>>, vector<32x128xf32>
    %cst_399 = arith.constant dense<0.000000e+00> : vector<8x128xf32>
    %872 = tpu.matmul %870, %871, %cst_399 {dimension_numbers = #tpu.dot_dimension_numbers<[1], [0], [0], [1], [0, 0, 1, 1], [], []>} : vector<8x32xf32>, vector<32x128xf32>, vector<8x128xf32> -> vector<8x128xf32>
    %c0_400 = arith.constant 0 : index
    %c0_401 = arith.constant 0 : index
    %873 = vector.load %arg45[%c0_400, %c0_401] : memref<1x128xf32, #tpu.memory_space<vmem>>, vector<1x128xf32>
    %874 = vector.broadcast %873 : vector<1x128xf32> to vector<8x128xf32>
    %875 = arith.addf %872, %874 : vector<8x128xf32>
    %c0_402 = arith.constant 0 : index
    %c0_403 = arith.constant 0 : index
    %876 = vector.load %arg46[%c0_402, %c0_403] : memref<8x128xf32, #tpu.memory_space<vmem>>, vector<8x128xf32>
    tpu.vector_store %arg46[%c0_402, %c0_403], %875 {strides = array<i32>} : memref<8x128xf32, #tpu.memory_space<vmem>>, vector<8x128xf32>,
    return
  }
  func.func @transform_0(%arg0: i32) -> (i32, i32) {
    %c0_i32 = arith.constant 0 : i32
    %c0_i32_0 = arith.constant 0 : i32
    return %arg0, %c0_i32 : i32, i32
  }
  func.func @transform_1(%arg0: i32) -> (i32, i32) {
    %c0_i32 = arith.constant 0 : i32
    %c0_i32_0 = arith.constant 0 : i32
    return %arg0, %c0_i32 : i32, i32
  }
  func.func @transform_2(%arg0: i32) -> (i32, i32) {
    %c0_i32 = arith.constant 0 : i32
    %c0_i32_0 = arith.constant 0 : i32
    return %arg0, %c0_i32 : i32, i32
  }
  func.func @transform_3(%arg0: i32) -> (i32, i32) {
    %c0_i32 = arith.constant 0 : i32
    %c0_i32_0 = arith.constant 0 : i32
    return %arg0, %c0_i32 : i32, i32
  }
  func.func @transform_4(%arg0: i32) -> (i32, i32) {
    %c0_i32 = arith.constant 0 : i32
    %c0_i32_0 = arith.constant 0 : i32
    %c0_i32_1 = arith.constant 0 : i32
    return %c0_i32, %c0_i32_0 : i32, i32
  }
  func.func @transform_5(%arg0: i32) -> (i32, i32) {
    %c0_i32 = arith.constant 0 : i32
    %c0_i32_0 = arith.constant 0 : i32
    %c0_i32_1 = arith.constant 0 : i32
    return %c0_i32, %c0_i32_0 : i32, i32
  }
  func.func @transform_6(%arg0: i32) -> (i32, i32) {
    %c0_i32 = arith.constant 0 : i32
    %c0_i32_0 = arith.constant 0 : i32
    %c0_i32_1 = arith.constant 0 : i32
    return %c0_i32, %c0_i32_0 : i32, i32
  }
  func.func @transform_7(%arg0: i32) -> (i32, i32, i32) {
    %c0_i32 = arith.constant 0 : i32
    %c0_i32_0 = arith.constant 0 : i32
    %c0_i32_1 = arith.constant 0 : i32
    %c0_i32_2 = arith.constant 0 : i32
    return %c0_i32, %c0_i32_0, %c0_i32_1 : i32, i32, i32
  }
  func.func @transform_8(%arg0: i32) -> (i32, i32, i32) {
    %c0_i32 = arith.constant 0 : i32
    %c0_i32_0 = arith.constant 0 : i32
    %c0_i32_1 = arith.constant 0 : i32
    %c0_i32_2 = arith.constant 0 : i32
    return %c0_i32, %c0_i32_0, %c0_i32_1 : i32, i32, i32
  }
  func.func @transform_9(%arg0: i32) -> (i32, i32, i32) {
    %c0_i32 = arith.constant 0 : i32
    %c0_i32_0 = arith.constant 0 : i32
    %c0_i32_1 = arith.constant 0 : i32
    %c0_i32_2 = arith.constant 0 : i32
    return %c0_i32, %c0_i32_0, %c0_i32_1 : i32, i32, i32
  }
  func.func @transform_10(%arg0: i32) -> (i32, i32, i32) {
    %c0_i32 = arith.constant 0 : i32
    %c0_i32_0 = arith.constant 0 : i32
    %c0_i32_1 = arith.constant 0 : i32
    %c0_i32_2 = arith.constant 0 : i32
    return %c0_i32, %c0_i32_0, %c0_i32_1 : i32, i32, i32
  }
  func.func @transform_11(%arg0: i32) -> (i32, i32, i32) {
    %c0_i32 = arith.constant 0 : i32
    %c0_i32_0 = arith.constant 0 : i32
    %c0_i32_1 = arith.constant 0 : i32
    %c0_i32_2 = arith.constant 0 : i32
    return %c0_i32, %c0_i32_0, %c0_i32_1 : i32, i32, i32
  }
  func.func @transform_12(%arg0: i32) -> (i32, i32, i32) {
    %c0_i32 = arith.constant 0 : i32
    %c0_i32_0 = arith.constant 0 : i32
    %c0_i32_1 = arith.constant 0 : i32
    %c0_i32_2 = arith.constant 0 : i32
    return %c0_i32, %c0_i32_0, %c0_i32_1 : i32, i32, i32
  }
  func.func @transform_13(%arg0: i32) -> (i32, i32, i32) {
    %c0_i32 = arith.constant 0 : i32
    %c0_i32_0 = arith.constant 0 : i32
    %c0_i32_1 = arith.constant 0 : i32
    %c0_i32_2 = arith.constant 0 : i32
    return %c0_i32, %c0_i32_0, %c0_i32_1 : i32, i32, i32
  }
  func.func @transform_14(%arg0: i32) -> (i32, i32, i32) {
    %c0_i32 = arith.constant 0 : i32
    %c0_i32_0 = arith.constant 0 : i32
    %c0_i32_1 = arith.constant 0 : i32
    %c0_i32_2 = arith.constant 0 : i32
    return %c0_i32, %c0_i32_0, %c0_i32_1 : i32, i32, i32
  }
  func.func @transform_15(%arg0: i32) -> (i32, i32, i32) {
    %c0_i32 = arith.constant 0 : i32
    %c0_i32_0 = arith.constant 0 : i32
    %c0_i32_1 = arith.constant 0 : i32
    %c0_i32_2 = arith.constant 0 : i32
    return %c0_i32, %c0_i32_0, %c0_i32_1 : i32, i32, i32
  }
  func.func @transform_16(%arg0: i32) -> (i32, i32, i32) {
    %c0_i32 = arith.constant 0 : i32
    %c0_i32_0 = arith.constant 0 : i32
    %c0_i32_1 = arith.constant 0 : i32
    %c0_i32_2 = arith.constant 0 : i32
    return %c0_i32, %c0_i32_0, %c0_i32_1 : i32, i32, i32
  }
  func.func @transform_17(%arg0: i32) -> (i32, i32, i32) {
    %c0_i32 = arith.constant 0 : i32
    %c0_i32_0 = arith.constant 0 : i32
    %c0_i32_1 = arith.constant 0 : i32
    %c0_i32_2 = arith.constant 0 : i32
    return %c0_i32, %c0_i32_0, %c0_i32_1 : i32, i32, i32
  }
  func.func @transform_18(%arg0: i32) -> (i32, i32, i32) {
    %c0_i32 = arith.constant 0 : i32
    %c0_i32_0 = arith.constant 0 : i32
    %c0_i32_1 = arith.constant 0 : i32
    %c0_i32_2 = arith.constant 0 : i32
    return %c0_i32, %c0_i32_0, %c0_i32_1 : i32, i32, i32
  }
  func.func @transform_19(%arg0: i32) -> (i32, i32) {
    %c0_i32 = arith.constant 0 : i32
    %c0_i32_0 = arith.constant 0 : i32
    %c0_i32_1 = arith.constant 0 : i32
    return %c0_i32, %c0_i32_0 : i32, i32
  }
  func.func @transform_20(%arg0: i32) -> (i32, i32) {
    %c0_i32 = arith.constant 0 : i32
    %c0_i32_0 = arith.constant 0 : i32
    %c0_i32_1 = arith.constant 0 : i32
    return %c0_i32, %c0_i32_0 : i32, i32
  }
  func.func @transform_21(%arg0: i32) -> (i32, i32, i32) {
    %c0_i32 = arith.constant 0 : i32
    %c0_i32_0 = arith.constant 0 : i32
    %c0_i32_1 = arith.constant 0 : i32
    %c0_i32_2 = arith.constant 0 : i32
    return %c0_i32, %c0_i32_0, %c0_i32_1 : i32, i32, i32
  }
  func.func @transform_22(%arg0: i32) -> (i32, i32, i32) {
    %c0_i32 = arith.constant 0 : i32
    %c0_i32_0 = arith.constant 0 : i32
    %c0_i32_1 = arith.constant 0 : i32
    %c0_i32_2 = arith.constant 0 : i32
    return %c0_i32, %c0_i32_0, %c0_i32_1 : i32, i32, i32
  }
  func.func @transform_23(%arg0: i32) -> (i32, i32, i32) {
    %c0_i32 = arith.constant 0 : i32
    %c0_i32_0 = arith.constant 0 : i32
    %c0_i32_1 = arith.constant 0 : i32
    %c0_i32_2 = arith.constant 0 : i32
    return %c0_i32, %c0_i32_0, %c0_i32_1 : i32, i32, i32
  }
  func.func @transform_24(%arg0: i32) -> (i32, i32, i32) {
    %c0_i32 = arith.constant 0 : i32
    %c0_i32_0 = arith.constant 0 : i32
    %c0_i32_1 = arith.constant 0 : i32
    %c0_i32_2 = arith.constant 0 : i32
    return %c0_i32, %c0_i32_0, %c0_i32_1 : i32, i32, i32
  }
  func.func @transform_25(%arg0: i32) -> (i32, i32, i32) {
    %c0_i32 = arith.constant 0 : i32
    %c0_i32_0 = arith.constant 0 : i32
    %c0_i32_1 = arith.constant 0 : i32
    %c0_i32_2 = arith.constant 0 : i32
    return %c0_i32, %c0_i32_0, %c0_i32_1 : i32, i32, i32
  }
  func.func @transform_26(%arg0: i32) -> (i32, i32, i32) {
    %c0_i32 = arith.constant 0 : i32
    %c0_i32_0 = arith.constant 0 : i32
    %c0_i32_1 = arith.constant 0 : i32
    %c0_i32_2 = arith.constant 0 : i32
    return %c0_i32, %c0_i32_0, %c0_i32_1 : i32, i32, i32
  }
  func.func @transform_27(%arg0: i32) -> (i32, i32, i32) {
    %c0_i32 = arith.constant 0 : i32
    %c0_i32_0 = arith.constant 0 : i32
    %c0_i32_1 = arith.constant 0 : i32
    %c0_i32_2 = arith.constant 0 : i32
    return %c0_i32, %c0_i32_0, %c0_i32_1 : i32, i32, i32
  }
  func.func @transform_28(%arg0: i32) -> (i32, i32, i32) {
    %c0_i32 = arith.constant 0 : i32
    %c0_i32_0 = arith.constant 0 : i32
    %c0_i32_1 = arith.constant 0 : i32
    %c0_i32_2 = arith.constant 0 : i32
    return %c0_i32, %c0_i32_0, %c0_i32_1 : i32, i32, i32
  }
  func.func @transform_29(%arg0: i32) -> (i32, i32, i32) {
    %c0_i32 = arith.constant 0 : i32
    %c0_i32_0 = arith.constant 0 : i32
    %c0_i32_1 = arith.constant 0 : i32
    %c0_i32_2 = arith.constant 0 : i32
    return %c0_i32, %c0_i32_0, %c0_i32_1 : i32, i32, i32
  }
  func.func @transform_30(%arg0: i32) -> (i32, i32, i32) {
    %c0_i32 = arith.constant 0 : i32
    %c0_i32_0 = arith.constant 0 : i32
    %c0_i32_1 = arith.constant 0 : i32
    %c0_i32_2 = arith.constant 0 : i32
    return %c0_i32, %c0_i32_0, %c0_i32_1 : i32, i32, i32
  }
  func.func @transform_31(%arg0: i32) -> (i32, i32, i32) {
    %c0_i32 = arith.constant 0 : i32
    %c0_i32_0 = arith.constant 0 : i32
    %c0_i32_1 = arith.constant 0 : i32
    %c0_i32_2 = arith.constant 0 : i32
    return %c0_i32, %c0_i32_0, %c0_i32_1 : i32, i32, i32
  }
  func.func @transform_32(%arg0: i32) -> (i32, i32, i32) {
    %c0_i32 = arith.constant 0 : i32
    %c0_i32_0 = arith.constant 0 : i32
    %c0_i32_1 = arith.constant 0 : i32
    %c0_i32_2 = arith.constant 0 : i32
    return %c0_i32, %c0_i32_0, %c0_i32_1 : i32, i32, i32
  }
  func.func @transform_33(%arg0: i32) -> (i32, i32, i32) {
    %c0_i32 = arith.constant 0 : i32
    %c0_i32_0 = arith.constant 0 : i32
    %c0_i32_1 = arith.constant 0 : i32
    %c0_i32_2 = arith.constant 0 : i32
    return %c0_i32, %c0_i32_0, %c0_i32_1 : i32, i32, i32
  }
  func.func @transform_34(%arg0: i32) -> (i32, i32, i32) {
    %c0_i32 = arith.constant 0 : i32
    %c0_i32_0 = arith.constant 0 : i32
    %c0_i32_1 = arith.constant 0 : i32
    %c0_i32_2 = arith.constant 0 : i32
    return %c0_i32, %c0_i32_0, %c0_i32_1 : i32, i32, i32
  }
  func.func @transform_35(%arg0: i32) -> (i32, i32, i32) {
    %c0_i32 = arith.constant 0 : i32
    %c0_i32_0 = arith.constant 0 : i32
    %c0_i32_1 = arith.constant 0 : i32
    %c0_i32_2 = arith.constant 0 : i32
    return %c0_i32, %c0_i32_0, %c0_i32_1 : i32, i32, i32
  }
  func.func @transform_36(%arg0: i32) -> (i32, i32, i32) {
    %c0_i32 = arith.constant 0 : i32
    %c0_i32_0 = arith.constant 0 : i32
    %c0_i32_1 = arith.constant 0 : i32
    %c0_i32_2 = arith.constant 0 : i32
    return %c0_i32, %c0_i32_0, %c0_i32_1 : i32, i32, i32
  }
  func.func @transform_37(%arg0: i32) -> (i32, i32, i32) {
    %c0_i32 = arith.constant 0 : i32
    %c0_i32_0 = arith.constant 0 : i32
    %c0_i32_1 = arith.constant 0 : i32
    %c0_i32_2 = arith.constant 0 : i32
    return %c0_i32, %c0_i32_0, %c0_i32_1 : i32, i32, i32
  }
  func.func @transform_38(%arg0: i32) -> (i32, i32, i32) {
    %c0_i32 = arith.constant 0 : i32
    %c0_i32_0 = arith.constant 0 : i32
    %c0_i32_1 = arith.constant 0 : i32
    %c0_i32_2 = arith.constant 0 : i32
    return %c0_i32, %c0_i32_0, %c0_i32_1 : i32, i32, i32
  }
  func.func @transform_39(%arg0: i32) -> (i32, i32, i32) {
    %c0_i32 = arith.constant 0 : i32
    %c0_i32_0 = arith.constant 0 : i32
    %c0_i32_1 = arith.constant 0 : i32
    %c0_i32_2 = arith.constant 0 : i32
    return %c0_i32, %c0_i32_0, %c0_i32_1 : i32, i32, i32
  }
  func.func @transform_40(%arg0: i32) -> (i32, i32, i32) {
    %c0_i32 = arith.constant 0 : i32
    %c0_i32_0 = arith.constant 0 : i32
    %c0_i32_1 = arith.constant 0 : i32
    %c0_i32_2 = arith.constant 0 : i32
    return %c0_i32, %c0_i32_0, %c0_i32_1 : i32, i32, i32
  }
  func.func @transform_41(%arg0: i32) -> (i32, i32) {
    %c0_i32 = arith.constant 0 : i32
    %c0_i32_0 = arith.constant 0 : i32
    %c0_i32_1 = arith.constant 0 : i32
    return %c0_i32, %c0_i32_0 : i32, i32
  }
  func.func @transform_42(%arg0: i32) -> (i32, i32) {
    %c0_i32 = arith.constant 0 : i32
    %c0_i32_0 = arith.constant 0 : i32
    %c0_i32_1 = arith.constant 0 : i32
    return %c0_i32, %c0_i32_0 : i32, i32
  }
  func.func @transform_43(%arg0: i32) -> (i32, i32) {
    %c0_i32 = arith.constant 0 : i32
    %c0_i32_0 = arith.constant 0 : i32
    %c0_i32_1 = arith.constant 0 : i32
    return %c0_i32, %c0_i32_0 : i32, i32
  }
  func.func @transform_44(%arg0: i32) -> (i32, i32) {
    %c0_i32 = arith.constant 0 : i32
    %c0_i32_0 = arith.constant 0 : i32
    %c0_i32_1 = arith.constant 0 : i32
    return %c0_i32, %c0_i32_0 : i32, i32
  }
  func.func @transform_45(%arg0: i32) -> (i32, i32) {
    %c0_i32 = arith.constant 0 : i32
    %c0_i32_0 = arith.constant 0 : i32
    return %arg0, %c0_i32 : i32, i32
  }
}

</mosaic_0001>

<llo_original>
// kernel: transformer_forward.1
$region0: #{transformer_forward.1}
  #allocation0 [shape = 'u32[]', space=smem, size = 0x4, offset = 0x4, fixed_abs, tag = 'smem constant byte address 0x4 - core index']
  #allocation1 [shape = 'u32[144,128]{1,0:T(1,128)}', space=vmem, size = 0x12000, scoped, tag = 'internal scratch']
  %s0 = inlined_call_operand.smem [shape: u32[46], index: -1, kind: input, shape index: {}]
  %s1 = sld [smem:[%s0]]
  %s2 = scalar_lea.smem %s0, 1
  %s3 = sld [smem:[%s2]]
  %s4 = scalar_lea.smem %s0, 2
  %s5 = sld [smem:[%s4]]
  %s6 = scalar_lea.smem %s0, 3
  %s7 = sld [smem:[%s6]]
  %s8 = scalar_lea.smem %s0, 4
  %s9 = sld [smem:[%s8]]
  %s10 = scalar_lea.smem %s0, 5
  %s11 = sld [smem:[%s10]]
  %s12 = scalar_lea.smem %s0, 6
  %s13 = sld [smem:[%s12]]
  %s14 = scalar_lea.smem %s0, 7
  %s15 = sld [smem:[%s14]]
  %s16 = scalar_lea.smem %s0, 8
  %s17 = sld [smem:[%s16]]
  %s18 = scalar_lea.smem %s0, 9
  %s19 = sld [smem:[%s18]]
  %s20 = scalar_lea.smem %s0, 10
  %s21 = sld [smem:[%s20]]
  %s22 = scalar_lea.smem %s0, 11
  %s23 = sld [smem:[%s22]]
  %s24 = scalar_lea.smem %s0, 12
  %s25 = sld [smem:[%s24]]
  %s26 = scalar_lea.smem %s0, 13
  %s27 = sld [smem:[%s26]]
  %s28 = scalar_lea.smem %s0, 14
  %s29 = sld [smem:[%s28]]
  %s30 = scalar_lea.smem %s0, 15
  %s31 = sld [smem:[%s30]]
  %s32 = scalar_lea.smem %s0, 16
  %s33 = sld [smem:[%s32]]
  %s34 = scalar_lea.smem %s0, 17
  %s35 = sld [smem:[%s34]]
  %s36 = scalar_lea.smem %s0, 18
  %s37 = sld [smem:[%s36]]
  %s38 = scalar_lea.smem %s0, 19
  %s39 = sld [smem:[%s38]]
  %s40 = scalar_lea.smem %s0, 20
  %s41 = sld [smem:[%s40]]
  %s42 = scalar_lea.smem %s0, 21
  %s43 = sld [smem:[%s42]]
  %s44 = scalar_lea.smem %s0, 22
  %s45 = sld [smem:[%s44]]
  %s46 = scalar_lea.smem %s0, 23
  %s47 = sld [smem:[%s46]]
  %s48 = scalar_lea.smem %s0, 24
  %s49 = sld [smem:[%s48]]
  %s50 = scalar_lea.smem %s0, 25
  %s51 = sld [smem:[%s50]]
  %s52 = scalar_lea.smem %s0, 26
  %s53 = sld [smem:[%s52]]
  %s54 = scalar_lea.smem %s0, 27
  %s55 = sld [smem:[%s54]]
  %s56 = scalar_lea.smem %s0, 28
  %s57 = sld [smem:[%s56]]
  %s58 = scalar_lea.smem %s0, 29
  %s59 = sld [smem:[%s58]]
  %s60 = scalar_lea.smem %s0, 30
  %s61 = sld [smem:[%s60]]
  %s62 = scalar_lea.smem %s0, 31
  %s63 = sld [smem:[%s62]]
  %s64 = scalar_lea.smem %s0, 32
  %s65 = sld [smem:[%s64]]
  %s66 = scalar_lea.smem %s0, 33
  %s67 = sld [smem:[%s66]]
  %s68 = scalar_lea.smem %s0, 34
  %s69 = sld [smem:[%s68]]
  %s70 = scalar_lea.smem %s0, 35
  %s71 = sld [smem:[%s70]]
  %s72 = scalar_lea.smem %s0, 36
  %s73 = sld [smem:[%s72]]
  %s74 = scalar_lea.smem %s0, 37
  %s75 = sld [smem:[%s74]]
  %s76 = scalar_lea.smem %s0, 38
  %s77 = sld [smem:[%s76]]
  %s78 = scalar_lea.smem %s0, 39
  %s79 = sld [smem:[%s78]]
  %s80 = scalar_lea.smem %s0, 40
  %s81 = sld [smem:[%s80]]
  %s82 = scalar_lea.smem %s0, 41
  %s83 = sld [smem:[%s82]]
  %s84 = scalar_lea.smem %s0, 42
  %s85 = sld [smem:[%s84]]
  %s86 = scalar_lea.smem %s0, 43
  %s87 = sld [smem:[%s86]]
  %s88 = scalar_lea.smem %s0, 44
  %s89 = sld [smem:[%s88]]
  %s90 = scalar_lea.smem %s0, 45
  %s91 = sld [smem:[%s90]]
  %s92 = sld [smem:[#allocation0]]
  $region309: #{transformer_forward.1} parent=0
    _
  %s94 = ssub.s32 1, %s92
  %s95 = scalar_select 0, %s94, %s92
  $region1: #{transformer_forward.1} parent=0
    #allocation2 [shape = 'u8[1024]{0}', space=vmem, size = 0x400, scoped, tag = 'input window, operand 11, single buffered']
    #allocation3 [shape = 's32[2]{0}', space=sflag, size = 0x8, scoped, tag = 'scoped memory for transformer_forward.1']
    #allocation4 [shape = 's32[2]{0}', space=sflag, size = 0x8, scoped, tag = 'scoped memory for transformer_forward.1']
    #allocation5 [shape = 'u8[1024]{0}', space=vmem, size = 0x400, scoped, tag = 'input window, operand 12, single buffered']
    #allocation6 [shape = 's32[1]{0}', space=sflag, size = 0x4, scoped, tag = 'scoped memory for transformer_forward.1']
    #allocation7 [shape = 'u8[1024]{0}', space=vmem, size = 0x400, scoped, tag = 'input window, operand 14, single buffered']
    #allocation8 [shape = 'u8[1024]{0}', space=vmem, size = 0x400, scoped, tag = 'input window, operand 16, single buffered']
    #allocation9 [shape = 's32[1]{0}', space=sflag, size = 0x4, scoped, tag = 'scoped memory for transformer_forward.1']
    #allocation10 [shape = 'u8[1024]{0}', space=vmem, size = 0x400, scoped, tag = 'input window, operand 17, single buffered']
    #allocation11 [shape = 'u8[1024]{0}', space=vmem, size = 0x400, scoped, tag = 'input window, operand 18, single buffered']
    #allocation12 [shape = 's32[1]{0}', space=sflag, size = 0x4, scoped, tag = 'scoped memory for transformer_forward.1']
    #allocation13 [shape = 'u8[512]{0}', space=vmem, size = 0x400, scoped, tag = 'input window, operand 19, single buffered']
    #allocation14 [shape = 'u8[512]{0}', space=vmem, size = 0x400, scoped, tag = 'input window, operand 20, single buffered']
    #allocation15 [shape = 's32[1]{0}', space=sflag, size = 0x4, scoped, tag = 'scoped memory for transformer_forward.1']
    #allocation16 [shape = 'u8[1024]{0}', space=vmem, size = 0x400, scoped, tag = 'input window, operand 22, single buffered']
    #allocation17 [shape = 'u8[1024]{0}', space=vmem, size = 0x400, scoped, tag = 'input window, operand 24, single buffered']
    #allocation18 [shape = 's32[1]{0}', space=sflag, size = 0x4, scoped, tag = 'scoped memory for transformer_forward.1']
    #allocation19 [shape = 'u8[1024]{0}', space=vmem, size = 0x400, scoped, tag = 'input window, operand 25, single buffered']
    #allocation20 [shape = 'u8[1024]{0}', space=vmem, size = 0x400, scoped, tag = 'input window, operand 26, single buffered']
    #allocation21 [shape = 's32[1]{0}', space=sflag, size = 0x4, scoped, tag = 'scoped memory for transformer_forward.1']
    #allocation22 [shape = 'u8[1024]{0}', space=vmem, size = 0x400, scoped, tag = 'input window, operand 28, single buffered']
    #allocation23 [shape = 'u8[1024]{0}', space=vmem, size = 0x400, scoped, tag = 'input window, operand 30, single buffered']
    #allocation24 [shape = 's32[1]{0}', space=sflag, size = 0x4, scoped, tag = 'scoped memory for transformer_forward.1']
    #allocation25 [shape = 'u8[1024]{0}', space=vmem, size = 0x400, scoped, tag = 'input window, operand 32, single buffered']
    #allocation26 [shape = 'u8[1024]{0}', space=vmem, size = 0x400, scoped, tag = 'input window, operand 33, single buffered']
    #allocation27 [shape = 's32[1]{0}', space=sflag, size = 0x4, scoped, tag = 'scoped memory for transformer_forward.1']
    #allocation28 [shape = 'u8[1024]{0}', space=vmem, size = 0x400, scoped, tag = 'input window, operand 34, single buffered']
    #allocation29 [shape = 'u8[32768]{0}', space=vmem, size = 0x8000, scoped, tag = 'input window, operand 35, single buffered']
    #allocation30 [shape = 's32[1]{0}', space=sflag, size = 0x4, scoped, tag = 'scoped memory for transformer_forward.1']
    #allocation31 [shape = 'u8[1024]{0}', space=vmem, size = 0x400, scoped, tag = 'input window, operand 36, single buffered']
    #allocation32 [shape = 'u8[1024]{0}', space=vmem, size = 0x400, scoped, tag = 'input window, operand 38, single buffered']
    #allocation33 [shape = 's32[1]{0}', space=sflag, size = 0x4, scoped, tag = 'scoped memory for transformer_forward.1']
    #allocation34 [shape = 'u8[1024]{0}', space=vmem, size = 0x400, scoped, tag = 'input window, operand 39, single buffered']
    #allocation35 [shape = 'u8[1024]{0}', space=vmem, size = 0x400, scoped, tag = 'input window, operand 40, single buffered']
    #allocation36 [shape = 's32[1]{0}', space=sflag, size = 0x4, scoped, tag = 'scoped memory for transformer_forward.1']
    #allocation37 [shape = 'u8[512]{0}', space=vmem, size = 0x400, scoped, tag = 'input window, operand 41, single buffered']
    #allocation38 [shape = 'u8[512]{0}', space=vmem, size = 0x400, scoped, tag = 'input window, operand 42, single buffered']
    #allocation39 [shape = 's32[1]{0}', space=sflag, size = 0x4, scoped, tag = 'scoped memory for transformer_forward.1']
    #allocation40 [shape = 'u8[8192]{0}', space=vmem, size = 0x2000, scoped, tag = 'output window, operand 0']
    %96 = vsyncpa [#allocation3], 0
    %97 = vsyncpa [#allocation6], 0
    %98 = vsyncpa [#allocation9], 0
    %99 = vsyncpa [#allocation12], 0
    %100 = vsyncpa [#allocation15], 0
    %101 = vsyncpa [#allocation18], 0
    %102 = vsyncpa [#allocation21], 0
    %103 = vsyncpa [#allocation24], 0
    %104 = vsyncpa [#allocation27], 0
    %105 = vsyncpa [#allocation30], 0
    %106 = vsyncpa [#allocation33], 0
    %107 = vsyncpa [#allocation36], 0
    %108 = vsyncpa [#allocation39], 0
    %109 = vsyncpa [#allocation4], 0
    %s110 = scalar_lea.sflag [#allocation4], 1
    %111 = vsyncpa %s110, 0
    loop: start=0, step=1, limit=4
    $region2: #{transformer_forward.1} parent=1 // loop_pre_header
      _
    $region3: #{transformer_forward.1} parent=1 // loop_header
      %s113 = sphi 0, %s117
      %p114 = scmp.ge.s32.totalorder %s113, 4
      %s123 = sphi 0, %s125
      %s126 = sphi 0, %s123
      %s127 = sphi 0, %s126
      %s143 = sphi 0, %s127
      %s149 = sphi 0, %s151
      %s152 = sphi 0, %s149
      %s153 = sphi 0, %s152
      %s169 = sphi 0, %s153
      %s175 = sphi 0, %s177
      %s178 = sphi 0, %s175
      %s179 = sphi 0, %s178
      %s195 = sphi 0, %s179
      %s201 = sphi 0, %s203
      %s204 = sphi 0, %s201
      %s205 = sphi 0, %s204
      %s221 = sphi 0, %s205
      %s225 = sphi 0, %s225
      %s227 = sphi 0, %s225
      %s228 = sphi 0, %s227
      %s242 = sphi 0, %s228
      %s246 = sphi 0, %s246
      %s248 = sphi 0, %s246
      %s249 = sphi 0, %s248
      %s263 = sphi 0, %s249
      %s267 = sphi 0, %s267
      %s269 = sphi 0, %s267
      %s270 = sphi 0, %s269
      %s284 = sphi 0, %s270
      %s288 = sphi 0, %s288
      %s290 = sphi 0, %s288
      %s291 = sphi 0, %s290
      %s305 = sphi 0, %s291
      %s309 = sphi 0, %s309
      %s311 = sphi 0, %s309
      %s312 = sphi 0, %s311
      %s326 = sphi 0, %s312
      %s330 = sphi 0, %s330
      %s332 = sphi 0, %s330
      %s333 = sphi 0, %s332
      %s347 = sphi 0, %s333
      %s351 = sphi 0, %s351
      %s353 = sphi 0, %s351
      %s354 = sphi 0, %s353
      %s368 = sphi 0, %s354
      %s372 = sphi 0, %s372
      %s374 = sphi 0, %s372
      %s375 = sphi 0, %s374
      %s389 = sphi 0, %s375
      %s393 = sphi 0, %s393
      %s395 = sphi 0, %s393
      %s396 = sphi 0, %s395
      %s410 = sphi 0, %s396
      %s414 = sphi 0, %s414
      %s416 = sphi 0, %s414
      %s417 = sphi 0, %s416
      %s431 = sphi 0, %s417
      %s435 = sphi 0, %s435
      %s437 = sphi 0, %s435
      %s438 = sphi 0, %s437
      %s452 = sphi 0, %s438
      %s456 = sphi 0, %s456
      %s458 = sphi 0, %s456
      %s459 = sphi 0, %s458
      %s473 = sphi 0, %s459
      %s477 = sphi 0, %s477
      %s479 = sphi 0, %s477
      %s480 = sphi 0, %s479
      %s494 = sphi 0, %s480
      %s498 = sphi 0, %s498
      %s500 = sphi 0, %s498
      %s501 = sphi 0, %s500
      %s515 = sphi 0, %s501
      %s519 = sphi 0, %s519
      %s521 = sphi 0, %s519
      %s522 = sphi 0, %s521
      %s536 = sphi 0, %s522
      %s540 = sphi 0, %s540
      %s542 = sphi 0, %s540
      %s543 = sphi 0, %s542
      %s557 = sphi 0, %s543
      %s561 = sphi 0, %s561
      %s563 = sphi 0, %s561
      %s564 = sphi 0, %s563
      %s578 = sphi 0, %s564
      %s582 = sphi 0, %s582
      %s584 = sphi 0, %s582
      %s585 = sphi 0, %s584
      %s599 = sphi 0, %s585
      %s603 = sphi 0, %s603
      %s605 = sphi 0, %s603
      %s606 = sphi 0, %s605
      %s620 = sphi 0, %s606
      %s624 = sphi 0, %s624
      %s626 = sphi 0, %s624
      %s627 = sphi 0, %s626
      %s641 = sphi 0, %s627
      %s645 = sphi 0, %s645
      %s647 = sphi 0, %s645
      %s648 = sphi 0, %s647
      %s662 = sphi 0, %s648
      %s666 = sphi 0, %s666
      %s668 = sphi 0, %s666
      %s669 = sphi 0, %s668
      %s683 = sphi 0, %s669
      %s687 = sphi 0, %s687
      %s689 = sphi 0, %s687
      %s690 = sphi 0, %s689
      %s704 = sphi 0, %s690
      %s708 = sphi 0, %s708
      %s710 = sphi 0, %s708
      %s711 = sphi 0, %s710
      %s725 = sphi 0, %s711
      %s729 = sphi 0, %s729
      %s731 = sphi 0, %s729
      %s732 = sphi 0, %s731
      %s746 = sphi 0, %s732
      %s750 = sphi 0, %s750
      %s752 = sphi 0, %s750
      %s753 = sphi 0, %s752
      %s767 = sphi 0, %s753
      %s771 = sphi 0, %s771
      %s773 = sphi 0, %s771
      %s774 = sphi 0, %s773
      %s788 = sphi 0, %s774
      %s792 = sphi 0, %s792
      %s794 = sphi 0, %s792
      %s795 = sphi 0, %s794
      %s809 = sphi 0, %s795
      %s813 = sphi 0, %s813
      %s815 = sphi 0, %s813
      %s816 = sphi 0, %s815
      %s830 = sphi 0, %s816
      %s834 = sphi 0, %s834
      %s836 = sphi 0, %s834
      %s837 = sphi 0, %s836
      %s851 = sphi 0, %s837
      %s855 = sphi 0, %s855
      %s857 = sphi 0, %s855
      %s858 = sphi 0, %s857
      %s872 = sphi 0, %s858
      %s876 = sphi 0, %s876
      %s878 = sphi 0, %s876
      %s879 = sphi 0, %s878
      %s893 = sphi 0, %s879
      %s897 = sphi 0, %s897
      %s899 = sphi 0, %s897
      %s900 = sphi 0, %s899
      %s914 = sphi 0, %s900
      %s918 = sphi 0, %s918
      %s920 = sphi 0, %s918
      %s921 = sphi 0, %s920
      %s935 = sphi 0, %s921
      %s939 = sphi 0, %s939
      %s941 = sphi 0, %s939
      %s942 = sphi 0, %s941
      %s956 = sphi 0, %s942
      %s960 = sphi 0, %s960
      %s962 = sphi 0, %s960
      %s963 = sphi 0, %s962
      %s977 = sphi 0, %s963
      %s981 = sphi 0, %s981
      %s983 = sphi 0, %s981
      %s984 = sphi 0, %s983
      %s998 = sphi 0, %s984
      %s1002 = sphi 0, %s1002
      %s1004 = sphi 0, %s1002
      %s1005 = sphi 0, %s1004
      %s1019 = sphi 0, %s1005
      %s1023 = sphi 0, %s1023
      %s1025 = sphi 0, %s1023
      %s1026 = sphi 0, %s1025
      %s1040 = sphi 0, %s1026
      %s1044 = sphi 0, %s1044
      %s1046 = sphi 0, %s1044
      %s1047 = sphi 0, %s1046
      %s1061 = sphi 0, %s1047
      %s1065 = sphi 0, %s1065
      %s1067 = sphi 0, %s1065
      %s1068 = sphi 0, %s1067
      %s1082 = sphi 0, %s1068
      %s1088 = sphi 0, %s1090
      %s1091 = sphi 0, %s1088
      %s1092 = sphi 0, %s1091
      %s1108 = sphi 0, %s1092
    $region4: #{transformer_forward.1} parent=1 // loop_header_branch
      %116 = sbr.rel (%p114) target = $region8
    $region5: #{transformer_forward.1} parent=1 // loop_body
      %s118 = ssub.s32 %s113, 1
      %s119 = ssub.s32 %s113, 2
      %s120 = sadd.s32 %s113, 1
      %s121 = ssub.s32 %s113, %s120
      %p122 = scmp.eq.s32.totalorder %s121, 0
      %s124 = sadd.s32 %s123, 1
      %s125 = scalar_select %p122, %s123, %s124
      %p128 = pneg %p122
      %p129 = scmp.eq.s32.totalorder %s113, 1
      %p130 = por %p128, %p129
      %p131 = scmp.ne.s32.totalorder %s123, %s126
      %p132 = scmp.eq.s32.totalorder %s113, 0
      %p133 = por %p131, %p132
      %p134 = scmp.ne.s32.totalorder %s123, %s126
      %p135 = scmp.eq.s32.totalorder %s118, 1
      %p136 = por %p134, %p135
      %p137 = scmp.ne.s32.totalorder %s126, %s127
      %p138 = scmp.eq.s32.totalorder %s118, 0
      %p139 = por %p137, %p138
      %p140 = scmp.ne.s32.totalorder %s126, %s127
      %p141 = scmp.eq.s32.totalorder %s119, 1
      %p142 = por %p140, %p141
      %p144 = scmp.ne.s32.totalorder %s127, %s143
      %p145 = scmp.eq.s32.totalorder %s119, 0
      %p146 = por %p144, %p145
      %s147 = ssub.s32 %s113, %s120
      %p148 = scmp.eq.s32.totalorder %s147, 0
      %s150 = sadd.s32 %s149, 1
      %s151 = scalar_select %p148, %s149, %s150
      %p154 = pneg %p148
      %p155 = scmp.eq.s32.totalorder %s113, 1
      %p156 = por %p154, %p155
      %p157 = scmp.ne.s32.totalorder %s149, %s152
      %p158 = scmp.eq.s32.totalorder %s113, 0
      %p159 = por %p157, %p158
      %p160 = scmp.ne.s32.totalorder %s149, %s152
      %p161 = scmp.eq.s32.totalorder %s118, 1
      %p162 = por %p160, %p161
      %p163 = scmp.ne.s32.totalorder %s152, %s153
      %p164 = scmp.eq.s32.totalorder %s118, 0
      %p165 = por %p163, %p164
      %p166 = scmp.ne.s32.totalorder %s152, %s153
      %p167 = scmp.eq.s32.totalorder %s119, 1
      %p168 = por %p166, %p167
      %p170 = scmp.ne.s32.totalorder %s153, %s169
      %p171 = scmp.eq.s32.totalorder %s119, 0
      %p172 = por %p170, %p171
      %s173 = ssub.s32 %s113, %s120
      %p174 = scmp.eq.s32.totalorder %s173, 0
      %s176 = sadd.s32 %s175, 1
      %s177 = scalar_select %p174, %s175, %s176
      %p180 = pneg %p174
      %p181 = scmp.eq.s32.totalorder %s113, 1
      %p182 = por %p180, %p181
      %p183 = scmp.ne.s32.totalorder %s175, %s178
      %p184 = scmp.eq.s32.totalorder %s113, 0
      %p185 = por %p183, %p184
      %p186 = scmp.ne.s32.totalorder %s175, %s178
      %p187 = scmp.eq.s32.totalorder %s118, 1
      %p188 = por %p186, %p187
      %p189 = scmp.ne.s32.totalorder %s178, %s179
      %p190 = scmp.eq.s32.totalorder %s118, 0
      %p191 = por %p189, %p190
      %p192 = scmp.ne.s32.totalorder %s178, %s179
      %p193 = scmp.eq.s32.totalorder %s119, 1
      %p194 = por %p192, %p193
      %p196 = scmp.ne.s32.totalorder %s179, %s195
      %p197 = scmp.eq.s32.totalorder %s119, 0
      %p198 = por %p196, %p197
      %s199 = ssub.s32 %s113, %s120
      %p200 = scmp.eq.s32.totalorder %s199, 0
      %s202 = sadd.s32 %s201, 1
      %s203 = scalar_select %p200, %s201, %s202
      %p206 = pneg %p200
      %p207 = scmp.eq.s32.totalorder %s113, 1
      %p208 = por %p206, %p207
      %p209 = scmp.ne.s32.totalorder %s201, %s204
      %p210 = scmp.eq.s32.totalorder %s113, 0
      %p211 = por %p209, %p210
      %p212 = scmp.ne.s32.totalorder %s201, %s204
      %p213 = scmp.eq.s32.totalorder %s118, 1
      %p214 = por %p212, %p213
      %p215 = scmp.ne.s32.totalorder %s204, %s205
      %p216 = scmp.eq.s32.totalorder %s118, 0
      %p217 = por %p215, %p216
      %p218 = scmp.ne.s32.totalorder %s204, %s205
      %p219 = scmp.eq.s32.totalorder %s119, 1
      %p220 = por %p218, %p219
      %p222 = scmp.ne.s32.totalorder %s205, %s221
      %p223 = scmp.eq.s32.totalorder %s119, 0
      %p224 = por %p222, %p223
      %s226 = sadd.s32 %s225, 1
      %p229 = scmp.eq.s32.totalorder %s113, 1
      %p230 = scmp.ne.s32.totalorder %s225, %s227
      %p231 = scmp.eq.s32.totalorder %s113, 0
      %p232 = por %p230, %p231
      %p233 = scmp.ne.s32.totalorder %s225, %s227
      %p234 = scmp.eq.s32.totalorder %s118, 1
      %p235 = por %p233, %p234
      %p236 = scmp.ne.s32.totalorder %s227, %s228
      %p237 = scmp.eq.s32.totalorder %s118, 0
      %p238 = por %p236, %p237
      %p239 = scmp.ne.s32.totalorder %s227, %s228
      %p240 = scmp.eq.s32.totalorder %s119, 1
      %p241 = por %p239, %p240
      %p243 = scmp.ne.s32.totalorder %s228, %s242
      %p244 = scmp.eq.s32.totalorder %s119, 0
      %p245 = por %p243, %p244
      %s247 = sadd.s32 %s246, 1
      %p250 = scmp.eq.s32.totalorder %s113, 1
      %p251 = scmp.ne.s32.totalorder %s246, %s248
      %p252 = scmp.eq.s32.totalorder %s113, 0
      %p253 = por %p251, %p252
      %p254 = scmp.ne.s32.totalorder %s246, %s248
      %p255 = scmp.eq.s32.totalorder %s118, 1
      %p256 = por %p254, %p255
      %p257 = scmp.ne.s32.totalorder %s248, %s249
      %p258 = scmp.eq.s32.totalorder %s118, 0
      %p259 = por %p257, %p258
      %p260 = scmp.ne.s32.totalorder %s248, %s249
      %p261 = scmp.eq.s32.totalorder %s119, 1
      %p262 = por %p260, %p261
      %p264 = scmp.ne.s32.totalorder %s249, %s263
      %p265 = scmp.eq.s32.totalorder %s119, 0
      %p266 = por %p264, %p265
      %s268 = sadd.s32 %s267, 1
      %p271 = scmp.eq.s32.totalorder %s113, 1
      %p272 = scmp.ne.s32.totalorder %s267, %s269
      %p273 = scmp.eq.s32.totalorder %s113, 0
      %p274 = por %p272, %p273
      %p275 = scmp.ne.s32.totalorder %s267, %s269
      %p276 = scmp.eq.s32.totalorder %s118, 1
      %p277 = por %p275, %p276
      %p278 = scmp.ne.s32.totalorder %s269, %s270
      %p279 = scmp.eq.s32.totalorder %s118, 0
      %p280 = por %p278, %p279
      %p281 = scmp.ne.s32.totalorder %s269, %s270
      %p282 = scmp.eq.s32.totalorder %s119, 1
      %p283 = por %p281, %p282
      %p285 = scmp.ne.s32.totalorder %s270, %s284
      %p286 = scmp.eq.s32.totalorder %s119, 0
      %p287 = por %p285, %p286
      %s289 = sadd.s32 %s288, 1
      %p292 = scmp.eq.s32.totalorder %s113, 1
      %p293 = scmp.ne.s32.totalorder %s288, %s290
      %p294 = scmp.eq.s32.totalorder %s113, 0
      %p295 = por %p293, %p294
      %p296 = scmp.ne.s32.totalorder %s288, %s290
      %p297 = scmp.eq.s32.totalorder %s118, 1
      %p298 = por %p296, %p297
      %p299 = scmp.ne.s32.totalorder %s290, %s291
      %p300 = scmp.eq.s32.totalorder %s118, 0
      %p301 = por %p299, %p300
      %p302 = scmp.ne.s32.totalorder %s290, %s291
      %p303 = scmp.eq.s32.totalorder %s119, 1
      %p304 = por %p302, %p303
      %p306 = scmp.ne.s32.totalorder %s291, %s305
      %p307 = scmp.eq.s32.totalorder %s119, 0
      %p308 = por %p306, %p307
      %s310 = sadd.s32 %s309, 1
      %p313 = scmp.eq.s32.totalorder %s113, 1
      %p314 = scmp.ne.s32.totalorder %s309, %s311
      %p315 = scmp.eq.s32.totalorder %s113, 0
      %p316 = por %p314, %p315
      %p317 = scmp.ne.s32.totalorder %s309, %s311
      %p318 = scmp.eq.s32.totalorder %s118, 1
      %p319 = por %p317, %p318
      %p320 = scmp.ne.s32.totalorder %s311, %s312
      %p321 = scmp.eq.s32.totalorder %s118, 0
      %p322 = por %p320, %p321
      %p323 = scmp.ne.s32.totalorder %s311, %s312
      %p324 = scmp.eq.s32.totalorder %s119, 1
      %p325 = por %p323, %p324
      %p327 = scmp.ne.s32.totalorder %s312, %s326
      %p328 = scmp.eq.s32.totalorder %s119, 0
      %p329 = por %p327, %p328
      %s331 = sadd.s32 %s330, 1
      %p334 = scmp.eq.s32.totalorder %s113, 1
      %p335 = scmp.ne.s32.totalorder %s330, %s332
      %p336 = scmp.eq.s32.totalorder %s113, 0
      %p337 = por %p335, %p336
      %p338 = scmp.ne.s32.totalorder %s330, %s332
      %p339 = scmp.eq.s32.totalorder %s118, 1
      %p340 = por %p338, %p339
      %p341 = scmp.ne.s32.totalorder %s332, %s333
      %p342 = scmp.eq.s32.totalorder %s118, 0
      %p343 = por %p341, %p342
      %p344 = scmp.ne.s32.totalorder %s332, %s333
      %p345 = scmp.eq.s32.totalorder %s119, 1
      %p346 = por %p344, %p345
      %p348 = scmp.ne.s32.totalorder %s333, %s347
      %p349 = scmp.eq.s32.totalorder %s119, 0
      %p350 = por %p348, %p349
      %s352 = sadd.s32 %s351, 1
      %p355 = scmp.eq.s32.totalorder %s113, 1
      %p356 = scmp.ne.s32.totalorder %s351, %s353
      %p357 = scmp.eq.s32.totalorder %s113, 0
      %p358 = por %p356, %p357
      %p359 = scmp.ne.s32.totalorder %s351, %s353
      %p360 = scmp.eq.s32.totalorder %s118, 1
      %p361 = por %p359, %p360
      %p362 = scmp.ne.s32.totalorder %s353, %s354
      %p363 = scmp.eq.s32.totalorder %s118, 0
      %p364 = por %p362, %p363
      %p365 = scmp.ne.s32.totalorder %s353, %s354
      %p366 = scmp.eq.s32.totalorder %s119, 1
      %p367 = por %p365, %p366
      %p369 = scmp.ne.s32.totalorder %s354, %s368
      %p370 = scmp.eq.s32.totalorder %s119, 0
      %p371 = por %p369, %p370
      %s373 = sadd.s32 %s372, 1
      %p376 = scmp.eq.s32.totalorder %s113, 1
      %p377 = scmp.ne.s32.totalorder %s372, %s374
      %p378 = scmp.eq.s32.totalorder %s113, 0
      %p379 = por %p377, %p378
      %p380 = scmp.ne.s32.totalorder %s372, %s374
      %p381 = scmp.eq.s32.totalorder %s118, 1
      %p382 = por %p380, %p381
      %p383 = scmp.ne.s32.totalorder %s374, %s375
      %p384 = scmp.eq.s32.totalorder %s118, 0
      %p385 = por %p383, %p384
      %p386 = scmp.ne.s32.totalorder %s374, %s375
      %p387 = scmp.eq.s32.totalorder %s119, 1
      %p388 = por %p386, %p387
      %p390 = scmp.ne.s32.totalorder %s375, %s389
      %p391 = scmp.eq.s32.totalorder %s119, 0
      %p392 = por %p390, %p391
      %s394 = sadd.s32 %s393, 1
      %p397 = scmp.eq.s32.totalorder %s113, 1
      %p398 = scmp.ne.s32.totalorder %s393, %s395
      %p399 = scmp.eq.s32.totalorder %s113, 0
      %p400 = por %p398, %p399
      %p401 = scmp.ne.s32.totalorder %s393, %s395
      %p402 = scmp.eq.s32.totalorder %s118, 1
      %p403 = por %p401, %p402
      %p404 = scmp.ne.s32.totalorder %s395, %s396
      %p405 = scmp.eq.s32.totalorder %s118, 0
      %p406 = por %p404, %p405
      %p407 = scmp.ne.s32.totalorder %s395, %s396
      %p408 = scmp.eq.s32.totalorder %s119, 1
      %p409 = por %p407, %p408
      %p411 = scmp.ne.s32.totalorder %s396, %s410
      %p412 = scmp.eq.s32.totalorder %s119, 0
      %p413 = por %p411, %p412
      %s415 = sadd.s32 %s414, 1
      %p418 = scmp.eq.s32.totalorder %s113, 1
      %p419 = scmp.ne.s32.totalorder %s414, %s416
      %p420 = scmp.eq.s32.totalorder %s113, 0
      %p421 = por %p419, %p420
      %p422 = scmp.ne.s32.totalorder %s414, %s416
      %p423 = scmp.eq.s32.totalorder %s118, 1
      %p424 = por %p422, %p423
      %p425 = scmp.ne.s32.totalorder %s416, %s417
      %p426 = scmp.eq.s32.totalorder %s118, 0
      %p427 = por %p425, %p426
      %p428 = scmp.ne.s32.totalorder %s416, %s417
      %p429 = scmp.eq.s32.totalorder %s119, 1
      %p430 = por %p428, %p429
      %p432 = scmp.ne.s32.totalorder %s417, %s431
      %p433 = scmp.eq.s32.totalorder %s119, 0
      %p434 = por %p432, %p433
      %s436 = sadd.s32 %s435, 1
      %p439 = scmp.eq.s32.totalorder %s113, 1
      %p440 = scmp.ne.s32.totalorder %s435, %s437
      %p441 = scmp.eq.s32.totalorder %s113, 0
      %p442 = por %p440, %p441
      %p443 = scmp.ne.s32.totalorder %s435, %s437
      %p444 = scmp.eq.s32.totalorder %s118, 1
      %p445 = por %p443, %p444
      %p446 = scmp.ne.s32.totalorder %s437, %s438
      %p447 = scmp.eq.s32.totalorder %s118, 0
      %p448 = por %p446, %p447
      %p449 = scmp.ne.s32.totalorder %s437, %s438
      %p450 = scmp.eq.s32.totalorder %s119, 1
      %p451 = por %p449, %p450
      %p453 = scmp.ne.s32.totalorder %s438, %s452
      %p454 = scmp.eq.s32.totalorder %s119, 0
      %p455 = por %p453, %p454
      %s457 = sadd.s32 %s456, 1
      %p460 = scmp.eq.s32.totalorder %s113, 1
      %p461 = scmp.ne.s32.totalorder %s456, %s458
      %p462 = scmp.eq.s32.totalorder %s113, 0
      %p463 = por %p461, %p462
      %p464 = scmp.ne.s32.totalorder %s456, %s458
      %p465 = scmp.eq.s32.totalorder %s118, 1
      %p466 = por %p464, %p465
      %p467 = scmp.ne.s32.totalorder %s458, %s459
      %p468 = scmp.eq.s32.totalorder %s118, 0
      %p469 = por %p467, %p468
      %p470 = scmp.ne.s32.totalorder %s458, %s459
      %p471 = scmp.eq.s32.totalorder %s119, 1
      %p472 = por %p470, %p471
      %p474 = scmp.ne.s32.totalorder %s459, %s473
      %p475 = scmp.eq.s32.totalorder %s119, 0
      %p476 = por %p474, %p475
      %s478 = sadd.s32 %s477, 1
      %p481 = scmp.eq.s32.totalorder %s113, 1
      %p482 = scmp.ne.s32.totalorder %s477, %s479
      %p483 = scmp.eq.s32.totalorder %s113, 0
      %p484 = por %p482, %p483
      %p485 = scmp.ne.s32.totalorder %s477, %s479
      %p486 = scmp.eq.s32.totalorder %s118, 1
      %p487 = por %p485, %p486
      %p488 = scmp.ne.s32.totalorder %s479, %s480
      %p489 = scmp.eq.s32.totalorder %s118, 0
      %p490 = por %p488, %p489
      %p491 = scmp.ne.s32.totalorder %s479, %s480
      %p492 = scmp.eq.s32.totalorder %s119, 1
      %p493 = por %p491, %p492
      %p495 = scmp.ne.s32.totalorder %s480, %s494
      %p496 = scmp.eq.s32.totalorder %s119, 0
      %p497 = por %p495, %p496
      %s499 = sadd.s32 %s498, 1
      %p502 = scmp.eq.s32.totalorder %s113, 1
      %p503 = scmp.ne.s32.totalorder %s498, %s500
      %p504 = scmp.eq.s32.totalorder %s113, 0
      %p505 = por %p503, %p504
      %p506 = scmp.ne.s32.totalorder %s498, %s500
      %p507 = scmp.eq.s32.totalorder %s118, 1
      %p508 = por %p506, %p507
      %p509 = scmp.ne.s32.totalorder %s500, %s501
      %p510 = scmp.eq.s32.totalorder %s118, 0
      %p511 = por %p509, %p510
      %p512 = scmp.ne.s32.totalorder %s500, %s501
      %p513 = scmp.eq.s32.totalorder %s119, 1
      %p514 = por %p512, %p513
      %p516 = scmp.ne.s32.totalorder %s501, %s515
      %p517 = scmp.eq.s32.totalorder %s119, 0
      %p518 = por %p516, %p517
      %s520 = sadd.s32 %s519, 1
      %p523 = scmp.eq.s32.totalorder %s113, 1
      %p524 = scmp.ne.s32.totalorder %s519, %s521
      %p525 = scmp.eq.s32.totalorder %s113, 0
      %p526 = por %p524, %p525
      %p527 = scmp.ne.s32.totalorder %s519, %s521
      %p528 = scmp.eq.s32.totalorder %s118, 1
      %p529 = por %p527, %p528
      %p530 = scmp.ne.s32.totalorder %s521, %s522
      %p531 = scmp.eq.s32.totalorder %s118, 0
      %p532 = por %p530, %p531
      %p533 = scmp.ne.s32.totalorder %s521, %s522
      %p534 = scmp.eq.s32.totalorder %s119, 1
      %p535 = por %p533, %p534
      %p537 = scmp.ne.s32.totalorder %s522, %s536
      %p538 = scmp.eq.s32.totalorder %s119, 0
      %p539 = por %p537, %p538
      %s541 = sadd.s32 %s540, 1
      %p544 = scmp.eq.s32.totalorder %s113, 1
      %p545 = scmp.ne.s32.totalorder %s540, %s542
      %p546 = scmp.eq.s32.totalorder %s113, 0
      %p547 = por %p545, %p546
      %p548 = scmp.ne.s32.totalorder %s540, %s542
      %p549 = scmp.eq.s32.totalorder %s118, 1
      %p550 = por %p548, %p549
      %p551 = scmp.ne.s32.totalorder %s542, %s543
      %p552 = scmp.eq.s32.totalorder %s118, 0
      %p553 = por %p551, %p552
      %p554 = scmp.ne.s32.totalorder %s542, %s543
      %p555 = scmp.eq.s32.totalorder %s119, 1
      %p556 = por %p554, %p555
      %p558 = scmp.ne.s32.totalorder %s543, %s557
      %p559 = scmp.eq.s32.totalorder %s119, 0
      %p560 = por %p558, %p559
      %s562 = sadd.s32 %s561, 1
      %p565 = scmp.eq.s32.totalorder %s113, 1
      %p566 = scmp.ne.s32.totalorder %s561, %s563
      %p567 = scmp.eq.s32.totalorder %s113, 0
      %p568 = por %p566, %p567
      %p569 = scmp.ne.s32.totalorder %s561, %s563
      %p570 = scmp.eq.s32.totalorder %s118, 1
      %p571 = por %p569, %p570
      %p572 = scmp.ne.s32.totalorder %s563, %s564
      %p573 = scmp.eq.s32.totalorder %s118, 0
      %p574 = por %p572, %p573
      %p575 = scmp.ne.s32.totalorder %s563, %s564
      %p576 = scmp.eq.s32.totalorder %s119, 1
      %p577 = por %p575, %p576
      %p579 = scmp.ne.s32.totalorder %s564, %s578
      %p580 = scmp.eq.s32.totalorder %s119, 0
      %p581 = por %p579, %p580
      %s583 = sadd.s32 %s582, 1
      %p586 = scmp.eq.s32.totalorder %s113, 1
      %p587 = scmp.ne.s32.totalorder %s582, %s584
      %p588 = scmp.eq.s32.totalorder %s113, 0
      %p589 = por %p587, %p588
      %p590 = scmp.ne.s32.totalorder %s582, %s584
      %p591 = scmp.eq.s32.totalorder %s118, 1
      %p592 = por %p590, %p591
      %p593 = scmp.ne.s32.totalorder %s584, %s585
      %p594 = scmp.eq.s32.totalorder %s118, 0
      %p595 = por %p593, %p594
      %p596 = scmp.ne.s32.totalorder %s584, %s585
      %p597 = scmp.eq.s32.totalorder %s119, 1
      %p598 = por %p596, %p597
      %p600 = scmp.ne.s32.totalorder %s585, %s599
      %p601 = scmp.eq.s32.totalorder %s119, 0
      %p602 = por %p600, %p601
      %s604 = sadd.s32 %s603, 1
      %p607 = scmp.eq.s32.totalorder %s113, 1
      %p608 = scmp.ne.s32.totalorder %s603, %s605
      %p609 = scmp.eq.s32.totalorder %s113, 0
      %p610 = por %p608, %p609
      %p611 = scmp.ne.s32.totalorder %s603, %s605
      %p612 = scmp.eq.s32.totalorder %s118, 1
      %p613 = por %p611, %p612
      %p614 = scmp.ne.s32.totalorder %s605, %s606
      %p615 = scmp.eq.s32.totalorder %s118, 0
      %p616 = por %p614, %p615
      %p617 = scmp.ne.s32.totalorder %s605, %s606
      %p618 = scmp.eq.s32.totalorder %s119, 1
      %p619 = por %p617, %p618
      %p621 = scmp.ne.s32.totalorder %s606, %s620
      %p622 = scmp.eq.s32.totalorder %s119, 0
      %p623 = por %p621, %p622
      %s625 = sadd.s32 %s624, 1
      %p628 = scmp.eq.s32.totalorder %s113, 1
      %p629 = scmp.ne.s32.totalorder %s624, %s626
      %p630 = scmp.eq.s32.totalorder %s113, 0
      %p631 = por %p629, %p630
      %p632 = scmp.ne.s32.totalorder %s624, %s626
      %p633 = scmp.eq.s32.totalorder %s118, 1
      %p634 = por %p632, %p633
      %p635 = scmp.ne.s32.totalorder %s626, %s627
      %p636 = scmp.eq.s32.totalorder %s118, 0
      %p637 = por %p635, %p636
      %p638 = scmp.ne.s32.totalorder %s626, %s627
      %p639 = scmp.eq.s32.totalorder %s119, 1
      %p640 = por %p638, %p639
      %p642 = scmp.ne.s32.totalorder %s627, %s641
      %p643 = scmp.eq.s32.totalorder %s119, 0
      %p644 = por %p642, %p643
      %s646 = sadd.s32 %s645, 1
      %p649 = scmp.eq.s32.totalorder %s113, 1
      %p650 = scmp.ne.s32.totalorder %s645, %s647
      %p651 = scmp.eq.s32.totalorder %s113, 0
      %p652 = por %p650, %p651
      %p653 = scmp.ne.s32.totalorder %s645, %s647
      %p654 = scmp.eq.s32.totalorder %s118, 1
      %p655 = por %p653, %p654
      %p656 = scmp.ne.s32.totalorder %s647, %s648
      %p657 = scmp.eq.s32.totalorder %s118, 0
      %p658 = por %p656, %p657
      %p659 = scmp.ne.s32.totalorder %s647, %s648
      %p660 = scmp.eq.s32.totalorder %s119, 1
      %p661 = por %p659, %p660
      %p663 = scmp.ne.s32.totalorder %s648, %s662
      %p664 = scmp.eq.s32.totalorder %s119, 0
      %p665 = por %p663, %p664
      %s667 = sadd.s32 %s666, 1
      %p670 = scmp.eq.s32.totalorder %s113, 1
      %p671 = scmp.ne.s32.totalorder %s666, %s668
      %p672 = scmp.eq.s32.totalorder %s113, 0
      %p673 = por %p671, %p672
      %p674 = scmp.ne.s32.totalorder %s666, %s668
      %p675 = scmp.eq.s32.totalorder %s118, 1
      %p676 = por %p674, %p675
      %p677 = scmp.ne.s32.totalorder %s668, %s669
      %p678 = scmp.eq.s32.totalorder %s118, 0
      %p679 = por %p677, %p678
      %p680 = scmp.ne.s32.totalorder %s668, %s669
      %p681 = scmp.eq.s32.totalorder %s119, 1
      %p682 = por %p680, %p681
      %p684 = scmp.ne.s32.totalorder %s669, %s683
      %p685 = scmp.eq.s32.totalorder %s119, 0
      %p686 = por %p684, %p685
      %s688 = sadd.s32 %s687, 1
      %p691 = scmp.eq.s32.totalorder %s113, 1
      %p692 = scmp.ne.s32.totalorder %s687, %s689
      %p693 = scmp.eq.s32.totalorder %s113, 0
      %p694 = por %p692, %p693
      %p695 = scmp.ne.s32.totalorder %s687, %s689
      %p696 = scmp.eq.s32.totalorder %s118, 1
      %p697 = por %p695, %p696
      %p698 = scmp.ne.s32.totalorder %s689, %s690
      %p699 = scmp.eq.s32.totalorder %s118, 0
      %p700 = por %p698, %p699
      %p701 = scmp.ne.s32.totalorder %s689, %s690
      %p702 = scmp.eq.s32.totalorder %s119, 1
      %p703 = por %p701, %p702
      %p705 = scmp.ne.s32.totalorder %s690, %s704
      %p706 = scmp.eq.s32.totalorder %s119, 0
      %p707 = por %p705, %p706
      %s709 = sadd.s32 %s708, 1
      %p712 = scmp.eq.s32.totalorder %s113, 1
      %p713 = scmp.ne.s32.totalorder %s708, %s710
      %p714 = scmp.eq.s32.totalorder %s113, 0
      %p715 = por %p713, %p714
      %p716 = scmp.ne.s32.totalorder %s708, %s710
      %p717 = scmp.eq.s32.totalorder %s118, 1
      %p718 = por %p716, %p717
      %p719 = scmp.ne.s32.totalorder %s710, %s711
      %p720 = scmp.eq.s32.totalorder %s118, 0
      %p721 = por %p719, %p720
      %p722 = scmp.ne.s32.totalorder %s710, %s711
      %p723 = scmp.eq.s32.totalorder %s119, 1
      %p724 = por %p722, %p723
      %p726 = scmp.ne.s32.totalorder %s711, %s725
      %p727 = scmp.eq.s32.totalorder %s119, 0
      %p728 = por %p726, %p727
      %s730 = sadd.s32 %s729, 1
      %p733 = scmp.eq.s32.totalorder %s113, 1
      %p734 = scmp.ne.s32.totalorder %s729, %s731
      %p735 = scmp.eq.s32.totalorder %s113, 0
      %p736 = por %p734, %p735
      %p737 = scmp.ne.s32.totalorder %s729, %s731
      %p738 = scmp.eq.s32.totalorder %s118, 1
      %p739 = por %p737, %p738
      %p740 = scmp.ne.s32.totalorder %s731, %s732
      %p741 = scmp.eq.s32.totalorder %s118, 0
      %p742 = por %p740, %p741
      %p743 = scmp.ne.s32.totalorder %s731, %s732
      %p744 = scmp.eq.s32.totalorder %s119, 1
      %p745 = por %p743, %p744
      %p747 = scmp.ne.s32.totalorder %s732, %s746
      %p748 = scmp.eq.s32.totalorder %s119, 0
      %p749 = por %p747, %p748
      %s751 = sadd.s32 %s750, 1
      %p754 = scmp.eq.s32.totalorder %s113, 1
      %p755 = scmp.ne.s32.totalorder %s750, %s752
      %p756 = scmp.eq.s32.totalorder %s113, 0
      %p757 = por %p755, %p756
      %p758 = scmp.ne.s32.totalorder %s750, %s752
      %p759 = scmp.eq.s32.totalorder %s118, 1
      %p760 = por %p758, %p759
      %p761 = scmp.ne.s32.totalorder %s752, %s753
      %p762 = scmp.eq.s32.totalorder %s118, 0
      %p763 = por %p761, %p762
      %p764 = scmp.ne.s32.totalorder %s752, %s753
      %p765 = scmp.eq.s32.totalorder %s119, 1
      %p766 = por %p764, %p765
      %p768 = scmp.ne.s32.totalorder %s753, %s767
      %p769 = scmp.eq.s32.totalorder %s119, 0
      %p770 = por %p768, %p769
      %s772 = sadd.s32 %s771, 1
      %p775 = scmp.eq.s32.totalorder %s113, 1
      %p776 = scmp.ne.s32.totalorder %s771, %s773
      %p777 = scmp.eq.s32.totalorder %s113, 0
      %p778 = por %p776, %p777
      %p779 = scmp.ne.s32.totalorder %s771, %s773
      %p780 = scmp.eq.s32.totalorder %s118, 1
      %p781 = por %p779, %p780
      %p782 = scmp.ne.s32.totalorder %s773, %s774
      %p783 = scmp.eq.s32.totalorder %s118, 0
      %p784 = por %p782, %p783
      %p785 = scmp.ne.s32.totalorder %s773, %s774
      %p786 = scmp.eq.s32.totalorder %s119, 1
      %p787 = por %p785, %p786
      %p789 = scmp.ne.s32.totalorder %s774, %s788
      %p790 = scmp.eq.s32.totalorder %s119, 0
      %p791 = por %p789, %p790
      %s793 = sadd.s32 %s792, 1
      %p796 = scmp.eq.s32.totalorder %s113, 1
      %p797 = scmp.ne.s32.totalorder %s792, %s794
      %p798 = scmp.eq.s32.totalorder %s113, 0
      %p799 = por %p797, %p798
      %p800 = scmp.ne.s32.totalorder %s792, %s794
      %p801 = scmp.eq.s32.totalorder %s118, 1
      %p802 = por %p800, %p801
      %p803 = scmp.ne.s32.totalorder %s794, %s795
      %p804 = scmp.eq.s32.totalorder %s118, 0
      %p805 = por %p803, %p804
      %p806 = scmp.ne.s32.totalorder %s794, %s795
      %p807 = scmp.eq.s32.totalorder %s119, 1
      %p808 = por %p806, %p807
      %p810 = scmp.ne.s32.totalorder %s795, %s809
      %p811 = scmp.eq.s32.totalorder %s119, 0
      %p812 = por %p810, %p811
      %s814 = sadd.s32 %s813, 1
      %p817 = scmp.eq.s32.totalorder %s113, 1
      %p818 = scmp.ne.s32.totalorder %s813, %s815
      %p819 = scmp.eq.s32.totalorder %s113, 0
      %p820 = por %p818, %p819
      %p821 = scmp.ne.s32.totalorder %s813, %s815
      %p822 = scmp.eq.s32.totalorder %s118, 1
      %p823 = por %p821, %p822
      %p824 = scmp.ne.s32.totalorder %s815, %s816
      %p825 = scmp.eq.s32.totalorder %s118, 0
      %p826 = por %p824, %p825
      %p827 = scmp.ne.s32.totalorder %s815, %s816
      %p828 = scmp.eq.s32.totalorder %s119, 1
      %p829 = por %p827, %p828
      %p831 = scmp.ne.s32.totalorder %s816, %s830
      %p832 = scmp.eq.s32.totalorder %s119, 0
      %p833 = por %p831, %p832
      %s835 = sadd.s32 %s834, 1
      %p838 = scmp.eq.s32.totalorder %s113, 1
      %p839 = scmp.ne.s32.totalorder %s834, %s836
      %p840 = scmp.eq.s32.totalorder %s113, 0
      %p841 = por %p839, %p840
      %p842 = scmp.ne.s32.totalorder %s834, %s836
      %p843 = scmp.eq.s32.totalorder %s118, 1
      %p844 = por %p842, %p843
      %p845 = scmp.ne.s32.totalorder %s836, %s837
      %p846 = scmp.eq.s32.totalorder %s118, 0
      %p847 = por %p845, %p846
      %p848 = scmp.ne.s32.totalorder %s836, %s837
      %p849 = scmp.eq.s32.totalorder %s119, 1
      %p850 = por %p848, %p849
      %p852 = scmp.ne.s32.totalorder %s837, %s851
      %p853 = scmp.eq.s32.totalorder %s119, 0
      %p854 = por %p852, %p853
      %s856 = sadd.s32 %s855, 1
      %p859 = scmp.eq.s32.totalorder %s113, 1
      %p860 = scmp.ne.s32.totalorder %s855, %s857
      %p861 = scmp.eq.s32.totalorder %s113, 0
      %p862 = por %p860, %p861
      %p863 = scmp.ne.s32.totalorder %s855, %s857
      %p864 = scmp.eq.s32.totalorder %s118, 1
      %p865 = por %p863, %p864
      %p866 = scmp.ne.s32.totalorder %s857, %s858
      %p867 = scmp.eq.s32.totalorder %s118, 0
      %p868 = por %p866, %p867
      %p869 = scmp.ne.s32.totalorder %s857, %s858
      %p870 = scmp.eq.s32.totalorder %s119, 1
      %p871 = por %p869, %p870
      %p873 = scmp.ne.s32.totalorder %s858, %s872
      %p874 = scmp.eq.s32.totalorder %s119, 0
      %p875 = por %p873, %p874
      %s877 = sadd.s32 %s876, 1
      %p880 = scmp.eq.s32.totalorder %s113, 1
      %p881 = scmp.ne.s32.totalorder %s876, %s878
      %p882 = scmp.eq.s32.totalorder %s113, 0
      %p883 = por %p881, %p882
      %p884 = scmp.ne.s32.totalorder %s876, %s878
      %p885 = scmp.eq.s32.totalorder %s118, 1
      %p886 = por %p884, %p885
      %p887 = scmp.ne.s32.totalorder %s878, %s879
      %p888 = scmp.eq.s32.totalorder %s118, 0
      %p889 = por %p887, %p888
      %p890 = scmp.ne.s32.totalorder %s878, %s879
      %p891 = scmp.eq.s32.totalorder %s119, 1
      %p892 = por %p890, %p891
      %p894 = scmp.ne.s32.totalorder %s879, %s893
      %p895 = scmp.eq.s32.totalorder %s119, 0
      %p896 = por %p894, %p895
      %s898 = sadd.s32 %s897, 1
      %p901 = scmp.eq.s32.totalorder %s113, 1
      %p902 = scmp.ne.s32.totalorder %s897, %s899
      %p903 = scmp.eq.s32.totalorder %s113, 0
      %p904 = por %p902, %p903
      %p905 = scmp.ne.s32.totalorder %s897, %s899
      %p906 = scmp.eq.s32.totalorder %s118, 1
      %p907 = por %p905, %p906
      %p908 = scmp.ne.s32.totalorder %s899, %s900
      %p909 = scmp.eq.s32.totalorder %s118, 0
      %p910 = por %p908, %p909
      %p911 = scmp.ne.s32.totalorder %s899, %s900
      %p912 = scmp.eq.s32.totalorder %s119, 1
      %p913 = por %p911, %p912
      %p915 = scmp.ne.s32.totalorder %s900, %s914
      %p916 = scmp.eq.s32.totalorder %s119, 0
      %p917 = por %p915, %p916
      %s919 = sadd.s32 %s918, 1
      %p922 = scmp.eq.s32.totalorder %s113, 1
      %p923 = scmp.ne.s32.totalorder %s918, %s920
      %p924 = scmp.eq.s32.totalorder %s113, 0
      %p925 = por %p923, %p924
      %p926 = scmp.ne.s32.totalorder %s918, %s920
      %p927 = scmp.eq.s32.totalorder %s118, 1
      %p928 = por %p926, %p927
      %p929 = scmp.ne.s32.totalorder %s920, %s921
      %p930 = scmp.eq.s32.totalorder %s118, 0
      %p931 = por %p929, %p930
      %p932 = scmp.ne.s32.totalorder %s920, %s921
      %p933 = scmp.eq.s32.totalorder %s119, 1
      %p934 = por %p932, %p933
      %p936 = scmp.ne.s32.totalorder %s921, %s935
      %p937 = scmp.eq.s32.totalorder %s119, 0
      %p938 = por %p936, %p937
      %s940 = sadd.s32 %s939, 1
      %p943 = scmp.eq.s32.totalorder %s113, 1
      %p944 = scmp.ne.s32.totalorder %s939, %s941
      %p945 = scmp.eq.s32.totalorder %s113, 0
      %p946 = por %p944, %p945
      %p947 = scmp.ne.s32.totalorder %s939, %s941
      %p948 = scmp.eq.s32.totalorder %s118, 1
      %p949 = por %p947, %p948
      %p950 = scmp.ne.s32.totalorder %s941, %s942
      %p951 = scmp.eq.s32.totalorder %s118, 0
      %p952 = por %p950, %p951
      %p953 = scmp.ne.s32.totalorder %s941, %s942
      %p954 = scmp.eq.s32.totalorder %s119, 1
      %p955 = por %p953, %p954
      %p957 = scmp.ne.s32.totalorder %s942, %s956
      %p958 = scmp.eq.s32.totalorder %s119, 0
      %p959 = por %p957, %p958
      %s961 = sadd.s32 %s960, 1
      %p964 = scmp.eq.s32.totalorder %s113, 1
      %p965 = scmp.ne.s32.totalorder %s960, %s962
      %p966 = scmp.eq.s32.totalorder %s113, 0
      %p967 = por %p965, %p966
      %p968 = scmp.ne.s32.totalorder %s960, %s962
      %p969 = scmp.eq.s32.totalorder %s118, 1
      %p970 = por %p968, %p969
      %p971 = scmp.ne.s32.totalorder %s962, %s963
      %p972 = scmp.eq.s32.totalorder %s118, 0
      %p973 = por %p971, %p972
      %p974 = scmp.ne.s32.totalorder %s962, %s963
      %p975 = scmp.eq.s32.totalorder %s119, 1
      %p976 = por %p974, %p975
      %p978 = scmp.ne.s32.totalorder %s963, %s977
      %p979 = scmp.eq.s32.totalorder %s119, 0
      %p980 = por %p978, %p979
      %s982 = sadd.s32 %s981, 1
      %p985 = scmp.eq.s32.totalorder %s113, 1
      %p986 = scmp.ne.s32.totalorder %s981, %s983
      %p987 = scmp.eq.s32.totalorder %s113, 0
      %p988 = por %p986, %p987
      %p989 = scmp.ne.s32.totalorder %s981, %s983
      %p990 = scmp.eq.s32.totalorder %s118, 1
      %p991 = por %p989, %p990
      %p992 = scmp.ne.s32.totalorder %s983, %s984
      %p993 = scmp.eq.s32.totalorder %s118, 0
      %p994 = por %p992, %p993
      %p995 = scmp.ne.s32.totalorder %s983, %s984
      %p996 = scmp.eq.s32.totalorder %s119, 1
      %p997 = por %p995, %p996
      %p999 = scmp.ne.s32.totalorder %s984, %s998
      %p1000 = scmp.eq.s32.totalorder %s119, 0
      %p1001 = por %p999, %p1000
      %s1003 = sadd.s32 %s1002, 1
      %p1006 = scmp.eq.s32.totalorder %s113, 1
      %p1007 = scmp.ne.s32.totalorder %s1002, %s1004
      %p1008 = scmp.eq.s32.totalorder %s113, 0
      %p1009 = por %p1007, %p1008
      %p1010 = scmp.ne.s32.totalorder %s1002, %s1004
      %p1011 = scmp.eq.s32.totalorder %s118, 1
      %p1012 = por %p1010, %p1011
      %p1013 = scmp.ne.s32.totalorder %s1004, %s1005
      %p1014 = scmp.eq.s32.totalorder %s118, 0
      %p1015 = por %p1013, %p1014
      %p1016 = scmp.ne.s32.totalorder %s1004, %s1005
      %p1017 = scmp.eq.s32.totalorder %s119, 1
      %p1018 = por %p1016, %p1017
      %p1020 = scmp.ne.s32.totalorder %s1005, %s1019
      %p1021 = scmp.eq.s32.totalorder %s119, 0
      %p1022 = por %p1020, %p1021
      %s1024 = sadd.s32 %s1023, 1
      %p1027 = scmp.eq.s32.totalorder %s113, 1
      %p1028 = scmp.ne.s32.totalorder %s1023, %s1025
      %p1029 = scmp.eq.s32.totalorder %s113, 0
      %p1030 = por %p1028, %p1029
      %p1031 = scmp.ne.s32.totalorder %s1023, %s1025
      %p1032 = scmp.eq.s32.totalorder %s118, 1
      %p1033 = por %p1031, %p1032
      %p1034 = scmp.ne.s32.totalorder %s1025, %s1026
      %p1035 = scmp.eq.s32.totalorder %s118, 0
      %p1036 = por %p1034, %p1035
      %p1037 = scmp.ne.s32.totalorder %s1025, %s1026
      %p1038 = scmp.eq.s32.totalorder %s119, 1
      %p1039 = por %p1037, %p1038
      %p1041 = scmp.ne.s32.totalorder %s1026, %s1040
      %p1042 = scmp.eq.s32.totalorder %s119, 0
      %p1043 = por %p1041, %p1042
      %s1045 = sadd.s32 %s1044, 1
      %p1048 = scmp.eq.s32.totalorder %s113, 1
      %p1049 = scmp.ne.s32.totalorder %s1044, %s1046
      %p1050 = scmp.eq.s32.totalorder %s113, 0
      %p1051 = por %p1049, %p1050
      %p1052 = scmp.ne.s32.totalorder %s1044, %s1046
      %p1053 = scmp.eq.s32.totalorder %s118, 1
      %p1054 = por %p1052, %p1053
      %p1055 = scmp.ne.s32.totalorder %s1046, %s1047
      %p1056 = scmp.eq.s32.totalorder %s118, 0
      %p1057 = por %p1055, %p1056
      %p1058 = scmp.ne.s32.totalorder %s1046, %s1047
      %p1059 = scmp.eq.s32.totalorder %s119, 1
      %p1060 = por %p1058, %p1059
      %p1062 = scmp.ne.s32.totalorder %s1047, %s1061
      %p1063 = scmp.eq.s32.totalorder %s119, 0
      %p1064 = por %p1062, %p1063
      %s1066 = sadd.s32 %s1065, 1
      %p1069 = scmp.eq.s32.totalorder %s113, 1
      %p1070 = scmp.ne.s32.totalorder %s1065, %s1067
      %p1071 = scmp.eq.s32.totalorder %s113, 0
      %p1072 = por %p1070, %p1071
      %p1073 = scmp.ne.s32.totalorder %s1065, %s1067
      %p1074 = scmp.eq.s32.totalorder %s118, 1
      %p1075 = por %p1073, %p1074
      %p1076 = scmp.ne.s32.totalorder %s1067, %s1068
      %p1077 = scmp.eq.s32.totalorder %s118, 0
      %p1078 = por %p1076, %p1077
      %p1079 = scmp.ne.s32.totalorder %s1067, %s1068
      %p1080 = scmp.eq.s32.totalorder %s119, 1
      %p1081 = por %p1079, %p1080
      %p1083 = scmp.ne.s32.totalorder %s1068, %s1082
      %p1084 = scmp.eq.s32.totalorder %s119, 0
      %p1085 = por %p1083, %p1084
      %s1086 = ssub.s32 %s113, %s120
      %p1087 = scmp.eq.s32.totalorder %s1086, 0
      %s1089 = sadd.s32 %s1088, 1
      %s1090 = scalar_select %p1087, %s1088, %s1089
      %p1093 = pneg %p1087
      %p1094 = scmp.eq.s32.totalorder %s113, 1
      %p1095 = por %p1093, %p1094
      %p1096 = scmp.ne.s32.totalorder %s1088, %s1091
      %p1097 = scmp.eq.s32.totalorder %s113, 0
      %p1098 = por %p1096, %p1097
      %p1099 = scmp.ne.s32.totalorder %s1088, %s1091
      %p1100 = scmp.eq.s32.totalorder %s118, 1
      %p1101 = por %p1099, %p1100
      %p1102 = scmp.ne.s32.totalorder %s1091, %s1092
      %p1103 = scmp.eq.s32.totalorder %s118, 0
      %p1104 = por %p1102, %p1103
      %p1105 = scmp.ne.s32.totalorder %s1091, %s1092
      %p1106 = scmp.eq.s32.totalorder %s119, 1
      %p1107 = por %p1105, %p1106
      %p1109 = scmp.ne.s32.totalorder %s1092, %s1108
      %p1110 = scmp.eq.s32.totalorder %s119, 0
      %p1111 = por %p1109, %p1110
      %p1112 = scmp.le.s32.totalorder 1, %s113
      %p1113 = scmp.lt.s32.totalorder %s113, 3
      %p1114 = pnand %p1112, %p1113
      %p1115 = pneg %p1114
      // Predicated region
      $region9: #{transformer_forward.1} parent=5 // pred_check
        _
      $region10: #{transformer_forward.1} parent=5 // pred_check_branch
        %1117 = sbr.rel (%p1114) target = $region12
      $region11: #{transformer_forward.1} parent=5 // pred_region
        %s1118 = ssub.s32 %s113, 1
        // Predicated region
        $region13: #{transformer_forward.1} parent=11 // pred_check
          %p1119 = pneg %p238
        $region14: #{transformer_forward.1} parent=11 // pred_check_branch
          %1121 = sbr.rel (%p1119) target = $region16
        $region15: #{transformer_forward.1} parent=11 // pred_region
          _
        $region16: #{transformer_forward.1} parent=11 // pred_fallthru
          _
        // Predicated region
        $region17: #{transformer_forward.1} parent=11 // pred_check
          %p1122 = pneg %p259
        $region18: #{transformer_forward.1} parent=11 // pred_check_branch
          %1124 = sbr.rel (%p1122) target = $region20
        $region19: #{transformer_forward.1} parent=11 // pred_region
          _
        $region20: #{transformer_forward.1} parent=11 // pred_fallthru
          _
        // Predicated region
        $region21: #{transformer_forward.1} parent=11 // pred_check
          %p1125 = pneg %p280
        $region22: #{transformer_forward.1} parent=11 // pred_check_branch
          %1127 = sbr.rel (%p1125) target = $region24
        $region23: #{transformer_forward.1} parent=11 // pred_region
          _
        $region24: #{transformer_forward.1} parent=11 // pred_fallthru
          _
        // Predicated region
        $region25: #{transformer_forward.1} parent=11 // pred_check
          %p1128 = pneg %p301
        $region26: #{transformer_forward.1} parent=11 // pred_check_branch
          %1130 = sbr.rel (%p1128) target = $region28
        $region27: #{transformer_forward.1} parent=11 // pred_region
          _
        $region28: #{transformer_forward.1} parent=11 // pred_fallthru
          _
        // Predicated region
        $region29: #{transformer_forward.1} parent=11 // pred_check
          %p1131 = pneg %p322
        $region30: #{transformer_forward.1} parent=11 // pred_check_branch
          %1133 = sbr.rel (%p1131) target = $region32
        $region31: #{transformer_forward.1} parent=11 // pred_region
          _
        $region32: #{transformer_forward.1} parent=11 // pred_fallthru
          _
        // Predicated region
        $region33: #{transformer_forward.1} parent=11 // pred_check
          %p1134 = pneg %p343
        $region34: #{transformer_forward.1} parent=11 // pred_check_branch
          %1136 = sbr.rel (%p1134) target = $region36
        $region35: #{transformer_forward.1} parent=11 // pred_region
          _
        $region36: #{transformer_forward.1} parent=11 // pred_fallthru
          _
        // Predicated region
        $region37: #{transformer_forward.1} parent=11 // pred_check
          %p1137 = pneg %p364
        $region38: #{transformer_forward.1} parent=11 // pred_check_branch
          %1139 = sbr.rel (%p1137) target = $region40
        $region39: #{transformer_forward.1} parent=11 // pred_region
          _
        $region40: #{transformer_forward.1} parent=11 // pred_fallthru
          _
        // Predicated region
        $region41: #{transformer_forward.1} parent=11 // pred_check
          %p1140 = pneg %p385
        $region42: #{transformer_forward.1} parent=11 // pred_check_branch
          %1142 = sbr.rel (%p1140) target = $region44
        $region43: #{transformer_forward.1} parent=11 // pred_region
          %s1144 = ssub.s32 32, 32
          %1145 = vsyncadd [#allocation3], %s1144
          %s1146 = sshll.u32 [#allocation2], 4
          %s1147 = int_to_ptr.vmem [resolvable:$true] %s1146
          %1152 = dma.hbm_to_vmem [thread:$0]  %s23, 32, %s1147, [#allocation3], 16, 16, 1
        $region44: #{transformer_forward.1} parent=11 // pred_fallthru
          _
        // Predicated region
        $region45: #{transformer_forward.1} parent=11 // pred_check
          %p1153 = pneg %p406
        $region46: #{transformer_forward.1} parent=11 // pred_check_branch
          %1155 = sbr.rel (%p1153) target = $region48
        $region47: #{transformer_forward.1} parent=11 // pred_region
          %s1157 = ssub.s32 32, 32
          %1158 = vsyncadd [#allocation6], %s1157
          %s1159 = sshll.u32 [#allocation5], 4
          %s1160 = int_to_ptr.vmem [resolvable:$true] %s1159
          %1165 = dma.hbm_to_vmem [thread:$0]  %s25, 32, %s1160, [#allocation6], 16, 16, 1
        $region48: #{transformer_forward.1} parent=11 // pred_fallthru
          _
        // Predicated region
        $region49: #{transformer_forward.1} parent=11 // pred_check
          %p1166 = pneg %p427
        $region50: #{transformer_forward.1} parent=11 // pred_check_branch
          %1168 = sbr.rel (%p1166) target = $region52
        $region51: #{transformer_forward.1} parent=11 // pred_region
          _
        $region52: #{transformer_forward.1} parent=11 // pred_fallthru
          _
        // Predicated region
        $region53: #{transformer_forward.1} parent=11 // pred_check
          %p1169 = pneg %p448
        $region54: #{transformer_forward.1} parent=11 // pred_check_branch
          %1171 = sbr.rel (%p1169) target = $region56
        $region55: #{transformer_forward.1} parent=11 // pred_region
          %s1173 = ssub.s32 32, 32
          %1174 = vsyncadd [#allocation6], %s1173
          %s1175 = sshll.u32 [#allocation7], 4
          %s1176 = int_to_ptr.vmem [resolvable:$true] %s1175
          %1181 = dma.hbm_to_vmem [thread:$0]  %s29, 32, %s1176, [#allocation6], 16, 16, 1
        $region56: #{transformer_forward.1} parent=11 // pred_fallthru
          _
        // Predicated region
        $region57: #{transformer_forward.1} parent=11 // pred_check
          %p1182 = pneg %p469
        $region58: #{transformer_forward.1} parent=11 // pred_check_branch
          %1184 = sbr.rel (%p1182) target = $region60
        $region59: #{transformer_forward.1} parent=11 // pred_region
          _
        $region60: #{transformer_forward.1} parent=11 // pred_fallthru
          _
        // Predicated region
        $region61: #{transformer_forward.1} parent=11 // pred_check
          %p1185 = pneg %p490
        $region62: #{transformer_forward.1} parent=11 // pred_check_branch
          %1187 = sbr.rel (%p1185) target = $region64
        $region63: #{transformer_forward.1} parent=11 // pred_region
          %s1189 = ssub.s32 32, 32
          %1190 = vsyncadd [#allocation9], %s1189
          %s1191 = sshll.u32 [#allocation8], 4
          %s1192 = int_to_ptr.vmem [resolvable:$true] %s1191
          %1197 = dma.hbm_to_vmem [thread:$0]  %s33, 32, %s1192, [#allocation9], 16, 16, 1
        $region64: #{transformer_forward.1} parent=11 // pred_fallthru
          _
        // Predicated region
        $region65: #{transformer_forward.1} parent=11 // pred_check
          %p1198 = pneg %p511
        $region66: #{transformer_forward.1} parent=11 // pred_check_branch
          %1200 = sbr.rel (%p1198) target = $region68
        $region67: #{transformer_forward.1} parent=11 // pred_region
          %s1202 = ssub.s32 32, 32
          %1203 = vsyncadd [#allocation9], %s1202
          %s1204 = sshll.u32 [#allocation10], 4
          %s1205 = int_to_ptr.vmem [resolvable:$true] %s1204
          %1210 = dma.hbm_to_vmem [thread:$0]  %s35, 32, %s1205, [#allocation9], 16, 16, 1
        $region68: #{transformer_forward.1} parent=11 // pred_fallthru
          _
        // Predicated region
        $region69: #{transformer_forward.1} parent=11 // pred_check
          %p1211 = pneg %p532
        $region70: #{transformer_forward.1} parent=11 // pred_check_branch
          %1213 = sbr.rel (%p1211) target = $region72
        $region71: #{transformer_forward.1} parent=11 // pred_region
          %s1215 = ssub.s32 32, 32
          %1216 = vsyncadd [#allocation12], %s1215
          %s1217 = sshll.u32 [#allocation11], 4
          %s1218 = int_to_ptr.vmem [resolvable:$true] %s1217
          %1223 = dma.hbm_to_vmem [thread:$0]  %s37, 32, %s1218, [#allocation12], 16, 16, 1
        $region72: #{transformer_forward.1} parent=11 // pred_fallthru
          _
        // Predicated region
        $region73: #{transformer_forward.1} parent=11 // pred_check
          %p1224 = pneg %p553
        $region74: #{transformer_forward.1} parent=11 // pred_check_branch
          %1226 = sbr.rel (%p1224) target = $region76
        $region75: #{transformer_forward.1} parent=11 // pred_region
          %s1228 = ssub.s32 16, 16
          %1229 = vsyncadd [#allocation12], %s1228
          %s1231 = sshll.u32 [#allocation13], 4
          %s1232 = int_to_ptr.vmem [resolvable:$true] %s1231
          %1234 = dma.hbm_to_vmem [thread:$0]  %s39, 16, %s1232, [#allocation12]
        $region76: #{transformer_forward.1} parent=11 // pred_fallthru
          _
        // Predicated region
        $region77: #{transformer_forward.1} parent=11 // pred_check
          %p1235 = pneg %p574
        $region78: #{transformer_forward.1} parent=11 // pred_check_branch
          %1237 = sbr.rel (%p1235) target = $region80
        $region79: #{transformer_forward.1} parent=11 // pred_region
          %s1239 = ssub.s32 16, 16
          %1240 = vsyncadd [#allocation15], %s1239
          %s1242 = sshll.u32 [#allocation14], 4
          %s1243 = int_to_ptr.vmem [resolvable:$true] %s1242
          %1245 = dma.hbm_to_vmem [thread:$0]  %s41, 16, %s1243, [#allocation15]
        $region80: #{transformer_forward.1} parent=11 // pred_fallthru
          _
        // Predicated region
        $region81: #{transformer_forward.1} parent=11 // pred_check
          %p1246 = pneg %p595
        $region82: #{transformer_forward.1} parent=11 // pred_check_branch
          %1248 = sbr.rel (%p1246) target = $region84
        $region83: #{transformer_forward.1} parent=11 // pred_region
          _
        $region84: #{transformer_forward.1} parent=11 // pred_fallthru
          _
        // Predicated region
        $region85: #{transformer_forward.1} parent=11 // pred_check
          %p1249 = pneg %p616
        $region86: #{transformer_forward.1} parent=11 // pred_check_branch
          %1251 = sbr.rel (%p1249) target = $region88
        $region87: #{transformer_forward.1} parent=11 // pred_region
          %s1253 = ssub.s32 32, 32
          %1254 = vsyncadd [#allocation15], %s1253
          %s1255 = sshll.u32 [#allocation16], 4
          %s1256 = int_to_ptr.vmem [resolvable:$true] %s1255
          %1261 = dma.hbm_to_vmem [thread:$0]  %s45, 32, %s1256, [#allocation15], 16, 16, 1
        $region88: #{transformer_forward.1} parent=11 // pred_fallthru
          _
        // Predicated region
        $region89: #{transformer_forward.1} parent=11 // pred_check
          %p1262 = pneg %p637
        $region90: #{transformer_forward.1} parent=11 // pred_check_branch
          %1264 = sbr.rel (%p1262) target = $region92
        $region91: #{transformer_forward.1} parent=11 // pred_region
          _
        $region92: #{transformer_forward.1} parent=11 // pred_fallthru
          _
        // Predicated region
        $region93: #{transformer_forward.1} parent=11 // pred_check
          %p1265 = pneg %p658
        $region94: #{transformer_forward.1} parent=11 // pred_check_branch
          %1267 = sbr.rel (%p1265) target = $region96
        $region95: #{transformer_forward.1} parent=11 // pred_region
          %s1269 = ssub.s32 32, 32
          %1270 = vsyncadd [#allocation18], %s1269
          %s1271 = sshll.u32 [#allocation17], 4
          %s1272 = int_to_ptr.vmem [resolvable:$true] %s1271
          %1277 = dma.hbm_to_vmem [thread:$0]  %s49, 32, %s1272, [#allocation18], 16, 16, 1
        $region96: #{transformer_forward.1} parent=11 // pred_fallthru
          _
        // Predicated region
        $region97: #{transformer_forward.1} parent=11 // pred_check
          %p1278 = pneg %p679
        $region98: #{transformer_forward.1} parent=11 // pred_check_branch
          %1280 = sbr.rel (%p1278) target = $region100
        $region99: #{transformer_forward.1} parent=11 // pred_region
          %s1282 = ssub.s32 32, 32
          %1283 = vsyncadd [#allocation18], %s1282
          %s1284 = sshll.u32 [#allocation19], 4
          %s1285 = int_to_ptr.vmem [resolvable:$true] %s1284
          %1290 = dma.hbm_to_vmem [thread:$0]  %s51, 32, %s1285, [#allocation18], 16, 16, 1
        $region100: #{transformer_forward.1} parent=11 // pred_fallthru
          _
        // Predicated region
        $region101: #{transformer_forward.1} parent=11 // pred_check
          %p1291 = pneg %p700
        $region102: #{transformer_forward.1} parent=11 // pred_check_branch
          %1293 = sbr.rel (%p1291) target = $region104
        $region103: #{transformer_forward.1} parent=11 // pred_region
          %s1295 = ssub.s32 32, 32
          %1296 = vsyncadd [#allocation21], %s1295
          %s1297 = sshll.u32 [#allocation20], 4
          %s1298 = int_to_ptr.vmem [resolvable:$true] %s1297
          %1303 = dma.hbm_to_vmem [thread:$0]  %s53, 32, %s1298, [#allocation21], 16, 16, 1
        $region104: #{transformer_forward.1} parent=11 // pred_fallthru
          _
        // Predicated region
        $region105: #{transformer_forward.1} parent=11 // pred_check
          %p1304 = pneg %p721
        $region106: #{transformer_forward.1} parent=11 // pred_check_branch
          %1306 = sbr.rel (%p1304) target = $region108
        $region107: #{transformer_forward.1} parent=11 // pred_region
          _
        $region108: #{transformer_forward.1} parent=11 // pred_fallthru
          _
        // Predicated region
        $region109: #{transformer_forward.1} parent=11 // pred_check
          %p1307 = pneg %p742
        $region110: #{transformer_forward.1} parent=11 // pred_check_branch
          %1309 = sbr.rel (%p1307) target = $region112
        $region111: #{transformer_forward.1} parent=11 // pred_region
          %s1311 = ssub.s32 32, 32
          %1312 = vsyncadd [#allocation21], %s1311
          %s1313 = sshll.u32 [#allocation22], 4
          %s1314 = int_to_ptr.vmem [resolvable:$true] %s1313
          %1319 = dma.hbm_to_vmem [thread:$0]  %s57, 32, %s1314, [#allocation21], 16, 16, 1
        $region112: #{transformer_forward.1} parent=11 // pred_fallthru
          _
        // Predicated region
        $region113: #{transformer_forward.1} parent=11 // pred_check
          %p1320 = pneg %p763
        $region114: #{transformer_forward.1} parent=11 // pred_check_branch
          %1322 = sbr.rel (%p1320) target = $region116
        $region115: #{transformer_forward.1} parent=11 // pred_region
          _
        $region116: #{transformer_forward.1} parent=11 // pred_fallthru
          _
        // Predicated region
        $region117: #{transformer_forward.1} parent=11 // pred_check
          %p1323 = pneg %p784
        $region118: #{transformer_forward.1} parent=11 // pred_check_branch
          %1325 = sbr.rel (%p1323) target = $region120
        $region119: #{transformer_forward.1} parent=11 // pred_region
          %s1327 = ssub.s32 32, 32
          %1328 = vsyncadd [#allocation24], %s1327
          %s1329 = sshll.u32 [#allocation23], 4
          %s1330 = int_to_ptr.vmem [resolvable:$true] %s1329
          %1335 = dma.hbm_to_vmem [thread:$0]  %s61, 32, %s1330, [#allocation24], 16, 16, 1
        $region120: #{transformer_forward.1} parent=11 // pred_fallthru
          _
        // Predicated region
        $region121: #{transformer_forward.1} parent=11 // pred_check
          %p1336 = pneg %p805
        $region122: #{transformer_forward.1} parent=11 // pred_check_branch
          %1338 = sbr.rel (%p1336) target = $region124
        $region123: #{transformer_forward.1} parent=11 // pred_region
          _
        $region124: #{transformer_forward.1} parent=11 // pred_fallthru
          _
        // Predicated region
        $region125: #{transformer_forward.1} parent=11 // pred_check
          %p1339 = pneg %p826
        $region126: #{transformer_forward.1} parent=11 // pred_check_branch
          %1341 = sbr.rel (%p1339) target = $region128
        $region127: #{transformer_forward.1} parent=11 // pred_region
          %s1343 = ssub.s32 32, 32
          %1344 = vsyncadd [#allocation24], %s1343
          %s1345 = sshll.u32 [#allocation25], 4
          %s1346 = int_to_ptr.vmem [resolvable:$true] %s1345
          %1351 = dma.hbm_to_vmem [thread:$0]  %s65, 32, %s1346, [#allocation24], 16, 16, 1
        $region128: #{transformer_forward.1} parent=11 // pred_fallthru
          _
        // Predicated region
        $region129: #{transformer_forward.1} parent=11 // pred_check
          %p1352 = pneg %p847
        $region130: #{transformer_forward.1} parent=11 // pred_check_branch
          %1354 = sbr.rel (%p1352) target = $region132
        $region131: #{transformer_forward.1} parent=11 // pred_region
          %s1356 = ssub.s32 32, 32
          %1357 = vsyncadd [#allocation27], %s1356
          %s1358 = sshll.u32 [#allocation26], 4
          %s1359 = int_to_ptr.vmem [resolvable:$true] %s1358
          %1364 = dma.hbm_to_vmem [thread:$0]  %s67, 32, %s1359, [#allocation27], 16, 16, 1
        $region132: #{transformer_forward.1} parent=11 // pred_fallthru
          _
        // Predicated region
        $region133: #{transformer_forward.1} parent=11 // pred_check
          %p1365 = pneg %p868
        $region134: #{transformer_forward.1} parent=11 // pred_check_branch
          %1367 = sbr.rel (%p1365) target = $region136
        $region135: #{transformer_forward.1} parent=11 // pred_region
          %s1369 = ssub.s32 32, 32
          %1370 = vsyncadd [#allocation27], %s1369
          %s1371 = sshll.u32 [#allocation28], 4
          %s1372 = int_to_ptr.vmem [resolvable:$true] %s1371
          %1377 = dma.hbm_to_vmem [thread:$0]  %s69, 32, %s1372, [#allocation27], 16, 16, 1
        $region136: #{transformer_forward.1} parent=11 // pred_fallthru
          _
        // Predicated region
        $region137: #{transformer_forward.1} parent=11 // pred_check
          %p1378 = pneg %p889
        $region138: #{transformer_forward.1} parent=11 // pred_check_branch
          %1380 = sbr.rel (%p1378) target = $region140
        $region139: #{transformer_forward.1} parent=11 // pred_region
          %s1382 = ssub.s32 1024, 1024
          %1383 = vsyncadd [#allocation30], %s1382
          %s1384 = sshll.u32 [#allocation29], 4
          %s1385 = int_to_ptr.vmem [resolvable:$true] %s1384
          %1390 = dma.hbm_to_vmem [thread:$0]  %s71, 1024, %s1385, [#allocation30], 128, 128, 8
        $region140: #{transformer_forward.1} parent=11 // pred_fallthru
          _
        // Predicated region
        $region141: #{transformer_forward.1} parent=11 // pred_check
          %p1391 = pneg %p910
        $region142: #{transformer_forward.1} parent=11 // pred_check_branch
          %1393 = sbr.rel (%p1391) target = $region144
        $region143: #{transformer_forward.1} parent=11 // pred_region
          %s1395 = ssub.s32 32, 32
          %1396 = vsyncadd [#allocation30], %s1395
          %s1397 = sshll.u32 [#allocation31], 4
          %s1398 = int_to_ptr.vmem [resolvable:$true] %s1397
          %1403 = dma.hbm_to_vmem [thread:$0]  %s73, 32, %s1398, [#allocation30], 16, 16, 1
        $region144: #{transformer_forward.1} parent=11 // pred_fallthru
          _
        // Predicated region
        $region145: #{transformer_forward.1} parent=11 // pred_check
          %p1404 = pneg %p931
        $region146: #{transformer_forward.1} parent=11 // pred_check_branch
          %1406 = sbr.rel (%p1404) target = $region148
        $region147: #{transformer_forward.1} parent=11 // pred_region
          _
        $region148: #{transformer_forward.1} parent=11 // pred_fallthru
          _
        // Predicated region
        $region149: #{transformer_forward.1} parent=11 // pred_check
          %p1407 = pneg %p952
        $region150: #{transformer_forward.1} parent=11 // pred_check_branch
          %1409 = sbr.rel (%p1407) target = $region152
        $region151: #{transformer_forward.1} parent=11 // pred_region
          %s1411 = ssub.s32 32, 32
          %1412 = vsyncadd [#allocation33], %s1411
          %s1413 = sshll.u32 [#allocation32], 4
          %s1414 = int_to_ptr.vmem [resolvable:$true] %s1413
          %1419 = dma.hbm_to_vmem [thread:$0]  %s77, 32, %s1414, [#allocation33], 16, 16, 1
        $region152: #{transformer_forward.1} parent=11 // pred_fallthru
          _
        // Predicated region
        $region153: #{transformer_forward.1} parent=11 // pred_check
          %p1420 = pneg %p973
        $region154: #{transformer_forward.1} parent=11 // pred_check_branch
          %1422 = sbr.rel (%p1420) target = $region156
        $region155: #{transformer_forward.1} parent=11 // pred_region
          %s1424 = ssub.s32 32, 32
          %1425 = vsyncadd [#allocation33], %s1424
          %s1426 = sshll.u32 [#allocation34], 4
          %s1427 = int_to_ptr.vmem [resolvable:$true] %s1426
          %1432 = dma.hbm_to_vmem [thread:$0]  %s79, 32, %s1427, [#allocation33], 16, 16, 1
        $region156: #{transformer_forward.1} parent=11 // pred_fallthru
          _
        // Predicated region
        $region157: #{transformer_forward.1} parent=11 // pred_check
          %p1433 = pneg %p994
        $region158: #{transformer_forward.1} parent=11 // pred_check_branch
          %1435 = sbr.rel (%p1433) target = $region160
        $region159: #{transformer_forward.1} parent=11 // pred_region
          %s1437 = ssub.s32 32, 32
          %1438 = vsyncadd [#allocation36], %s1437
          %s1439 = sshll.u32 [#allocation35], 4
          %s1440 = int_to_ptr.vmem [resolvable:$true] %s1439
          %1445 = dma.hbm_to_vmem [thread:$0]  %s81, 32, %s1440, [#allocation36], 16, 16, 1
        $region160: #{transformer_forward.1} parent=11 // pred_fallthru
          _
        // Predicated region
        $region161: #{transformer_forward.1} parent=11 // pred_check
          %p1446 = pneg %p1015
        $region162: #{transformer_forward.1} parent=11 // pred_check_branch
          %1448 = sbr.rel (%p1446) target = $region164
        $region163: #{transformer_forward.1} parent=11 // pred_region
          %s1450 = ssub.s32 16, 16
          %1451 = vsyncadd [#allocation36], %s1450
          %s1453 = sshll.u32 [#allocation37], 4
          %s1454 = int_to_ptr.vmem [resolvable:$true] %s1453
          %1456 = dma.hbm_to_vmem [thread:$0]  %s83, 16, %s1454, [#allocation36]
        $region164: #{transformer_forward.1} parent=11 // pred_fallthru
          _
        // Predicated region
        $region165: #{transformer_forward.1} parent=11 // pred_check
          %p1457 = pneg %p1036
        $region166: #{transformer_forward.1} parent=11 // pred_check_branch
          %1459 = sbr.rel (%p1457) target = $region168
        $region167: #{transformer_forward.1} parent=11 // pred_region
          %s1461 = ssub.s32 16, 16
          %1462 = vsyncadd [#allocation39], %s1461
          %s1464 = sshll.u32 [#allocation38], 4
          %s1465 = int_to_ptr.vmem [resolvable:$true] %s1464
          %1467 = dma.hbm_to_vmem [thread:$0]  %s85, 16, %s1465, [#allocation39]
        $region168: #{transformer_forward.1} parent=11 // pred_fallthru
          _
        // Predicated region
        $region169: #{transformer_forward.1} parent=11 // pred_check
          %p1468 = pneg %p1057
        $region170: #{transformer_forward.1} parent=11 // pred_check_branch
          %1470 = sbr.rel (%p1468) target = $region172
        $region171: #{transformer_forward.1} parent=11 // pred_region
          _
        $region172: #{transformer_forward.1} parent=11 // pred_fallthru
          _
        // Predicated region
        $region173: #{transformer_forward.1} parent=11 // pred_check
          %p1471 = pneg %p1078
        $region174: #{transformer_forward.1} parent=11 // pred_check_branch
          %1473 = sbr.rel (%p1471) target = $region176
        $region175: #{transformer_forward.1} parent=11 // pred_region
          _
        $region176: #{transformer_forward.1} parent=11 // pred_fallthru
          _
      $region12: #{transformer_forward.1} parent=5 // pred_fallthru
        _
      %p1474 = scmp.lt.s32.totalorder %s113, 2
      // Predicated region
      $region177: #{transformer_forward.1} parent=5 // pred_check
        %p1475 = pneg %p1474
      $region178: #{transformer_forward.1} parent=5 // pred_check_branch
        %1477 = sbr.rel (%p1475) target = $region180
      $region179: #{transformer_forward.1} parent=5 // pred_region
        // Predicated region
        $region181: #{transformer_forward.1} parent=179 // pred_check
          %p1478 = pneg %p133
        $region182: #{transformer_forward.1} parent=179 // pred_check_branch
          %1480 = sbr.rel (%p1478) target = $region184
        $region183: #{transformer_forward.1} parent=179 // pred_region
          %p1481 = scmp.lt.s32.totalorder %s113, 1
          %s1482 = scalar_select %p1481, %s113, 1
          %s1483 = smul.addr %s1482, 8
          %s1484 = scalar_lea.vmem %s1, %s1483
        $region184: #{transformer_forward.1} parent=179 // pred_fallthru
          _
        // Predicated region
        $region185: #{transformer_forward.1} parent=179 // pred_check
          %p1485 = pneg %p159
        $region186: #{transformer_forward.1} parent=179 // pred_check_branch
          %1487 = sbr.rel (%p1485) target = $region188
        $region187: #{transformer_forward.1} parent=179 // pred_region
          %p1488 = scmp.lt.s32.totalorder %s113, 1
          %s1489 = scalar_select %p1488, %s113, 1
          %s1490 = smul.addr %s1489, 8
          %s1491 = scalar_lea.vmem %s3, %s1490
        $region188: #{transformer_forward.1} parent=179 // pred_fallthru
          _
        // Predicated region
        $region189: #{transformer_forward.1} parent=179 // pred_check
          %p1492 = pneg %p185
        $region190: #{transformer_forward.1} parent=179 // pred_check_branch
          %1494 = sbr.rel (%p1492) target = $region192
        $region191: #{transformer_forward.1} parent=179 // pred_region
          %p1495 = scmp.lt.s32.totalorder %s113, 1
          %s1496 = scalar_select %p1495, %s113, 1
          %s1497 = smul.addr %s1496, 8
          %s1498 = scalar_lea.vmem %s5, %s1497
        $region192: #{transformer_forward.1} parent=179 // pred_fallthru
          _
        // Predicated region
        $region193: #{transformer_forward.1} parent=179 // pred_check
          %p1499 = pneg %p211
        $region194: #{transformer_forward.1} parent=179 // pred_check_branch
          %1501 = sbr.rel (%p1499) target = $region196
        $region195: #{transformer_forward.1} parent=179 // pred_region
          %p1502 = scmp.lt.s32.totalorder %s113, 1
          %s1503 = scalar_select %p1502, %s113, 1
          %s1504 = smul.addr %s1503, 8
          %s1505 = scalar_lea.vmem %s7, %s1504
        $region196: #{transformer_forward.1} parent=179 // pred_fallthru
          _
      $region180: #{transformer_forward.1} parent=5 // pred_fallthru
        _
      %p1506 = scmp.le.s32.totalorder 1, %s113
      %p1507 = scmp.lt.s32.totalorder %s113, 3
      %p1508 = pnand %p1506, %p1507
      %p1509 = pneg %p1508
      // Predicated region
      $region197: #{transformer_forward.1} parent=5 // pred_check
        _
      $region198: #{transformer_forward.1} parent=5 // pred_check_branch
        %1511 = sbr.rel (%p1508) target = $region200
      $region199: #{transformer_forward.1} parent=5 // pred_region
        %s1512 = ssub.s32 %s113, 1
        // Predicated region
        $region201: #{transformer_forward.1} parent=199 // pred_check
          %p1513 = pneg %p385
        $region202: #{transformer_forward.1} parent=199 // pred_check_branch
          %1515 = sbr.rel (%p1513) target = $region204
        $region203: #{transformer_forward.1} parent=199 // pred_region
          %1516 = dma.done [#allocation3], 32
        $region204: #{transformer_forward.1} parent=199 // pred_fallthru
          _
        // Predicated region
        $region205: #{transformer_forward.1} parent=199 // pred_check
          %p1517 = pneg %p406
        $region206: #{transformer_forward.1} parent=199 // pred_check_branch
          %1519 = sbr.rel (%p1517) target = $region208
        $region207: #{transformer_forward.1} parent=199 // pred_region
          %1520 = dma.done [#allocation6], 32
        $region208: #{transformer_forward.1} parent=199 // pred_fallthru
          _
        // Predicated region
        $region209: #{transformer_forward.1} parent=199 // pred_check
          %p1521 = pneg %p448
        $region210: #{transformer_forward.1} parent=199 // pred_check_branch
          %1523 = sbr.rel (%p1521) target = $region212
        $region211: #{transformer_forward.1} parent=199 // pred_region
          %1524 = dma.done [#allocation6], 32
        $region212: #{transformer_forward.1} parent=199 // pred_fallthru
          _
        // Predicated region
        $region213: #{transformer_forward.1} parent=199 // pred_check
          %p1525 = pneg %p490
        $region214: #{transformer_forward.1} parent=199 // pred_check_branch
          %1527 = sbr.rel (%p1525) target = $region216
        $region215: #{transformer_forward.1} parent=199 // pred_region
          %1528 = dma.done [#allocation9], 32
        $region216: #{transformer_forward.1} parent=199 // pred_fallthru
          _
        // Predicated region
        $region217: #{transformer_forward.1} parent=199 // pred_check
          %p1529 = pneg %p511
        $region218: #{transformer_forward.1} parent=199 // pred_check_branch
          %1531 = sbr.rel (%p1529) target = $region220
        $region219: #{transformer_forward.1} parent=199 // pred_region
          %1532 = dma.done [#allocation9], 32
        $region220: #{transformer_forward.1} parent=199 // pred_fallthru
          _
        // Predicated region
        $region221: #{transformer_forward.1} parent=199 // pred_check
          %p1533 = pneg %p532
        $region222: #{transformer_forward.1} parent=199 // pred_check_branch
          %1535 = sbr.rel (%p1533) target = $region224
        $region223: #{transformer_forward.1} parent=199 // pred_region
          %1536 = dma.done [#allocation12], 32
        $region224: #{transformer_forward.1} parent=199 // pred_fallthru
          _
        // Predicated region
        $region225: #{transformer_forward.1} parent=199 // pred_check
          %p1537 = pneg %p553
        $region226: #{transformer_forward.1} parent=199 // pred_check_branch
          %1539 = sbr.rel (%p1537) target = $region228
        $region227: #{transformer_forward.1} parent=199 // pred_region
          %1540 = dma.done [#allocation12], 16
        $region228: #{transformer_forward.1} parent=199 // pred_fallthru
          _
        // Predicated region
        $region229: #{transformer_forward.1} parent=199 // pred_check
          %p1541 = pneg %p574
        $region230: #{transformer_forward.1} parent=199 // pred_check_branch
          %1543 = sbr.rel (%p1541) target = $region232
        $region231: #{transformer_forward.1} parent=199 // pred_region
          %1544 = dma.done [#allocation15], 16
        $region232: #{transformer_forward.1} parent=199 // pred_fallthru
          _
        // Predicated region
        $region233: #{transformer_forward.1} parent=199 // pred_check
          %p1545 = pneg %p616
        $region234: #{transformer_forward.1} parent=199 // pred_check_branch
          %1547 = sbr.rel (%p1545) target = $region236
        $region235: #{transformer_forward.1} parent=199 // pred_region
          %1548 = dma.done [#allocation15], 32
        $region236: #{transformer_forward.1} parent=199 // pred_fallthru
          _
        // Predicated region
        $region237: #{transformer_forward.1} parent=199 // pred_check
          %p1549 = pneg %p658
        $region238: #{transformer_forward.1} parent=199 // pred_check_branch
          %1551 = sbr.rel (%p1549) target = $region240
        $region239: #{transformer_forward.1} parent=199 // pred_region
          %1552 = dma.done [#allocation18], 32
        $region240: #{transformer_forward.1} parent=199 // pred_fallthru
          _
        // Predicated region
        $region241: #{transformer_forward.1} parent=199 // pred_check
          %p1553 = pneg %p679
        $region242: #{transformer_forward.1} parent=199 // pred_check_branch
          %1555 = sbr.rel (%p1553) target = $region244
        $region243: #{transformer_forward.1} parent=199 // pred_region
          %1556 = dma.done [#allocation18], 32
        $region244: #{transformer_forward.1} parent=199 // pred_fallthru
          _
        // Predicated region
        $region245: #{transformer_forward.1} parent=199 // pred_check
          %p1557 = pneg %p700
        $region246: #{transformer_forward.1} parent=199 // pred_check_branch
          %1559 = sbr.rel (%p1557) target = $region248
        $region247: #{transformer_forward.1} parent=199 // pred_region
          %1560 = dma.done [#allocation21], 32
        $region248: #{transformer_forward.1} parent=199 // pred_fallthru
          _
        // Predicated region
        $region249: #{transformer_forward.1} parent=199 // pred_check
          %p1561 = pneg %p742
        $region250: #{transformer_forward.1} parent=199 // pred_check_branch
          %1563 = sbr.rel (%p1561) target = $region252
        $region251: #{transformer_forward.1} parent=199 // pred_region
          %1564 = dma.done [#allocation21], 32
        $region252: #{transformer_forward.1} parent=199 // pred_fallthru
          _
        // Predicated region
        $region253: #{transformer_forward.1} parent=199 // pred_check
          %p1565 = pneg %p784
        $region254: #{transformer_forward.1} parent=199 // pred_check_branch
          %1567 = sbr.rel (%p1565) target = $region256
        $region255: #{transformer_forward.1} parent=199 // pred_region
          %1568 = dma.done [#allocation24], 32
        $region256: #{transformer_forward.1} parent=199 // pred_fallthru
          _
        // Predicated region
        $region257: #{transformer_forward.1} parent=199 // pred_check
          %p1569 = pneg %p826
        $region258: #{transformer_forward.1} parent=199 // pred_check_branch
          %1571 = sbr.rel (%p1569) target = $region260
        $region259: #{transformer_forward.1} parent=199 // pred_region
          %1572 = dma.done [#allocation24], 32
        $region260: #{transformer_forward.1} parent=199 // pred_fallthru
          _
        // Predicated region
        $region261: #{transformer_forward.1} parent=199 // pred_check
          %p1573 = pneg %p847
        $region262: #{transformer_forward.1} parent=199 // pred_check_branch
          %1575 = sbr.rel (%p1573) target = $region264
        $region263: #{transformer_forward.1} parent=199 // pred_region
          %1576 = dma.done [#allocation27], 32
        $region264: #{transformer_forward.1} parent=199 // pred_fallthru
          _
        // Predicated region
        $region265: #{transformer_forward.1} parent=199 // pred_check
          %p1577 = pneg %p868
        $region266: #{transformer_forward.1} parent=199 // pred_check_branch
          %1579 = sbr.rel (%p1577) target = $region268
        $region267: #{transformer_forward.1} parent=199 // pred_region
          %1580 = dma.done [#allocation27], 32
        $region268: #{transformer_forward.1} parent=199 // pred_fallthru
          _
        // Predicated region
        $region269: #{transformer_forward.1} parent=199 // pred_check
          %p1581 = pneg %p889
        $region270: #{transformer_forward.1} parent=199 // pred_check_branch
          %1583 = sbr.rel (%p1581) target = $region272
        $region271: #{transformer_forward.1} parent=199 // pred_region
          %1584 = dma.done [#allocation30], 1024
        $region272: #{transformer_forward.1} parent=199 // pred_fallthru
          _
        // Predicated region
        $region273: #{transformer_forward.1} parent=199 // pred_check
          %p1585 = pneg %p910
        $region274: #{transformer_forward.1} parent=199 // pred_check_branch
          %1587 = sbr.rel (%p1585) target = $region276
        $region275: #{transformer_forward.1} parent=199 // pred_region
          %1588 = dma.done [#allocation30], 32
        $region276: #{transformer_forward.1} parent=199 // pred_fallthru
          _
        // Predicated region
        $region277: #{transformer_forward.1} parent=199 // pred_check
          %p1589 = pneg %p952
        $region278: #{transformer_forward.1} parent=199 // pred_check_branch
          %1591 = sbr.rel (%p1589) target = $region280
        $region279: #{transformer_forward.1} parent=199 // pred_region
          %1592 = dma.done [#allocation33], 32
        $region280: #{transformer_forward.1} parent=199 // pred_fallthru
          _
        // Predicated region
        $region281: #{transformer_forward.1} parent=199 // pred_check
          %p1593 = pneg %p973
        $region282: #{transformer_forward.1} parent=199 // pred_check_branch
          %1595 = sbr.rel (%p1593) target = $region284
        $region283: #{transformer_forward.1} parent=199 // pred_region
          %1596 = dma.done [#allocation33], 32
        $region284: #{transformer_forward.1} parent=199 // pred_fallthru
          _
        // Predicated region
        $region285: #{transformer_forward.1} parent=199 // pred_check
          %p1597 = pneg %p994
        $region286: #{transformer_forward.1} parent=199 // pred_check_branch
          %1599 = sbr.rel (%p1597) target = $region288
        $region287: #{transformer_forward.1} parent=199 // pred_region
          %1600 = dma.done [#allocation36], 32
        $region288: #{transformer_forward.1} parent=199 // pred_fallthru
          _
        // Predicated region
        $region289: #{transformer_forward.1} parent=199 // pred_check
          %p1601 = pneg %p1015
        $region290: #{transformer_forward.1} parent=199 // pred_check_branch
          %1603 = sbr.rel (%p1601) target = $region292
        $region291: #{transformer_forward.1} parent=199 // pred_region
          %1604 = dma.done [#allocation36], 16
        $region292: #{transformer_forward.1} parent=199 // pred_fallthru
          _
        // Predicated region
        $region293: #{transformer_forward.1} parent=199 // pred_check
          %p1605 = pneg %p1036
        $region294: #{transformer_forward.1} parent=199 // pred_check_branch
          %1607 = sbr.rel (%p1605) target = $region296
        $region295: #{transformer_forward.1} parent=199 // pred_region
          %1608 = dma.done [#allocation39], 16
        $region296: #{transformer_forward.1} parent=199 // pred_fallthru
          _
        %p1609 = scmp.lt.s32.totalorder %s118, 1
        %s1610 = scalar_select %p1609, %s118, 1
        %s1611 = smul.addr %s1610, 8
        %s1612 = scalar_lea.vmem %s1, %s1611
        %p1613 = pneg %p139
        %p1614 = pneg %p136
        %p1615 = scmp.lt.s32.totalorder %s118, 1
        %s1616 = scalar_select %p1615, %s118, 1
        %s1617 = smul.addr %s1616, 8
        %s1618 = scalar_lea.vmem %s3, %s1617
        %p1619 = pneg %p165
        %p1620 = pneg %p162
        %p1621 = scmp.lt.s32.totalorder %s118, 1
        %s1622 = scalar_select %p1621, %s118, 1
        %s1623 = smul.addr %s1622, 8
        %s1624 = scalar_lea.vmem %s5, %s1623
        %p1625 = pneg %p191
        %p1626 = pneg %p188
        %p1627 = scmp.lt.s32.totalorder %s118, 1
        %s1628 = scalar_select %p1627, %s118, 1
        %s1629 = smul.addr %s1628, 8
        %s1630 = scalar_lea.vmem %s7, %s1629
        %p1631 = pneg %p217
        %p1632 = pneg %p214
        %p1633 = pneg %p238
        %p1634 = pneg %p235
        %p1635 = pneg %p259
        %p1636 = pneg %p256
        %p1637 = pneg %p280
        %p1638 = pneg %p277
        %p1639 = pneg %p301
        %p1640 = pneg %p298
        %p1641 = pneg %p322
        %p1642 = pneg %p319
        %p1643 = pneg %p343
        %p1644 = pneg %p340
        %p1645 = pneg %p364
        %p1646 = pneg %p361
        %p1647 = pneg %p385
        %p1648 = pneg %p382
        %p1649 = pneg %p406
        %p1650 = pneg %p403
        %p1651 = pneg %p427
        %p1652 = pneg %p424
        %p1653 = pneg %p448
        %p1654 = pneg %p445
        %p1655 = pneg %p469
        %p1656 = pneg %p466
        %p1657 = pneg %p490
        %p1658 = pneg %p487
        %p1659 = pneg %p511
        %p1660 = pneg %p508
        %p1661 = pneg %p532
        %p1662 = pneg %p529
        %p1663 = pneg %p553
        %p1664 = pneg %p550
        %p1665 = pneg %p574
        %p1666 = pneg %p571
        %p1667 = pneg %p595
        %p1668 = pneg %p592
        %p1669 = pneg %p616
        %p1670 = pneg %p613
        %p1671 = pneg %p637
        %p1672 = pneg %p634
        %p1673 = pneg %p658
        %p1674 = pneg %p655
        %p1675 = pneg %p679
        %p1676 = pneg %p676
        %p1677 = pneg %p700
        %p1678 = pneg %p697
        %p1679 = pneg %p721
        %p1680 = pneg %p718
        %p1681 = pneg %p742
        %p1682 = pneg %p739
        %p1683 = pneg %p763
        %p1684 = pneg %p760
        %p1685 = pneg %p784
        %p1686 = pneg %p781
        %p1687 = pneg %p805
        %p1688 = pneg %p802
        %p1689 = pneg %p826
        %p1690 = pneg %p823
        %p1691 = pneg %p847
        %p1692 = pneg %p844
        %p1693 = pneg %p868
        %p1694 = pneg %p865
        %p1695 = pneg %p889
        %p1696 = pneg %p886
        %p1697 = pneg %p910
        %p1698 = pneg %p907
        %p1699 = pneg %p931
        %p1700 = pneg %p928
        %p1701 = pneg %p952
        %p1702 = pneg %p949
        %p1703 = pneg %p973
        %p1704 = pneg %p970
        %p1705 = pneg %p994
        %p1706 = pneg %p991
        %p1707 = pneg %p1015
        %p1708 = pneg %p1012
        %p1709 = pneg %p1036
        %p1710 = pneg %p1033
        %p1711 = pneg %p1057
        %p1712 = pneg %p1054
        %p1713 = pneg %p1078
        %p1714 = pneg %p1075
        %p1715 = pneg %p1104
        %p1716 = pneg %p1101
        %s1717 = sand.u32 %s1091, 1
        %s1718 = scalar_lea.sflag [#allocation4], %s1717
        %s1719 = sand.u32 %s1091, 1
        %s1720 = smul.addr %s1719, 8
        %s1721 = scalar_lea.vmem [#allocation40], %s1720
        %p1722 = scmp.lt.s32.totalorder %s118, 1
        %s1723 = scalar_select %p1722, %s118, 1
        %s1724 = smul.addr %s1723, 8
        %s1725 = scalar_lea.vmem %s1, %s1724
        %p1726 = scmp.lt.s32.totalorder %s118, 1
        %s1727 = scalar_select %p1726, %s118, 1
        %s1728 = smul.addr %s1727, 8
        %s1729 = scalar_lea.vmem %s3, %s1728
        %p1730 = scmp.lt.s32.totalorder %s118, 1
        %s1731 = scalar_select %p1730, %s118, 1
        %s1732 = smul.addr %s1731, 8
        %s1733 = scalar_lea.vmem %s5, %s1732
        %p1734 = scmp.lt.s32.totalorder %s118, 1
        %s1735 = scalar_select %p1734, %s118, 1
        %s1736 = smul.addr %s1735, 8
        %s1737 = scalar_lea.vmem %s7, %s1736
        %v1738 = vld [vmem:[%s9] sm:$0xff]
        %v1739 = vld [vmem:[%s9 + $0x8] sm:$0xff]
        %v1740 = vld [vmem:[%s9 + $0x10] sm:$0xff]
        %v1741 = vld [vmem:[%s9 + $0x18] sm:$0xff]
        %v1742 = vld [vmem:[%s9 + $0x20] sm:$0xff]
        %v1743 = vld [vmem:[%s9 + $0x28] sm:$0xff]
        %v1744 = vld [vmem:[%s9 + $0x30] sm:$0xff]
        %v1745 = vld [vmem:[%s9 + $0x38] sm:$0xff]
        %v1746 = vld [vmem:[%s9 + $0x40] sm:$0xff]
        %v1747 = vld [vmem:[%s9 + $0x48] sm:$0xff]
        %v1748 = vld [vmem:[%s9 + $0x50] sm:$0xff]
        %v1749 = vld [vmem:[%s9 + $0x58] sm:$0xff]
        %v1750 = vld [vmem:[%s9 + $0x60] sm:$0xff]
        %v1751 = vld [vmem:[%s9 + $0x68] sm:$0xff]
        %v1752 = vld [vmem:[%s9 + $0x70] sm:$0xff]
        %v1753 = vld [vmem:[%s9 + $0x78] sm:$0xff]
        %v1754 = vld [vmem:[%s1725] sm:$0xff]
        %v1755 = vlaneseq
        %v1756 = vand.u32 %v1755, 127
        %1757 = vset.pattern.permute.xlu0 0
        %1758 = vperm.xlu0 %1757, %v1754
        %v1759 = vpop.permute.xlu0 %1758
        %vm1760 = vcmp.eq.s32.totalorder %v1759, %v1756
        %v1761 = vsel %vm1760, 1, 0
        %v1762 = vcvt.s32.f32 %v1761
        %v1763 = vld [vmem:[%s1729] sm:$0xff]
        %v1764 = vld [vmem:[%s11] sm:$0xff]
        %v1765 = vld [vmem:[%s11 + $0x8] sm:$0xff]
        %1766 = vset.pattern.permute.xlu0 0
        %1767 = vperm.xlu0 %1766, %v1763
        %v1768 = vpop.permute.xlu0 %1767
        %vm1769 = vcmp.eq.s32.totalorder %v1768, %v1756
        %v1770 = vsel %vm1769, 1, 0
        %v1771 = vcvt.s32.f32 %v1770
        %vm1772 = vcmask 130048
        %v1774 = vsel %vm1772, %v1771, 0
        %1776 = vmatprep.subr.mxu0 0.0
        %1777 = vmatpush1.msra.mxu0 %v1764
        %1778 = vmatprep.subr.mxu0 0.0
        %1779 = vmatpush1.msra.mxu0 %v1765
        %1780 = vmatprep.subr.mxu0 0.0
        %1781 = vmatpush1.msra.mxu0 0.0
        %1782 = vmatprep.subr.mxu0 0.0
        %1783 = vmatpush1.msra.mxu0 0.0
        %1784 = vmatprep.subr.mxu0 0.0
        %1785 = vmatpush1.msra.mxu0 0.0
        %1786 = vmatprep.subr.mxu0 0.0
        %1787 = vmatpush1.msra.mxu0 0.0
        %1788 = vmatprep.subr.mxu0 0.0
        %1789 = vmatpush1.msra.mxu0 0.0
        %1790 = vmatprep.subr.mxu0 0.0
        %1791 = vmatpush1.msra.mxu0 0.0
        %1792 = vmatprep.subr.mxu0 0.0
        %1793 = vmatpush1.msra.mxu0 0.0
        %1794 = vmatprep.subr.mxu0 0.0
        %1795 = vmatpush1.msra.mxu0 0.0
        %1796 = vmatprep.subr.mxu0 0.0
        %1797 = vmatpush1.msra.mxu0 0.0
        %1798 = vmatprep.subr.mxu0 0.0
        %1799 = vmatpush1.msra.mxu0 0.0
        %1800 = vmatprep.subr.mxu0 0.0
        %1801 = vmatpush1.msra.mxu0 0.0
        %1802 = vmatprep.subr.mxu0 0.0
        %1803 = vmatpush1.msra.mxu0 0.0
        %1804 = vmatprep.subr.mxu0 0.0
        %1805 = vmatpush1.msra.mxu0 0.0
        %1806 = vmatprep.subr.mxu0 0.0
        %1807 = vmatpush1.msra.mxu0 0.0
        %1808 = vmatprep.subr.mxu0 0.0
        %1809 = vmatpush1.msra.mxu0 0.0
        %1810 = vmatprep.subr.mxu0 0.0
        %1811 = vmatpush1.msra.mxu0 0.0
        %1812 = vmatprep.subr.mxu0 0.0
        %1813 = vmatpush1.msra.mxu0 0.0
        %1814 = vmatprep.subr.mxu0 0.0
        %1815 = vmatpush1.msra.mxu0 0.0
        %1816 = vmatprep.subr.mxu0 0.0
        %1817 = vmatpush1.msra.mxu0 0.0
        %1818 = vmatprep.subr.mxu0 0.0
        %1819 = vmatpush1.msra.mxu0 0.0
        %1820 = vmatprep.subr.mxu0 0.0
        %1821 = vmatpush1.msra.mxu0 0.0
        %1822 = vmatprep.subr.mxu0 0.0
        %1823 = vmatpush1.msra.mxu0 0.0
        %1824 = vmatprep.subr.mxu0 0.0
        %1825 = vmatpush1.msra.mxu0 0.0
        %1826 = vmatprep.subr.mxu0 0.0
        %1827 = vmatpush1.msra.mxu0 0.0
        %1828 = vmatprep.subr.mxu0 0.0
        %1829 = vmatpush1.msra.mxu0 0.0
        %1830 = vmatprep.subr.mxu0 0.0
        %1831 = vmatpush1.msra.mxu0 0.0
        %1832 = vmatprep.subr.mxu0 0.0
        %1833 = vmatpush1.msra.mxu0 0.0
        %1834 = vmatprep.subr.mxu0 0.0
        %1835 = vmatpush1.msra.mxu0 0.0
        %1836 = vmatprep.subr.mxu0 0.0
        %1837 = vmatpush1.msra.mxu0 0.0
        %1838 = vmatprep.subr.mxu0 0.0
        %1839 = vmatpush1.msra.mxu0 0.0
        %1840 = vmatprep.mubr.f32.mxu0 0.0
        %1841 = vmatmul.mubr.f32.gmra.mrb[0].mxu0 %v1774
        %v1842 = vpop.f32.mrb[0].mxu0
        %v1843 = vadd.f32 0.0, %v1842
        %v1844 = vpop.f32.mrb[0].mxu0
        %1845 = vdwg.mxu0
        %1846 = vmatprep.subr.mxu0 0.0
        %1847 = vmatpush1.msra.mxu0 %v1738
        %1848 = vmatprep.subr.mxu0 0.0
        %1849 = vmatpush1.msra.mxu0 %v1739
        %1850 = vmatprep.subr.mxu0 0.0
        %1851 = vmatpush1.msra.mxu0 %v1740
        %1852 = vmatprep.subr.mxu0 0.0
        %1853 = vmatpush1.msra.mxu0 %v1741
        %1854 = vmatprep.subr.mxu0 0.0
        %1855 = vmatpush1.msra.mxu0 %v1742
        %1856 = vmatprep.subr.mxu0 0.0
        %1857 = vmatpush1.msra.mxu0 %v1743
        %1858 = vmatprep.subr.mxu0 0.0
        %1859 = vmatpush1.msra.mxu0 %v1744
        %1860 = vmatprep.subr.mxu0 0.0
        %1861 = vmatpush1.msra.mxu0 %v1745
        %1862 = vmatprep.subr.mxu0 0.0
        %1863 = vmatpush1.msra.mxu0 %v1746
        %1864 = vmatprep.subr.mxu0 0.0
        %1865 = vmatpush1.msra.mxu0 %v1747
        %1866 = vmatprep.subr.mxu0 0.0
        %1867 = vmatpush1.msra.mxu0 %v1748
        %1868 = vmatprep.subr.mxu0 0.0
        %1869 = vmatpush1.msra.mxu0 %v1749
        %1870 = vmatprep.subr.mxu0 0.0
        %1871 = vmatpush1.msra.mxu0 %v1750
        %1872 = vmatprep.subr.mxu0 0.0
        %1873 = vmatpush1.msra.mxu0 %v1751
        %1874 = vmatprep.subr.mxu0 0.0
        %1875 = vmatpush1.msra.mxu0 %v1752
        %1876 = vmatprep.subr.mxu0 0.0
        %1877 = vmatpush1.msra.mxu0 %v1753
        %1878 = vmatprep.subr.mxu0 0.0
        %1879 = vmatpush1.msra.mxu0 0.0
        %1880 = vmatprep.subr.mxu0 0.0
        %1881 = vmatpush1.msra.mxu0 0.0
        %1882 = vmatprep.subr.mxu0 0.0
        %1883 = vmatpush1.msra.mxu0 0.0
        %1884 = vmatprep.subr.mxu0 0.0
        %1885 = vmatpush1.msra.mxu0 0.0
        %1886 = vmatprep.subr.mxu0 0.0
        %1887 = vmatpush1.msra.mxu0 0.0
        %1888 = vmatprep.subr.mxu0 0.0
        %1889 = vmatpush1.msra.mxu0 0.0
        %1890 = vmatprep.subr.mxu0 0.0
        %1891 = vmatpush1.msra.mxu0 0.0
        %1892 = vmatprep.subr.mxu0 0.0
        %1893 = vmatpush1.msra.mxu0 0.0
        %1894 = vmatprep.subr.mxu0 0.0
        %1895 = vmatpush1.msra.mxu0 0.0
        %1896 = vmatprep.subr.mxu0 0.0
        %1897 = vmatpush1.msra.mxu0 0.0
        %1898 = vmatprep.subr.mxu0 0.0
        %1899 = vmatpush1.msra.mxu0 0.0
        %1900 = vmatprep.subr.mxu0 0.0
        %1901 = vmatpush1.msra.mxu0 0.0
        %1902 = vmatprep.subr.mxu0 0.0
        %1903 = vmatpush1.msra.mxu0 0.0
        %1904 = vmatprep.subr.mxu0 0.0
        %1905 = vmatpush1.msra.mxu0 0.0
        %1906 = vmatprep.subr.mxu0 0.0
        %1907 = vmatpush1.msra.mxu0 0.0
        %1908 = vmatprep.subr.mxu0 0.0
        %1909 = vmatpush1.msra.mxu0 0.0
        %1910 = vmatprep.mubr.f32.mxu0 0.0
        %1911 = vmatmul.mubr.f32.gmra.mrb[0].mxu0 %v1762
        %v1912 = vpop.f32.mrb[0].mxu0
        %v1913 = vadd.f32 %v1843, %v1912
        %v1914 = vpop.f32.mrb[0].mxu0
        %1915 = vdwg.mxu0
        %v1916 = vld [vmem:[%s1733] sm:$0xff]
        %1917 = vset.pattern.permute.xlu0 0
        %1918 = vperm.xlu0 %1917, %v1916
        %v1919 = vpop.permute.xlu0 %1918
        %vm1920 = vcmp.eq.s32.totalorder %v1919, %v1756
        %v1921 = vsel %vm1920, 1, 0
        %v1922 = vcvt.s32.f32 %v1921
        %v1923 = vld [vmem:[%s1737] sm:$0xff]
        %v1924 = vld [vmem:[%s13] sm:$0xff]
        %v1925 = vld [vmem:[%s13 + $0x8] sm:$0xff]
        %1926 = vset.pattern.permute.xlu0 0
        %1927 = vperm.xlu0 %1926, %v1923
        %v1928 = vpop.permute.xlu0 %1927
        %vm1929 = vcmp.eq.s32.totalorder %v1928, %v1756
        %v1930 = vsel %vm1929, 1, 0
        %v1931 = vcvt.s32.f32 %v1930
        %v1933 = vsel %vm1772, %v1931, 0
        %1935 = vmatprep.subr.mxu0 0.0
        %1936 = vmatpush1.msra.mxu0 %v1924
        %1937 = vmatprep.subr.mxu0 0.0
        %1938 = vmatpush1.msra.mxu0 %v1925
        %1939 = vmatprep.subr.mxu0 0.0
        %1940 = vmatpush1.msra.mxu0 0.0
        %1941 = vmatprep.subr.mxu0 0.0
        %1942 = vmatpush1.msra.mxu0 0.0
        %1943 = vmatprep.subr.mxu0 0.0
        %1944 = vmatpush1.msra.mxu0 0.0
        %1945 = vmatprep.subr.mxu0 0.0
        %1946 = vmatpush1.msra.mxu0 0.0
        %1947 = vmatprep.subr.mxu0 0.0
        %1948 = vmatpush1.msra.mxu0 0.0
        %1949 = vmatprep.subr.mxu0 0.0
        %1950 = vmatpush1.msra.mxu0 0.0
        %1951 = vmatprep.subr.mxu0 0.0
        %1952 = vmatpush1.msra.mxu0 0.0
        %1953 = vmatprep.subr.mxu0 0.0
        %1954 = vmatpush1.msra.mxu0 0.0
        %1955 = vmatprep.subr.mxu0 0.0
        %1956 = vmatpush1.msra.mxu0 0.0
        %1957 = vmatprep.subr.mxu0 0.0
        %1958 = vmatpush1.msra.mxu0 0.0
        %1959 = vmatprep.subr.mxu0 0.0
        %1960 = vmatpush1.msra.mxu0 0.0
        %1961 = vmatprep.subr.mxu0 0.0
        %1962 = vmatpush1.msra.mxu0 0.0
        %1963 = vmatprep.subr.mxu0 0.0
        %1964 = vmatpush1.msra.mxu0 0.0
        %1965 = vmatprep.subr.mxu0 0.0
        %1966 = vmatpush1.msra.mxu0 0.0
        %1967 = vmatprep.subr.mxu0 0.0
        %1968 = vmatpush1.msra.mxu0 0.0
        %1969 = vmatprep.subr.mxu0 0.0
        %1970 = vmatpush1.msra.mxu0 0.0
        %1971 = vmatprep.subr.mxu0 0.0
        %1972 = vmatpush1.msra.mxu0 0.0
        %1973 = vmatprep.subr.mxu0 0.0
        %1974 = vmatpush1.msra.mxu0 0.0
        %1975 = vmatprep.subr.mxu0 0.0
        %1976 = vmatpush1.msra.mxu0 0.0
        %1977 = vmatprep.subr.mxu0 0.0
        %1978 = vmatpush1.msra.mxu0 0.0
        %1979 = vmatprep.subr.mxu0 0.0
        %1980 = vmatpush1.msra.mxu0 0.0
        %1981 = vmatprep.subr.mxu0 0.0
        %1982 = vmatpush1.msra.mxu0 0.0
        %1983 = vmatprep.subr.mxu0 0.0
        %1984 = vmatpush1.msra.mxu0 0.0
        %1985 = vmatprep.subr.mxu0 0.0
        %1986 = vmatpush1.msra.mxu0 0.0
        %1987 = vmatprep.subr.mxu0 0.0
        %1988 = vmatpush1.msra.mxu0 0.0
        %1989 = vmatprep.subr.mxu0 0.0
        %1990 = vmatpush1.msra.mxu0 0.0
        %1991 = vmatprep.subr.mxu0 0.0
        %1992 = vmatpush1.msra.mxu0 0.0
        %1993 = vmatprep.subr.mxu0 0.0
        %1994 = vmatpush1.msra.mxu0 0.0
        %1995 = vmatprep.subr.mxu0 0.0
        %1996 = vmatpush1.msra.mxu0 0.0
        %1997 = vmatprep.subr.mxu0 0.0
        %1998 = vmatpush1.msra.mxu0 0.0
        %1999 = vmatprep.mubr.f32.mxu0 0.0
        %2000 = vmatmul.mubr.f32.gmra.mrb[0].mxu0 %v1933
        %v2001 = vpop.f32.mrb[0].mxu0
        %v2002 = vadd.f32 0.0, %v2001
        %v2003 = vpop.f32.mrb[0].mxu0
        %2004 = vdwg.mxu0
        %2005 = vmatprep.subr.mxu0 0.0
        %2006 = vmatpush1.msra.mxu0 %v1738
        %2007 = vmatprep.subr.mxu0 0.0
        %2008 = vmatpush1.msra.mxu0 %v1739
        %2009 = vmatprep.subr.mxu0 0.0
        %2010 = vmatpush1.msra.mxu0 %v1740
        %2011 = vmatprep.subr.mxu0 0.0
        %2012 = vmatpush1.msra.mxu0 %v1741
        %2013 = vmatprep.subr.mxu0 0.0
        %2014 = vmatpush1.msra.mxu0 %v1742
        %2015 = vmatprep.subr.mxu0 0.0
        %2016 = vmatpush1.msra.mxu0 %v1743
        %2017 = vmatprep.subr.mxu0 0.0
        %2018 = vmatpush1.msra.mxu0 %v1744
        %2019 = vmatprep.subr.mxu0 0.0
        %2020 = vmatpush1.msra.mxu0 %v1745
        %2021 = vmatprep.subr.mxu0 0.0
        %2022 = vmatpush1.msra.mxu0 %v1746
        %2023 = vmatprep.subr.mxu0 0.0
        %2024 = vmatpush1.msra.mxu0 %v1747
        %2025 = vmatprep.subr.mxu0 0.0
        %2026 = vmatpush1.msra.mxu0 %v1748
        %2027 = vmatprep.subr.mxu0 0.0
        %2028 = vmatpush1.msra.mxu0 %v1749
        %2029 = vmatprep.subr.mxu0 0.0
        %2030 = vmatpush1.msra.mxu0 %v1750
        %2031 = vmatprep.subr.mxu0 0.0
        %2032 = vmatpush1.msra.mxu0 %v1751
        %2033 = vmatprep.subr.mxu0 0.0
        %2034 = vmatpush1.msra.mxu0 %v1752
        %2035 = vmatprep.subr.mxu0 0.0
        %2036 = vmatpush1.msra.mxu0 %v1753
        %2037 = vmatprep.subr.mxu0 0.0
        %2038 = vmatpush1.msra.mxu0 0.0
        %2039 = vmatprep.subr.mxu0 0.0
        %2040 = vmatpush1.msra.mxu0 0.0
        %2041 = vmatprep.subr.mxu0 0.0
        %2042 = vmatpush1.msra.mxu0 0.0
        %2043 = vmatprep.subr.mxu0 0.0
        %2044 = vmatpush1.msra.mxu0 0.0
        %2045 = vmatprep.subr.mxu0 0.0
        %2046 = vmatpush1.msra.mxu0 0.0
        %2047 = vmatprep.subr.mxu0 0.0
        %2048 = vmatpush1.msra.mxu0 0.0
        %2049 = vmatprep.subr.mxu0 0.0
        %2050 = vmatpush1.msra.mxu0 0.0
        %2051 = vmatprep.subr.mxu0 0.0
        %2052 = vmatpush1.msra.mxu0 0.0
        %2053 = vmatprep.subr.mxu0 0.0
        %2054 = vmatpush1.msra.mxu0 0.0
        %2055 = vmatprep.subr.mxu0 0.0
        %2056 = vmatpush1.msra.mxu0 0.0
        %2057 = vmatprep.subr.mxu0 0.0
        %2058 = vmatpush1.msra.mxu0 0.0
        %2059 = vmatprep.subr.mxu0 0.0
        %2060 = vmatpush1.msra.mxu0 0.0
        %2061 = vmatprep.subr.mxu0 0.0
        %2062 = vmatpush1.msra.mxu0 0.0
        %2063 = vmatprep.subr.mxu0 0.0
        %2064 = vmatpush1.msra.mxu0 0.0
        %2065 = vmatprep.subr.mxu0 0.0
        %2066 = vmatpush1.msra.mxu0 0.0
        %2067 = vmatprep.subr.mxu0 0.0
        %2068 = vmatpush1.msra.mxu0 0.0
        %2069 = vmatprep.mubr.f32.mxu0 0.0
        %2070 = vmatmul.mubr.f32.gmra.mrb[0].mxu0 %v1922
        %v2071 = vpop.f32.mrb[0].mxu0
        %v2072 = vadd.f32 %v2002, %v2071
        %v2073 = vpop.f32.mrb[0].mxu0
        %2074 = vdwg.mxu0
        %v2075 = vld [vmem:[%s15] sm:$0xff]
        %v2076 = vld [vmem:[%s15 + $0x8] sm:$0xff]
        %v2077 = vld [vmem:[%s15 + $0x10] sm:$0xff]
        %v2078 = vld [vmem:[%s15 + $0x18] sm:$0xff]
        %v2079 = vld [vmem:[%s17] sm:$0x1]
        %v2081 = vlaneseq
        %v2082 = vshrl.u32 %v2081, 7
        %v2083 = vsub.s32 0, %v2082
        %v2084 = vrot.slane %v2079, %v2083
        %vm2086 = vcmask 261120
        %v2088 = vsel %vm2086, %v1913, 0
        %2090 = vmatprep.subr.mxu0 0.0
        %2091 = vmatpush1.msra.mxu0 %v2075
        %2092 = vmatprep.subr.mxu0 0.0
        %2093 = vmatpush1.msra.mxu0 %v2076
        %2094 = vmatprep.subr.mxu0 0.0
        %2095 = vmatpush1.msra.mxu0 %v2077
        %2096 = vmatprep.subr.mxu0 0.0
        %2097 = vmatpush1.msra.mxu0 %v2078
        %2098 = vmatprep.subr.mxu0 0.0
        %2099 = vmatpush1.msra.mxu0 0.0
        %2100 = vmatprep.subr.mxu0 0.0
        %2101 = vmatpush1.msra.mxu0 0.0
        %2102 = vmatprep.subr.mxu0 0.0
        %2103 = vmatpush1.msra.mxu0 0.0
        %2104 = vmatprep.subr.mxu0 0.0
        %2105 = vmatpush1.msra.mxu0 0.0
        %2106 = vmatprep.subr.mxu0 0.0
        %2107 = vmatpush1.msra.mxu0 0.0
        %2108 = vmatprep.subr.mxu0 0.0
        %2109 = vmatpush1.msra.mxu0 0.0
        %2110 = vmatprep.subr.mxu0 0.0
        %2111 = vmatpush1.msra.mxu0 0.0
        %2112 = vmatprep.subr.mxu0 0.0
        %2113 = vmatpush1.msra.mxu0 0.0
        %2114 = vmatprep.subr.mxu0 0.0
        %2115 = vmatpush1.msra.mxu0 0.0
        %2116 = vmatprep.subr.mxu0 0.0
        %2117 = vmatpush1.msra.mxu0 0.0
        %2118 = vmatprep.subr.mxu0 0.0
        %2119 = vmatpush1.msra.mxu0 0.0
        %2120 = vmatprep.subr.mxu0 0.0
        %2121 = vmatpush1.msra.mxu0 0.0
        %2122 = vmatprep.subr.mxu0 0.0
        %2123 = vmatpush1.msra.mxu0 0.0
        %2124 = vmatprep.subr.mxu0 0.0
        %2125 = vmatpush1.msra.mxu0 0.0
        %2126 = vmatprep.subr.mxu0 0.0
        %2127 = vmatpush1.msra.mxu0 0.0
        %2128 = vmatprep.subr.mxu0 0.0
        %2129 = vmatpush1.msra.mxu0 0.0
        %2130 = vmatprep.subr.mxu0 0.0
        %2131 = vmatpush1.msra.mxu0 0.0
        %2132 = vmatprep.subr.mxu0 0.0
        %2133 = vmatpush1.msra.mxu0 0.0
        %2134 = vmatprep.subr.mxu0 0.0
        %2135 = vmatpush1.msra.mxu0 0.0
        %2136 = vmatprep.subr.mxu0 0.0
        %2137 = vmatpush1.msra.mxu0 0.0
        %2138 = vmatprep.subr.mxu0 0.0
        %2139 = vmatpush1.msra.mxu0 0.0
        %2140 = vmatprep.subr.mxu0 0.0
        %2141 = vmatpush1.msra.mxu0 0.0
        %2142 = vmatprep.subr.mxu0 0.0
        %2143 = vmatpush1.msra.mxu0 0.0
        %2144 = vmatprep.subr.mxu0 0.0
        %2145 = vmatpush1.msra.mxu0 0.0
        %2146 = vmatprep.subr.mxu0 0.0
        %2147 = vmatpush1.msra.mxu0 0.0
        %2148 = vmatprep.subr.mxu0 0.0
        %2149 = vmatpush1.msra.mxu0 0.0
        %2150 = vmatprep.subr.mxu0 0.0
        %2151 = vmatpush1.msra.mxu0 0.0
        %2152 = vmatprep.subr.mxu0 0.0
        %2153 = vmatpush1.msra.mxu0 0.0
        %2154 = vmatprep.mubr.f32.mxu0 0.0
        %2155 = vmatmul.mubr.f32.gmra.mrb[0].mxu0 %v2088
        %v2156 = vpop.f32.mrb[0].mxu0
        %v2157 = vadd.f32 %v2084, %v2156
        %v2158 = vpop.f32.mrb[0].mxu0
        %2159 = vdwg.mxu0
        %2161 = vrot.lane.b32.xlu0 %v2157, 96
        %v2162 = vpop.permute.xlu0 %2161
        %vm2163 = vcmask 64512
        %v2164 = vsel %vm2163, %v2157, 0
        %v2166 = vsel %vm2163, %v2162, 0
        %2168 = vmatprep.subr.mxu0 0.0
        %2169 = vmatpush1.xpose.msra.mxu0 %v2166
        %2170 = vmatprep.subr.mxu0 0.0
        %2171 = vmatpush1.xpose.msra.mxu0 0.0
        %2172 = vmatprep.subr.mxu0 0.0
        %2173 = vmatpush1.xpose.msra.mxu0 0.0
        %2174 = vmatprep.subr.mxu0 0.0
        %2175 = vmatpush1.xpose.msra.mxu0 0.0
        %2176 = vmatprep.subr.mxu0 0.0
        %2177 = vmatpush1.xpose.msra.mxu0 0.0
        %2178 = vmatprep.subr.mxu0 0.0
        %2179 = vmatpush1.xpose.msra.mxu0 0.0
        %2180 = vmatprep.subr.mxu0 0.0
        %2181 = vmatpush1.xpose.msra.mxu0 0.0
        %2182 = vmatprep.subr.mxu0 0.0
        %2183 = vmatpush1.xpose.msra.mxu0 0.0
        %2184 = vmatprep.subr.mxu0 0.0
        %2185 = vmatpush1.xpose.msra.mxu0 0.0
        %2186 = vmatprep.subr.mxu0 0.0
        %2187 = vmatpush1.xpose.msra.mxu0 0.0
        %2188 = vmatprep.subr.mxu0 0.0
        %2189 = vmatpush1.xpose.msra.mxu0 0.0
        %2190 = vmatprep.subr.mxu0 0.0
        %2191 = vmatpush1.xpose.msra.mxu0 0.0
        %2192 = vmatprep.subr.mxu0 0.0
        %2193 = vmatpush1.xpose.msra.mxu0 0.0
        %2194 = vmatprep.subr.mxu0 0.0
        %2195 = vmatpush1.xpose.msra.mxu0 0.0
        %2196 = vmatprep.subr.mxu0 0.0
        %2197 = vmatpush1.xpose.msra.mxu0 0.0
        %2198 = vmatprep.subr.mxu0 0.0
        %2199 = vmatpush1.xpose.msra.mxu0 0.0
        %2200 = vmatprep.subr.mxu0 0.0
        %2201 = vmatpush1.xpose.msra.mxu0 0.0
        %2202 = vmatprep.subr.mxu0 0.0
        %2203 = vmatpush1.xpose.msra.mxu0 0.0
        %2204 = vmatprep.subr.mxu0 0.0
        %2205 = vmatpush1.xpose.msra.mxu0 0.0
        %2206 = vmatprep.subr.mxu0 0.0
        %2207 = vmatpush1.xpose.msra.mxu0 0.0
        %2208 = vmatprep.subr.mxu0 0.0
        %2209 = vmatpush1.xpose.msra.mxu0 0.0
        %2210 = vmatprep.subr.mxu0 0.0
        %2211 = vmatpush1.xpose.msra.mxu0 0.0
        %2212 = vmatprep.subr.mxu0 0.0
        %2213 = vmatpush1.xpose.msra.mxu0 0.0
        %2214 = vmatprep.subr.mxu0 0.0
        %2215 = vmatpush1.xpose.msra.mxu0 0.0
        %2216 = vmatprep.subr.mxu0 0.0
        %2217 = vmatpush1.xpose.msra.mxu0 0.0
        %2218 = vmatprep.subr.mxu0 0.0
        %2219 = vmatpush1.xpose.msra.mxu0 0.0
        %2220 = vmatprep.subr.mxu0 0.0
        %2221 = vmatpush1.xpose.msra.mxu0 0.0
        %2222 = vmatprep.subr.mxu0 0.0
        %2223 = vmatpush1.xpose.msra.mxu0 0.0
        %2224 = vmatprep.subr.mxu0 0.0
        %2225 = vmatpush1.xpose.msra.mxu0 0.0
        %2226 = vmatprep.subr.mxu0 0.0
        %2227 = vmatpush1.xpose.msra.mxu0 0.0
        %2228 = vmatprep.subr.mxu0 0.0
        %2229 = vmatpush1.xpose.msra.mxu0 0.0
        %2230 = vmatprep.subr.mxu0 0.0
        %2231 = vmatpush1.xpose.msra.mxu0 0.0
        %2232 = vmatprep.mubr.f32.mxu0 0.0
        %2233 = vmatmul.mubr.f32.gmra.mrb[0].mxu0 %v2164
        %v2234 = vpop.f32.mrb[0].mxu0
        %v2235 = vadd.f32 0.0, %v2234
        %v2236 = vpop.f32.mrb[0].mxu0
        %2237 = vdwg.mxu0
        %v2238 = vsel %vm2163, %v2235, -inf
        %2239 = vmax.xlane.f32.xlu0 %v2238
        %v2240 = vpop.xlane.xlu0 %2239
        %v2241 = vsub.f32 %v2235, %v2240
        %v2242 = vmul.f32 %v2241, 1.442695
        %v2243 = vpow.pop %v2242
        %v2244 = vsel %vm2163, %v2243, 0.0
        %2245 = vadd.xlane.f32.xlu0 %v2244
        %v2246 = vpop.xlane.xlu0 %2245
        %v2247 = vrcp.pop %v2246
        %v2248 = vmul.f32 %v2243, %v2247
        %2249 = vrot.lane.b32.xlu0 %v2157, 64
        %v2250 = vpop.permute.xlu0 %2249
        %v2253 = vsel %vm2163, %v2248, 0
        %2255 = vmatprep.subr.mxu0 0.0
        %2256 = vmatpush1.msra.mxu0 %v2250
        %2257 = vmatprep.subr.mxu0 0.0
        %2258 = vmatpush1.msra.mxu0 0.0
        %2259 = vmatprep.subr.mxu0 0.0
        %2260 = vmatpush1.msra.mxu0 0.0
        %2261 = vmatprep.subr.mxu0 0.0
        %2262 = vmatpush1.msra.mxu0 0.0
        %2263 = vmatprep.subr.mxu0 0.0
        %2264 = vmatpush1.msra.mxu0 0.0
        %2265 = vmatprep.subr.mxu0 0.0
        %2266 = vmatpush1.msra.mxu0 0.0
        %2267 = vmatprep.subr.mxu0 0.0
        %2268 = vmatpush1.msra.mxu0 0.0
        %2269 = vmatprep.subr.mxu0 0.0
        %2270 = vmatpush1.msra.mxu0 0.0
        %2271 = vmatprep.subr.mxu0 0.0
        %2272 = vmatpush1.msra.mxu0 0.0
        %2273 = vmatprep.subr.mxu0 0.0
        %2274 = vmatpush1.msra.mxu0 0.0
        %2275 = vmatprep.subr.mxu0 0.0
        %2276 = vmatpush1.msra.mxu0 0.0
        %2277 = vmatprep.subr.mxu0 0.0
        %2278 = vmatpush1.msra.mxu0 0.0
        %2279 = vmatprep.subr.mxu0 0.0
        %2280 = vmatpush1.msra.mxu0 0.0
        %2281 = vmatprep.subr.mxu0 0.0
        %2282 = vmatpush1.msra.mxu0 0.0
        %2283 = vmatprep.subr.mxu0 0.0
        %2284 = vmatpush1.msra.mxu0 0.0
        %2285 = vmatprep.subr.mxu0 0.0
        %2286 = vmatpush1.msra.mxu0 0.0
        %2287 = vmatprep.subr.mxu0 0.0
        %2288 = vmatpush1.msra.mxu0 0.0
        %2289 = vmatprep.subr.mxu0 0.0
        %2290 = vmatpush1.msra.mxu0 0.0
        %2291 = vmatprep.subr.mxu0 0.0
        %2292 = vmatpush1.msra.mxu0 0.0
        %2293 = vmatprep.subr.mxu0 0.0
        %2294 = vmatpush1.msra.mxu0 0.0
        %2295 = vmatprep.subr.mxu0 0.0
        %2296 = vmatpush1.msra.mxu0 0.0
        %2297 = vmatprep.subr.mxu0 0.0
        %2298 = vmatpush1.msra.mxu0 0.0
        %2299 = vmatprep.subr.mxu0 0.0
        %2300 = vmatpush1.msra.mxu0 0.0
        %2301 = vmatprep.subr.mxu0 0.0
        %2302 = vmatpush1.msra.mxu0 0.0
        %2303 = vmatprep.subr.mxu0 0.0
        %2304 = vmatpush1.msra.mxu0 0.0
        %2305 = vmatprep.subr.mxu0 0.0
        %2306 = vmatpush1.msra.mxu0 0.0
        %2307 = vmatprep.subr.mxu0 0.0
        %2308 = vmatpush1.msra.mxu0 0.0
        %2309 = vmatprep.subr.mxu0 0.0
        %2310 = vmatpush1.msra.mxu0 0.0
        %2311 = vmatprep.subr.mxu0 0.0
        %2312 = vmatpush1.msra.mxu0 0.0
        %2313 = vmatprep.subr.mxu0 0.0
        %2314 = vmatpush1.msra.mxu0 0.0
        %2315 = vmatprep.subr.mxu0 0.0
        %2316 = vmatpush1.msra.mxu0 0.0
        %2317 = vmatprep.subr.mxu0 0.0
        %2318 = vmatpush1.msra.mxu0 0.0
        %2319 = vmatprep.mubr.f32.mxu0 0.0
        %2320 = vmatmul.mubr.f32.gmra.mrb[0].mxu0 %v2253
        %v2321 = vpop.f32.mrb[0].mxu0
        %v2322 = vadd.f32 0.0, %v2321
        %v2323 = vpop.f32.mrb[0].mxu0
        %2324 = vdwg.mxu0
        %2325 = vrot.lane.b32.xlu0 %v2157, 120
        %v2326 = vpop.permute.xlu0 %2325
        %2327 = vrot.lane.b32.xlu0 %v2157, 88
        %v2328 = vpop.permute.xlu0 %2327
        %v2329 = vsel %vm2163, %v2326, 0
        %v2331 = vsel %vm2163, %v2328, 0
        %2333 = vmatprep.subr.mxu0 0.0
        %2334 = vmatpush1.xpose.msra.mxu0 %v2331
        %2335 = vmatprep.subr.mxu0 0.0
        %2336 = vmatpush1.xpose.msra.mxu0 0.0
        %2337 = vmatprep.subr.mxu0 0.0
        %2338 = vmatpush1.xpose.msra.mxu0 0.0
        %2339 = vmatprep.subr.mxu0 0.0
        %2340 = vmatpush1.xpose.msra.mxu0 0.0
        %2341 = vmatprep.subr.mxu0 0.0
        %2342 = vmatpush1.xpose.msra.mxu0 0.0
        %2343 = vmatprep.subr.mxu0 0.0
        %2344 = vmatpush1.xpose.msra.mxu0 0.0
        %2345 = vmatprep.subr.mxu0 0.0
        %2346 = vmatpush1.xpose.msra.mxu0 0.0
        %2347 = vmatprep.subr.mxu0 0.0
        %2348 = vmatpush1.xpose.msra.mxu0 0.0
        %2349 = vmatprep.subr.mxu0 0.0
        %2350 = vmatpush1.xpose.msra.mxu0 0.0
        %2351 = vmatprep.subr.mxu0 0.0
        %2352 = vmatpush1.xpose.msra.mxu0 0.0
        %2353 = vmatprep.subr.mxu0 0.0
        %2354 = vmatpush1.xpose.msra.mxu0 0.0
        %2355 = vmatprep.subr.mxu0 0.0
        %2356 = vmatpush1.xpose.msra.mxu0 0.0
        %2357 = vmatprep.subr.mxu0 0.0
        %2358 = vmatpush1.xpose.msra.mxu0 0.0
        %2359 = vmatprep.subr.mxu0 0.0
        %2360 = vmatpush1.xpose.msra.mxu0 0.0
        %2361 = vmatprep.subr.mxu0 0.0
        %2362 = vmatpush1.xpose.msra.mxu0 0.0
        %2363 = vmatprep.subr.mxu0 0.0
        %2364 = vmatpush1.xpose.msra.mxu0 0.0
        %2365 = vmatprep.subr.mxu0 0.0
        %2366 = vmatpush1.xpose.msra.mxu0 0.0
        %2367 = vmatprep.subr.mxu0 0.0
        %2368 = vmatpush1.xpose.msra.mxu0 0.0
        %2369 = vmatprep.subr.mxu0 0.0
        %2370 = vmatpush1.xpose.msra.mxu0 0.0
        %2371 = vmatprep.subr.mxu0 0.0
        %2372 = vmatpush1.xpose.msra.mxu0 0.0
        %2373 = vmatprep.subr.mxu0 0.0
        %2374 = vmatpush1.xpose.msra.mxu0 0.0
        %2375 = vmatprep.subr.mxu0 0.0
        %2376 = vmatpush1.xpose.msra.mxu0 0.0
        %2377 = vmatprep.subr.mxu0 0.0
        %2378 = vmatpush1.xpose.msra.mxu0 0.0
        %2379 = vmatprep.subr.mxu0 0.0
        %2380 = vmatpush1.xpose.msra.mxu0 0.0
        %2381 = vmatprep.subr.mxu0 0.0
        %2382 = vmatpush1.xpose.msra.mxu0 0.0
        %2383 = vmatprep.subr.mxu0 0.0
        %2384 = vmatpush1.xpose.msra.mxu0 0.0
        %2385 = vmatprep.subr.mxu0 0.0
        %2386 = vmatpush1.xpose.msra.mxu0 0.0
        %2387 = vmatprep.subr.mxu0 0.0
        %2388 = vmatpush1.xpose.msra.mxu0 0.0
        %2389 = vmatprep.subr.mxu0 0.0
        %2390 = vmatpush1.xpose.msra.mxu0 0.0
        %2391 = vmatprep.subr.mxu0 0.0
        %2392 = vmatpush1.xpose.msra.mxu0 0.0
        %2393 = vmatprep.subr.mxu0 0.0
        %2394 = vmatpush1.xpose.msra.mxu0 0.0
        %2395 = vmatprep.subr.mxu0 0.0
        %2396 = vmatpush1.xpose.msra.mxu0 0.0
        %2397 = vmatprep.mubr.f32.mxu0 0.0
        %2398 = vmatmul.mubr.f32.gmra.mrb[0].mxu0 %v2329
        %v2399 = vpop.f32.mrb[0].mxu0
        %v2400 = vadd.f32 0.0, %v2399
        %v2401 = vpop.f32.mrb[0].mxu0
        %2402 = vdwg.mxu0
        %v2403 = vsel %vm2163, %v2400, -inf
        %2404 = vmax.xlane.f32.xlu0 %v2403
        %v2405 = vpop.xlane.xlu0 %2404
        %v2406 = vsub.f32 %v2400, %v2405
        %v2407 = vmul.f32 %v2406, 1.442695
        %v2408 = vpow.pop %v2407
        %v2409 = vsel %vm2163, %v2408, 0.0
        %2410 = vadd.xlane.f32.xlu0 %v2409
        %v2411 = vpop.xlane.xlu0 %2410
        %v2412 = vrcp.pop %v2411
        %v2413 = vmul.f32 %v2408, %v2412
        %2414 = vrot.lane.b32.xlu0 %v2157, 56
        %v2415 = vpop.permute.xlu0 %2414
        %v2418 = vsel %vm2163, %v2413, 0
        %2420 = vmatprep.subr.mxu0 0.0
        %2421 = vmatpush1.msra.mxu0 %v2415
        %2422 = vmatprep.subr.mxu0 0.0
        %2423 = vmatpush1.msra.mxu0 0.0
        %2424 = vmatprep.subr.mxu0 0.0
        %2425 = vmatpush1.msra.mxu0 0.0
        %2426 = vmatprep.subr.mxu0 0.0
        %2427 = vmatpush1.msra.mxu0 0.0
        %2428 = vmatprep.subr.mxu0 0.0
        %2429 = vmatpush1.msra.mxu0 0.0
        %2430 = vmatprep.subr.mxu0 0.0
        %2431 = vmatpush1.msra.mxu0 0.0
        %2432 = vmatprep.subr.mxu0 0.0
        %2433 = vmatpush1.msra.mxu0 0.0
        %2434 = vmatprep.subr.mxu0 0.0
        %2435 = vmatpush1.msra.mxu0 0.0
        %2436 = vmatprep.subr.mxu0 0.0
        %2437 = vmatpush1.msra.mxu0 0.0
        %2438 = vmatprep.subr.mxu0 0.0
        %2439 = vmatpush1.msra.mxu0 0.0
        %2440 = vmatprep.subr.mxu0 0.0
        %2441 = vmatpush1.msra.mxu0 0.0
        %2442 = vmatprep.subr.mxu0 0.0
        %2443 = vmatpush1.msra.mxu0 0.0
        %2444 = vmatprep.subr.mxu0 0.0
        %2445 = vmatpush1.msra.mxu0 0.0
        %2446 = vmatprep.subr.mxu0 0.0
        %2447 = vmatpush1.msra.mxu0 0.0
        %2448 = vmatprep.subr.mxu0 0.0
        %2449 = vmatpush1.msra.mxu0 0.0
        %2450 = vmatprep.subr.mxu0 0.0
        %2451 = vmatpush1.msra.mxu0 0.0
        %2452 = vmatprep.subr.mxu0 0.0
        %2453 = vmatpush1.msra.mxu0 0.0
        %2454 = vmatprep.subr.mxu0 0.0
        %2455 = vmatpush1.msra.mxu0 0.0
        %2456 = vmatprep.subr.mxu0 0.0
        %2457 = vmatpush1.msra.mxu0 0.0
        %2458 = vmatprep.subr.mxu0 0.0
        %2459 = vmatpush1.msra.mxu0 0.0
        %2460 = vmatprep.subr.mxu0 0.0
        %2461 = vmatpush1.msra.mxu0 0.0
        %2462 = vmatprep.subr.mxu0 0.0
        %2463 = vmatpush1.msra.mxu0 0.0
        %2464 = vmatprep.subr.mxu0 0.0
        %2465 = vmatpush1.msra.mxu0 0.0
        %2466 = vmatprep.subr.mxu0 0.0
        %2467 = vmatpush1.msra.mxu0 0.0
        %2468 = vmatprep.subr.mxu0 0.0
        %2469 = vmatpush1.msra.mxu0 0.0
        %2470 = vmatprep.subr.mxu0 0.0
        %2471 = vmatpush1.msra.mxu0 0.0
        %2472 = vmatprep.subr.mxu0 0.0
        %2473 = vmatpush1.msra.mxu0 0.0
        %2474 = vmatprep.subr.mxu0 0.0
        %2475 = vmatpush1.msra.mxu0 0.0
        %2476 = vmatprep.subr.mxu0 0.0
        %2477 = vmatpush1.msra.mxu0 0.0
        %2478 = vmatprep.subr.mxu0 0.0
        %2479 = vmatpush1.msra.mxu0 0.0
        %2480 = vmatprep.subr.mxu0 0.0
        %2481 = vmatpush1.msra.mxu0 0.0
        %2482 = vmatprep.subr.mxu0 0.0
        %2483 = vmatpush1.msra.mxu0 0.0
        %2484 = vmatprep.mubr.f32.mxu0 0.0
        %2485 = vmatmul.mubr.f32.gmra.mrb[0].mxu0 %v2418
        %v2486 = vpop.f32.mrb[0].mxu0
        %v2487 = vadd.f32 0.0, %v2486
        %v2488 = vpop.f32.mrb[0].mxu0
        %2489 = vdwg.mxu0
        %2490 = vrot.lane.b32.xlu0 %v2157, 112
        %v2491 = vpop.permute.xlu0 %2490
        %2492 = vrot.lane.b32.xlu0 %v2157, 80
        %v2493 = vpop.permute.xlu0 %2492
        %v2494 = vsel %vm2163, %v2491, 0
        %v2496 = vsel %vm2163, %v2493, 0
        %2498 = vmatprep.subr.mxu0 0.0
        %2499 = vmatpush1.xpose.msra.mxu0 %v2496
        %2500 = vmatprep.subr.mxu0 0.0
        %2501 = vmatpush1.xpose.msra.mxu0 0.0
        %2502 = vmatprep.subr.mxu0 0.0
        %2503 = vmatpush1.xpose.msra.mxu0 0.0
        %2504 = vmatprep.subr.mxu0 0.0
        %2505 = vmatpush1.xpose.msra.mxu0 0.0
        %2506 = vmatprep.subr.mxu0 0.0
        %2507 = vmatpush1.xpose.msra.mxu0 0.0
        %2508 = vmatprep.subr.mxu0 0.0
        %2509 = vmatpush1.xpose.msra.mxu0 0.0
        %2510 = vmatprep.subr.mxu0 0.0
        %2511 = vmatpush1.xpose.msra.mxu0 0.0
        %2512 = vmatprep.subr.mxu0 0.0
        %2513 = vmatpush1.xpose.msra.mxu0 0.0
        %2514 = vmatprep.subr.mxu0 0.0
        %2515 = vmatpush1.xpose.msra.mxu0 0.0
        %2516 = vmatprep.subr.mxu0 0.0
        %2517 = vmatpush1.xpose.msra.mxu0 0.0
        %2518 = vmatprep.subr.mxu0 0.0
        %2519 = vmatpush1.xpose.msra.mxu0 0.0
        %2520 = vmatprep.subr.mxu0 0.0
        %2521 = vmatpush1.xpose.msra.mxu0 0.0
        %2522 = vmatprep.subr.mxu0 0.0
        %2523 = vmatpush1.xpose.msra.mxu0 0.0
        %2524 = vmatprep.subr.mxu0 0.0
        %2525 = vmatpush1.xpose.msra.mxu0 0.0
        %2526 = vmatprep.subr.mxu0 0.0
        %2527 = vmatpush1.xpose.msra.mxu0 0.0
        %2528 = vmatprep.subr.mxu0 0.0
        %2529 = vmatpush1.xpose.msra.mxu0 0.0
        %2530 = vmatprep.subr.mxu0 0.0
        %2531 = vmatpush1.xpose.msra.mxu0 0.0
        %2532 = vmatprep.subr.mxu0 0.0
        %2533 = vmatpush1.xpose.msra.mxu0 0.0
        %2534 = vmatprep.subr.mxu0 0.0
        %2535 = vmatpush1.xpose.msra.mxu0 0.0
        %2536 = vmatprep.subr.mxu0 0.0
        %2537 = vmatpush1.xpose.msra.mxu0 0.0
        %2538 = vmatprep.subr.mxu0 0.0
        %2539 = vmatpush1.xpose.msra.mxu0 0.0
        %2540 = vmatprep.subr.mxu0 0.0
        %2541 = vmatpush1.xpose.msra.mxu0 0.0
        %2542 = vmatprep.subr.mxu0 0.0
        %2543 = vmatpush1.xpose.msra.mxu0 0.0
        %2544 = vmatprep.subr.mxu0 0.0
        %2545 = vmatpush1.xpose.msra.mxu0 0.0
        %2546 = vmatprep.subr.mxu0 0.0
        %2547 = vmatpush1.xpose.msra.mxu0 0.0
        %2548 = vmatprep.subr.mxu0 0.0
        %2549 = vmatpush1.xpose.msra.mxu0 0.0
        %2550 = vmatprep.subr.mxu0 0.0
        %2551 = vmatpush1.xpose.msra.mxu0 0.0
        %2552 = vmatprep.subr.mxu0 0.0
        %2553 = vmatpush1.xpose.msra.mxu0 0.0
        %2554 = vmatprep.subr.mxu0 0.0
        %2555 = vmatpush1.xpose.msra.mxu0 0.0
        %2556 = vmatprep.subr.mxu0 0.0
        %2557 = vmatpush1.xpose.msra.mxu0 0.0
        %2558 = vmatprep.subr.mxu0 0.0
        %2559 = vmatpush1.xpose.msra.mxu0 0.0
        %2560 = vmatprep.subr.mxu0 0.0
        %2561 = vmatpush1.xpose.msra.mxu0 0.0
        %2562 = vmatprep.mubr.f32.mxu0 0.0
        %2563 = vmatmul.mubr.f32.gmra.mrb[0].mxu0 %v2494
        %v2564 = vpop.f32.mrb[0].mxu0
        %v2565 = vadd.f32 0.0, %v2564
        %v2566 = vpop.f32.mrb[0].mxu0
        %2567 = vdwg.mxu0
        %v2568 = vsel %vm2163, %v2565, -inf
        %2569 = vmax.xlane.f32.xlu0 %v2568
        %v2570 = vpop.xlane.xlu0 %2569
        %v2571 = vsub.f32 %v2565, %v2570
        %v2572 = vmul.f32 %v2571, 1.442695
        %v2573 = vpow.pop %v2572
        %v2574 = vsel %vm2163, %v2573, 0.0
        %2575 = vadd.xlane.f32.xlu0 %v2574
        %v2576 = vpop.xlane.xlu0 %2575
        %v2577 = vrcp.pop %v2576
        %v2578 = vmul.f32 %v2573, %v2577
        %2579 = vrot.lane.b32.xlu0 %v2157, 48
        %v2580 = vpop.permute.xlu0 %2579
        %v2583 = vsel %vm2163, %v2578, 0
        %2585 = vmatprep.subr.mxu0 0.0
        %2586 = vmatpush1.msra.mxu0 %v2580
        %2587 = vmatprep.subr.mxu0 0.0
        %2588 = vmatpush1.msra.mxu0 0.0
        %2589 = vmatprep.subr.mxu0 0.0
        %2590 = vmatpush1.msra.mxu0 0.0
        %2591 = vmatprep.subr.mxu0 0.0
        %2592 = vmatpush1.msra.mxu0 0.0
        %2593 = vmatprep.subr.mxu0 0.0
        %2594 = vmatpush1.msra.mxu0 0.0
        %2595 = vmatprep.subr.mxu0 0.0
        %2596 = vmatpush1.msra.mxu0 0.0
        %2597 = vmatprep.subr.mxu0 0.0
        %2598 = vmatpush1.msra.mxu0 0.0
        %2599 = vmatprep.subr.mxu0 0.0
        %2600 = vmatpush1.msra.mxu0 0.0
        %2601 = vmatprep.subr.mxu0 0.0
        %2602 = vmatpush1.msra.mxu0 0.0
        %2603 = vmatprep.subr.mxu0 0.0
        %2604 = vmatpush1.msra.mxu0 0.0
        %2605 = vmatprep.subr.mxu0 0.0
        %2606 = vmatpush1.msra.mxu0 0.0
        %2607 = vmatprep.subr.mxu0 0.0
        %2608 = vmatpush1.msra.mxu0 0.0
        %2609 = vmatprep.subr.mxu0 0.0
        %2610 = vmatpush1.msra.mxu0 0.0
        %2611 = vmatprep.subr.mxu0 0.0
        %2612 = vmatpush1.msra.mxu0 0.0
        %2613 = vmatprep.subr.mxu0 0.0
        %2614 = vmatpush1.msra.mxu0 0.0
        %2615 = vmatprep.subr.mxu0 0.0
        %2616 = vmatpush1.msra.mxu0 0.0
        %2617 = vmatprep.subr.mxu0 0.0
        %2618 = vmatpush1.msra.mxu0 0.0
        %2619 = vmatprep.subr.mxu0 0.0
        %2620 = vmatpush1.msra.mxu0 0.0
        %2621 = vmatprep.subr.mxu0 0.0
        %2622 = vmatpush1.msra.mxu0 0.0
        %2623 = vmatprep.subr.mxu0 0.0
        %2624 = vmatpush1.msra.mxu0 0.0
        %2625 = vmatprep.subr.mxu0 0.0
        %2626 = vmatpush1.msra.mxu0 0.0
        %2627 = vmatprep.subr.mxu0 0.0
        %2628 = vmatpush1.msra.mxu0 0.0
        %2629 = vmatprep.subr.mxu0 0.0
        %2630 = vmatpush1.msra.mxu0 0.0
        %2631 = vmatprep.subr.mxu0 0.0
        %2632 = vmatpush1.msra.mxu0 0.0
        %2633 = vmatprep.subr.mxu0 0.0
        %2634 = vmatpush1.msra.mxu0 0.0
        %2635 = vmatprep.subr.mxu0 0.0
        %2636 = vmatpush1.msra.mxu0 0.0
        %2637 = vmatprep.subr.mxu0 0.0
        %2638 = vmatpush1.msra.mxu0 0.0
        %2639 = vmatprep.subr.mxu0 0.0
        %2640 = vmatpush1.msra.mxu0 0.0
        %2641 = vmatprep.subr.mxu0 0.0
        %2642 = vmatpush1.msra.mxu0 0.0
        %2643 = vmatprep.subr.mxu0 0.0
        %2644 = vmatpush1.msra.mxu0 0.0
        %2645 = vmatprep.subr.mxu0 0.0
        %2646 = vmatpush1.msra.mxu0 0.0
        %2647 = vmatprep.subr.mxu0 0.0
        %2648 = vmatpush1.msra.mxu0 0.0
        %2649 = vmatprep.mubr.f32.mxu0 0.0
        %2650 = vmatmul.mubr.f32.gmra.mrb[0].mxu0 %v2583
        %v2651 = vpop.f32.mrb[0].mxu0
        %v2652 = vadd.f32 0.0, %v2651
        %v2653 = vpop.f32.mrb[0].mxu0
        %2654 = vdwg.mxu0
        %2655 = vrot.lane.b32.xlu0 %v2157, 104
        %v2656 = vpop.permute.xlu0 %2655
        %2657 = vrot.lane.b32.xlu0 %v2157, 72
        %v2658 = vpop.permute.xlu0 %2657
        %v2659 = vsel %vm2163, %v2656, 0
        %v2661 = vsel %vm2163, %v2658, 0
        %2663 = vmatprep.subr.mxu0 0.0
        %2664 = vmatpush1.xpose.msra.mxu0 %v2661
        %2665 = vmatprep.subr.mxu0 0.0
        %2666 = vmatpush1.xpose.msra.mxu0 0.0
        %2667 = vmatprep.subr.mxu0 0.0
        %2668 = vmatpush1.xpose.msra.mxu0 0.0
        %2669 = vmatprep.subr.mxu0 0.0
        %2670 = vmatpush1.xpose.msra.mxu0 0.0
        %2671 = vmatprep.subr.mxu0 0.0
        %2672 = vmatpush1.xpose.msra.mxu0 0.0
        %2673 = vmatprep.subr.mxu0 0.0
        %2674 = vmatpush1.xpose.msra.mxu0 0.0
        %2675 = vmatprep.subr.mxu0 0.0
        %2676 = vmatpush1.xpose.msra.mxu0 0.0
        %2677 = vmatprep.subr.mxu0 0.0
        %2678 = vmatpush1.xpose.msra.mxu0 0.0
        %2679 = vmatprep.subr.mxu0 0.0
        %2680 = vmatpush1.xpose.msra.mxu0 0.0
        %2681 = vmatprep.subr.mxu0 0.0
        %2682 = vmatpush1.xpose.msra.mxu0 0.0
        %2683 = vmatprep.subr.mxu0 0.0
        %2684 = vmatpush1.xpose.msra.mxu0 0.0
        %2685 = vmatprep.subr.mxu0 0.0
        %2686 = vmatpush1.xpose.msra.mxu0 0.0
        %2687 = vmatprep.subr.mxu0 0.0
        %2688 = vmatpush1.xpose.msra.mxu0 0.0
        %2689 = vmatprep.subr.mxu0 0.0
        %2690 = vmatpush1.xpose.msra.mxu0 0.0
        %2691 = vmatprep.subr.mxu0 0.0
        %2692 = vmatpush1.xpose.msra.mxu0 0.0
        %2693 = vmatprep.subr.mxu0 0.0
        %2694 = vmatpush1.xpose.msra.mxu0 0.0
        %2695 = vmatprep.subr.mxu0 0.0
        %2696 = vmatpush1.xpose.msra.mxu0 0.0
        %2697 = vmatprep.subr.mxu0 0.0
        %2698 = vmatpush1.xpose.msra.mxu0 0.0
        %2699 = vmatprep.subr.mxu0 0.0
        %2700 = vmatpush1.xpose.msra.mxu0 0.0
        %2701 = vmatprep.subr.mxu0 0.0
        %2702 = vmatpush1.xpose.msra.mxu0 0.0
        %2703 = vmatprep.subr.mxu0 0.0
        %2704 = vmatpush1.xpose.msra.mxu0 0.0
        %2705 = vmatprep.subr.mxu0 0.0
        %2706 = vmatpush1.xpose.msra.mxu0 0.0
        %2707 = vmatprep.subr.mxu0 0.0
        %2708 = vmatpush1.xpose.msra.mxu0 0.0
        %2709 = vmatprep.subr.mxu0 0.0
        %2710 = vmatpush1.xpose.msra.mxu0 0.0
        %2711 = vmatprep.subr.mxu0 0.0
        %2712 = vmatpush1.xpose.msra.mxu0 0.0
        %2713 = vmatprep.subr.mxu0 0.0
        %2714 = vmatpush1.xpose.msra.mxu0 0.0
        %2715 = vmatprep.subr.mxu0 0.0
        %2716 = vmatpush1.xpose.msra.mxu0 0.0
        %2717 = vmatprep.subr.mxu0 0.0
        %2718 = vmatpush1.xpose.msra.mxu0 0.0
        %2719 = vmatprep.subr.mxu0 0.0
        %2720 = vmatpush1.xpose.msra.mxu0 0.0
        %2721 = vmatprep.subr.mxu0 0.0
        %2722 = vmatpush1.xpose.msra.mxu0 0.0
        %2723 = vmatprep.subr.mxu0 0.0
        %2724 = vmatpush1.xpose.msra.mxu0 0.0
        %2725 = vmatprep.subr.mxu0 0.0
        %2726 = vmatpush1.xpose.msra.mxu0 0.0
        %2727 = vmatprep.mubr.f32.mxu0 0.0
        %2728 = vmatmul.mubr.f32.gmra.mrb[0].mxu0 %v2659
        %v2729 = vpop.f32.mrb[0].mxu0
        %v2730 = vadd.f32 0.0, %v2729
        %v2731 = vpop.f32.mrb[0].mxu0
        %2732 = vdwg.mxu0
        %v2733 = vsel %vm2163, %v2730, -inf
        %2734 = vmax.xlane.f32.xlu0 %v2733
        %v2735 = vpop.xlane.xlu0 %2734
        %v2736 = vsub.f32 %v2730, %v2735
        %v2737 = vmul.f32 %v2736, 1.442695
        %v2738 = vpow.pop %v2737
        %v2739 = vsel %vm2163, %v2738, 0.0
        %2740 = vadd.xlane.f32.xlu0 %v2739
        %v2741 = vpop.xlane.xlu0 %2740
        %v2742 = vrcp.pop %v2741
        %v2743 = vmul.f32 %v2738, %v2742
        %2744 = vrot.lane.b32.xlu0 %v2157, 40
        %v2745 = vpop.permute.xlu0 %2744
        %v2748 = vsel %vm2163, %v2743, 0
        %2750 = vmatprep.subr.mxu0 0.0
        %2751 = vmatpush1.msra.mxu0 %v2745
        %2752 = vmatprep.subr.mxu0 0.0
        %2753 = vmatpush1.msra.mxu0 0.0
        %2754 = vmatprep.subr.mxu0 0.0
        %2755 = vmatpush1.msra.mxu0 0.0
        %2756 = vmatprep.subr.mxu0 0.0
        %2757 = vmatpush1.msra.mxu0 0.0
        %2758 = vmatprep.subr.mxu0 0.0
        %2759 = vmatpush1.msra.mxu0 0.0
        %2760 = vmatprep.subr.mxu0 0.0
        %2761 = vmatpush1.msra.mxu0 0.0
        %2762 = vmatprep.subr.mxu0 0.0
        %2763 = vmatpush1.msra.mxu0 0.0
        %2764 = vmatprep.subr.mxu0 0.0
        %2765 = vmatpush1.msra.mxu0 0.0
        %2766 = vmatprep.subr.mxu0 0.0
        %2767 = vmatpush1.msra.mxu0 0.0
        %2768 = vmatprep.subr.mxu0 0.0
        %2769 = vmatpush1.msra.mxu0 0.0
        %2770 = vmatprep.subr.mxu0 0.0
        %2771 = vmatpush1.msra.mxu0 0.0
        %2772 = vmatprep.subr.mxu0 0.0
        %2773 = vmatpush1.msra.mxu0 0.0
        %2774 = vmatprep.subr.mxu0 0.0
        %2775 = vmatpush1.msra.mxu0 0.0
        %2776 = vmatprep.subr.mxu0 0.0
        %2777 = vmatpush1.msra.mxu0 0.0
        %2778 = vmatprep.subr.mxu0 0.0
        %2779 = vmatpush1.msra.mxu0 0.0
        %2780 = vmatprep.subr.mxu0 0.0
        %2781 = vmatpush1.msra.mxu0 0.0
        %2782 = vmatprep.subr.mxu0 0.0
        %2783 = vmatpush1.msra.mxu0 0.0
        %2784 = vmatprep.subr.mxu0 0.0
        %2785 = vmatpush1.msra.mxu0 0.0
        %2786 = vmatprep.subr.mxu0 0.0
        %2787 = vmatpush1.msra.mxu0 0.0
        %2788 = vmatprep.subr.mxu0 0.0
        %2789 = vmatpush1.msra.mxu0 0.0
        %2790 = vmatprep.subr.mxu0 0.0
        %2791 = vmatpush1.msra.mxu0 0.0
        %2792 = vmatprep.subr.mxu0 0.0
        %2793 = vmatpush1.msra.mxu0 0.0
        %2794 = vmatprep.subr.mxu0 0.0
        %2795 = vmatpush1.msra.mxu0 0.0
        %2796 = vmatprep.subr.mxu0 0.0
        %2797 = vmatpush1.msra.mxu0 0.0
        %2798 = vmatprep.subr.mxu0 0.0
        %2799 = vmatpush1.msra.mxu0 0.0
        %2800 = vmatprep.subr.mxu0 0.0
        %2801 = vmatpush1.msra.mxu0 0.0
        %2802 = vmatprep.subr.mxu0 0.0
        %2803 = vmatpush1.msra.mxu0 0.0
        %2804 = vmatprep.subr.mxu0 0.0
        %2805 = vmatpush1.msra.mxu0 0.0
        %2806 = vmatprep.subr.mxu0 0.0
        %2807 = vmatpush1.msra.mxu0 0.0
        %2808 = vmatprep.subr.mxu0 0.0
        %2809 = vmatpush1.msra.mxu0 0.0
        %2810 = vmatprep.subr.mxu0 0.0
        %2811 = vmatpush1.msra.mxu0 0.0
        %2812 = vmatprep.subr.mxu0 0.0
        %2813 = vmatpush1.msra.mxu0 0.0
        %2814 = vmatprep.mubr.f32.mxu0 0.0
        %2815 = vmatmul.mubr.f32.gmra.mrb[0].mxu0 %v2748
        %v2816 = vpop.f32.mrb[0].mxu0
        %v2817 = vadd.f32 0.0, %v2816
        %v2818 = vpop.f32.mrb[0].mxu0
        %2819 = vdwg.mxu0
        %2821 = vrot.lane.b32.xlu0 %v2487, 8
        %v2822 = vpop.permute.xlu0 %2821
        %2825 = vrot.lane.b32.xlu0 %v2652, 16
        %v2826 = vpop.permute.xlu0 %2825
        %2829 = vrot.lane.b32.xlu0 %v2817, 24
        %v2830 = vpop.permute.xlu0 %2829
        %v2832 = vsel %vm2163, %v2322, %v2822
        %v2833 = vsel %vm1772, %v2832, %v2826
        %vm2834 = vcmask 195584
        %v2835 = vsel %vm2834, %v2833, %v2830
        %v2836 = vld [vmem:[%s19] sm:$0xff]
        %v2837 = vld [vmem:[%s19 + $0x8] sm:$0xff]
        %v2838 = vld [vmem:[%s19 + $0x10] sm:$0xff]
        %v2839 = vld [vmem:[%s19 + $0x18] sm:$0xff]
        %v2840 = vld [vmem:[%s21] sm:$0x1]
        %v2842 = vlaneseq
        %v2843 = vshrl.u32 %v2842, 7
        %v2844 = vsub.s32 0, %v2843
        %v2845 = vrot.slane %v2840, %v2844
        %v2848 = vsel %vm2086, %v2835, 0
        %2850 = vmatprep.subr.mxu0 0.0
        %2851 = vmatpush1.msra.mxu0 %v2836
        %2852 = vmatprep.subr.mxu0 0.0
        %2853 = vmatpush1.msra.mxu0 %v2837
        %2854 = vmatprep.subr.mxu0 0.0
        %2855 = vmatpush1.msra.mxu0 %v2838
        %2856 = vmatprep.subr.mxu0 0.0
        %2857 = vmatpush1.msra.mxu0 %v2839
        %2858 = vmatprep.subr.mxu0 0.0
        %2859 = vmatpush1.msra.mxu0 0.0
        %2860 = vmatprep.subr.mxu0 0.0
        %2861 = vmatpush1.msra.mxu0 0.0
        %2862 = vmatprep.subr.mxu0 0.0
        %2863 = vmatpush1.msra.mxu0 0.0
        %2864 = vmatprep.subr.mxu0 0.0
        %2865 = vmatpush1.msra.mxu0 0.0
        %2866 = vmatprep.subr.mxu0 0.0
        %2867 = vmatpush1.msra.mxu0 0.0
        %2868 = vmatprep.subr.mxu0 0.0
        %2869 = vmatpush1.msra.mxu0 0.0
        %2870 = vmatprep.subr.mxu0 0.0
        %2871 = vmatpush1.msra.mxu0 0.0
        %2872 = vmatprep.subr.mxu0 0.0
        %2873 = vmatpush1.msra.mxu0 0.0
        %2874 = vmatprep.subr.mxu0 0.0
        %2875 = vmatpush1.msra.mxu0 0.0
        %2876 = vmatprep.subr.mxu0 0.0
        %2877 = vmatpush1.msra.mxu0 0.0
        %2878 = vmatprep.subr.mxu0 0.0
        %2879 = vmatpush1.msra.mxu0 0.0
        %2880 = vmatprep.subr.mxu0 0.0
        %2881 = vmatpush1.msra.mxu0 0.0
        %2882 = vmatprep.subr.mxu0 0.0
        %2883 = vmatpush1.msra.mxu0 0.0
        %2884 = vmatprep.subr.mxu0 0.0
        %2885 = vmatpush1.msra.mxu0 0.0
        %2886 = vmatprep.subr.mxu0 0.0
        %2887 = vmatpush1.msra.mxu0 0.0
        %2888 = vmatprep.subr.mxu0 0.0
        %2889 = vmatpush1.msra.mxu0 0.0
        %2890 = vmatprep.subr.mxu0 0.0
        %2891 = vmatpush1.msra.mxu0 0.0
        %2892 = vmatprep.subr.mxu0 0.0
        %2893 = vmatpush1.msra.mxu0 0.0
        %2894 = vmatprep.subr.mxu0 0.0
        %2895 = vmatpush1.msra.mxu0 0.0
        %2896 = vmatprep.subr.mxu0 0.0
        %2897 = vmatpush1.msra.mxu0 0.0
        %2898 = vmatprep.subr.mxu0 0.0
        %2899 = vmatpush1.msra.mxu0 0.0
        %2900 = vmatprep.subr.mxu0 0.0
        %2901 = vmatpush1.msra.mxu0 0.0
        %2902 = vmatprep.subr.mxu0 0.0
        %2903 = vmatpush1.msra.mxu0 0.0
        %2904 = vmatprep.subr.mxu0 0.0
        %2905 = vmatpush1.msra.mxu0 0.0
        %2906 = vmatprep.subr.mxu0 0.0
        %2907 = vmatpush1.msra.mxu0 0.0
        %2908 = vmatprep.subr.mxu0 0.0
        %2909 = vmatpush1.msra.mxu0 0.0
        %2910 = vmatprep.subr.mxu0 0.0
        %2911 = vmatpush1.msra.mxu0 0.0
        %2912 = vmatprep.subr.mxu0 0.0
        %2913 = vmatpush1.msra.mxu0 0.0
        %2914 = vmatprep.mubr.f32.mxu0 0.0
        %2915 = vmatmul.mubr.f32.gmra.mrb[0].mxu0 %v2848
        %v2916 = vpop.f32.mrb[0].mxu0
        %v2917 = vadd.f32 %v2845, %v2916
        %v2918 = vpop.f32.mrb[0].mxu0
        %2919 = vdwg.mxu0
        %v2920 = vadd.f32 %v1913, %v2917
        %v2921 = vld [vmem:[#allocation2] sm:$0x1]
        %v2922 = vld [vmem:[#allocation5] sm:$0x1]
        %v2923 = vsel %vm2086, %v2920, 0.0
        %2924 = vadd.xlane.f32.xlu0 %v2923
        %v2925 = vpop.xlane.xlu0 %2924
        %v2926 = vrcp.pop 32.0
        %v2927 = vmul.f32 %v2925, %v2926
        %v2928 = vsub.f32 %v2920, %v2927
        %v2929 = vmul.f32 %v2928, %v2928
        %v2930 = vsel %vm2086, %v2929, 0.0
        %2931 = vadd.xlane.f32.xlu0 %v2930
        %v2932 = vpop.xlane.xlu0 %2931
        %v2933 = vmul.f32 %v2932, %v2926
        %v2934 = vadd.f32 %v2933, 1e-05
        %v2935 = vrsqrt.pop %v2934
        %v2936 = vmul.f32 %v2928, %v2935
        %v2938 = vlaneseq
        %v2939 = vshrl.u32 %v2938, 7
        %v2940 = vsub.s32 0, %v2939
        %v2941 = vrot.slane %v2921, %v2940
        %v2943 = vmul.f32 %v2936, %v2941
        %v2945 = vlaneseq
        %v2946 = vshrl.u32 %v2945, 7
        %v2947 = vsub.s32 0, %v2946
        %v2948 = vrot.slane %v2922, %v2947
        %v2950 = vadd.f32 %v2943, %v2948
        %v2951 = vld [vmem:[%s27] sm:$0xff]
        %v2952 = vld [vmem:[%s27 + $0x8] sm:$0xff]
        %v2953 = vld [vmem:[%s27 + $0x10] sm:$0xff]
        %v2954 = vld [vmem:[%s27 + $0x18] sm:$0xff]
        %v2955 = vld [vmem:[#allocation7] sm:$0x1]
        %v2957 = vlaneseq
        %v2958 = vshrl.u32 %v2957, 7
        %v2959 = vsub.s32 0, %v2958
        %v2960 = vrot.slane %v2955, %v2959
        %v2963 = vsel %vm2086, %v2950, 0
        %2965 = vmatprep.subr.mxu0 0.0
        %2966 = vmatpush1.msra.mxu0 %v2951
        %2967 = vmatprep.subr.mxu0 0.0
        %2968 = vmatpush1.msra.mxu0 %v2952
        %2969 = vmatprep.subr.mxu0 0.0
        %2970 = vmatpush1.msra.mxu0 %v2953
        %2971 = vmatprep.subr.mxu0 0.0
        %2972 = vmatpush1.msra.mxu0 %v2954
        %2973 = vmatprep.subr.mxu0 0.0
        %2974 = vmatpush1.msra.mxu0 0.0
        %2975 = vmatprep.subr.mxu0 0.0
        %2976 = vmatpush1.msra.mxu0 0.0
        %2977 = vmatprep.subr.mxu0 0.0
        %2978 = vmatpush1.msra.mxu0 0.0
        %2979 = vmatprep.subr.mxu0 0.0
        %2980 = vmatpush1.msra.mxu0 0.0
        %2981 = vmatprep.subr.mxu0 0.0
        %2982 = vmatpush1.msra.mxu0 0.0
        %2983 = vmatprep.subr.mxu0 0.0
        %2984 = vmatpush1.msra.mxu0 0.0
        %2985 = vmatprep.subr.mxu0 0.0
        %2986 = vmatpush1.msra.mxu0 0.0
        %2987 = vmatprep.subr.mxu0 0.0
        %2988 = vmatpush1.msra.mxu0 0.0
        %2989 = vmatprep.subr.mxu0 0.0
        %2990 = vmatpush1.msra.mxu0 0.0
        %2991 = vmatprep.subr.mxu0 0.0
        %2992 = vmatpush1.msra.mxu0 0.0
        %2993 = vmatprep.subr.mxu0 0.0
        %2994 = vmatpush1.msra.mxu0 0.0
        %2995 = vmatprep.subr.mxu0 0.0
        %2996 = vmatpush1.msra.mxu0 0.0
        %2997 = vmatprep.subr.mxu0 0.0
        %2998 = vmatpush1.msra.mxu0 0.0
        %2999 = vmatprep.subr.mxu0 0.0
        %3000 = vmatpush1.msra.mxu0 0.0
        %3001 = vmatprep.subr.mxu0 0.0
        %3002 = vmatpush1.msra.mxu0 0.0
        %3003 = vmatprep.subr.mxu0 0.0
        %3004 = vmatpush1.msra.mxu0 0.0
        %3005 = vmatprep.subr.mxu0 0.0
        %3006 = vmatpush1.msra.mxu0 0.0
        %3007 = vmatprep.subr.mxu0 0.0
        %3008 = vmatpush1.msra.mxu0 0.0
        %3009 = vmatprep.subr.mxu0 0.0
        %3010 = vmatpush1.msra.mxu0 0.0
        %3011 = vmatprep.subr.mxu0 0.0
        %3012 = vmatpush1.msra.mxu0 0.0
        %3013 = vmatprep.subr.mxu0 0.0
        %3014 = vmatpush1.msra.mxu0 0.0
        %3015 = vmatprep.subr.mxu0 0.0
        %3016 = vmatpush1.msra.mxu0 0.0
        %3017 = vmatprep.subr.mxu0 0.0
        %3018 = vmatpush1.msra.mxu0 0.0
        %3019 = vmatprep.subr.mxu0 0.0
        %3020 = vmatpush1.msra.mxu0 0.0
        %3021 = vmatprep.subr.mxu0 0.0
        %3022 = vmatpush1.msra.mxu0 0.0
        %3023 = vmatprep.subr.mxu0 0.0
        %3024 = vmatpush1.msra.mxu0 0.0
        %3025 = vmatprep.subr.mxu0 0.0
        %3026 = vmatpush1.msra.mxu0 0.0
        %3027 = vmatprep.subr.mxu0 0.0
        %3028 = vmatpush1.msra.mxu0 0.0
        %3029 = vmatprep.mubr.f32.mxu0 0.0
        %3030 = vmatmul.mubr.f32.gmra.mrb[0].mxu0 %v2963
        %v3031 = vpop.f32.mrb[0].mxu0
        %v3032 = vadd.f32 %v2960, %v3031
        %v3033 = vpop.f32.mrb[0].mxu0
        %3034 = vdwg.mxu0
        %v3035 = vmax.f32 %v3032, 0.0
        %v3036 = vld [vmem:[%s31] sm:$0xff]
        %v3037 = vld [vmem:[%s31 + $0x8] sm:$0xff]
        %v3038 = vld [vmem:[%s31 + $0x10] sm:$0xff]
        %v3039 = vld [vmem:[%s31 + $0x18] sm:$0xff]
        %v3040 = vld [vmem:[%s31 + $0x20] sm:$0xff]
        %v3041 = vld [vmem:[%s31 + $0x28] sm:$0xff]
        %v3042 = vld [vmem:[%s31 + $0x30] sm:$0xff]
        %v3043 = vld [vmem:[%s31 + $0x38] sm:$0xff]
        %v3044 = vld [vmem:[#allocation8] sm:$0x1]
        %v3046 = vlaneseq
        %v3047 = vshrl.u32 %v3046, 7
        %v3048 = vsub.s32 0, %v3047
        %v3049 = vrot.slane %v3044, %v3048
        %vm3051 = vcmask 523264
        %v3053 = vsel %vm3051, %v3035, 0
        %3055 = vmatprep.subr.mxu0 0.0
        %3056 = vmatpush1.msra.mxu0 %v3036
        %3057 = vmatprep.subr.mxu0 0.0
        %3058 = vmatpush1.msra.mxu0 %v3037
        %3059 = vmatprep.subr.mxu0 0.0
        %3060 = vmatpush1.msra.mxu0 %v3038
        %3061 = vmatprep.subr.mxu0 0.0
        %3062 = vmatpush1.msra.mxu0 %v3039
        %3063 = vmatprep.subr.mxu0 0.0
        %3064 = vmatpush1.msra.mxu0 %v3040
        %3065 = vmatprep.subr.mxu0 0.0
        %3066 = vmatpush1.msra.mxu0 %v3041
        %3067 = vmatprep.subr.mxu0 0.0
        %3068 = vmatpush1.msra.mxu0 %v3042
        %3069 = vmatprep.subr.mxu0 0.0
        %3070 = vmatpush1.msra.mxu0 %v3043
        %3071 = vmatprep.subr.mxu0 0.0
        %3072 = vmatpush1.msra.mxu0 0.0
        %3073 = vmatprep.subr.mxu0 0.0
        %3074 = vmatpush1.msra.mxu0 0.0
        %3075 = vmatprep.subr.mxu0 0.0
        %3076 = vmatpush1.msra.mxu0 0.0
        %3077 = vmatprep.subr.mxu0 0.0
        %3078 = vmatpush1.msra.mxu0 0.0
        %3079 = vmatprep.subr.mxu0 0.0
        %3080 = vmatpush1.msra.mxu0 0.0
        %3081 = vmatprep.subr.mxu0 0.0
        %3082 = vmatpush1.msra.mxu0 0.0
        %3083 = vmatprep.subr.mxu0 0.0
        %3084 = vmatpush1.msra.mxu0 0.0
        %3085 = vmatprep.subr.mxu0 0.0
        %3086 = vmatpush1.msra.mxu0 0.0
        %3087 = vmatprep.subr.mxu0 0.0
        %3088 = vmatpush1.msra.mxu0 0.0
        %3089 = vmatprep.subr.mxu0 0.0
        %3090 = vmatpush1.msra.mxu0 0.0
        %3091 = vmatprep.subr.mxu0 0.0
        %3092 = vmatpush1.msra.mxu0 0.0
        %3093 = vmatprep.subr.mxu0 0.0
        %3094 = vmatpush1.msra.mxu0 0.0
        %3095 = vmatprep.subr.mxu0 0.0
        %3096 = vmatpush1.msra.mxu0 0.0
        %3097 = vmatprep.subr.mxu0 0.0
        %3098 = vmatpush1.msra.mxu0 0.0
        %3099 = vmatprep.subr.mxu0 0.0
        %3100 = vmatpush1.msra.mxu0 0.0
        %3101 = vmatprep.subr.mxu0 0.0
        %3102 = vmatpush1.msra.mxu0 0.0
        %3103 = vmatprep.subr.mxu0 0.0
        %3104 = vmatpush1.msra.mxu0 0.0
        %3105 = vmatprep.subr.mxu0 0.0
        %3106 = vmatpush1.msra.mxu0 0.0
        %3107 = vmatprep.subr.mxu0 0.0
        %3108 = vmatpush1.msra.mxu0 0.0
        %3109 = vmatprep.subr.mxu0 0.0
        %3110 = vmatpush1.msra.mxu0 0.0
        %3111 = vmatprep.subr.mxu0 0.0
        %3112 = vmatpush1.msra.mxu0 0.0
        %3113 = vmatprep.subr.mxu0 0.0
        %3114 = vmatpush1.msra.mxu0 0.0
        %3115 = vmatprep.subr.mxu0 0.0
        %3116 = vmatpush1.msra.mxu0 0.0
        %3117 = vmatprep.subr.mxu0 0.0
        %3118 = vmatpush1.msra.mxu0 0.0
        %3119 = vmatprep.mubr.f32.mxu0 0.0
        %3120 = vmatmul.mubr.f32.gmra.mrb[0].mxu0 %v3053
        %v3121 = vpop.f32.mrb[0].mxu0
        %v3122 = vadd.f32 %v3049, %v3121
        %v3123 = vpop.f32.mrb[0].mxu0
        %3124 = vdwg.mxu0
        %v3125 = vadd.f32 %v2950, %v3122
        %v3126 = vld [vmem:[#allocation10] sm:$0x1]
        %v3127 = vld [vmem:[#allocation11] sm:$0x1]
        %v3128 = vsel %vm2086, %v3125, 0.0
        %3129 = vadd.xlane.f32.xlu0 %v3128
        %v3130 = vpop.xlane.xlu0 %3129
        %v3131 = vmul.f32 %v3130, %v2926
        %v3132 = vsub.f32 %v3125, %v3131
        %v3133 = vmul.f32 %v3132, %v3132
        %v3134 = vsel %vm2086, %v3133, 0.0
        %3135 = vadd.xlane.f32.xlu0 %v3134
        %v3136 = vpop.xlane.xlu0 %3135
        %v3137 = vmul.f32 %v3136, %v2926
        %v3138 = vadd.f32 %v3137, 1e-05
        %v3139 = vrsqrt.pop %v3138
        %v3140 = vmul.f32 %v3132, %v3139
        %v3142 = vlaneseq
        %v3143 = vshrl.u32 %v3142, 7
        %v3144 = vsub.s32 0, %v3143
        %v3145 = vrot.slane %v3126, %v3144
        %v3147 = vmul.f32 %v3140, %v3145
        %v3149 = vlaneseq
        %v3150 = vshrl.u32 %v3149, 7
        %v3151 = vsub.s32 0, %v3150
        %v3152 = vrot.slane %v3127, %v3151
        %v3154 = vadd.f32 %v3147, %v3152
        %s3155 = scalar_lea.vmem %s15, 32
        %v3156 = vld [vmem:[%s3155] sm:$0xff]
        %v3157 = vld [vmem:[%s3155 + $0x8] sm:$0xff]
        %v3158 = vld [vmem:[%s3155 + $0x10] sm:$0xff]
        %v3159 = vld [vmem:[%s3155 + $0x18] sm:$0xff]
        %s3160 = scalar_lea.vmem %s17, 1
        %v3161 = vld [vmem:[%s3160] sm:$0x1]
        %v3163 = vlaneseq
        %v3164 = vshrl.u32 %v3163, 7
        %v3165 = vsub.s32 0, %v3164
        %v3166 = vrot.slane %v3161, %v3165
        %v3169 = vsel %vm2086, %v3154, 0
        %3171 = vmatprep.subr.mxu0 0.0
        %3172 = vmatpush1.msra.mxu0 %v3156
        %3173 = vmatprep.subr.mxu0 0.0
        %3174 = vmatpush1.msra.mxu0 %v3157
        %3175 = vmatprep.subr.mxu0 0.0
        %3176 = vmatpush1.msra.mxu0 %v3158
        %3177 = vmatprep.subr.mxu0 0.0
        %3178 = vmatpush1.msra.mxu0 %v3159
        %3179 = vmatprep.subr.mxu0 0.0
        %3180 = vmatpush1.msra.mxu0 0.0
        %3181 = vmatprep.subr.mxu0 0.0
        %3182 = vmatpush1.msra.mxu0 0.0
        %3183 = vmatprep.subr.mxu0 0.0
        %3184 = vmatpush1.msra.mxu0 0.0
        %3185 = vmatprep.subr.mxu0 0.0
        %3186 = vmatpush1.msra.mxu0 0.0
        %3187 = vmatprep.subr.mxu0 0.0
        %3188 = vmatpush1.msra.mxu0 0.0
        %3189 = vmatprep.subr.mxu0 0.0
        %3190 = vmatpush1.msra.mxu0 0.0
        %3191 = vmatprep.subr.mxu0 0.0
        %3192 = vmatpush1.msra.mxu0 0.0
        %3193 = vmatprep.subr.mxu0 0.0
        %3194 = vmatpush1.msra.mxu0 0.0
        %3195 = vmatprep.subr.mxu0 0.0
        %3196 = vmatpush1.msra.mxu0 0.0
        %3197 = vmatprep.subr.mxu0 0.0
        %3198 = vmatpush1.msra.mxu0 0.0
        %3199 = vmatprep.subr.mxu0 0.0
        %3200 = vmatpush1.msra.mxu0 0.0
        %3201 = vmatprep.subr.mxu0 0.0
        %3202 = vmatpush1.msra.mxu0 0.0
        %3203 = vmatprep.subr.mxu0 0.0
        %3204 = vmatpush1.msra.mxu0 0.0
        %3205 = vmatprep.subr.mxu0 0.0
        %3206 = vmatpush1.msra.mxu0 0.0
        %3207 = vmatprep.subr.mxu0 0.0
        %3208 = vmatpush1.msra.mxu0 0.0
        %3209 = vmatprep.subr.mxu0 0.0
        %3210 = vmatpush1.msra.mxu0 0.0
        %3211 = vmatprep.subr.mxu0 0.0
        %3212 = vmatpush1.msra.mxu0 0.0
        %3213 = vmatprep.subr.mxu0 0.0
        %3214 = vmatpush1.msra.mxu0 0.0
        %3215 = vmatprep.subr.mxu0 0.0
        %3216 = vmatpush1.msra.mxu0 0.0
        %3217 = vmatprep.subr.mxu0 0.0
        %3218 = vmatpush1.msra.mxu0 0.0
        %3219 = vmatprep.subr.mxu0 0.0
        %3220 = vmatpush1.msra.mxu0 0.0
        %3221 = vmatprep.subr.mxu0 0.0
        %3222 = vmatpush1.msra.mxu0 0.0
        %3223 = vmatprep.subr.mxu0 0.0
        %3224 = vmatpush1.msra.mxu0 0.0
        %3225 = vmatprep.subr.mxu0 0.0
        %3226 = vmatpush1.msra.mxu0 0.0
        %3227 = vmatprep.subr.mxu0 0.0
        %3228 = vmatpush1.msra.mxu0 0.0
        %3229 = vmatprep.subr.mxu0 0.0
        %3230 = vmatpush1.msra.mxu0 0.0
        %3231 = vmatprep.subr.mxu0 0.0
        %3232 = vmatpush1.msra.mxu0 0.0
        %3233 = vmatprep.subr.mxu0 0.0
        %3234 = vmatpush1.msra.mxu0 0.0
        %3235 = vmatprep.mubr.f32.mxu0 0.0
        %3236 = vmatmul.mubr.f32.gmra.mrb[0].mxu0 %v3169
        %v3237 = vpop.f32.mrb[0].mxu0
        %v3238 = vadd.f32 %v3166, %v3237
        %v3239 = vpop.f32.mrb[0].mxu0
        %3240 = vdwg.mxu0
        %3242 = vrot.lane.b32.xlu0 %v3238, 96
        %v3243 = vpop.permute.xlu0 %3242
        %v3244 = vsel %vm2163, %v3238, 0
        %v3246 = vsel %vm2163, %v3243, 0
        %3248 = vmatprep.subr.mxu0 0.0
        %3249 = vmatpush1.xpose.msra.mxu0 %v3246
        %3250 = vmatprep.subr.mxu0 0.0
        %3251 = vmatpush1.xpose.msra.mxu0 0.0
        %3252 = vmatprep.subr.mxu0 0.0
        %3253 = vmatpush1.xpose.msra.mxu0 0.0
        %3254 = vmatprep.subr.mxu0 0.0
        %3255 = vmatpush1.xpose.msra.mxu0 0.0
        %3256 = vmatprep.subr.mxu0 0.0
        %3257 = vmatpush1.xpose.msra.mxu0 0.0
        %3258 = vmatprep.subr.mxu0 0.0
        %3259 = vmatpush1.xpose.msra.mxu0 0.0
        %3260 = vmatprep.subr.mxu0 0.0
        %3261 = vmatpush1.xpose.msra.mxu0 0.0
        %3262 = vmatprep.subr.mxu0 0.0
        %3263 = vmatpush1.xpose.msra.mxu0 0.0
        %3264 = vmatprep.subr.mxu0 0.0
        %3265 = vmatpush1.xpose.msra.mxu0 0.0
        %3266 = vmatprep.subr.mxu0 0.0
        %3267 = vmatpush1.xpose.msra.mxu0 0.0
        %3268 = vmatprep.subr.mxu0 0.0
        %3269 = vmatpush1.xpose.msra.mxu0 0.0
        %3270 = vmatprep.subr.mxu0 0.0
        %3271 = vmatpush1.xpose.msra.mxu0 0.0
        %3272 = vmatprep.subr.mxu0 0.0
        %3273 = vmatpush1.xpose.msra.mxu0 0.0
        %3274 = vmatprep.subr.mxu0 0.0
        %3275 = vmatpush1.xpose.msra.mxu0 0.0
        %3276 = vmatprep.subr.mxu0 0.0
        %3277 = vmatpush1.xpose.msra.mxu0 0.0
        %3278 = vmatprep.subr.mxu0 0.0
        %3279 = vmatpush1.xpose.msra.mxu0 0.0
        %3280 = vmatprep.subr.mxu0 0.0
        %3281 = vmatpush1.xpose.msra.mxu0 0.0
        %3282 = vmatprep.subr.mxu0 0.0
        %3283 = vmatpush1.xpose.msra.mxu0 0.0
        %3284 = vmatprep.subr.mxu0 0.0
        %3285 = vmatpush1.xpose.msra.mxu0 0.0
        %3286 = vmatprep.subr.mxu0 0.0
        %3287 = vmatpush1.xpose.msra.mxu0 0.0
        %3288 = vmatprep.subr.mxu0 0.0
        %3289 = vmatpush1.xpose.msra.mxu0 0.0
        %3290 = vmatprep.subr.mxu0 0.0
        %3291 = vmatpush1.xpose.msra.mxu0 0.0
        %3292 = vmatprep.subr.mxu0 0.0
        %3293 = vmatpush1.xpose.msra.mxu0 0.0
        %3294 = vmatprep.subr.mxu0 0.0
        %3295 = vmatpush1.xpose.msra.mxu0 0.0
        %3296 = vmatprep.subr.mxu0 0.0
        %3297 = vmatpush1.xpose.msra.mxu0 0.0
        %3298 = vmatprep.subr.mxu0 0.0
        %3299 = vmatpush1.xpose.msra.mxu0 0.0
        %3300 = vmatprep.subr.mxu0 0.0
        %3301 = vmatpush1.xpose.msra.mxu0 0.0
        %3302 = vmatprep.subr.mxu0 0.0
        %3303 = vmatpush1.xpose.msra.mxu0 0.0
        %3304 = vmatprep.subr.mxu0 0.0
        %3305 = vmatpush1.xpose.msra.mxu0 0.0
        %3306 = vmatprep.subr.mxu0 0.0
        %3307 = vmatpush1.xpose.msra.mxu0 0.0
        %3308 = vmatprep.subr.mxu0 0.0
        %3309 = vmatpush1.xpose.msra.mxu0 0.0
        %3310 = vmatprep.subr.mxu0 0.0
        %3311 = vmatpush1.xpose.msra.mxu0 0.0
        %3312 = vmatprep.mubr.f32.mxu0 0.0
        %3313 = vmatmul.mubr.f32.gmra.mrb[0].mxu0 %v3244
        %v3314 = vpop.f32.mrb[0].mxu0
        %v3315 = vadd.f32 0.0, %v3314
        %v3316 = vpop.f32.mrb[0].mxu0
        %3317 = vdwg.mxu0
        %v3318 = vsel %vm2163, %v3315, -inf
        %3319 = vmax.xlane.f32.xlu0 %v3318
        %v3320 = vpop.xlane.xlu0 %3319
        %v3321 = vsub.f32 %v3315, %v3320
        %v3322 = vmul.f32 %v3321, 1.442695
        %v3323 = vpow.pop %v3322
        %v3324 = vsel %vm2163, %v3323, 0.0
        %3325 = vadd.xlane.f32.xlu0 %v3324
        %v3326 = vpop.xlane.xlu0 %3325
        %v3327 = vrcp.pop %v3326
        %v3328 = vmul.f32 %v3323, %v3327
        %3329 = vrot.lane.b32.xlu0 %v3238, 64
        %v3330 = vpop.permute.xlu0 %3329
        %v3333 = vsel %vm2163, %v3328, 0
        %3335 = vmatprep.subr.mxu0 0.0
        %3336 = vmatpush1.msra.mxu0 %v3330
        %3337 = vmatprep.subr.mxu0 0.0
        %3338 = vmatpush1.msra.mxu0 0.0
        %3339 = vmatprep.subr.mxu0 0.0
        %3340 = vmatpush1.msra.mxu0 0.0
        %3341 = vmatprep.subr.mxu0 0.0
        %3342 = vmatpush1.msra.mxu0 0.0
        %3343 = vmatprep.subr.mxu0 0.0
        %3344 = vmatpush1.msra.mxu0 0.0
        %3345 = vmatprep.subr.mxu0 0.0
        %3346 = vmatpush1.msra.mxu0 0.0
        %3347 = vmatprep.subr.mxu0 0.0
        %3348 = vmatpush1.msra.mxu0 0.0
        %3349 = vmatprep.subr.mxu0 0.0
        %3350 = vmatpush1.msra.mxu0 0.0
        %3351 = vmatprep.subr.mxu0 0.0
        %3352 = vmatpush1.msra.mxu0 0.0
        %3353 = vmatprep.subr.mxu0 0.0
        %3354 = vmatpush1.msra.mxu0 0.0
        %3355 = vmatprep.subr.mxu0 0.0
        %3356 = vmatpush1.msra.mxu0 0.0
        %3357 = vmatprep.subr.mxu0 0.0
        %3358 = vmatpush1.msra.mxu0 0.0
        %3359 = vmatprep.subr.mxu0 0.0
        %3360 = vmatpush1.msra.mxu0 0.0
        %3361 = vmatprep.subr.mxu0 0.0
        %3362 = vmatpush1.msra.mxu0 0.0
        %3363 = vmatprep.subr.mxu0 0.0
        %3364 = vmatpush1.msra.mxu0 0.0
        %3365 = vmatprep.subr.mxu0 0.0
        %3366 = vmatpush1.msra.mxu0 0.0
        %3367 = vmatprep.subr.mxu0 0.0
        %3368 = vmatpush1.msra.mxu0 0.0
        %3369 = vmatprep.subr.mxu0 0.0
        %3370 = vmatpush1.msra.mxu0 0.0
        %3371 = vmatprep.subr.mxu0 0.0
        %3372 = vmatpush1.msra.mxu0 0.0
        %3373 = vmatprep.subr.mxu0 0.0
        %3374 = vmatpush1.msra.mxu0 0.0
        %3375 = vmatprep.subr.mxu0 0.0
        %3376 = vmatpush1.msra.mxu0 0.0
        %3377 = vmatprep.subr.mxu0 0.0
        %3378 = vmatpush1.msra.mxu0 0.0
        %3379 = vmatprep.subr.mxu0 0.0
        %3380 = vmatpush1.msra.mxu0 0.0
        %3381 = vmatprep.subr.mxu0 0.0
        %3382 = vmatpush1.msra.mxu0 0.0
        %3383 = vmatprep.subr.mxu0 0.0
        %3384 = vmatpush1.msra.mxu0 0.0
        %3385 = vmatprep.subr.mxu0 0.0
        %3386 = vmatpush1.msra.mxu0 0.0
        %3387 = vmatprep.subr.mxu0 0.0
        %3388 = vmatpush1.msra.mxu0 0.0
        %3389 = vmatprep.subr.mxu0 0.0
        %3390 = vmatpush1.msra.mxu0 0.0
        %3391 = vmatprep.subr.mxu0 0.0
        %3392 = vmatpush1.msra.mxu0 0.0
        %3393 = vmatprep.subr.mxu0 0.0
        %3394 = vmatpush1.msra.mxu0 0.0
        %3395 = vmatprep.subr.mxu0 0.0
        %3396 = vmatpush1.msra.mxu0 0.0
        %3397 = vmatprep.subr.mxu0 0.0
        %3398 = vmatpush1.msra.mxu0 0.0
        %3399 = vmatprep.mubr.f32.mxu0 0.0
        %3400 = vmatmul.mubr.f32.gmra.mrb[0].mxu0 %v3333
        %v3401 = vpop.f32.mrb[0].mxu0
        %v3402 = vadd.f32 0.0, %v3401
        %v3403 = vpop.f32.mrb[0].mxu0
        %3404 = vdwg.mxu0
        %3405 = vrot.lane.b32.xlu0 %v3238, 120
        %v3406 = vpop.permute.xlu0 %3405
        %3407 = vrot.lane.b32.xlu0 %v3238, 88
        %v3408 = vpop.permute.xlu0 %3407
        %v3409 = vsel %vm2163, %v3406, 0
        %v3411 = vsel %vm2163, %v3408, 0
        %3413 = vmatprep.subr.mxu0 0.0
        %3414 = vmatpush1.xpose.msra.mxu0 %v3411
        %3415 = vmatprep.subr.mxu0 0.0
        %3416 = vmatpush1.xpose.msra.mxu0 0.0
        %3417 = vmatprep.subr.mxu0 0.0
        %3418 = vmatpush1.xpose.msra.mxu0 0.0
        %3419 = vmatprep.subr.mxu0 0.0
        %3420 = vmatpush1.xpose.msra.mxu0 0.0
        %3421 = vmatprep.subr.mxu0 0.0
        %3422 = vmatpush1.xpose.msra.mxu0 0.0
        %3423 = vmatprep.subr.mxu0 0.0
        %3424 = vmatpush1.xpose.msra.mxu0 0.0
        %3425 = vmatprep.subr.mxu0 0.0
        %3426 = vmatpush1.xpose.msra.mxu0 0.0
        %3427 = vmatprep.subr.mxu0 0.0
        %3428 = vmatpush1.xpose.msra.mxu0 0.0
        %3429 = vmatprep.subr.mxu0 0.0
        %3430 = vmatpush1.xpose.msra.mxu0 0.0
        %3431 = vmatprep.subr.mxu0 0.0
        %3432 = vmatpush1.xpose.msra.mxu0 0.0
        %3433 = vmatprep.subr.mxu0 0.0
        %3434 = vmatpush1.xpose.msra.mxu0 0.0
        %3435 = vmatprep.subr.mxu0 0.0
        %3436 = vmatpush1.xpose.msra.mxu0 0.0
        %3437 = vmatprep.subr.mxu0 0.0
        %3438 = vmatpush1.xpose.msra.mxu0 0.0
        %3439 = vmatprep.subr.mxu0 0.0
        %3440 = vmatpush1.xpose.msra.mxu0 0.0
        %3441 = vmatprep.subr.mxu0 0.0
        %3442 = vmatpush1.xpose.msra.mxu0 0.0
        %3443 = vmatprep.subr.mxu0 0.0
        %3444 = vmatpush1.xpose.msra.mxu0 0.0
        %3445 = vmatprep.subr.mxu0 0.0
        %3446 = vmatpush1.xpose.msra.mxu0 0.0
        %3447 = vmatprep.subr.mxu0 0.0
        %3448 = vmatpush1.xpose.msra.mxu0 0.0
        %3449 = vmatprep.subr.mxu0 0.0
        %3450 = vmatpush1.xpose.msra.mxu0 0.0
        %3451 = vmatprep.subr.mxu0 0.0
        %3452 = vmatpush1.xpose.msra.mxu0 0.0
        %3453 = vmatprep.subr.mxu0 0.0
        %3454 = vmatpush1.xpose.msra.mxu0 0.0
        %3455 = vmatprep.subr.mxu0 0.0
        %3456 = vmatpush1.xpose.msra.mxu0 0.0
        %3457 = vmatprep.subr.mxu0 0.0
        %3458 = vmatpush1.xpose.msra.mxu0 0.0
        %3459 = vmatprep.subr.mxu0 0.0
        %3460 = vmatpush1.xpose.msra.mxu0 0.0
        %3461 = vmatprep.subr.mxu0 0.0
        %3462 = vmatpush1.xpose.msra.mxu0 0.0
        %3463 = vmatprep.subr.mxu0 0.0
        %3464 = vmatpush1.xpose.msra.mxu0 0.0
        %3465 = vmatprep.subr.mxu0 0.0
        %3466 = vmatpush1.xpose.msra.mxu0 0.0
        %3467 = vmatprep.subr.mxu0 0.0
        %3468 = vmatpush1.xpose.msra.mxu0 0.0
        %3469 = vmatprep.subr.mxu0 0.0
        %3470 = vmatpush1.xpose.msra.mxu0 0.0
        %3471 = vmatprep.subr.mxu0 0.0
        %3472 = vmatpush1.xpose.msra.mxu0 0.0
        %3473 = vmatprep.subr.mxu0 0.0
        %3474 = vmatpush1.xpose.msra.mxu0 0.0
        %3475 = vmatprep.subr.mxu0 0.0
        %3476 = vmatpush1.xpose.msra.mxu0 0.0
        %3477 = vmatprep.mubr.f32.mxu0 0.0
        %3478 = vmatmul.mubr.f32.gmra.mrb[0].mxu0 %v3409
        %v3479 = vpop.f32.mrb[0].mxu0
        %v3480 = vadd.f32 0.0, %v3479
        %v3481 = vpop.f32.mrb[0].mxu0
        %3482 = vdwg.mxu0
        %v3483 = vsel %vm2163, %v3480, -inf
        %3484 = vmax.xlane.f32.xlu0 %v3483
        %v3485 = vpop.xlane.xlu0 %3484
        %v3486 = vsub.f32 %v3480, %v3485
        %v3487 = vmul.f32 %v3486, 1.442695
        %v3488 = vpow.pop %v3487
        %v3489 = vsel %vm2163, %v3488, 0.0
        %3490 = vadd.xlane.f32.xlu0 %v3489
        %v3491 = vpop.xlane.xlu0 %3490
        %v3492 = vrcp.pop %v3491
        %v3493 = vmul.f32 %v3488, %v3492
        %3494 = vrot.lane.b32.xlu0 %v3238, 56
        %v3495 = vpop.permute.xlu0 %3494
        %v3498 = vsel %vm2163, %v3493, 0
        %3500 = vmatprep.subr.mxu0 0.0
        %3501 = vmatpush1.msra.mxu0 %v3495
        %3502 = vmatprep.subr.mxu0 0.0
        %3503 = vmatpush1.msra.mxu0 0.0
        %3504 = vmatprep.subr.mxu0 0.0
        %3505 = vmatpush1.msra.mxu0 0.0
        %3506 = vmatprep.subr.mxu0 0.0
        %3507 = vmatpush1.msra.mxu0 0.0
        %3508 = vmatprep.subr.mxu0 0.0
        %3509 = vmatpush1.msra.mxu0 0.0
        %3510 = vmatprep.subr.mxu0 0.0
        %3511 = vmatpush1.msra.mxu0 0.0
        %3512 = vmatprep.subr.mxu0 0.0
        %3513 = vmatpush1.msra.mxu0 0.0
        %3514 = vmatprep.subr.mxu0 0.0
        %3515 = vmatpush1.msra.mxu0 0.0
        %3516 = vmatprep.subr.mxu0 0.0
        %3517 = vmatpush1.msra.mxu0 0.0
        %3518 = vmatprep.subr.mxu0 0.0
        %3519 = vmatpush1.msra.mxu0 0.0
        %3520 = vmatprep.subr.mxu0 0.0
        %3521 = vmatpush1.msra.mxu0 0.0
        %3522 = vmatprep.subr.mxu0 0.0
        %3523 = vmatpush1.msra.mxu0 0.0
        %3524 = vmatprep.subr.mxu0 0.0
        %3525 = vmatpush1.msra.mxu0 0.0
        %3526 = vmatprep.subr.mxu0 0.0
        %3527 = vmatpush1.msra.mxu0 0.0
        %3528 = vmatprep.subr.mxu0 0.0
        %3529 = vmatpush1.msra.mxu0 0.0
        %3530 = vmatprep.subr.mxu0 0.0
        %3531 = vmatpush1.msra.mxu0 0.0
        %3532 = vmatprep.subr.mxu0 0.0
        %3533 = vmatpush1.msra.mxu0 0.0
        %3534 = vmatprep.subr.mxu0 0.0
        %3535 = vmatpush1.msra.mxu0 0.0
        %3536 = vmatprep.subr.mxu0 0.0
        %3537 = vmatpush1.msra.mxu0 0.0
        %3538 = vmatprep.subr.mxu0 0.0
        %3539 = vmatpush1.msra.mxu0 0.0
        %3540 = vmatprep.subr.mxu0 0.0
        %3541 = vmatpush1.msra.mxu0 0.0
        %3542 = vmatprep.subr.mxu0 0.0
        %3543 = vmatpush1.msra.mxu0 0.0
        %3544 = vmatprep.subr.mxu0 0.0
        %3545 = vmatpush1.msra.mxu0 0.0
        %3546 = vmatprep.subr.mxu0 0.0
        %3547 = vmatpush1.msra.mxu0 0.0
        %3548 = vmatprep.subr.mxu0 0.0
        %3549 = vmatpush1.msra.mxu0 0.0
        %3550 = vmatprep.subr.mxu0 0.0
        %3551 = vmatpush1.msra.mxu0 0.0
        %3552 = vmatprep.subr.mxu0 0.0
        %3553 = vmatpush1.msra.mxu0 0.0
        %3554 = vmatprep.subr.mxu0 0.0
        %3555 = vmatpush1.msra.mxu0 0.0
        %3556 = vmatprep.subr.mxu0 0.0
        %3557 = vmatpush1.msra.mxu0 0.0
        %3558 = vmatprep.subr.mxu0 0.0
        %3559 = vmatpush1.msra.mxu0 0.0
        %3560 = vmatprep.subr.mxu0 0.0
        %3561 = vmatpush1.msra.mxu0 0.0
        %3562 = vmatprep.subr.mxu0 0.0
        %3563 = vmatpush1.msra.mxu0 0.0
        %3564 = vmatprep.mubr.f32.mxu0 0.0
        %3565 = vmatmul.mubr.f32.gmra.mrb[0].mxu0 %v3498
        %v3566 = vpop.f32.mrb[0].mxu0
        %v3567 = vadd.f32 0.0, %v3566
        %v3568 = vpop.f32.mrb[0].mxu0
        %3569 = vdwg.mxu0
        %3570 = vrot.lane.b32.xlu0 %v3238, 112
        %v3571 = vpop.permute.xlu0 %3570
        %3572 = vrot.lane.b32.xlu0 %v3238, 80
        %v3573 = vpop.permute.xlu0 %3572
        %v3574 = vsel %vm2163, %v3571, 0
        %v3576 = vsel %vm2163, %v3573, 0
        %3578 = vmatprep.subr.mxu0 0.0
        %3579 = vmatpush1.xpose.msra.mxu0 %v3576
        %3580 = vmatprep.subr.mxu0 0.0
        %3581 = vmatpush1.xpose.msra.mxu0 0.0
        %3582 = vmatprep.subr.mxu0 0.0
        %3583 = vmatpush1.xpose.msra.mxu0 0.0
        %3584 = vmatprep.subr.mxu0 0.0
        %3585 = vmatpush1.xpose.msra.mxu0 0.0
        %3586 = vmatprep.subr.mxu0 0.0
        %3587 = vmatpush1.xpose.msra.mxu0 0.0
        %3588 = vmatprep.subr.mxu0 0.0
        %3589 = vmatpush1.xpose.msra.mxu0 0.0
        %3590 = vmatprep.subr.mxu0 0.0
        %3591 = vmatpush1.xpose.msra.mxu0 0.0
        %3592 = vmatprep.subr.mxu0 0.0
        %3593 = vmatpush1.xpose.msra.mxu0 0.0
        %3594 = vmatprep.subr.mxu0 0.0
        %3595 = vmatpush1.xpose.msra.mxu0 0.0
        %3596 = vmatprep.subr.mxu0 0.0
        %3597 = vmatpush1.xpose.msra.mxu0 0.0
        %3598 = vmatprep.subr.mxu0 0.0
        %3599 = vmatpush1.xpose.msra.mxu0 0.0
        %3600 = vmatprep.subr.mxu0 0.0
        %3601 = vmatpush1.xpose.msra.mxu0 0.0
        %3602 = vmatprep.subr.mxu0 0.0
        %3603 = vmatpush1.xpose.msra.mxu0 0.0
        %3604 = vmatprep.subr.mxu0 0.0
        %3605 = vmatpush1.xpose.msra.mxu0 0.0
        %3606 = vmatprep.subr.mxu0 0.0
        %3607 = vmatpush1.xpose.msra.mxu0 0.0
        %3608 = vmatprep.subr.mxu0 0.0
        %3609 = vmatpush1.xpose.msra.mxu0 0.0
        %3610 = vmatprep.subr.mxu0 0.0
        %3611 = vmatpush1.xpose.msra.mxu0 0.0
        %3612 = vmatprep.subr.mxu0 0.0
        %3613 = vmatpush1.xpose.msra.mxu0 0.0
        %3614 = vmatprep.subr.mxu0 0.0
        %3615 = vmatpush1.xpose.msra.mxu0 0.0
        %3616 = vmatprep.subr.mxu0 0.0
        %3617 = vmatpush1.xpose.msra.mxu0 0.0
        %3618 = vmatprep.subr.mxu0 0.0
        %3619 = vmatpush1.xpose.msra.mxu0 0.0
        %3620 = vmatprep.subr.mxu0 0.0
        %3621 = vmatpush1.xpose.msra.mxu0 0.0
        %3622 = vmatprep.subr.mxu0 0.0
        %3623 = vmatpush1.xpose.msra.mxu0 0.0
        %3624 = vmatprep.subr.mxu0 0.0
        %3625 = vmatpush1.xpose.msra.mxu0 0.0
        %3626 = vmatprep.subr.mxu0 0.0
        %3627 = vmatpush1.xpose.msra.mxu0 0.0
        %3628 = vmatprep.subr.mxu0 0.0
        %3629 = vmatpush1.xpose.msra.mxu0 0.0
        %3630 = vmatprep.subr.mxu0 0.0
        %3631 = vmatpush1.xpose.msra.mxu0 0.0
        %3632 = vmatprep.subr.mxu0 0.0
        %3633 = vmatpush1.xpose.msra.mxu0 0.0
        %3634 = vmatprep.subr.mxu0 0.0
        %3635 = vmatpush1.xpose.msra.mxu0 0.0
        %3636 = vmatprep.subr.mxu0 0.0
        %3637 = vmatpush1.xpose.msra.mxu0 0.0
        %3638 = vmatprep.subr.mxu0 0.0
        %3639 = vmatpush1.xpose.msra.mxu0 0.0
        %3640 = vmatprep.subr.mxu0 0.0
        %3641 = vmatpush1.xpose.msra.mxu0 0.0
        %3642 = vmatprep.mubr.f32.mxu0 0.0
        %3643 = vmatmul.mubr.f32.gmra.mrb[0].mxu0 %v3574
        %v3644 = vpop.f32.mrb[0].mxu0
        %v3645 = vadd.f32 0.0, %v3644
        %v3646 = vpop.f32.mrb[0].mxu0
        %3647 = vdwg.mxu0
        %v3648 = vsel %vm2163, %v3645, -inf
        %3649 = vmax.xlane.f32.xlu0 %v3648
        %v3650 = vpop.xlane.xlu0 %3649
        %v3651 = vsub.f32 %v3645, %v3650
        %v3652 = vmul.f32 %v3651, 1.442695
        %v3653 = vpow.pop %v3652
        %v3654 = vsel %vm2163, %v3653, 0.0
        %3655 = vadd.xlane.f32.xlu0 %v3654
        %v3656 = vpop.xlane.xlu0 %3655
        %v3657 = vrcp.pop %v3656
        %v3658 = vmul.f32 %v3653, %v3657
        %3659 = vrot.lane.b32.xlu0 %v3238, 48
        %v3660 = vpop.permute.xlu0 %3659
        %v3663 = vsel %vm2163, %v3658, 0
        %3665 = vmatprep.subr.mxu0 0.0
        %3666 = vmatpush1.msra.mxu0 %v3660
        %3667 = vmatprep.subr.mxu0 0.0
        %3668 = vmatpush1.msra.mxu0 0.0
        %3669 = vmatprep.subr.mxu0 0.0
        %3670 = vmatpush1.msra.mxu0 0.0
        %3671 = vmatprep.subr.mxu0 0.0
        %3672 = vmatpush1.msra.mxu0 0.0
        %3673 = vmatprep.subr.mxu0 0.0
        %3674 = vmatpush1.msra.mxu0 0.0
        %3675 = vmatprep.subr.mxu0 0.0
        %3676 = vmatpush1.msra.mxu0 0.0
        %3677 = vmatprep.subr.mxu0 0.0
        %3678 = vmatpush1.msra.mxu0 0.0
        %3679 = vmatprep.subr.mxu0 0.0
        %3680 = vmatpush1.msra.mxu0 0.0
        %3681 = vmatprep.subr.mxu0 0.0
        %3682 = vmatpush1.msra.mxu0 0.0
        %3683 = vmatprep.subr.mxu0 0.0
        %3684 = vmatpush1.msra.mxu0 0.0
        %3685 = vmatprep.subr.mxu0 0.0
        %3686 = vmatpush1.msra.mxu0 0.0
        %3687 = vmatprep.subr.mxu0 0.0
        %3688 = vmatpush1.msra.mxu0 0.0
        %3689 = vmatprep.subr.mxu0 0.0
        %3690 = vmatpush1.msra.mxu0 0.0
        %3691 = vmatprep.subr.mxu0 0.0
        %3692 = vmatpush1.msra.mxu0 0.0
        %3693 = vmatprep.subr.mxu0 0.0
        %3694 = vmatpush1.msra.mxu0 0.0
        %3695 = vmatprep.subr.mxu0 0.0
        %3696 = vmatpush1.msra.mxu0 0.0
        %3697 = vmatprep.subr.mxu0 0.0
        %3698 = vmatpush1.msra.mxu0 0.0
        %3699 = vmatprep.subr.mxu0 0.0
        %3700 = vmatpush1.msra.mxu0 0.0
        %3701 = vmatprep.subr.mxu0 0.0
        %3702 = vmatpush1.msra.mxu0 0.0
        %3703 = vmatprep.subr.mxu0 0.0
        %3704 = vmatpush1.msra.mxu0 0.0
        %3705 = vmatprep.subr.mxu0 0.0
        %3706 = vmatpush1.msra.mxu0 0.0
        %3707 = vmatprep.subr.mxu0 0.0
        %3708 = vmatpush1.msra.mxu0 0.0
        %3709 = vmatprep.subr.mxu0 0.0
        %3710 = vmatpush1.msra.mxu0 0.0
        %3711 = vmatprep.subr.mxu0 0.0
        %3712 = vmatpush1.msra.mxu0 0.0
        %3713 = vmatprep.subr.mxu0 0.0
        %3714 = vmatpush1.msra.mxu0 0.0
        %3715 = vmatprep.subr.mxu0 0.0
        %3716 = vmatpush1.msra.mxu0 0.0
        %3717 = vmatprep.subr.mxu0 0.0
        %3718 = vmatpush1.msra.mxu0 0.0
        %3719 = vmatprep.subr.mxu0 0.0
        %3720 = vmatpush1.msra.mxu0 0.0
        %3721 = vmatprep.subr.mxu0 0.0
        %3722 = vmatpush1.msra.mxu0 0.0
        %3723 = vmatprep.subr.mxu0 0.0
        %3724 = vmatpush1.msra.mxu0 0.0
        %3725 = vmatprep.subr.mxu0 0.0
        %3726 = vmatpush1.msra.mxu0 0.0
        %3727 = vmatprep.subr.mxu0 0.0
        %3728 = vmatpush1.msra.mxu0 0.0
        %3729 = vmatprep.mubr.f32.mxu0 0.0
        %3730 = vmatmul.mubr.f32.gmra.mrb[0].mxu0 %v3663
        %v3731 = vpop.f32.mrb[0].mxu0
        %v3732 = vadd.f32 0.0, %v3731
        %v3733 = vpop.f32.mrb[0].mxu0
        %3734 = vdwg.mxu0
        %3735 = vrot.lane.b32.xlu0 %v3238, 104
        %v3736 = vpop.permute.xlu0 %3735
        %3737 = vrot.lane.b32.xlu0 %v3238, 72
        %v3738 = vpop.permute.xlu0 %3737
        %v3739 = vsel %vm2163, %v3736, 0
        %v3741 = vsel %vm2163, %v3738, 0
        %3743 = vmatprep.subr.mxu0 0.0
        %3744 = vmatpush1.xpose.msra.mxu0 %v3741
        %3745 = vmatprep.subr.mxu0 0.0
        %3746 = vmatpush1.xpose.msra.mxu0 0.0
        %3747 = vmatprep.subr.mxu0 0.0
        %3748 = vmatpush1.xpose.msra.mxu0 0.0
        %3749 = vmatprep.subr.mxu0 0.0
        %3750 = vmatpush1.xpose.msra.mxu0 0.0
        %3751 = vmatprep.subr.mxu0 0.0
        %3752 = vmatpush1.xpose.msra.mxu0 0.0
        %3753 = vmatprep.subr.mxu0 0.0
        %3754 = vmatpush1.xpose.msra.mxu0 0.0
        %3755 = vmatprep.subr.mxu0 0.0
        %3756 = vmatpush1.xpose.msra.mxu0 0.0
        %3757 = vmatprep.subr.mxu0 0.0
        %3758 = vmatpush1.xpose.msra.mxu0 0.0
        %3759 = vmatprep.subr.mxu0 0.0
        %3760 = vmatpush1.xpose.msra.mxu0 0.0
        %3761 = vmatprep.subr.mxu0 0.0
        %3762 = vmatpush1.xpose.msra.mxu0 0.0
        %3763 = vmatprep.subr.mxu0 0.0
        %3764 = vmatpush1.xpose.msra.mxu0 0.0
        %3765 = vmatprep.subr.mxu0 0.0
        %3766 = vmatpush1.xpose.msra.mxu0 0.0
        %3767 = vmatprep.subr.mxu0 0.0
        %3768 = vmatpush1.xpose.msra.mxu0 0.0
        %3769 = vmatprep.subr.mxu0 0.0
        %3770 = vmatpush1.xpose.msra.mxu0 0.0
        %3771 = vmatprep.subr.mxu0 0.0
        %3772 = vmatpush1.xpose.msra.mxu0 0.0
        %3773 = vmatprep.subr.mxu0 0.0
        %3774 = vmatpush1.xpose.msra.mxu0 0.0
        %3775 = vmatprep.subr.mxu0 0.0
        %3776 = vmatpush1.xpose.msra.mxu0 0.0
        %3777 = vmatprep.subr.mxu0 0.0
        %3778 = vmatpush1.xpose.msra.mxu0 0.0
        %3779 = vmatprep.subr.mxu0 0.0
        %3780 = vmatpush1.xpose.msra.mxu0 0.0
        %3781 = vmatprep.subr.mxu0 0.0
        %3782 = vmatpush1.xpose.msra.mxu0 0.0
        %3783 = vmatprep.subr.mxu0 0.0
        %3784 = vmatpush1.xpose.msra.mxu0 0.0
        %3785 = vmatprep.subr.mxu0 0.0
        %3786 = vmatpush1.xpose.msra.mxu0 0.0
        %3787 = vmatprep.subr.mxu0 0.0
        %3788 = vmatpush1.xpose.msra.mxu0 0.0
        %3789 = vmatprep.subr.mxu0 0.0
        %3790 = vmatpush1.xpose.msra.mxu0 0.0
        %3791 = vmatprep.subr.mxu0 0.0
        %3792 = vmatpush1.xpose.msra.mxu0 0.0
        %3793 = vmatprep.subr.mxu0 0.0
        %3794 = vmatpush1.xpose.msra.mxu0 0.0
        %3795 = vmatprep.subr.mxu0 0.0
        %3796 = vmatpush1.xpose.msra.mxu0 0.0
        %3797 = vmatprep.subr.mxu0 0.0
        %3798 = vmatpush1.xpose.msra.mxu0 0.0
        %3799 = vmatprep.subr.mxu0 0.0
        %3800 = vmatpush1.xpose.msra.mxu0 0.0
        %3801 = vmatprep.subr.mxu0 0.0
        %3802 = vmatpush1.xpose.msra.mxu0 0.0
        %3803 = vmatprep.subr.mxu0 0.0
        %3804 = vmatpush1.xpose.msra.mxu0 0.0
        %3805 = vmatprep.subr.mxu0 0.0
        %3806 = vmatpush1.xpose.msra.mxu0 0.0
        %3807 = vmatprep.mubr.f32.mxu0 0.0
        %3808 = vmatmul.mubr.f32.gmra.mrb[0].mxu0 %v3739
        %v3809 = vpop.f32.mrb[0].mxu0
        %v3810 = vadd.f32 0.0, %v3809
        %v3811 = vpop.f32.mrb[0].mxu0
        %3812 = vdwg.mxu0
        %v3813 = vsel %vm2163, %v3810, -inf
        %3814 = vmax.xlane.f32.xlu0 %v3813
        %v3815 = vpop.xlane.xlu0 %3814
        %v3816 = vsub.f32 %v3810, %v3815
        %v3817 = vmul.f32 %v3816, 1.442695
        %v3818 = vpow.pop %v3817
        %v3819 = vsel %vm2163, %v3818, 0.0
        %3820 = vadd.xlane.f32.xlu0 %v3819
        %v3821 = vpop.xlane.xlu0 %3820
        %v3822 = vrcp.pop %v3821
        %v3823 = vmul.f32 %v3818, %v3822
        %3824 = vrot.lane.b32.xlu0 %v3238, 40
        %v3825 = vpop.permute.xlu0 %3824
        %v3828 = vsel %vm2163, %v3823, 0
        %3830 = vmatprep.subr.mxu0 0.0
        %3831 = vmatpush1.msra.mxu0 %v3825
        %3832 = vmatprep.subr.mxu0 0.0
        %3833 = vmatpush1.msra.mxu0 0.0
        %3834 = vmatprep.subr.mxu0 0.0
        %3835 = vmatpush1.msra.mxu0 0.0
        %3836 = vmatprep.subr.mxu0 0.0
        %3837 = vmatpush1.msra.mxu0 0.0
        %3838 = vmatprep.subr.mxu0 0.0
        %3839 = vmatpush1.msra.mxu0 0.0
        %3840 = vmatprep.subr.mxu0 0.0
        %3841 = vmatpush1.msra.mxu0 0.0
        %3842 = vmatprep.subr.mxu0 0.0
        %3843 = vmatpush1.msra.mxu0 0.0
        %3844 = vmatprep.subr.mxu0 0.0
        %3845 = vmatpush1.msra.mxu0 0.0
        %3846 = vmatprep.subr.mxu0 0.0
        %3847 = vmatpush1.msra.mxu0 0.0
        %3848 = vmatprep.subr.mxu0 0.0
        %3849 = vmatpush1.msra.mxu0 0.0
        %3850 = vmatprep.subr.mxu0 0.0
        %3851 = vmatpush1.msra.mxu0 0.0
        %3852 = vmatprep.subr.mxu0 0.0
        %3853 = vmatpush1.msra.mxu0 0.0
        %3854 = vmatprep.subr.mxu0 0.0
        %3855 = vmatpush1.msra.mxu0 0.0
        %3856 = vmatprep.subr.mxu0 0.0
        %3857 = vmatpush1.msra.mxu0 0.0
        %3858 = vmatprep.subr.mxu0 0.0
        %3859 = vmatpush1.msra.mxu0 0.0
        %3860 = vmatprep.subr.mxu0 0.0
        %3861 = vmatpush1.msra.mxu0 0.0
        %3862 = vmatprep.subr.mxu0 0.0
        %3863 = vmatpush1.msra.mxu0 0.0
        %3864 = vmatprep.subr.mxu0 0.0
        %3865 = vmatpush1.msra.mxu0 0.0
        %3866 = vmatprep.subr.mxu0 0.0
        %3867 = vmatpush1.msra.mxu0 0.0
        %3868 = vmatprep.subr.mxu0 0.0
        %3869 = vmatpush1.msra.mxu0 0.0
        %3870 = vmatprep.subr.mxu0 0.0
        %3871 = vmatpush1.msra.mxu0 0.0
        %3872 = vmatprep.subr.mxu0 0.0
        %3873 = vmatpush1.msra.mxu0 0.0
        %3874 = vmatprep.subr.mxu0 0.0
        %3875 = vmatpush1.msra.mxu0 0.0
        %3876 = vmatprep.subr.mxu0 0.0
        %3877 = vmatpush1.msra.mxu0 0.0
        %3878 = vmatprep.subr.mxu0 0.0
        %3879 = vmatpush1.msra.mxu0 0.0
        %3880 = vmatprep.subr.mxu0 0.0
        %3881 = vmatpush1.msra.mxu0 0.0
        %3882 = vmatprep.subr.mxu0 0.0
        %3883 = vmatpush1.msra.mxu0 0.0
        %3884 = vmatprep.subr.mxu0 0.0
        %3885 = vmatpush1.msra.mxu0 0.0
        %3886 = vmatprep.subr.mxu0 0.0
        %3887 = vmatpush1.msra.mxu0 0.0
        %3888 = vmatprep.subr.mxu0 0.0
        %3889 = vmatpush1.msra.mxu0 0.0
        %3890 = vmatprep.subr.mxu0 0.0
        %3891 = vmatpush1.msra.mxu0 0.0
        %3892 = vmatprep.subr.mxu0 0.0
        %3893 = vmatpush1.msra.mxu0 0.0
        %3894 = vmatprep.mubr.f32.mxu0 0.0
        %3895 = vmatmul.mubr.f32.gmra.mrb[0].mxu0 %v3828
        %v3896 = vpop.f32.mrb[0].mxu0
        %v3897 = vadd.f32 0.0, %v3896
        %v3898 = vpop.f32.mrb[0].mxu0
        %3899 = vdwg.mxu0
        %3901 = vrot.lane.b32.xlu0 %v3567, 8
        %v3902 = vpop.permute.xlu0 %3901
        %3905 = vrot.lane.b32.xlu0 %v3732, 16
        %v3906 = vpop.permute.xlu0 %3905
        %3909 = vrot.lane.b32.xlu0 %v3897, 24
        %v3910 = vpop.permute.xlu0 %3909
        %v3912 = vsel %vm2163, %v3402, %v3902
        %v3913 = vsel %vm1772, %v3912, %v3906
        %v3914 = vsel %vm2834, %v3913, %v3910
        %s3915 = scalar_lea.vmem %s19, 32
        %v3916 = vld [vmem:[%s3915] sm:$0xff]
        %v3917 = vld [vmem:[%s3915 + $0x8] sm:$0xff]
        %v3918 = vld [vmem:[%s3915 + $0x10] sm:$0xff]
        %v3919 = vld [vmem:[%s3915 + $0x18] sm:$0xff]
        %s3920 = scalar_lea.vmem %s21, 1
        %v3921 = vld [vmem:[%s3920] sm:$0x1]
        %v3923 = vlaneseq
        %v3924 = vshrl.u32 %v3923, 7
        %v3925 = vsub.s32 0, %v3924
        %v3926 = vrot.slane %v3921, %v3925
        %v3929 = vsel %vm2086, %v3914, 0
        %3931 = vmatprep.subr.mxu0 0.0
        %3932 = vmatpush1.msra.mxu0 %v3916
        %3933 = vmatprep.subr.mxu0 0.0
        %3934 = vmatpush1.msra.mxu0 %v3917
        %3935 = vmatprep.subr.mxu0 0.0
        %3936 = vmatpush1.msra.mxu0 %v3918
        %3937 = vmatprep.subr.mxu0 0.0
        %3938 = vmatpush1.msra.mxu0 %v3919
        %3939 = vmatprep.subr.mxu0 0.0
        %3940 = vmatpush1.msra.mxu0 0.0
        %3941 = vmatprep.subr.mxu0 0.0
        %3942 = vmatpush1.msra.mxu0 0.0
        %3943 = vmatprep.subr.mxu0 0.0
        %3944 = vmatpush1.msra.mxu0 0.0
        %3945 = vmatprep.subr.mxu0 0.0
        %3946 = vmatpush1.msra.mxu0 0.0
        %3947 = vmatprep.subr.mxu0 0.0
        %3948 = vmatpush1.msra.mxu0 0.0
        %3949 = vmatprep.subr.mxu0 0.0
        %3950 = vmatpush1.msra.mxu0 0.0
        %3951 = vmatprep.subr.mxu0 0.0
        %3952 = vmatpush1.msra.mxu0 0.0
        %3953 = vmatprep.subr.mxu0 0.0
        %3954 = vmatpush1.msra.mxu0 0.0
        %3955 = vmatprep.subr.mxu0 0.0
        %3956 = vmatpush1.msra.mxu0 0.0
        %3957 = vmatprep.subr.mxu0 0.0
        %3958 = vmatpush1.msra.mxu0 0.0
        %3959 = vmatprep.subr.mxu0 0.0
        %3960 = vmatpush1.msra.mxu0 0.0
        %3961 = vmatprep.subr.mxu0 0.0
        %3962 = vmatpush1.msra.mxu0 0.0
        %3963 = vmatprep.subr.mxu0 0.0
        %3964 = vmatpush1.msra.mxu0 0.0
        %3965 = vmatprep.subr.mxu0 0.0
        %3966 = vmatpush1.msra.mxu0 0.0
        %3967 = vmatprep.subr.mxu0 0.0
        %3968 = vmatpush1.msra.mxu0 0.0
        %3969 = vmatprep.subr.mxu0 0.0
        %3970 = vmatpush1.msra.mxu0 0.0
        %3971 = vmatprep.subr.mxu0 0.0
        %3972 = vmatpush1.msra.mxu0 0.0
        %3973 = vmatprep.subr.mxu0 0.0
        %3974 = vmatpush1.msra.mxu0 0.0
        %3975 = vmatprep.subr.mxu0 0.0
        %3976 = vmatpush1.msra.mxu0 0.0
        %3977 = vmatprep.subr.mxu0 0.0
        %3978 = vmatpush1.msra.mxu0 0.0
        %3979 = vmatprep.subr.mxu0 0.0
        %3980 = vmatpush1.msra.mxu0 0.0
        %3981 = vmatprep.subr.mxu0 0.0
        %3982 = vmatpush1.msra.mxu0 0.0
        %3983 = vmatprep.subr.mxu0 0.0
        %3984 = vmatpush1.msra.mxu0 0.0
        %3985 = vmatprep.subr.mxu0 0.0
        %3986 = vmatpush1.msra.mxu0 0.0
        %3987 = vmatprep.subr.mxu0 0.0
        %3988 = vmatpush1.msra.mxu0 0.0
        %3989 = vmatprep.subr.mxu0 0.0
        %3990 = vmatpush1.msra.mxu0 0.0
        %3991 = vmatprep.subr.mxu0 0.0
        %3992 = vmatpush1.msra.mxu0 0.0
        %3993 = vmatprep.subr.mxu0 0.0
        %3994 = vmatpush1.msra.mxu0 0.0
        %3995 = vmatprep.mubr.f32.mxu0 0.0
        %3996 = vmatmul.mubr.f32.gmra.mrb[0].mxu0 %v3929
        %v3997 = vpop.f32.mrb[0].mxu0
        %v3998 = vadd.f32 %v3926, %v3997
        %v3999 = vpop.f32.mrb[0].mxu0
        %4000 = vdwg.mxu0
        %v4001 = vadd.f32 %v3154, %v3998
        %s4002 = scalar_lea.vmem [#allocation2], 1
        %v4003 = vld [vmem:[%s4002] sm:$0x1]
        %s4004 = scalar_lea.vmem [#allocation5], 1
        %v4005 = vld [vmem:[%s4004] sm:$0x1]
        %v4006 = vsel %vm2086, %v4001, 0.0
        %4007 = vadd.xlane.f32.xlu0 %v4006
        %v4008 = vpop.xlane.xlu0 %4007
        %v4009 = vmul.f32 %v4008, %v2926
        %v4010 = vsub.f32 %v4001, %v4009
        %v4011 = vmul.f32 %v4010, %v4010
        %v4012 = vsel %vm2086, %v4011, 0.0
        %4013 = vadd.xlane.f32.xlu0 %v4012
        %v4014 = vpop.xlane.xlu0 %4013
        %v4015 = vmul.f32 %v4014, %v2926
        %v4016 = vadd.f32 %v4015, 1e-05
        %v4017 = vrsqrt.pop %v4016
        %v4018 = vmul.f32 %v4010, %v4017
        %v4020 = vlaneseq
        %v4021 = vshrl.u32 %v4020, 7
        %v4022 = vsub.s32 0, %v4021
        %v4023 = vrot.slane %v4003, %v4022
        %v4025 = vmul.f32 %v4018, %v4023
        %v4027 = vlaneseq
        %v4028 = vshrl.u32 %v4027, 7
        %v4029 = vsub.s32 0, %v4028
        %v4030 = vrot.slane %v4005, %v4029
        %v4032 = vadd.f32 %v4025, %v4030
        %s4033 = scalar_lea.vmem %s27, 32
        %v4034 = vld [vmem:[%s4033] sm:$0xff]
        %v4035 = vld [vmem:[%s4033 + $0x8] sm:$0xff]
        %v4036 = vld [vmem:[%s4033 + $0x10] sm:$0xff]
        %v4037 = vld [vmem:[%s4033 + $0x18] sm:$0xff]
        %s4038 = scalar_lea.vmem [#allocation7], 1
        %v4039 = vld [vmem:[%s4038] sm:$0x1]
        %v4041 = vlaneseq
        %v4042 = vshrl.u32 %v4041, 7
        %v4043 = vsub.s32 0, %v4042
        %v4044 = vrot.slane %v4039, %v4043
        %v4047 = vsel %vm2086, %v4032, 0
        %4049 = vmatprep.subr.mxu0 0.0
        %4050 = vmatpush1.msra.mxu0 %v4034
        %4051 = vmatprep.subr.mxu0 0.0
        %4052 = vmatpush1.msra.mxu0 %v4035
        %4053 = vmatprep.subr.mxu0 0.0
        %4054 = vmatpush1.msra.mxu0 %v4036
        %4055 = vmatprep.subr.mxu0 0.0
        %4056 = vmatpush1.msra.mxu0 %v4037
        %4057 = vmatprep.subr.mxu0 0.0
        %4058 = vmatpush1.msra.mxu0 0.0
        %4059 = vmatprep.subr.mxu0 0.0
        %4060 = vmatpush1.msra.mxu0 0.0
        %4061 = vmatprep.subr.mxu0 0.0
        %4062 = vmatpush1.msra.mxu0 0.0
        %4063 = vmatprep.subr.mxu0 0.0
        %4064 = vmatpush1.msra.mxu0 0.0
        %4065 = vmatprep.subr.mxu0 0.0
        %4066 = vmatpush1.msra.mxu0 0.0
        %4067 = vmatprep.subr.mxu0 0.0
        %4068 = vmatpush1.msra.mxu0 0.0
        %4069 = vmatprep.subr.mxu0 0.0
        %4070 = vmatpush1.msra.mxu0 0.0
        %4071 = vmatprep.subr.mxu0 0.0
        %4072 = vmatpush1.msra.mxu0 0.0
        %4073 = vmatprep.subr.mxu0 0.0
        %4074 = vmatpush1.msra.mxu0 0.0
        %4075 = vmatprep.subr.mxu0 0.0
        %4076 = vmatpush1.msra.mxu0 0.0
        %4077 = vmatprep.subr.mxu0 0.0
        %4078 = vmatpush1.msra.mxu0 0.0
        %4079 = vmatprep.subr.mxu0 0.0
        %4080 = vmatpush1.msra.mxu0 0.0
        %4081 = vmatprep.subr.mxu0 0.0
        %4082 = vmatpush1.msra.mxu0 0.0
        %4083 = vmatprep.subr.mxu0 0.0
        %4084 = vmatpush1.msra.mxu0 0.0
        %4085 = vmatprep.subr.mxu0 0.0
        %4086 = vmatpush1.msra.mxu0 0.0
        %4087 = vmatprep.subr.mxu0 0.0
        %4088 = vmatpush1.msra.mxu0 0.0
        %4089 = vmatprep.subr.mxu0 0.0
        %4090 = vmatpush1.msra.mxu0 0.0
        %4091 = vmatprep.subr.mxu0 0.0
        %4092 = vmatpush1.msra.mxu0 0.0
        %4093 = vmatprep.subr.mxu0 0.0
        %4094 = vmatpush1.msra.mxu0 0.0
        %4095 = vmatprep.subr.mxu0 0.0
        %4096 = vmatpush1.msra.mxu0 0.0
        %4097 = vmatprep.subr.mxu0 0.0
        %4098 = vmatpush1.msra.mxu0 0.0
        %4099 = vmatprep.subr.mxu0 0.0
        %4100 = vmatpush1.msra.mxu0 0.0
        %4101 = vmatprep.subr.mxu0 0.0
        %4102 = vmatpush1.msra.mxu0 0.0
        %4103 = vmatprep.subr.mxu0 0.0
        %4104 = vmatpush1.msra.mxu0 0.0
        %4105 = vmatprep.subr.mxu0 0.0
        %4106 = vmatpush1.msra.mxu0 0.0
        %4107 = vmatprep.subr.mxu0 0.0
        %4108 = vmatpush1.msra.mxu0 0.0
        %4109 = vmatprep.subr.mxu0 0.0
        %4110 = vmatpush1.msra.mxu0 0.0
        %4111 = vmatprep.subr.mxu0 0.0
        %4112 = vmatpush1.msra.mxu0 0.0
        %4113 = vmatprep.mubr.f32.mxu0 0.0
        %4114 = vmatmul.mubr.f32.gmra.mrb[0].mxu0 %v4047
        %v4115 = vpop.f32.mrb[0].mxu0
        %v4116 = vadd.f32 %v4044, %v4115
        %v4117 = vpop.f32.mrb[0].mxu0
        %4118 = vdwg.mxu0
        %v4119 = vmax.f32 %v4116, 0.0
        %s4120 = scalar_lea.vmem %s31, 64
        %v4121 = vld [vmem:[%s4120] sm:$0xff]
        %v4122 = vld [vmem:[%s4120 + $0x8] sm:$0xff]
        %v4123 = vld [vmem:[%s4120 + $0x10] sm:$0xff]
        %v4124 = vld [vmem:[%s4120 + $0x18] sm:$0xff]
        %v4125 = vld [vmem:[%s4120 + $0x20] sm:$0xff]
        %v4126 = vld [vmem:[%s4120 + $0x28] sm:$0xff]
        %v4127 = vld [vmem:[%s4120 + $0x30] sm:$0xff]
        %v4128 = vld [vmem:[%s4120 + $0x38] sm:$0xff]
        %s4129 = scalar_lea.vmem [#allocation8], 1
        %v4130 = vld [vmem:[%s4129] sm:$0x1]
        %v4132 = vlaneseq
        %v4133 = vshrl.u32 %v4132, 7
        %v4134 = vsub.s32 0, %v4133
        %v4135 = vrot.slane %v4130, %v4134
        %v4138 = vsel %vm3051, %v4119, 0
        %4140 = vmatprep.subr.mxu0 0.0
        %4141 = vmatpush1.msra.mxu0 %v4121
        %4142 = vmatprep.subr.mxu0 0.0
        %4143 = vmatpush1.msra.mxu0 %v4122
        %4144 = vmatprep.subr.mxu0 0.0
        %4145 = vmatpush1.msra.mxu0 %v4123
        %4146 = vmatprep.subr.mxu0 0.0
        %4147 = vmatpush1.msra.mxu0 %v4124
        %4148 = vmatprep.subr.mxu0 0.0
        %4149 = vmatpush1.msra.mxu0 %v4125
        %4150 = vmatprep.subr.mxu0 0.0
        %4151 = vmatpush1.msra.mxu0 %v4126
        %4152 = vmatprep.subr.mxu0 0.0
        %4153 = vmatpush1.msra.mxu0 %v4127
        %4154 = vmatprep.subr.mxu0 0.0
        %4155 = vmatpush1.msra.mxu0 %v4128
        %4156 = vmatprep.subr.mxu0 0.0
        %4157 = vmatpush1.msra.mxu0 0.0
        %4158 = vmatprep.subr.mxu0 0.0
        %4159 = vmatpush1.msra.mxu0 0.0
        %4160 = vmatprep.subr.mxu0 0.0
        %4161 = vmatpush1.msra.mxu0 0.0
        %4162 = vmatprep.subr.mxu0 0.0
        %4163 = vmatpush1.msra.mxu0 0.0
        %4164 = vmatprep.subr.mxu0 0.0
        %4165 = vmatpush1.msra.mxu0 0.0
        %4166 = vmatprep.subr.mxu0 0.0
        %4167 = vmatpush1.msra.mxu0 0.0
        %4168 = vmatprep.subr.mxu0 0.0
        %4169 = vmatpush1.msra.mxu0 0.0
        %4170 = vmatprep.subr.mxu0 0.0
        %4171 = vmatpush1.msra.mxu0 0.0
        %4172 = vmatprep.subr.mxu0 0.0
        %4173 = vmatpush1.msra.mxu0 0.0
        %4174 = vmatprep.subr.mxu0 0.0
        %4175 = vmatpush1.msra.mxu0 0.0
        %4176 = vmatprep.subr.mxu0 0.0
        %4177 = vmatpush1.msra.mxu0 0.0
        %4178 = vmatprep.subr.mxu0 0.0
        %4179 = vmatpush1.msra.mxu0 0.0
        %4180 = vmatprep.subr.mxu0 0.0
        %4181 = vmatpush1.msra.mxu0 0.0
        %4182 = vmatprep.subr.mxu0 0.0
        %4183 = vmatpush1.msra.mxu0 0.0
        %4184 = vmatprep.subr.mxu0 0.0
        %4185 = vmatpush1.msra.mxu0 0.0
        %4186 = vmatprep.subr.mxu0 0.0
        %4187 = vmatpush1.msra.mxu0 0.0
        %4188 = vmatprep.subr.mxu0 0.0
        %4189 = vmatpush1.msra.mxu0 0.0
        %4190 = vmatprep.subr.mxu0 0.0
        %4191 = vmatpush1.msra.mxu0 0.0
        %4192 = vmatprep.subr.mxu0 0.0
        %4193 = vmatpush1.msra.mxu0 0.0
        %4194 = vmatprep.subr.mxu0 0.0
        %4195 = vmatpush1.msra.mxu0 0.0
        %4196 = vmatprep.subr.mxu0 0.0
        %4197 = vmatpush1.msra.mxu0 0.0
        %4198 = vmatprep.subr.mxu0 0.0
        %4199 = vmatpush1.msra.mxu0 0.0
        %4200 = vmatprep.subr.mxu0 0.0
        %4201 = vmatpush1.msra.mxu0 0.0
        %4202 = vmatprep.subr.mxu0 0.0
        %4203 = vmatpush1.msra.mxu0 0.0
        %4204 = vmatprep.mubr.f32.mxu0 0.0
        %4205 = vmatmul.mubr.f32.gmra.mrb[0].mxu0 %v4138
        %v4206 = vpop.f32.mrb[0].mxu0
        %v4207 = vadd.f32 %v4135, %v4206
        %v4208 = vpop.f32.mrb[0].mxu0
        %4209 = vdwg.mxu0
        %v4210 = vadd.f32 %v4032, %v4207
        %s4211 = scalar_lea.vmem [#allocation10], 1
        %v4212 = vld [vmem:[%s4211] sm:$0x1]
        %s4213 = scalar_lea.vmem [#allocation11], 1
        %v4214 = vld [vmem:[%s4213] sm:$0x1]
        %v4215 = vsel %vm2086, %v4210, 0.0
        %4216 = vadd.xlane.f32.xlu0 %v4215
        %v4217 = vpop.xlane.xlu0 %4216
        %v4218 = vmul.f32 %v4217, %v2926
        %v4219 = vsub.f32 %v4210, %v4218
        %v4220 = vmul.f32 %v4219, %v4219
        %v4221 = vsel %vm2086, %v4220, 0.0
        %4222 = vadd.xlane.f32.xlu0 %v4221
        %v4223 = vpop.xlane.xlu0 %4222
        %v4224 = vmul.f32 %v4223, %v2926
        %v4225 = vadd.f32 %v4224, 1e-05
        %v4226 = vrsqrt.pop %v4225
        %v4227 = vmul.f32 %v4219, %v4226
        %v4229 = vlaneseq
        %v4230 = vshrl.u32 %v4229, 7
        %v4231 = vsub.s32 0, %v4230
        %v4232 = vrot.slane %v4212, %v4231
        %v4234 = vmul.f32 %v4227, %v4232
        %v4236 = vlaneseq
        %v4237 = vshrl.u32 %v4236, 7
        %v4238 = vsub.s32 0, %v4237
        %v4239 = vrot.slane %v4214, %v4238
        %v4241 = vadd.f32 %v4234, %v4239
        %v4242 = vld [vmem:[#allocation13] sm:$0x1]
        %v4243 = vld [vmem:[#allocation14] sm:$0x1]
        %v4244 = vsel %vm2086, %v4241, 0.0
        %4245 = vadd.xlane.f32.xlu0 %v4244
        %v4246 = vpop.xlane.xlu0 %4245
        %v4247 = vmul.f32 %v4246, %v2926
        %v4248 = vsub.f32 %v4241, %v4247
        %v4249 = vmul.f32 %v4248, %v4248
        %v4250 = vsel %vm2086, %v4249, 0.0
        %4251 = vadd.xlane.f32.xlu0 %v4250
        %v4252 = vpop.xlane.xlu0 %4251
        %v4253 = vmul.f32 %v4252, %v2926
        %v4254 = vadd.f32 %v4253, 1e-05
        %v4255 = vrsqrt.pop %v4254
        %v4256 = vmul.f32 %v4248, %v4255
        %v4258 = vlaneseq
        %v4259 = vshrl.u32 %v4258, 7
        %v4260 = vsub.s32 0, %v4259
        %v4261 = vrot.slane %v4242, %v4260
        %v4263 = vmul.f32 %v4256, %v4261
        %v4265 = vlaneseq
        %v4266 = vshrl.u32 %v4265, 7
        %v4267 = vsub.s32 0, %v4266
        %v4268 = vrot.slane %v4243, %v4267
        %v4270 = vadd.f32 %v4263, %v4268
        %v4271 = vld [vmem:[%s43] sm:$0xff]
        %v4272 = vld [vmem:[%s43 + $0x8] sm:$0xff]
        %v4273 = vld [vmem:[%s43 + $0x10] sm:$0xff]
        %v4274 = vld [vmem:[%s43 + $0x18] sm:$0xff]
        %v4275 = vld [vmem:[#allocation16] sm:$0x1]
        %v4277 = vlaneseq
        %v4278 = vshrl.u32 %v4277, 7
        %v4279 = vsub.s32 0, %v4278
        %v4280 = vrot.slane %v4275, %v4279
        %v4283 = vsel %vm2086, %v2072, 0
        %4285 = vmatprep.subr.mxu0 0.0
        %4286 = vmatpush1.msra.mxu0 %v4271
        %4287 = vmatprep.subr.mxu0 0.0
        %4288 = vmatpush1.msra.mxu0 %v4272
        %4289 = vmatprep.subr.mxu0 0.0
        %4290 = vmatpush1.msra.mxu0 %v4273
        %4291 = vmatprep.subr.mxu0 0.0
        %4292 = vmatpush1.msra.mxu0 %v4274
        %4293 = vmatprep.subr.mxu0 0.0
        %4294 = vmatpush1.msra.mxu0 0.0
        %4295 = vmatprep.subr.mxu0 0.0
        %4296 = vmatpush1.msra.mxu0 0.0
        %4297 = vmatprep.subr.mxu0 0.0
        %4298 = vmatpush1.msra.mxu0 0.0
        %4299 = vmatprep.subr.mxu0 0.0
        %4300 = vmatpush1.msra.mxu0 0.0
        %4301 = vmatprep.subr.mxu0 0.0
        %4302 = vmatpush1.msra.mxu0 0.0
        %4303 = vmatprep.subr.mxu0 0.0
        %4304 = vmatpush1.msra.mxu0 0.0
        %4305 = vmatprep.subr.mxu0 0.0
        %4306 = vmatpush1.msra.mxu0 0.0
        %4307 = vmatprep.subr.mxu0 0.0
        %4308 = vmatpush1.msra.mxu0 0.0
        %4309 = vmatprep.subr.mxu0 0.0
        %4310 = vmatpush1.msra.mxu0 0.0
        %4311 = vmatprep.subr.mxu0 0.0
        %4312 = vmatpush1.msra.mxu0 0.0
        %4313 = vmatprep.subr.mxu0 0.0
        %4314 = vmatpush1.msra.mxu0 0.0
        %4315 = vmatprep.subr.mxu0 0.0
        %4316 = vmatpush1.msra.mxu0 0.0
        %4317 = vmatprep.subr.mxu0 0.0
        %4318 = vmatpush1.msra.mxu0 0.0
        %4319 = vmatprep.subr.mxu0 0.0
        %4320 = vmatpush1.msra.mxu0 0.0
        %4321 = vmatprep.subr.mxu0 0.0
        %4322 = vmatpush1.msra.mxu0 0.0
        %4323 = vmatprep.subr.mxu0 0.0
        %4324 = vmatpush1.msra.mxu0 0.0
        %4325 = vmatprep.subr.mxu0 0.0
        %4326 = vmatpush1.msra.mxu0 0.0
        %4327 = vmatprep.subr.mxu0 0.0
        %4328 = vmatpush1.msra.mxu0 0.0
        %4329 = vmatprep.subr.mxu0 0.0
        %4330 = vmatpush1.msra.mxu0 0.0
        %4331 = vmatprep.subr.mxu0 0.0
        %4332 = vmatpush1.msra.mxu0 0.0
        %4333 = vmatprep.subr.mxu0 0.0
        %4334 = vmatpush1.msra.mxu0 0.0
        %4335 = vmatprep.subr.mxu0 0.0
        %4336 = vmatpush1.msra.mxu0 0.0
        %4337 = vmatprep.subr.mxu0 0.0
        %4338 = vmatpush1.msra.mxu0 0.0
        %4339 = vmatprep.subr.mxu0 0.0
        %4340 = vmatpush1.msra.mxu0 0.0
        %4341 = vmatprep.subr.mxu0 0.0
        %4342 = vmatpush1.msra.mxu0 0.0
        %4343 = vmatprep.subr.mxu0 0.0
        %4344 = vmatpush1.msra.mxu0 0.0
        %4345 = vmatprep.subr.mxu0 0.0
        %4346 = vmatpush1.msra.mxu0 0.0
        %4347 = vmatprep.subr.mxu0 0.0
        %4348 = vmatpush1.msra.mxu0 0.0
        %4349 = vmatprep.mubr.f32.mxu0 0.0
        %4350 = vmatmul.mubr.f32.gmra.mrb[0].mxu0 %v4283
        %v4351 = vpop.f32.mrb[0].mxu0
        %v4352 = vadd.f32 %v4280, %v4351
        %v4353 = vpop.f32.mrb[0].mxu0
        %4354 = vdwg.mxu0
        %4356 = vrot.lane.b32.xlu0 %v4352, 96
        %v4357 = vpop.permute.xlu0 %4356
        %v4358 = vsel %vm2163, %v4352, 0
        %v4360 = vsel %vm2163, %v4357, 0
        %4362 = vmatprep.subr.mxu0 0.0
        %4363 = vmatpush1.xpose.msra.mxu0 %v4360
        %4364 = vmatprep.subr.mxu0 0.0
        %4365 = vmatpush1.xpose.msra.mxu0 0.0
        %4366 = vmatprep.subr.mxu0 0.0
        %4367 = vmatpush1.xpose.msra.mxu0 0.0
        %4368 = vmatprep.subr.mxu0 0.0
        %4369 = vmatpush1.xpose.msra.mxu0 0.0
        %4370 = vmatprep.subr.mxu0 0.0
        %4371 = vmatpush1.xpose.msra.mxu0 0.0
        %4372 = vmatprep.subr.mxu0 0.0
        %4373 = vmatpush1.xpose.msra.mxu0 0.0
        %4374 = vmatprep.subr.mxu0 0.0
        %4375 = vmatpush1.xpose.msra.mxu0 0.0
        %4376 = vmatprep.subr.mxu0 0.0
        %4377 = vmatpush1.xpose.msra.mxu0 0.0
        %4378 = vmatprep.subr.mxu0 0.0
        %4379 = vmatpush1.xpose.msra.mxu0 0.0
        %4380 = vmatprep.subr.mxu0 0.0
        %4381 = vmatpush1.xpose.msra.mxu0 0.0
        %4382 = vmatprep.subr.mxu0 0.0
        %4383 = vmatpush1.xpose.msra.mxu0 0.0
        %4384 = vmatprep.subr.mxu0 0.0
        %4385 = vmatpush1.xpose.msra.mxu0 0.0
        %4386 = vmatprep.subr.mxu0 0.0
        %4387 = vmatpush1.xpose.msra.mxu0 0.0
        %4388 = vmatprep.subr.mxu0 0.0
        %4389 = vmatpush1.xpose.msra.mxu0 0.0
        %4390 = vmatprep.subr.mxu0 0.0
        %4391 = vmatpush1.xpose.msra.mxu0 0.0
        %4392 = vmatprep.subr.mxu0 0.0
        %4393 = vmatpush1.xpose.msra.mxu0 0.0
        %4394 = vmatprep.subr.mxu0 0.0
        %4395 = vmatpush1.xpose.msra.mxu0 0.0
        %4396 = vmatprep.subr.mxu0 0.0
        %4397 = vmatpush1.xpose.msra.mxu0 0.0
        %4398 = vmatprep.subr.mxu0 0.0
        %4399 = vmatpush1.xpose.msra.mxu0 0.0
        %4400 = vmatprep.subr.mxu0 0.0
        %4401 = vmatpush1.xpose.msra.mxu0 0.0
        %4402 = vmatprep.subr.mxu0 0.0
        %4403 = vmatpush1.xpose.msra.mxu0 0.0
        %4404 = vmatprep.subr.mxu0 0.0
        %4405 = vmatpush1.xpose.msra.mxu0 0.0
        %4406 = vmatprep.subr.mxu0 0.0
        %4407 = vmatpush1.xpose.msra.mxu0 0.0
        %4408 = vmatprep.subr.mxu0 0.0
        %4409 = vmatpush1.xpose.msra.mxu0 0.0
        %4410 = vmatprep.subr.mxu0 0.0
        %4411 = vmatpush1.xpose.msra.mxu0 0.0
        %4412 = vmatprep.subr.mxu0 0.0
        %4413 = vmatpush1.xpose.msra.mxu0 0.0
        %4414 = vmatprep.subr.mxu0 0.0
        %4415 = vmatpush1.xpose.msra.mxu0 0.0
        %4416 = vmatprep.subr.mxu0 0.0
        %4417 = vmatpush1.xpose.msra.mxu0 0.0
        %4418 = vmatprep.subr.mxu0 0.0
        %4419 = vmatpush1.xpose.msra.mxu0 0.0
        %4420 = vmatprep.subr.mxu0 0.0
        %4421 = vmatpush1.xpose.msra.mxu0 0.0
        %4422 = vmatprep.subr.mxu0 0.0
        %4423 = vmatpush1.xpose.msra.mxu0 0.0
        %4424 = vmatprep.subr.mxu0 0.0
        %4425 = vmatpush1.xpose.msra.mxu0 0.0
        %4426 = vmatprep.mubr.f32.mxu0 0.0
        %4427 = vmatmul.mubr.f32.gmra.mrb[0].mxu0 %v4358
        %v4428 = vpop.f32.mrb[0].mxu0
        %v4429 = vadd.f32 0.0, %v4428
        %v4430 = vpop.f32.mrb[0].mxu0
        %4431 = vdwg.mxu0
        %v4432 = vsel %vm2163, %v4429, -inf
        %4433 = vmax.xlane.f32.xlu0 %v4432
        %v4434 = vpop.xlane.xlu0 %4433
        %v4435 = vsub.f32 %v4429, %v4434
        %v4436 = vmul.f32 %v4435, 1.442695
        %v4437 = vpow.pop %v4436
        %v4438 = vsel %vm2163, %v4437, 0.0
        %4439 = vadd.xlane.f32.xlu0 %v4438
        %v4440 = vpop.xlane.xlu0 %4439
        %v4441 = vrcp.pop %v4440
        %v4442 = vmul.f32 %v4437, %v4441
        %4443 = vrot.lane.b32.xlu0 %v4352, 64
        %v4444 = vpop.permute.xlu0 %4443
        %v4447 = vsel %vm2163, %v4442, 0
        %4449 = vmatprep.subr.mxu0 0.0
        %4450 = vmatpush1.msra.mxu0 %v4444
        %4451 = vmatprep.subr.mxu0 0.0
        %4452 = vmatpush1.msra.mxu0 0.0
        %4453 = vmatprep.subr.mxu0 0.0
        %4454 = vmatpush1.msra.mxu0 0.0
        %4455 = vmatprep.subr.mxu0 0.0
        %4456 = vmatpush1.msra.mxu0 0.0
        %4457 = vmatprep.subr.mxu0 0.0
        %4458 = vmatpush1.msra.mxu0 0.0
        %4459 = vmatprep.subr.mxu0 0.0
        %4460 = vmatpush1.msra.mxu0 0.0
        %4461 = vmatprep.subr.mxu0 0.0
        %4462 = vmatpush1.msra.mxu0 0.0
        %4463 = vmatprep.subr.mxu0 0.0
        %4464 = vmatpush1.msra.mxu0 0.0
        %4465 = vmatprep.subr.mxu0 0.0
        %4466 = vmatpush1.msra.mxu0 0.0
        %4467 = vmatprep.subr.mxu0 0.0
        %4468 = vmatpush1.msra.mxu0 0.0
        %4469 = vmatprep.subr.mxu0 0.0
        %4470 = vmatpush1.msra.mxu0 0.0
        %4471 = vmatprep.subr.mxu0 0.0
        %4472 = vmatpush1.msra.mxu0 0.0
        %4473 = vmatprep.subr.mxu0 0.0
        %4474 = vmatpush1.msra.mxu0 0.0
        %4475 = vmatprep.subr.mxu0 0.0
        %4476 = vmatpush1.msra.mxu0 0.0
        %4477 = vmatprep.subr.mxu0 0.0
        %4478 = vmatpush1.msra.mxu0 0.0
        %4479 = vmatprep.subr.mxu0 0.0
        %4480 = vmatpush1.msra.mxu0 0.0
        %4481 = vmatprep.subr.mxu0 0.0
        %4482 = vmatpush1.msra.mxu0 0.0
        %4483 = vmatprep.subr.mxu0 0.0
        %4484 = vmatpush1.msra.mxu0 0.0
        %4485 = vmatprep.subr.mxu0 0.0
        %4486 = vmatpush1.msra.mxu0 0.0
        %4487 = vmatprep.subr.mxu0 0.0
        %4488 = vmatpush1.msra.mxu0 0.0
        %4489 = vmatprep.subr.mxu0 0.0
        %4490 = vmatpush1.msra.mxu0 0.0
        %4491 = vmatprep.subr.mxu0 0.0
        %4492 = vmatpush1.msra.mxu0 0.0
        %4493 = vmatprep.subr.mxu0 0.0
        %4494 = vmatpush1.msra.mxu0 0.0
        %4495 = vmatprep.subr.mxu0 0.0
        %4496 = vmatpush1.msra.mxu0 0.0
        %4497 = vmatprep.subr.mxu0 0.0
        %4498 = vmatpush1.msra.mxu0 0.0
        %4499 = vmatprep.subr.mxu0 0.0
        %4500 = vmatpush1.msra.mxu0 0.0
        %4501 = vmatprep.subr.mxu0 0.0
        %4502 = vmatpush1.msra.mxu0 0.0
        %4503 = vmatprep.subr.mxu0 0.0
        %4504 = vmatpush1.msra.mxu0 0.0
        %4505 = vmatprep.subr.mxu0 0.0
        %4506 = vmatpush1.msra.mxu0 0.0
        %4507 = vmatprep.subr.mxu0 0.0
        %4508 = vmatpush1.msra.mxu0 0.0
        %4509 = vmatprep.subr.mxu0 0.0
        %4510 = vmatpush1.msra.mxu0 0.0
        %4511 = vmatprep.subr.mxu0 0.0
        %4512 = vmatpush1.msra.mxu0 0.0
        %4513 = vmatprep.mubr.f32.mxu0 0.0
        %4514 = vmatmul.mubr.f32.gmra.mrb[0].mxu0 %v4447
        %v4515 = vpop.f32.mrb[0].mxu0
        %v4516 = vadd.f32 0.0, %v4515
        %v4517 = vpop.f32.mrb[0].mxu0
        %4518 = vdwg.mxu0
        %4519 = vrot.lane.b32.xlu0 %v4352, 120
        %v4520 = vpop.permute.xlu0 %4519
        %4521 = vrot.lane.b32.xlu0 %v4352, 88
        %v4522 = vpop.permute.xlu0 %4521
        %v4523 = vsel %vm2163, %v4520, 0
        %v4525 = vsel %vm2163, %v4522, 0
        %4527 = vmatprep.subr.mxu0 0.0
        %4528 = vmatpush1.xpose.msra.mxu0 %v4525
        %4529 = vmatprep.subr.mxu0 0.0
        %4530 = vmatpush1.xpose.msra.mxu0 0.0
        %4531 = vmatprep.subr.mxu0 0.0
        %4532 = vmatpush1.xpose.msra.mxu0 0.0
        %4533 = vmatprep.subr.mxu0 0.0
        %4534 = vmatpush1.xpose.msra.mxu0 0.0
        %4535 = vmatprep.subr.mxu0 0.0
        %4536 = vmatpush1.xpose.msra.mxu0 0.0
        %4537 = vmatprep.subr.mxu0 0.0
        %4538 = vmatpush1.xpose.msra.mxu0 0.0
        %4539 = vmatprep.subr.mxu0 0.0
        %4540 = vmatpush1.xpose.msra.mxu0 0.0
        %4541 = vmatprep.subr.mxu0 0.0
        %4542 = vmatpush1.xpose.msra.mxu0 0.0
        %4543 = vmatprep.subr.mxu0 0.0
        %4544 = vmatpush1.xpose.msra.mxu0 0.0
        %4545 = vmatprep.subr.mxu0 0.0
        %4546 = vmatpush1.xpose.msra.mxu0 0.0
        %4547 = vmatprep.subr.mxu0 0.0
        %4548 = vmatpush1.xpose.msra.mxu0 0.0
        %4549 = vmatprep.subr.mxu0 0.0
        %4550 = vmatpush1.xpose.msra.mxu0 0.0
        %4551 = vmatprep.subr.mxu0 0.0
        %4552 = vmatpush1.xpose.msra.mxu0 0.0
        %4553 = vmatprep.subr.mxu0 0.0
        %4554 = vmatpush1.xpose.msra.mxu0 0.0
        %4555 = vmatprep.subr.mxu0 0.0
        %4556 = vmatpush1.xpose.msra.mxu0 0.0
        %4557 = vmatprep.subr.mxu0 0.0
        %4558 = vmatpush1.xpose.msra.mxu0 0.0
        %4559 = vmatprep.subr.mxu0 0.0
        %4560 = vmatpush1.xpose.msra.mxu0 0.0
        %4561 = vmatprep.subr.mxu0 0.0
        %4562 = vmatpush1.xpose.msra.mxu0 0.0
        %4563 = vmatprep.subr.mxu0 0.0
        %4564 = vmatpush1.xpose.msra.mxu0 0.0
        %4565 = vmatprep.subr.mxu0 0.0
        %4566 = vmatpush1.xpose.msra.mxu0 0.0
        %4567 = vmatprep.subr.mxu0 0.0
        %4568 = vmatpush1.xpose.msra.mxu0 0.0
        %4569 = vmatprep.subr.mxu0 0.0
        %4570 = vmatpush1.xpose.msra.mxu0 0.0
        %4571 = vmatprep.subr.mxu0 0.0
        %4572 = vmatpush1.xpose.msra.mxu0 0.0
        %4573 = vmatprep.subr.mxu0 0.0
        %4574 = vmatpush1.xpose.msra.mxu0 0.0
        %4575 = vmatprep.subr.mxu0 0.0
        %4576 = vmatpush1.xpose.msra.mxu0 0.0
        %4577 = vmatprep.subr.mxu0 0.0
        %4578 = vmatpush1.xpose.msra.mxu0 0.0
        %4579 = vmatprep.subr.mxu0 0.0
        %4580 = vmatpush1.xpose.msra.mxu0 0.0
        %4581 = vmatprep.subr.mxu0 0.0
        %4582 = vmatpush1.xpose.msra.mxu0 0.0
        %4583 = vmatprep.subr.mxu0 0.0
        %4584 = vmatpush1.xpose.msra.mxu0 0.0
        %4585 = vmatprep.subr.mxu0 0.0
        %4586 = vmatpush1.xpose.msra.mxu0 0.0
        %4587 = vmatprep.subr.mxu0 0.0
        %4588 = vmatpush1.xpose.msra.mxu0 0.0
        %4589 = vmatprep.subr.mxu0 0.0
        %4590 = vmatpush1.xpose.msra.mxu0 0.0
        %4591 = vmatprep.mubr.f32.mxu0 0.0
        %4592 = vmatmul.mubr.f32.gmra.mrb[0].mxu0 %v4523
        %v4593 = vpop.f32.mrb[0].mxu0
        %v4594 = vadd.f32 0.0, %v4593
        %v4595 = vpop.f32.mrb[0].mxu0
        %4596 = vdwg.mxu0
        %v4597 = vsel %vm2163, %v4594, -inf
        %4598 = vmax.xlane.f32.xlu0 %v4597
        %v4599 = vpop.xlane.xlu0 %4598
        %v4600 = vsub.f32 %v4594, %v4599
        %v4601 = vmul.f32 %v4600, 1.442695
        %v4602 = vpow.pop %v4601
        %v4603 = vsel %vm2163, %v4602, 0.0
        %4604 = vadd.xlane.f32.xlu0 %v4603
        %v4605 = vpop.xlane.xlu0 %4604
        %v4606 = vrcp.pop %v4605
        %v4607 = vmul.f32 %v4602, %v4606
        %4608 = vrot.lane.b32.xlu0 %v4352, 56
        %v4609 = vpop.permute.xlu0 %4608
        %v4612 = vsel %vm2163, %v4607, 0
        %4614 = vmatprep.subr.mxu0 0.0
        %4615 = vmatpush1.msra.mxu0 %v4609
        %4616 = vmatprep.subr.mxu0 0.0
        %4617 = vmatpush1.msra.mxu0 0.0
        %4618 = vmatprep.subr.mxu0 0.0
        %4619 = vmatpush1.msra.mxu0 0.0
        %4620 = vmatprep.subr.mxu0 0.0
        %4621 = vmatpush1.msra.mxu0 0.0
        %4622 = vmatprep.subr.mxu0 0.0
        %4623 = vmatpush1.msra.mxu0 0.0
        %4624 = vmatprep.subr.mxu0 0.0
        %4625 = vmatpush1.msra.mxu0 0.0
        %4626 = vmatprep.subr.mxu0 0.0
        %4627 = vmatpush1.msra.mxu0 0.0
        %4628 = vmatprep.subr.mxu0 0.0
        %4629 = vmatpush1.msra.mxu0 0.0
        %4630 = vmatprep.subr.mxu0 0.0
        %4631 = vmatpush1.msra.mxu0 0.0
        %4632 = vmatprep.subr.mxu0 0.0
        %4633 = vmatpush1.msra.mxu0 0.0
        %4634 = vmatprep.subr.mxu0 0.0
        %4635 = vmatpush1.msra.mxu0 0.0
        %4636 = vmatprep.subr.mxu0 0.0
        %4637 = vmatpush1.msra.mxu0 0.0
        %4638 = vmatprep.subr.mxu0 0.0
        %4639 = vmatpush1.msra.mxu0 0.0
        %4640 = vmatprep.subr.mxu0 0.0
        %4641 = vmatpush1.msra.mxu0 0.0
        %4642 = vmatprep.subr.mxu0 0.0
        %4643 = vmatpush1.msra.mxu0 0.0
        %4644 = vmatprep.subr.mxu0 0.0
        %4645 = vmatpush1.msra.mxu0 0.0
        %4646 = vmatprep.subr.mxu0 0.0
        %4647 = vmatpush1.msra.mxu0 0.0
        %4648 = vmatprep.subr.mxu0 0.0
        %4649 = vmatpush1.msra.mxu0 0.0
        %4650 = vmatprep.subr.mxu0 0.0
        %4651 = vmatpush1.msra.mxu0 0.0
        %4652 = vmatprep.subr.mxu0 0.0
        %4653 = vmatpush1.msra.mxu0 0.0
        %4654 = vmatprep.subr.mxu0 0.0
        %4655 = vmatpush1.msra.mxu0 0.0
        %4656 = vmatprep.subr.mxu0 0.0
        %4657 = vmatpush1.msra.mxu0 0.0
        %4658 = vmatprep.subr.mxu0 0.0
        %4659 = vmatpush1.msra.mxu0 0.0
        %4660 = vmatprep.subr.mxu0 0.0
        %4661 = vmatpush1.msra.mxu0 0.0
        %4662 = vmatprep.subr.mxu0 0.0
        %4663 = vmatpush1.msra.mxu0 0.0
        %4664 = vmatprep.subr.mxu0 0.0
        %4665 = vmatpush1.msra.mxu0 0.0
        %4666 = vmatprep.subr.mxu0 0.0
        %4667 = vmatpush1.msra.mxu0 0.0
        %4668 = vmatprep.subr.mxu0 0.0
        %4669 = vmatpush1.msra.mxu0 0.0
        %4670 = vmatprep.subr.mxu0 0.0
        %4671 = vmatpush1.msra.mxu0 0.0
        %4672 = vmatprep.subr.mxu0 0.0
        %4673 = vmatpush1.msra.mxu0 0.0
        %4674 = vmatprep.subr.mxu0 0.0
        %4675 = vmatpush1.msra.mxu0 0.0
        %4676 = vmatprep.subr.mxu0 0.0
        %4677 = vmatpush1.msra.mxu0 0.0
        %4678 = vmatprep.mubr.f32.mxu0 0.0
        %4679 = vmatmul.mubr.f32.gmra.mrb[0].mxu0 %v4612
        %v4680 = vpop.f32.mrb[0].mxu0
        %v4681 = vadd.f32 0.0, %v4680
        %v4682 = vpop.f32.mrb[0].mxu0
        %4683 = vdwg.mxu0
        %4684 = vrot.lane.b32.xlu0 %v4352, 112
        %v4685 = vpop.permute.xlu0 %4684
        %4686 = vrot.lane.b32.xlu0 %v4352, 80
        %v4687 = vpop.permute.xlu0 %4686
        %v4688 = vsel %vm2163, %v4685, 0
        %v4690 = vsel %vm2163, %v4687, 0
        %4692 = vmatprep.subr.mxu0 0.0
        %4693 = vmatpush1.xpose.msra.mxu0 %v4690
        %4694 = vmatprep.subr.mxu0 0.0
        %4695 = vmatpush1.xpose.msra.mxu0 0.0
        %4696 = vmatprep.subr.mxu0 0.0
        %4697 = vmatpush1.xpose.msra.mxu0 0.0
        %4698 = vmatprep.subr.mxu0 0.0
        %4699 = vmatpush1.xpose.msra.mxu0 0.0
        %4700 = vmatprep.subr.mxu0 0.0
        %4701 = vmatpush1.xpose.msra.mxu0 0.0
        %4702 = vmatprep.subr.mxu0 0.0
        %4703 = vmatpush1.xpose.msra.mxu0 0.0
        %4704 = vmatprep.subr.mxu0 0.0
        %4705 = vmatpush1.xpose.msra.mxu0 0.0
        %4706 = vmatprep.subr.mxu0 0.0
        %4707 = vmatpush1.xpose.msra.mxu0 0.0
        %4708 = vmatprep.subr.mxu0 0.0
        %4709 = vmatpush1.xpose.msra.mxu0 0.0
        %4710 = vmatprep.subr.mxu0 0.0
        %4711 = vmatpush1.xpose.msra.mxu0 0.0
        %4712 = vmatprep.subr.mxu0 0.0
        %4713 = vmatpush1.xpose.msra.mxu0 0.0
        %4714 = vmatprep.subr.mxu0 0.0
        %4715 = vmatpush1.xpose.msra.mxu0 0.0
        %4716 = vmatprep.subr.mxu0 0.0
        %4717 = vmatpush1.xpose.msra.mxu0 0.0
        %4718 = vmatprep.subr.mxu0 0.0
        %4719 = vmatpush1.xpose.msra.mxu0 0.0
        %4720 = vmatprep.subr.mxu0 0.0
        %4721 = vmatpush1.xpose.msra.mxu0 0.0
        %4722 = vmatprep.subr.mxu0 0.0
        %4723 = vmatpush1.xpose.msra.mxu0 0.0
        %4724 = vmatprep.subr.mxu0 0.0
        %4725 = vmatpush1.xpose.msra.mxu0 0.0
        %4726 = vmatprep.subr.mxu0 0.0
        %4727 = vmatpush1.xpose.msra.mxu0 0.0
        %4728 = vmatprep.subr.mxu0 0.0
        %4729 = vmatpush1.xpose.msra.mxu0 0.0
        %4730 = vmatprep.subr.mxu0 0.0
        %4731 = vmatpush1.xpose.msra.mxu0 0.0
        %4732 = vmatprep.subr.mxu0 0.0
        %4733 = vmatpush1.xpose.msra.mxu0 0.0
        %4734 = vmatprep.subr.mxu0 0.0
        %4735 = vmatpush1.xpose.msra.mxu0 0.0
        %4736 = vmatprep.subr.mxu0 0.0
        %4737 = vmatpush1.xpose.msra.mxu0 0.0
        %4738 = vmatprep.subr.mxu0 0.0
        %4739 = vmatpush1.xpose.msra.mxu0 0.0
        %4740 = vmatprep.subr.mxu0 0.0
        %4741 = vmatpush1.xpose.msra.mxu0 0.0
        %4742 = vmatprep.subr.mxu0 0.0
        %4743 = vmatpush1.xpose.msra.mxu0 0.0
        %4744 = vmatprep.subr.mxu0 0.0
        %4745 = vmatpush1.xpose.msra.mxu0 0.0
        %4746 = vmatprep.subr.mxu0 0.0
        %4747 = vmatpush1.xpose.msra.mxu0 0.0
        %4748 = vmatprep.subr.mxu0 0.0
        %4749 = vmatpush1.xpose.msra.mxu0 0.0
        %4750 = vmatprep.subr.mxu0 0.0
        %4751 = vmatpush1.xpose.msra.mxu0 0.0
        %4752 = vmatprep.subr.mxu0 0.0
        %4753 = vmatpush1.xpose.msra.mxu0 0.0
        %4754 = vmatprep.subr.mxu0 0.0
        %4755 = vmatpush1.xpose.msra.mxu0 0.0
        %4756 = vmatprep.mubr.f32.mxu0 0.0
        %4757 = vmatmul.mubr.f32.gmra.mrb[0].mxu0 %v4688
        %v4758 = vpop.f32.mrb[0].mxu0
        %v4759 = vadd.f32 0.0, %v4758
        %v4760 = vpop.f32.mrb[0].mxu0
        %4761 = vdwg.mxu0
        %v4762 = vsel %vm2163, %v4759, -inf
        %4763 = vmax.xlane.f32.xlu0 %v4762
        %v4764 = vpop.xlane.xlu0 %4763
        %v4765 = vsub.f32 %v4759, %v4764
        %v4766 = vmul.f32 %v4765, 1.442695
        %v4767 = vpow.pop %v4766
        %v4768 = vsel %vm2163, %v4767, 0.0
        %4769 = vadd.xlane.f32.xlu0 %v4768
        %v4770 = vpop.xlane.xlu0 %4769
        %v4771 = vrcp.pop %v4770
        %v4772 = vmul.f32 %v4767, %v4771
        %4773 = vrot.lane.b32.xlu0 %v4352, 48
        %v4774 = vpop.permute.xlu0 %4773
        %v4777 = vsel %vm2163, %v4772, 0
        %4779 = vmatprep.subr.mxu0 0.0
        %4780 = vmatpush1.msra.mxu0 %v4774
        %4781 = vmatprep.subr.mxu0 0.0
        %4782 = vmatpush1.msra.mxu0 0.0
        %4783 = vmatprep.subr.mxu0 0.0
        %4784 = vmatpush1.msra.mxu0 0.0
        %4785 = vmatprep.subr.mxu0 0.0
        %4786 = vmatpush1.msra.mxu0 0.0
        %4787 = vmatprep.subr.mxu0 0.0
        %4788 = vmatpush1.msra.mxu0 0.0
        %4789 = vmatprep.subr.mxu0 0.0
        %4790 = vmatpush1.msra.mxu0 0.0
        %4791 = vmatprep.subr.mxu0 0.0
        %4792 = vmatpush1.msra.mxu0 0.0
        %4793 = vmatprep.subr.mxu0 0.0
        %4794 = vmatpush1.msra.mxu0 0.0
        %4795 = vmatprep.subr.mxu0 0.0
        %4796 = vmatpush1.msra.mxu0 0.0
        %4797 = vmatprep.subr.mxu0 0.0
        %4798 = vmatpush1.msra.mxu0 0.0
        %4799 = vmatprep.subr.mxu0 0.0
        %4800 = vmatpush1.msra.mxu0 0.0
        %4801 = vmatprep.subr.mxu0 0.0
        %4802 = vmatpush1.msra.mxu0 0.0
        %4803 = vmatprep.subr.mxu0 0.0
        %4804 = vmatpush1.msra.mxu0 0.0
        %4805 = vmatprep.subr.mxu0 0.0
        %4806 = vmatpush1.msra.mxu0 0.0
        %4807 = vmatprep.subr.mxu0 0.0
        %4808 = vmatpush1.msra.mxu0 0.0
        %4809 = vmatprep.subr.mxu0 0.0
        %4810 = vmatpush1.msra.mxu0 0.0
        %4811 = vmatprep.subr.mxu0 0.0
        %4812 = vmatpush1.msra.mxu0 0.0
        %4813 = vmatprep.subr.mxu0 0.0
        %4814 = vmatpush1.msra.mxu0 0.0
        %4815 = vmatprep.subr.mxu0 0.0
        %4816 = vmatpush1.msra.mxu0 0.0
        %4817 = vmatprep.subr.mxu0 0.0
        %4818 = vmatpush1.msra.mxu0 0.0
        %4819 = vmatprep.subr.mxu0 0.0
        %4820 = vmatpush1.msra.mxu0 0.0
        %4821 = vmatprep.subr.mxu0 0.0
        %4822 = vmatpush1.msra.mxu0 0.0
        %4823 = vmatprep.subr.mxu0 0.0
        %4824 = vmatpush1.msra.mxu0 0.0
        %4825 = vmatprep.subr.mxu0 0.0
        %4826 = vmatpush1.msra.mxu0 0.0
        %4827 = vmatprep.subr.mxu0 0.0
        %4828 = vmatpush1.msra.mxu0 0.0
        %4829 = vmatprep.subr.mxu0 0.0
        %4830 = vmatpush1.msra.mxu0 0.0
        %4831 = vmatprep.subr.mxu0 0.0
        %4832 = vmatpush1.msra.mxu0 0.0
        %4833 = vmatprep.subr.mxu0 0.0
        %4834 = vmatpush1.msra.mxu0 0.0
        %4835 = vmatprep.subr.mxu0 0.0
        %4836 = vmatpush1.msra.mxu0 0.0
        %4837 = vmatprep.subr.mxu0 0.0
        %4838 = vmatpush1.msra.mxu0 0.0
        %4839 = vmatprep.subr.mxu0 0.0
        %4840 = vmatpush1.msra.mxu0 0.0
        %4841 = vmatprep.subr.mxu0 0.0
        %4842 = vmatpush1.msra.mxu0 0.0
        %4843 = vmatprep.mubr.f32.mxu0 0.0
        %4844 = vmatmul.mubr.f32.gmra.mrb[0].mxu0 %v4777
        %v4845 = vpop.f32.mrb[0].mxu0
        %v4846 = vadd.f32 0.0, %v4845
        %v4847 = vpop.f32.mrb[0].mxu0
        %4848 = vdwg.mxu0
        %4849 = vrot.lane.b32.xlu0 %v4352, 104
        %v4850 = vpop.permute.xlu0 %4849
        %4851 = vrot.lane.b32.xlu0 %v4352, 72
        %v4852 = vpop.permute.xlu0 %4851
        %v4853 = vsel %vm2163, %v4850, 0
        %v4855 = vsel %vm2163, %v4852, 0
        %4857 = vmatprep.subr.mxu0 0.0
        %4858 = vmatpush1.xpose.msra.mxu0 %v4855
        %4859 = vmatprep.subr.mxu0 0.0
        %4860 = vmatpush1.xpose.msra.mxu0 0.0
        %4861 = vmatprep.subr.mxu0 0.0
        %4862 = vmatpush1.xpose.msra.mxu0 0.0
        %4863 = vmatprep.subr.mxu0 0.0
        %4864 = vmatpush1.xpose.msra.mxu0 0.0
        %4865 = vmatprep.subr.mxu0 0.0
        %4866 = vmatpush1.xpose.msra.mxu0 0.0
        %4867 = vmatprep.subr.mxu0 0.0
        %4868 = vmatpush1.xpose.msra.mxu0 0.0
        %4869 = vmatprep.subr.mxu0 0.0
        %4870 = vmatpush1.xpose.msra.mxu0 0.0
        %4871 = vmatprep.subr.mxu0 0.0
        %4872 = vmatpush1.xpose.msra.mxu0 0.0
        %4873 = vmatprep.subr.mxu0 0.0
        %4874 = vmatpush1.xpose.msra.mxu0 0.0
        %4875 = vmatprep.subr.mxu0 0.0
        %4876 = vmatpush1.xpose.msra.mxu0 0.0
        %4877 = vmatprep.subr.mxu0 0.0
        %4878 = vmatpush1.xpose.msra.mxu0 0.0
        %4879 = vmatprep.subr.mxu0 0.0
        %4880 = vmatpush1.xpose.msra.mxu0 0.0
        %4881 = vmatprep.subr.mxu0 0.0
        %4882 = vmatpush1.xpose.msra.mxu0 0.0
        %4883 = vmatprep.subr.mxu0 0.0
        %4884 = vmatpush1.xpose.msra.mxu0 0.0
        %4885 = vmatprep.subr.mxu0 0.0
        %4886 = vmatpush1.xpose.msra.mxu0 0.0
        %4887 = vmatprep.subr.mxu0 0.0
        %4888 = vmatpush1.xpose.msra.mxu0 0.0
        %4889 = vmatprep.subr.mxu0 0.0
        %4890 = vmatpush1.xpose.msra.mxu0 0.0
        %4891 = vmatprep.subr.mxu0 0.0
        %4892 = vmatpush1.xpose.msra.mxu0 0.0
        %4893 = vmatprep.subr.mxu0 0.0
        %4894 = vmatpush1.xpose.msra.mxu0 0.0
        %4895 = vmatprep.subr.mxu0 0.0
        %4896 = vmatpush1.xpose.msra.mxu0 0.0
        %4897 = vmatprep.subr.mxu0 0.0
        %4898 = vmatpush1.xpose.msra.mxu0 0.0
        %4899 = vmatprep.subr.mxu0 0.0
        %4900 = vmatpush1.xpose.msra.mxu0 0.0
        %4901 = vmatprep.subr.mxu0 0.0
        %4902 = vmatpush1.xpose.msra.mxu0 0.0
        %4903 = vmatprep.subr.mxu0 0.0
        %4904 = vmatpush1.xpose.msra.mxu0 0.0
        %4905 = vmatprep.subr.mxu0 0.0
        %4906 = vmatpush1.xpose.msra.mxu0 0.0
        %4907 = vmatprep.subr.mxu0 0.0
        %4908 = vmatpush1.xpose.msra.mxu0 0.0
        %4909 = vmatprep.subr.mxu0 0.0
        %4910 = vmatpush1.xpose.msra.mxu0 0.0
        %4911 = vmatprep.subr.mxu0 0.0
        %4912 = vmatpush1.xpose.msra.mxu0 0.0
        %4913 = vmatprep.subr.mxu0 0.0
        %4914 = vmatpush1.xpose.msra.mxu0 0.0
        %4915 = vmatprep.subr.mxu0 0.0
        %4916 = vmatpush1.xpose.msra.mxu0 0.0
        %4917 = vmatprep.subr.mxu0 0.0
        %4918 = vmatpush1.xpose.msra.mxu0 0.0
        %4919 = vmatprep.subr.mxu0 0.0
        %4920 = vmatpush1.xpose.msra.mxu0 0.0
        %4921 = vmatprep.mubr.f32.mxu0 0.0
        %4922 = vmatmul.mubr.f32.gmra.mrb[0].mxu0 %v4853
        %v4923 = vpop.f32.mrb[0].mxu0
        %v4924 = vadd.f32 0.0, %v4923
        %v4925 = vpop.f32.mrb[0].mxu0
        %4926 = vdwg.mxu0
        %v4927 = vsel %vm2163, %v4924, -inf
        %4928 = vmax.xlane.f32.xlu0 %v4927
        %v4929 = vpop.xlane.xlu0 %4928
        %v4930 = vsub.f32 %v4924, %v4929
        %v4931 = vmul.f32 %v4930, 1.442695
        %v4932 = vpow.pop %v4931
        %v4933 = vsel %vm2163, %v4932, 0.0
        %4934 = vadd.xlane.f32.xlu0 %v4933
        %v4935 = vpop.xlane.xlu0 %4934
        %v4936 = vrcp.pop %v4935
        %v4937 = vmul.f32 %v4932, %v4936
        %4938 = vrot.lane.b32.xlu0 %v4352, 40
        %v4939 = vpop.permute.xlu0 %4938
        %v4942 = vsel %vm2163, %v4937, 0
        %4944 = vmatprep.subr.mxu0 0.0
        %4945 = vmatpush1.msra.mxu0 %v4939
        %4946 = vmatprep.subr.mxu0 0.0
        %4947 = vmatpush1.msra.mxu0 0.0
        %4948 = vmatprep.subr.mxu0 0.0
        %4949 = vmatpush1.msra.mxu0 0.0
        %4950 = vmatprep.subr.mxu0 0.0
        %4951 = vmatpush1.msra.mxu0 0.0
        %4952 = vmatprep.subr.mxu0 0.0
        %4953 = vmatpush1.msra.mxu0 0.0
        %4954 = vmatprep.subr.mxu0 0.0
        %4955 = vmatpush1.msra.mxu0 0.0
        %4956 = vmatprep.subr.mxu0 0.0
        %4957 = vmatpush1.msra.mxu0 0.0
        %4958 = vmatprep.subr.mxu0 0.0
        %4959 = vmatpush1.msra.mxu0 0.0
        %4960 = vmatprep.subr.mxu0 0.0
        %4961 = vmatpush1.msra.mxu0 0.0
        %4962 = vmatprep.subr.mxu0 0.0
        %4963 = vmatpush1.msra.mxu0 0.0
        %4964 = vmatprep.subr.mxu0 0.0
        %4965 = vmatpush1.msra.mxu0 0.0
        %4966 = vmatprep.subr.mxu0 0.0
        %4967 = vmatpush1.msra.mxu0 0.0
        %4968 = vmatprep.subr.mxu0 0.0
        %4969 = vmatpush1.msra.mxu0 0.0
        %4970 = vmatprep.subr.mxu0 0.0
        %4971 = vmatpush1.msra.mxu0 0.0
        %4972 = vmatprep.subr.mxu0 0.0
        %4973 = vmatpush1.msra.mxu0 0.0
        %4974 = vmatprep.subr.mxu0 0.0
        %4975 = vmatpush1.msra.mxu0 0.0
        %4976 = vmatprep.subr.mxu0 0.0
        %4977 = vmatpush1.msra.mxu0 0.0
        %4978 = vmatprep.subr.mxu0 0.0
        %4979 = vmatpush1.msra.mxu0 0.0
        %4980 = vmatprep.subr.mxu0 0.0
        %4981 = vmatpush1.msra.mxu0 0.0
        %4982 = vmatprep.subr.mxu0 0.0
        %4983 = vmatpush1.msra.mxu0 0.0
        %4984 = vmatprep.subr.mxu0 0.0
        %4985 = vmatpush1.msra.mxu0 0.0
        %4986 = vmatprep.subr.mxu0 0.0
        %4987 = vmatpush1.msra.mxu0 0.0
        %4988 = vmatprep.subr.mxu0 0.0
        %4989 = vmatpush1.msra.mxu0 0.0
        %4990 = vmatprep.subr.mxu0 0.0
        %4991 = vmatpush1.msra.mxu0 0.0
        %4992 = vmatprep.subr.mxu0 0.0
        %4993 = vmatpush1.msra.mxu0 0.0
        %4994 = vmatprep.subr.mxu0 0.0
        %4995 = vmatpush1.msra.mxu0 0.0
        %4996 = vmatprep.subr.mxu0 0.0
        %4997 = vmatpush1.msra.mxu0 0.0
        %4998 = vmatprep.subr.mxu0 0.0
        %4999 = vmatpush1.msra.mxu0 0.0
        %5000 = vmatprep.subr.mxu0 0.0
        %5001 = vmatpush1.msra.mxu0 0.0
        %5002 = vmatprep.subr.mxu0 0.0
        %5003 = vmatpush1.msra.mxu0 0.0
        %5004 = vmatprep.subr.mxu0 0.0
        %5005 = vmatpush1.msra.mxu0 0.0
        %5006 = vmatprep.subr.mxu0 0.0
        %5007 = vmatpush1.msra.mxu0 0.0
        %5008 = vmatprep.mubr.f32.mxu0 0.0
        %5009 = vmatmul.mubr.f32.gmra.mrb[0].mxu0 %v4942
        %v5010 = vpop.f32.mrb[0].mxu0
        %v5011 = vadd.f32 0.0, %v5010
        %v5012 = vpop.f32.mrb[0].mxu0
        %5013 = vdwg.mxu0
        %5015 = vrot.lane.b32.xlu0 %v4681, 8
        %v5016 = vpop.permute.xlu0 %5015
        %5019 = vrot.lane.b32.xlu0 %v4846, 16
        %v5020 = vpop.permute.xlu0 %5019
        %5023 = vrot.lane.b32.xlu0 %v5011, 24
        %v5024 = vpop.permute.xlu0 %5023
        %v5026 = vsel %vm2163, %v4516, %v5016
        %v5027 = vsel %vm1772, %v5026, %v5020
        %v5028 = vsel %vm2834, %v5027, %v5024
        %v5029 = vld [vmem:[%s47] sm:$0xff]
        %v5030 = vld [vmem:[%s47 + $0x8] sm:$0xff]
        %v5031 = vld [vmem:[%s47 + $0x10] sm:$0xff]
        %v5032 = vld [vmem:[%s47 + $0x18] sm:$0xff]
        %v5033 = vld [vmem:[#allocation17] sm:$0x1]
        %v5035 = vlaneseq
        %v5036 = vshrl.u32 %v5035, 7
        %v5037 = vsub.s32 0, %v5036
        %v5038 = vrot.slane %v5033, %v5037
        %v5041 = vsel %vm2086, %v5028, 0
        %5043 = vmatprep.subr.mxu0 0.0
        %5044 = vmatpush1.msra.mxu0 %v5029
        %5045 = vmatprep.subr.mxu0 0.0
        %5046 = vmatpush1.msra.mxu0 %v5030
        %5047 = vmatprep.subr.mxu0 0.0
        %5048 = vmatpush1.msra.mxu0 %v5031
        %5049 = vmatprep.subr.mxu0 0.0
        %5050 = vmatpush1.msra.mxu0 %v5032
        %5051 = vmatprep.subr.mxu0 0.0
        %5052 = vmatpush1.msra.mxu0 0.0
        %5053 = vmatprep.subr.mxu0 0.0
        %5054 = vmatpush1.msra.mxu0 0.0
        %5055 = vmatprep.subr.mxu0 0.0
        %5056 = vmatpush1.msra.mxu0 0.0
        %5057 = vmatprep.subr.mxu0 0.0
        %5058 = vmatpush1.msra.mxu0 0.0
        %5059 = vmatprep.subr.mxu0 0.0
        %5060 = vmatpush1.msra.mxu0 0.0
        %5061 = vmatprep.subr.mxu0 0.0
        %5062 = vmatpush1.msra.mxu0 0.0
        %5063 = vmatprep.subr.mxu0 0.0
        %5064 = vmatpush1.msra.mxu0 0.0
        %5065 = vmatprep.subr.mxu0 0.0
        %5066 = vmatpush1.msra.mxu0 0.0
        %5067 = vmatprep.subr.mxu0 0.0
        %5068 = vmatpush1.msra.mxu0 0.0
        %5069 = vmatprep.subr.mxu0 0.0
        %5070 = vmatpush1.msra.mxu0 0.0
        %5071 = vmatprep.subr.mxu0 0.0
        %5072 = vmatpush1.msra.mxu0 0.0
        %5073 = vmatprep.subr.mxu0 0.0
        %5074 = vmatpush1.msra.mxu0 0.0
        %5075 = vmatprep.subr.mxu0 0.0
        %5076 = vmatpush1.msra.mxu0 0.0
        %5077 = vmatprep.subr.mxu0 0.0
        %5078 = vmatpush1.msra.mxu0 0.0
        %5079 = vmatprep.subr.mxu0 0.0
        %5080 = vmatpush1.msra.mxu0 0.0
        %5081 = vmatprep.subr.mxu0 0.0
        %5082 = vmatpush1.msra.mxu0 0.0
        %5083 = vmatprep.subr.mxu0 0.0
        %5084 = vmatpush1.msra.mxu0 0.0
        %5085 = vmatprep.subr.mxu0 0.0
        %5086 = vmatpush1.msra.mxu0 0.0
        %5087 = vmatprep.subr.mxu0 0.0
        %5088 = vmatpush1.msra.mxu0 0.0
        %5089 = vmatprep.subr.mxu0 0.0
        %5090 = vmatpush1.msra.mxu0 0.0
        %5091 = vmatprep.subr.mxu0 0.0
        %5092 = vmatpush1.msra.mxu0 0.0
        %5093 = vmatprep.subr.mxu0 0.0
        %5094 = vmatpush1.msra.mxu0 0.0
        %5095 = vmatprep.subr.mxu0 0.0
        %5096 = vmatpush1.msra.mxu0 0.0
        %5097 = vmatprep.subr.mxu0 0.0
        %5098 = vmatpush1.msra.mxu0 0.0
        %5099 = vmatprep.subr.mxu0 0.0
        %5100 = vmatpush1.msra.mxu0 0.0
        %5101 = vmatprep.subr.mxu0 0.0
        %5102 = vmatpush1.msra.mxu0 0.0
        %5103 = vmatprep.subr.mxu0 0.0
        %5104 = vmatpush1.msra.mxu0 0.0
        %5105 = vmatprep.subr.mxu0 0.0
        %5106 = vmatpush1.msra.mxu0 0.0
        %5107 = vmatprep.mubr.f32.mxu0 0.0
        %5108 = vmatmul.mubr.f32.gmra.mrb[0].mxu0 %v5041
        %v5109 = vpop.f32.mrb[0].mxu0
        %v5110 = vadd.f32 %v5038, %v5109
        %v5111 = vpop.f32.mrb[0].mxu0
        %5112 = vdwg.mxu0
        %v5113 = vadd.f32 %v2072, %v5110
        %v5114 = vld [vmem:[#allocation19] sm:$0x1]
        %v5115 = vld [vmem:[#allocation20] sm:$0x1]
        %v5116 = vsel %vm2086, %v5113, 0.0
        %5117 = vadd.xlane.f32.xlu0 %v5116
        %v5118 = vpop.xlane.xlu0 %5117
        %v5119 = vmul.f32 %v5118, %v2926
        %v5120 = vsub.f32 %v5113, %v5119
        %v5121 = vmul.f32 %v5120, %v5120
        %v5122 = vsel %vm2086, %v5121, 0.0
        %5123 = vadd.xlane.f32.xlu0 %v5122
        %v5124 = vpop.xlane.xlu0 %5123
        %v5125 = vmul.f32 %v5124, %v2926
        %v5126 = vadd.f32 %v5125, 1e-05
        %v5127 = vrsqrt.pop %v5126
        %v5128 = vmul.f32 %v5120, %v5127
        %v5130 = vlaneseq
        %v5131 = vshrl.u32 %v5130, 7
        %v5132 = vsub.s32 0, %v5131
        %v5133 = vrot.slane %v5114, %v5132
        %v5135 = vmul.f32 %v5128, %v5133
        %v5137 = vlaneseq
        %v5138 = vshrl.u32 %v5137, 7
        %v5139 = vsub.s32 0, %v5138
        %v5140 = vrot.slane %v5115, %v5139
        %v5142 = vadd.f32 %v5135, %v5140
        %v5143 = vld [vmem:[%s55] sm:$0xff]
        %v5144 = vld [vmem:[%s55 + $0x8] sm:$0xff]
        %v5145 = vld [vmem:[%s55 + $0x10] sm:$0xff]
        %v5146 = vld [vmem:[%s55 + $0x18] sm:$0xff]
        %v5147 = vld [vmem:[#allocation22] sm:$0x1]
        %v5149 = vlaneseq
        %v5150 = vshrl.u32 %v5149, 7
        %v5151 = vsub.s32 0, %v5150
        %v5152 = vrot.slane %v5147, %v5151
        %v5155 = vsel %vm2086, %v5142, 0
        %5157 = vmatprep.subr.mxu0 0.0
        %5158 = vmatpush1.msra.mxu0 %v5143
        %5159 = vmatprep.subr.mxu0 0.0
        %5160 = vmatpush1.msra.mxu0 %v5144
        %5161 = vmatprep.subr.mxu0 0.0
        %5162 = vmatpush1.msra.mxu0 %v5145
        %5163 = vmatprep.subr.mxu0 0.0
        %5164 = vmatpush1.msra.mxu0 %v5146
        %5165 = vmatprep.subr.mxu0 0.0
        %5166 = vmatpush1.msra.mxu0 0.0
        %5167 = vmatprep.subr.mxu0 0.0
        %5168 = vmatpush1.msra.mxu0 0.0
        %5169 = vmatprep.subr.mxu0 0.0
        %5170 = vmatpush1.msra.mxu0 0.0
        %5171 = vmatprep.subr.mxu0 0.0
        %5172 = vmatpush1.msra.mxu0 0.0
        %5173 = vmatprep.subr.mxu0 0.0
        %5174 = vmatpush1.msra.mxu0 0.0
        %5175 = vmatprep.subr.mxu0 0.0
        %5176 = vmatpush1.msra.mxu0 0.0
        %5177 = vmatprep.subr.mxu0 0.0
        %5178 = vmatpush1.msra.mxu0 0.0
        %5179 = vmatprep.subr.mxu0 0.0
        %5180 = vmatpush1.msra.mxu0 0.0
        %5181 = vmatprep.subr.mxu0 0.0
        %5182 = vmatpush1.msra.mxu0 0.0
        %5183 = vmatprep.subr.mxu0 0.0
        %5184 = vmatpush1.msra.mxu0 0.0
        %5185 = vmatprep.subr.mxu0 0.0
        %5186 = vmatpush1.msra.mxu0 0.0
        %5187 = vmatprep.subr.mxu0 0.0
        %5188 = vmatpush1.msra.mxu0 0.0
        %5189 = vmatprep.subr.mxu0 0.0
        %5190 = vmatpush1.msra.mxu0 0.0
        %5191 = vmatprep.subr.mxu0 0.0
        %5192 = vmatpush1.msra.mxu0 0.0
        %5193 = vmatprep.subr.mxu0 0.0
        %5194 = vmatpush1.msra.mxu0 0.0
        %5195 = vmatprep.subr.mxu0 0.0
        %5196 = vmatpush1.msra.mxu0 0.0
        %5197 = vmatprep.subr.mxu0 0.0
        %5198 = vmatpush1.msra.mxu0 0.0
        %5199 = vmatprep.subr.mxu0 0.0
        %5200 = vmatpush1.msra.mxu0 0.0
        %5201 = vmatprep.subr.mxu0 0.0
        %5202 = vmatpush1.msra.mxu0 0.0
        %5203 = vmatprep.subr.mxu0 0.0
        %5204 = vmatpush1.msra.mxu0 0.0
        %5205 = vmatprep.subr.mxu0 0.0
        %5206 = vmatpush1.msra.mxu0 0.0
        %5207 = vmatprep.subr.mxu0 0.0
        %5208 = vmatpush1.msra.mxu0 0.0
        %5209 = vmatprep.subr.mxu0 0.0
        %5210 = vmatpush1.msra.mxu0 0.0
        %5211 = vmatprep.subr.mxu0 0.0
        %5212 = vmatpush1.msra.mxu0 0.0
        %5213 = vmatprep.subr.mxu0 0.0
        %5214 = vmatpush1.msra.mxu0 0.0
        %5215 = vmatprep.subr.mxu0 0.0
        %5216 = vmatpush1.msra.mxu0 0.0
        %5217 = vmatprep.subr.mxu0 0.0
        %5218 = vmatpush1.msra.mxu0 0.0
        %5219 = vmatprep.subr.mxu0 0.0
        %5220 = vmatpush1.msra.mxu0 0.0
        %5221 = vmatprep.mubr.f32.mxu0 0.0
        %5222 = vmatmul.mubr.f32.gmra.mrb[0].mxu0 %v5155
        %v5223 = vpop.f32.mrb[0].mxu0
        %v5224 = vadd.f32 %v5152, %v5223
        %v5225 = vpop.f32.mrb[0].mxu0
        %5226 = vdwg.mxu0
        %v5227 = vld [vmem:[%s59] sm:$0xff]
        %v5228 = vld [vmem:[%s59 + $0x8] sm:$0xff]
        %v5229 = vld [vmem:[%s59 + $0x10] sm:$0xff]
        %v5230 = vld [vmem:[%s59 + $0x18] sm:$0xff]
        %v5231 = vld [vmem:[#allocation23] sm:$0x1]
        %v5233 = vlaneseq
        %v5234 = vshrl.u32 %v5233, 7
        %v5235 = vsub.s32 0, %v5234
        %v5236 = vrot.slane %v5231, %v5235
        %v5239 = vsel %vm2086, %v4270, 0
        %5241 = vmatprep.subr.mxu0 0.0
        %5242 = vmatpush1.msra.mxu0 %v5227
        %5243 = vmatprep.subr.mxu0 0.0
        %5244 = vmatpush1.msra.mxu0 %v5228
        %5245 = vmatprep.subr.mxu0 0.0
        %5246 = vmatpush1.msra.mxu0 %v5229
        %5247 = vmatprep.subr.mxu0 0.0
        %5248 = vmatpush1.msra.mxu0 %v5230
        %5249 = vmatprep.subr.mxu0 0.0
        %5250 = vmatpush1.msra.mxu0 0.0
        %5251 = vmatprep.subr.mxu0 0.0
        %5252 = vmatpush1.msra.mxu0 0.0
        %5253 = vmatprep.subr.mxu0 0.0
        %5254 = vmatpush1.msra.mxu0 0.0
        %5255 = vmatprep.subr.mxu0 0.0
        %5256 = vmatpush1.msra.mxu0 0.0
        %5257 = vmatprep.subr.mxu0 0.0
        %5258 = vmatpush1.msra.mxu0 0.0
        %5259 = vmatprep.subr.mxu0 0.0
        %5260 = vmatpush1.msra.mxu0 0.0
        %5261 = vmatprep.subr.mxu0 0.0
        %5262 = vmatpush1.msra.mxu0 0.0
        %5263 = vmatprep.subr.mxu0 0.0
        %5264 = vmatpush1.msra.mxu0 0.0
        %5265 = vmatprep.subr.mxu0 0.0
        %5266 = vmatpush1.msra.mxu0 0.0
        %5267 = vmatprep.subr.mxu0 0.0
        %5268 = vmatpush1.msra.mxu0 0.0
        %5269 = vmatprep.subr.mxu0 0.0
        %5270 = vmatpush1.msra.mxu0 0.0
        %5271 = vmatprep.subr.mxu0 0.0
        %5272 = vmatpush1.msra.mxu0 0.0
        %5273 = vmatprep.subr.mxu0 0.0
        %5274 = vmatpush1.msra.mxu0 0.0
        %5275 = vmatprep.subr.mxu0 0.0
        %5276 = vmatpush1.msra.mxu0 0.0
        %5277 = vmatprep.subr.mxu0 0.0
        %5278 = vmatpush1.msra.mxu0 0.0
        %5279 = vmatprep.subr.mxu0 0.0
        %5280 = vmatpush1.msra.mxu0 0.0
        %5281 = vmatprep.subr.mxu0 0.0
        %5282 = vmatpush1.msra.mxu0 0.0
        %5283 = vmatprep.subr.mxu0 0.0
        %5284 = vmatpush1.msra.mxu0 0.0
        %5285 = vmatprep.subr.mxu0 0.0
        %5286 = vmatpush1.msra.mxu0 0.0
        %5287 = vmatprep.subr.mxu0 0.0
        %5288 = vmatpush1.msra.mxu0 0.0
        %5289 = vmatprep.subr.mxu0 0.0
        %5290 = vmatpush1.msra.mxu0 0.0
        %5291 = vmatprep.subr.mxu0 0.0
        %5292 = vmatpush1.msra.mxu0 0.0
        %5293 = vmatprep.subr.mxu0 0.0
        %5294 = vmatpush1.msra.mxu0 0.0
        %5295 = vmatprep.subr.mxu0 0.0
        %5296 = vmatpush1.msra.mxu0 0.0
        %5297 = vmatprep.subr.mxu0 0.0
        %5298 = vmatpush1.msra.mxu0 0.0
        %5299 = vmatprep.subr.mxu0 0.0
        %5300 = vmatpush1.msra.mxu0 0.0
        %5301 = vmatprep.subr.mxu0 0.0
        %5302 = vmatpush1.msra.mxu0 0.0
        %5303 = vmatprep.subr.mxu0 0.0
        %5304 = vmatpush1.msra.mxu0 0.0
        %5305 = vmatprep.mubr.f32.mxu0 0.0
        %5306 = vmatmul.mubr.f32.gmra.mrb[0].mxu0 %v5239
        %v5307 = vpop.f32.mrb[0].mxu0
        %v5308 = vadd.f32 %v5236, %v5307
        %v5309 = vpop.f32.mrb[0].mxu0
        %5310 = vdwg.mxu0
        %v5312 = vsel %vm2163, %v5224, 0
        %v5315 = vsel %vm2163, %v5308, 0
        %5317 = vmatprep.subr.mxu0 0.0
        %5318 = vmatpush1.xpose.msra.mxu0 %v5315
        %5319 = vmatprep.subr.mxu0 0.0
        %5320 = vmatpush1.xpose.msra.mxu0 0.0
        %5321 = vmatprep.subr.mxu0 0.0
        %5322 = vmatpush1.xpose.msra.mxu0 0.0
        %5323 = vmatprep.subr.mxu0 0.0
        %5324 = vmatpush1.xpose.msra.mxu0 0.0
        %5325 = vmatprep.subr.mxu0 0.0
        %5326 = vmatpush1.xpose.msra.mxu0 0.0
        %5327 = vmatprep.subr.mxu0 0.0
        %5328 = vmatpush1.xpose.msra.mxu0 0.0
        %5329 = vmatprep.subr.mxu0 0.0
        %5330 = vmatpush1.xpose.msra.mxu0 0.0
        %5331 = vmatprep.subr.mxu0 0.0
        %5332 = vmatpush1.xpose.msra.mxu0 0.0
        %5333 = vmatprep.subr.mxu0 0.0
        %5334 = vmatpush1.xpose.msra.mxu0 0.0
        %5335 = vmatprep.subr.mxu0 0.0
        %5336 = vmatpush1.xpose.msra.mxu0 0.0
        %5337 = vmatprep.subr.mxu0 0.0
        %5338 = vmatpush1.xpose.msra.mxu0 0.0
        %5339 = vmatprep.subr.mxu0 0.0
        %5340 = vmatpush1.xpose.msra.mxu0 0.0
        %5341 = vmatprep.subr.mxu0 0.0
        %5342 = vmatpush1.xpose.msra.mxu0 0.0
        %5343 = vmatprep.subr.mxu0 0.0
        %5344 = vmatpush1.xpose.msra.mxu0 0.0
        %5345 = vmatprep.subr.mxu0 0.0
        %5346 = vmatpush1.xpose.msra.mxu0 0.0
        %5347 = vmatprep.subr.mxu0 0.0
        %5348 = vmatpush1.xpose.msra.mxu0 0.0
        %5349 = vmatprep.subr.mxu0 0.0
        %5350 = vmatpush1.xpose.msra.mxu0 0.0
        %5351 = vmatprep.subr.mxu0 0.0
        %5352 = vmatpush1.xpose.msra.mxu0 0.0
        %5353 = vmatprep.subr.mxu0 0.0
        %5354 = vmatpush1.xpose.msra.mxu0 0.0
        %5355 = vmatprep.subr.mxu0 0.0
        %5356 = vmatpush1.xpose.msra.mxu0 0.0
        %5357 = vmatprep.subr.mxu0 0.0
        %5358 = vmatpush1.xpose.msra.mxu0 0.0
        %5359 = vmatprep.subr.mxu0 0.0
        %5360 = vmatpush1.xpose.msra.mxu0 0.0
        %5361 = vmatprep.subr.mxu0 0.0
        %5362 = vmatpush1.xpose.msra.mxu0 0.0
        %5363 = vmatprep.subr.mxu0 0.0
        %5364 = vmatpush1.xpose.msra.mxu0 0.0
        %5365 = vmatprep.subr.mxu0 0.0
        %5366 = vmatpush1.xpose.msra.mxu0 0.0
        %5367 = vmatprep.subr.mxu0 0.0
        %5368 = vmatpush1.xpose.msra.mxu0 0.0
        %5369 = vmatprep.subr.mxu0 0.0
        %5370 = vmatpush1.xpose.msra.mxu0 0.0
        %5371 = vmatprep.subr.mxu0 0.0
        %5372 = vmatpush1.xpose.msra.mxu0 0.0
        %5373 = vmatprep.subr.mxu0 0.0
        %5374 = vmatpush1.xpose.msra.mxu0 0.0
        %5375 = vmatprep.subr.mxu0 0.0
        %5376 = vmatpush1.xpose.msra.mxu0 0.0
        %5377 = vmatprep.subr.mxu0 0.0
        %5378 = vmatpush1.xpose.msra.mxu0 0.0
        %5379 = vmatprep.subr.mxu0 0.0
        %5380 = vmatpush1.xpose.msra.mxu0 0.0
        %5381 = vmatprep.mubr.f32.mxu0 0.0
        %5382 = vmatmul.mubr.f32.gmra.mrb[0].mxu0 %v5312
        %v5383 = vpop.f32.mrb[0].mxu0
        %v5384 = vadd.f32 0.0, %v5383
        %v5385 = vpop.f32.mrb[0].mxu0
        %5386 = vdwg.mxu0
        %v5387 = vsel %vm2163, %v5384, -inf
        %5388 = vmax.xlane.f32.xlu0 %v5387
        %v5389 = vpop.xlane.xlu0 %5388
        %v5390 = vsub.f32 %v5384, %v5389
        %v5391 = vmul.f32 %v5390, 1.442695
        %v5392 = vpow.pop %v5391
        %v5393 = vsel %vm2163, %v5392, 0.0
        %5394 = vadd.xlane.f32.xlu0 %v5393
        %v5395 = vpop.xlane.xlu0 %5394
        %v5396 = vrcp.pop %v5395
        %v5397 = vmul.f32 %v5392, %v5396
        %5398 = vrot.lane.b32.xlu0 %v5308, 96
        %v5399 = vpop.permute.xlu0 %5398
        %v5402 = vsel %vm2163, %v5397, 0
        %5404 = vmatprep.subr.mxu0 0.0
        %5405 = vmatpush1.msra.mxu0 %v5399
        %5406 = vmatprep.subr.mxu0 0.0
        %5407 = vmatpush1.msra.mxu0 0.0
        %5408 = vmatprep.subr.mxu0 0.0
        %5409 = vmatpush1.msra.mxu0 0.0
        %5410 = vmatprep.subr.mxu0 0.0
        %5411 = vmatpush1.msra.mxu0 0.0
        %5412 = vmatprep.subr.mxu0 0.0
        %5413 = vmatpush1.msra.mxu0 0.0
        %5414 = vmatprep.subr.mxu0 0.0
        %5415 = vmatpush1.msra.mxu0 0.0
        %5416 = vmatprep.subr.mxu0 0.0
        %5417 = vmatpush1.msra.mxu0 0.0
        %5418 = vmatprep.subr.mxu0 0.0
        %5419 = vmatpush1.msra.mxu0 0.0
        %5420 = vmatprep.subr.mxu0 0.0
        %5421 = vmatpush1.msra.mxu0 0.0
        %5422 = vmatprep.subr.mxu0 0.0
        %5423 = vmatpush1.msra.mxu0 0.0
        %5424 = vmatprep.subr.mxu0 0.0
        %5425 = vmatpush1.msra.mxu0 0.0
        %5426 = vmatprep.subr.mxu0 0.0
        %5427 = vmatpush1.msra.mxu0 0.0
        %5428 = vmatprep.subr.mxu0 0.0
        %5429 = vmatpush1.msra.mxu0 0.0
        %5430 = vmatprep.subr.mxu0 0.0
        %5431 = vmatpush1.msra.mxu0 0.0
        %5432 = vmatprep.subr.mxu0 0.0
        %5433 = vmatpush1.msra.mxu0 0.0
        %5434 = vmatprep.subr.mxu0 0.0
        %5435 = vmatpush1.msra.mxu0 0.0
        %5436 = vmatprep.subr.mxu0 0.0
        %5437 = vmatpush1.msra.mxu0 0.0
        %5438 = vmatprep.subr.mxu0 0.0
        %5439 = vmatpush1.msra.mxu0 0.0
        %5440 = vmatprep.subr.mxu0 0.0
        %5441 = vmatpush1.msra.mxu0 0.0
        %5442 = vmatprep.subr.mxu0 0.0
        %5443 = vmatpush1.msra.mxu0 0.0
        %5444 = vmatprep.subr.mxu0 0.0
        %5445 = vmatpush1.msra.mxu0 0.0
        %5446 = vmatprep.subr.mxu0 0.0
        %5447 = vmatpush1.msra.mxu0 0.0
        %5448 = vmatprep.subr.mxu0 0.0
        %5449 = vmatpush1.msra.mxu0 0.0
        %5450 = vmatprep.subr.mxu0 0.0
        %5451 = vmatpush1.msra.mxu0 0.0
        %5452 = vmatprep.subr.mxu0 0.0
        %5453 = vmatpush1.msra.mxu0 0.0
        %5454 = vmatprep.subr.mxu0 0.0
        %5455 = vmatpush1.msra.mxu0 0.0
        %5456 = vmatprep.subr.mxu0 0.0
        %5457 = vmatpush1.msra.mxu0 0.0
        %5458 = vmatprep.subr.mxu0 0.0
        %5459 = vmatpush1.msra.mxu0 0.0
        %5460 = vmatprep.subr.mxu0 0.0
        %5461 = vmatpush1.msra.mxu0 0.0
        %5462 = vmatprep.subr.mxu0 0.0
        %5463 = vmatpush1.msra.mxu0 0.0
        %5464 = vmatprep.subr.mxu0 0.0
        %5465 = vmatpush1.msra.mxu0 0.0
        %5466 = vmatprep.subr.mxu0 0.0
        %5467 = vmatpush1.msra.mxu0 0.0
        %5468 = vmatprep.mubr.f32.mxu0 0.0
        %5469 = vmatmul.mubr.f32.gmra.mrb[0].mxu0 %v5402
        %v5470 = vpop.f32.mrb[0].mxu0
        %v5471 = vadd.f32 0.0, %v5470
        %v5472 = vpop.f32.mrb[0].mxu0
        %5473 = vdwg.mxu0
        %5474 = vrot.lane.b32.xlu0 %v5224, 120
        %v5475 = vpop.permute.xlu0 %5474
        %5476 = vrot.lane.b32.xlu0 %v5308, 120
        %v5477 = vpop.permute.xlu0 %5476
        %v5478 = vsel %vm2163, %v5475, 0
        %v5480 = vsel %vm2163, %v5477, 0
        %5482 = vmatprep.subr.mxu0 0.0
        %5483 = vmatpush1.xpose.msra.mxu0 %v5480
        %5484 = vmatprep.subr.mxu0 0.0
        %5485 = vmatpush1.xpose.msra.mxu0 0.0
        %5486 = vmatprep.subr.mxu0 0.0
        %5487 = vmatpush1.xpose.msra.mxu0 0.0
        %5488 = vmatprep.subr.mxu0 0.0
        %5489 = vmatpush1.xpose.msra.mxu0 0.0
        %5490 = vmatprep.subr.mxu0 0.0
        %5491 = vmatpush1.xpose.msra.mxu0 0.0
        %5492 = vmatprep.subr.mxu0 0.0
        %5493 = vmatpush1.xpose.msra.mxu0 0.0
        %5494 = vmatprep.subr.mxu0 0.0
        %5495 = vmatpush1.xpose.msra.mxu0 0.0
        %5496 = vmatprep.subr.mxu0 0.0
        %5497 = vmatpush1.xpose.msra.mxu0 0.0
        %5498 = vmatprep.subr.mxu0 0.0
        %5499 = vmatpush1.xpose.msra.mxu0 0.0
        %5500 = vmatprep.subr.mxu0 0.0
        %5501 = vmatpush1.xpose.msra.mxu0 0.0
        %5502 = vmatprep.subr.mxu0 0.0
        %5503 = vmatpush1.xpose.msra.mxu0 0.0
        %5504 = vmatprep.subr.mxu0 0.0
        %5505 = vmatpush1.xpose.msra.mxu0 0.0
        %5506 = vmatprep.subr.mxu0 0.0
        %5507 = vmatpush1.xpose.msra.mxu0 0.0
        %5508 = vmatprep.subr.mxu0 0.0
        %5509 = vmatpush1.xpose.msra.mxu0 0.0
        %5510 = vmatprep.subr.mxu0 0.0
        %5511 = vmatpush1.xpose.msra.mxu0 0.0
        %5512 = vmatprep.subr.mxu0 0.0
        %5513 = vmatpush1.xpose.msra.mxu0 0.0
        %5514 = vmatprep.subr.mxu0 0.0
        %5515 = vmatpush1.xpose.msra.mxu0 0.0
        %5516 = vmatprep.subr.mxu0 0.0
        %5517 = vmatpush1.xpose.msra.mxu0 0.0
        %5518 = vmatprep.subr.mxu0 0.0
        %5519 = vmatpush1.xpose.msra.mxu0 0.0
        %5520 = vmatprep.subr.mxu0 0.0
        %5521 = vmatpush1.xpose.msra.mxu0 0.0
        %5522 = vmatprep.subr.mxu0 0.0
        %5523 = vmatpush1.xpose.msra.mxu0 0.0
        %5524 = vmatprep.subr.mxu0 0.0
        %5525 = vmatpush1.xpose.msra.mxu0 0.0
        %5526 = vmatprep.subr.mxu0 0.0
        %5527 = vmatpush1.xpose.msra.mxu0 0.0
        %5528 = vmatprep.subr.mxu0 0.0
        %5529 = vmatpush1.xpose.msra.mxu0 0.0
        %5530 = vmatprep.subr.mxu0 0.0
        %5531 = vmatpush1.xpose.msra.mxu0 0.0
        %5532 = vmatprep.subr.mxu0 0.0
        %5533 = vmatpush1.xpose.msra.mxu0 0.0
        %5534 = vmatprep.subr.mxu0 0.0
        %5535 = vmatpush1.xpose.msra.mxu0 0.0
        %5536 = vmatprep.subr.mxu0 0.0
        %5537 = vmatpush1.xpose.msra.mxu0 0.0
        %5538 = vmatprep.subr.mxu0 0.0
        %5539 = vmatpush1.xpose.msra.mxu0 0.0
        %5540 = vmatprep.subr.mxu0 0.0
        %5541 = vmatpush1.xpose.msra.mxu0 0.0
        %5542 = vmatprep.subr.mxu0 0.0
        %5543 = vmatpush1.xpose.msra.mxu0 0.0
        %5544 = vmatprep.subr.mxu0 0.0
        %5545 = vmatpush1.xpose.msra.mxu0 0.0
        %5546 = vmatprep.mubr.f32.mxu0 0.0
        %5547 = vmatmul.mubr.f32.gmra.mrb[0].mxu0 %v5478
        %v5548 = vpop.f32.mrb[0].mxu0
        %v5549 = vadd.f32 0.0, %v5548
        %v5550 = vpop.f32.mrb[0].mxu0
        %5551 = vdwg.mxu0
        %v5552 = vsel %vm2163, %v5549, -inf
        %5553 = vmax.xlane.f32.xlu0 %v5552
        %v5554 = vpop.xlane.xlu0 %5553
        %v5555 = vsub.f32 %v5549, %v5554
        %v5556 = vmul.f32 %v5555, 1.442695
        %v5557 = vpow.pop %v5556
        %v5558 = vsel %vm2163, %v5557, 0.0
        %5559 = vadd.xlane.f32.xlu0 %v5558
        %v5560 = vpop.xlane.xlu0 %5559
        %v5561 = vrcp.pop %v5560
        %v5562 = vmul.f32 %v5557, %v5561
        %5563 = vrot.lane.b32.xlu0 %v5308, 88
        %v5564 = vpop.permute.xlu0 %5563
        %v5567 = vsel %vm2163, %v5562, 0
        %5569 = vmatprep.subr.mxu0 0.0
        %5570 = vmatpush1.msra.mxu0 %v5564
        %5571 = vmatprep.subr.mxu0 0.0
        %5572 = vmatpush1.msra.mxu0 0.0
        %5573 = vmatprep.subr.mxu0 0.0
        %5574 = vmatpush1.msra.mxu0 0.0
        %5575 = vmatprep.subr.mxu0 0.0
        %5576 = vmatpush1.msra.mxu0 0.0
        %5577 = vmatprep.subr.mxu0 0.0
        %5578 = vmatpush1.msra.mxu0 0.0
        %5579 = vmatprep.subr.mxu0 0.0
        %5580 = vmatpush1.msra.mxu0 0.0
        %5581 = vmatprep.subr.mxu0 0.0
        %5582 = vmatpush1.msra.mxu0 0.0
        %5583 = vmatprep.subr.mxu0 0.0
        %5584 = vmatpush1.msra.mxu0 0.0
        %5585 = vmatprep.subr.mxu0 0.0
        %5586 = vmatpush1.msra.mxu0 0.0
        %5587 = vmatprep.subr.mxu0 0.0
        %5588 = vmatpush1.msra.mxu0 0.0
        %5589 = vmatprep.subr.mxu0 0.0
        %5590 = vmatpush1.msra.mxu0 0.0
        %5591 = vmatprep.subr.mxu0 0.0
        %5592 = vmatpush1.msra.mxu0 0.0
        %5593 = vmatprep.subr.mxu0 0.0
        %5594 = vmatpush1.msra.mxu0 0.0
        %5595 = vmatprep.subr.mxu0 0.0
        %5596 = vmatpush1.msra.mxu0 0.0
        %5597 = vmatprep.subr.mxu0 0.0
        %5598 = vmatpush1.msra.mxu0 0.0
        %5599 = vmatprep.subr.mxu0 0.0
        %5600 = vmatpush1.msra.mxu0 0.0
        %5601 = vmatprep.subr.mxu0 0.0
        %5602 = vmatpush1.msra.mxu0 0.0
        %5603 = vmatprep.subr.mxu0 0.0
        %5604 = vmatpush1.msra.mxu0 0.0
        %5605 = vmatprep.subr.mxu0 0.0
        %5606 = vmatpush1.msra.mxu0 0.0
        %5607 = vmatprep.subr.mxu0 0.0
        %5608 = vmatpush1.msra.mxu0 0.0
        %5609 = vmatprep.subr.mxu0 0.0
        %5610 = vmatpush1.msra.mxu0 0.0
        %5611 = vmatprep.subr.mxu0 0.0
        %5612 = vmatpush1.msra.mxu0 0.0
        %5613 = vmatprep.subr.mxu0 0.0
        %5614 = vmatpush1.msra.mxu0 0.0
        %5615 = vmatprep.subr.mxu0 0.0
        %5616 = vmatpush1.msra.mxu0 0.0
        %5617 = vmatprep.subr.mxu0 0.0
        %5618 = vmatpush1.msra.mxu0 0.0
        %5619 = vmatprep.subr.mxu0 0.0
        %5620 = vmatpush1.msra.mxu0 0.0
        %5621 = vmatprep.subr.mxu0 0.0
        %5622 = vmatpush1.msra.mxu0 0.0
        %5623 = vmatprep.subr.mxu0 0.0
        %5624 = vmatpush1.msra.mxu0 0.0
        %5625 = vmatprep.subr.mxu0 0.0
        %5626 = vmatpush1.msra.mxu0 0.0
        %5627 = vmatprep.subr.mxu0 0.0
        %5628 = vmatpush1.msra.mxu0 0.0
        %5629 = vmatprep.subr.mxu0 0.0
        %5630 = vmatpush1.msra.mxu0 0.0
        %5631 = vmatprep.subr.mxu0 0.0
        %5632 = vmatpush1.msra.mxu0 0.0
        %5633 = vmatprep.mubr.f32.mxu0 0.0
        %5634 = vmatmul.mubr.f32.gmra.mrb[0].mxu0 %v5567
        %v5635 = vpop.f32.mrb[0].mxu0
        %v5636 = vadd.f32 0.0, %v5635
        %v5637 = vpop.f32.mrb[0].mxu0
        %5638 = vdwg.mxu0
        %5639 = vrot.lane.b32.xlu0 %v5224, 112
        %v5640 = vpop.permute.xlu0 %5639
        %5641 = vrot.lane.b32.xlu0 %v5308, 112
        %v5642 = vpop.permute.xlu0 %5641
        %v5643 = vsel %vm2163, %v5640, 0
        %v5645 = vsel %vm2163, %v5642, 0
        %5647 = vmatprep.subr.mxu0 0.0
        %5648 = vmatpush1.xpose.msra.mxu0 %v5645
        %5649 = vmatprep.subr.mxu0 0.0
        %5650 = vmatpush1.xpose.msra.mxu0 0.0
        %5651 = vmatprep.subr.mxu0 0.0
        %5652 = vmatpush1.xpose.msra.mxu0 0.0
        %5653 = vmatprep.subr.mxu0 0.0
        %5654 = vmatpush1.xpose.msra.mxu0 0.0
        %5655 = vmatprep.subr.mxu0 0.0
        %5656 = vmatpush1.xpose.msra.mxu0 0.0
        %5657 = vmatprep.subr.mxu0 0.0
        %5658 = vmatpush1.xpose.msra.mxu0 0.0
        %5659 = vmatprep.subr.mxu0 0.0
        %5660 = vmatpush1.xpose.msra.mxu0 0.0
        %5661 = vmatprep.subr.mxu0 0.0
        %5662 = vmatpush1.xpose.msra.mxu0 0.0
        %5663 = vmatprep.subr.mxu0 0.0
        %5664 = vmatpush1.xpose.msra.mxu0 0.0
        %5665 = vmatprep.subr.mxu0 0.0
        %5666 = vmatpush1.xpose.msra.mxu0 0.0
        %5667 = vmatprep.subr.mxu0 0.0
        %5668 = vmatpush1.xpose.msra.mxu0 0.0
        %5669 = vmatprep.subr.mxu0 0.0
        %5670 = vmatpush1.xpose.msra.mxu0 0.0
        %5671 = vmatprep.subr.mxu0 0.0
        %5672 = vmatpush1.xpose.msra.mxu0 0.0
        %5673 = vmatprep.subr.mxu0 0.0
        %5674 = vmatpush1.xpose.msra.mxu0 0.0
        %5675 = vmatprep.subr.mxu0 0.0
        %5676 = vmatpush1.xpose.msra.mxu0 0.0
        %5677 = vmatprep.subr.mxu0 0.0
        %5678 = vmatpush1.xpose.msra.mxu0 0.0
        %5679 = vmatprep.subr.mxu0 0.0
        %5680 = vmatpush1.xpose.msra.mxu0 0.0
        %5681 = vmatprep.subr.mxu0 0.0
        %5682 = vmatpush1.xpose.msra.mxu0 0.0
        %5683 = vmatprep.subr.mxu0 0.0
        %5684 = vmatpush1.xpose.msra.mxu0 0.0
        %5685 = vmatprep.subr.mxu0 0.0
        %5686 = vmatpush1.xpose.msra.mxu0 0.0
        %5687 = vmatprep.subr.mxu0 0.0
        %5688 = vmatpush1.xpose.msra.mxu0 0.0
        %5689 = vmatprep.subr.mxu0 0.0
        %5690 = vmatpush1.xpose.msra.mxu0 0.0
        %5691 = vmatprep.subr.mxu0 0.0
        %5692 = vmatpush1.xpose.msra.mxu0 0.0
        %5693 = vmatprep.subr.mxu0 0.0
        %5694 = vmatpush1.xpose.msra.mxu0 0.0
        %5695 = vmatprep.subr.mxu0 0.0
        %5696 = vmatpush1.xpose.msra.mxu0 0.0
        %5697 = vmatprep.subr.mxu0 0.0
        %5698 = vmatpush1.xpose.msra.mxu0 0.0
        %5699 = vmatprep.subr.mxu0 0.0
        %5700 = vmatpush1.xpose.msra.mxu0 0.0
        %5701 = vmatprep.subr.mxu0 0.0
        %5702 = vmatpush1.xpose.msra.mxu0 0.0
        %5703 = vmatprep.subr.mxu0 0.0
        %5704 = vmatpush1.xpose.msra.mxu0 0.0
        %5705 = vmatprep.subr.mxu0 0.0
        %5706 = vmatpush1.xpose.msra.mxu0 0.0
        %5707 = vmatprep.subr.mxu0 0.0
        %5708 = vmatpush1.xpose.msra.mxu0 0.0
        %5709 = vmatprep.subr.mxu0 0.0
        %5710 = vmatpush1.xpose.msra.mxu0 0.0
        %5711 = vmatprep.mubr.f32.mxu0 0.0
        %5712 = vmatmul.mubr.f32.gmra.mrb[0].mxu0 %v5643
        %v5713 = vpop.f32.mrb[0].mxu0
        %v5714 = vadd.f32 0.0, %v5713
        %v5715 = vpop.f32.mrb[0].mxu0
        %5716 = vdwg.mxu0
        %v5717 = vsel %vm2163, %v5714, -inf
        %5718 = vmax.xlane.f32.xlu0 %v5717
        %v5719 = vpop.xlane.xlu0 %5718
        %v5720 = vsub.f32 %v5714, %v5719
        %v5721 = vmul.f32 %v5720, 1.442695
        %v5722 = vpow.pop %v5721
        %v5723 = vsel %vm2163, %v5722, 0.0
        %5724 = vadd.xlane.f32.xlu0 %v5723
        %v5725 = vpop.xlane.xlu0 %5724
        %v5726 = vrcp.pop %v5725
        %v5727 = vmul.f32 %v5722, %v5726
        %5728 = vrot.lane.b32.xlu0 %v5308, 80
        %v5729 = vpop.permute.xlu0 %5728
        %v5732 = vsel %vm2163, %v5727, 0
        %5734 = vmatprep.subr.mxu0 0.0
        %5735 = vmatpush1.msra.mxu0 %v5729
        %5736 = vmatprep.subr.mxu0 0.0
        %5737 = vmatpush1.msra.mxu0 0.0
        %5738 = vmatprep.subr.mxu0 0.0
        %5739 = vmatpush1.msra.mxu0 0.0
        %5740 = vmatprep.subr.mxu0 0.0
        %5741 = vmatpush1.msra.mxu0 0.0
        %5742 = vmatprep.subr.mxu0 0.0
        %5743 = vmatpush1.msra.mxu0 0.0
        %5744 = vmatprep.subr.mxu0 0.0
        %5745 = vmatpush1.msra.mxu0 0.0
        %5746 = vmatprep.subr.mxu0 0.0
        %5747 = vmatpush1.msra.mxu0 0.0
        %5748 = vmatprep.subr.mxu0 0.0
        %5749 = vmatpush1.msra.mxu0 0.0
        %5750 = vmatprep.subr.mxu0 0.0
        %5751 = vmatpush1.msra.mxu0 0.0
        %5752 = vmatprep.subr.mxu0 0.0
        %5753 = vmatpush1.msra.mxu0 0.0
        %5754 = vmatprep.subr.mxu0 0.0
        %5755 = vmatpush1.msra.mxu0 0.0
        %5756 = vmatprep.subr.mxu0 0.0
        %5757 = vmatpush1.msra.mxu0 0.0
        %5758 = vmatprep.subr.mxu0 0.0
        %5759 = vmatpush1.msra.mxu0 0.0
        %5760 = vmatprep.subr.mxu0 0.0
        %5761 = vmatpush1.msra.mxu0 0.0
        %5762 = vmatprep.subr.mxu0 0.0
        %5763 = vmatpush1.msra.mxu0 0.0
        %5764 = vmatprep.subr.mxu0 0.0
        %5765 = vmatpush1.msra.mxu0 0.0
        %5766 = vmatprep.subr.mxu0 0.0
        %5767 = vmatpush1.msra.mxu0 0.0
        %5768 = vmatprep.subr.mxu0 0.0
        %5769 = vmatpush1.msra.mxu0 0.0
        %5770 = vmatprep.subr.mxu0 0.0
        %5771 = vmatpush1.msra.mxu0 0.0
        %5772 = vmatprep.subr.mxu0 0.0
        %5773 = vmatpush1.msra.mxu0 0.0
        %5774 = vmatprep.subr.mxu0 0.0
        %5775 = vmatpush1.msra.mxu0 0.0
        %5776 = vmatprep.subr.mxu0 0.0
        %5777 = vmatpush1.msra.mxu0 0.0
        %5778 = vmatprep.subr.mxu0 0.0
        %5779 = vmatpush1.msra.mxu0 0.0
        %5780 = vmatprep.subr.mxu0 0.0
        %5781 = vmatpush1.msra.mxu0 0.0
        %5782 = vmatprep.subr.mxu0 0.0
        %5783 = vmatpush1.msra.mxu0 0.0
        %5784 = vmatprep.subr.mxu0 0.0
        %5785 = vmatpush1.msra.mxu0 0.0
        %5786 = vmatprep.subr.mxu0 0.0
        %5787 = vmatpush1.msra.mxu0 0.0
        %5788 = vmatprep.subr.mxu0 0.0
        %5789 = vmatpush1.msra.mxu0 0.0
        %5790 = vmatprep.subr.mxu0 0.0
        %5791 = vmatpush1.msra.mxu0 0.0
        %5792 = vmatprep.subr.mxu0 0.0
        %5793 = vmatpush1.msra.mxu0 0.0
        %5794 = vmatprep.subr.mxu0 0.0
        %5795 = vmatpush1.msra.mxu0 0.0
        %5796 = vmatprep.subr.mxu0 0.0
        %5797 = vmatpush1.msra.mxu0 0.0
        %5798 = vmatprep.mubr.f32.mxu0 0.0
        %5799 = vmatmul.mubr.f32.gmra.mrb[0].mxu0 %v5732
        %v5800 = vpop.f32.mrb[0].mxu0
        %v5801 = vadd.f32 0.0, %v5800
        %v5802 = vpop.f32.mrb[0].mxu0
        %5803 = vdwg.mxu0
        %5804 = vrot.lane.b32.xlu0 %v5224, 104
        %v5805 = vpop.permute.xlu0 %5804
        %5806 = vrot.lane.b32.xlu0 %v5308, 104
        %v5807 = vpop.permute.xlu0 %5806
        %v5808 = vsel %vm2163, %v5805, 0
        %v5810 = vsel %vm2163, %v5807, 0
        %5812 = vmatprep.subr.mxu0 0.0
        %5813 = vmatpush1.xpose.msra.mxu0 %v5810
        %5814 = vmatprep.subr.mxu0 0.0
        %5815 = vmatpush1.xpose.msra.mxu0 0.0
        %5816 = vmatprep.subr.mxu0 0.0
        %5817 = vmatpush1.xpose.msra.mxu0 0.0
        %5818 = vmatprep.subr.mxu0 0.0
        %5819 = vmatpush1.xpose.msra.mxu0 0.0
        %5820 = vmatprep.subr.mxu0 0.0
        %5821 = vmatpush1.xpose.msra.mxu0 0.0
        %5822 = vmatprep.subr.mxu0 0.0
        %5823 = vmatpush1.xpose.msra.mxu0 0.0
        %5824 = vmatprep.subr.mxu0 0.0
        %5825 = vmatpush1.xpose.msra.mxu0 0.0
        %5826 = vmatprep.subr.mxu0 0.0
        %5827 = vmatpush1.xpose.msra.mxu0 0.0
        %5828 = vmatprep.subr.mxu0 0.0
        %5829 = vmatpush1.xpose.msra.mxu0 0.0
        %5830 = vmatprep.subr.mxu0 0.0
        %5831 = vmatpush1.xpose.msra.mxu0 0.0
        %5832 = vmatprep.subr.mxu0 0.0
        %5833 = vmatpush1.xpose.msra.mxu0 0.0
        %5834 = vmatprep.subr.mxu0 0.0
        %5835 = vmatpush1.xpose.msra.mxu0 0.0
        %5836 = vmatprep.subr.mxu0 0.0
        %5837 = vmatpush1.xpose.msra.mxu0 0.0
        %5838 = vmatprep.subr.mxu0 0.0
        %5839 = vmatpush1.xpose.msra.mxu0 0.0
        %5840 = vmatprep.subr.mxu0 0.0
        %5841 = vmatpush1.xpose.msra.mxu0 0.0
        %5842 = vmatprep.subr.mxu0 0.0
        %5843 = vmatpush1.xpose.msra.mxu0 0.0
        %5844 = vmatprep.subr.mxu0 0.0
        %5845 = vmatpush1.xpose.msra.mxu0 0.0
        %5846 = vmatprep.subr.mxu0 0.0
        %5847 = vmatpush1.xpose.msra.mxu0 0.0
        %5848 = vmatprep.subr.mxu0 0.0
        %5849 = vmatpush1.xpose.msra.mxu0 0.0
        %5850 = vmatprep.subr.mxu0 0.0
        %5851 = vmatpush1.xpose.msra.mxu0 0.0
        %5852 = vmatprep.subr.mxu0 0.0
        %5853 = vmatpush1.xpose.msra.mxu0 0.0
        %5854 = vmatprep.subr.mxu0 0.0
        %5855 = vmatpush1.xpose.msra.mxu0 0.0
        %5856 = vmatprep.subr.mxu0 0.0
        %5857 = vmatpush1.xpose.msra.mxu0 0.0
        %5858 = vmatprep.subr.mxu0 0.0
        %5859 = vmatpush1.xpose.msra.mxu0 0.0
        %5860 = vmatprep.subr.mxu0 0.0
        %5861 = vmatpush1.xpose.msra.mxu0 0.0
        %5862 = vmatprep.subr.mxu0 0.0
        %5863 = vmatpush1.xpose.msra.mxu0 0.0
        %5864 = vmatprep.subr.mxu0 0.0
        %5865 = vmatpush1.xpose.msra.mxu0 0.0
        %5866 = vmatprep.subr.mxu0 0.0
        %5867 = vmatpush1.xpose.msra.mxu0 0.0
        %5868 = vmatprep.subr.mxu0 0.0
        %5869 = vmatpush1.xpose.msra.mxu0 0.0
        %5870 = vmatprep.subr.mxu0 0.0
        %5871 = vmatpush1.xpose.msra.mxu0 0.0
        %5872 = vmatprep.subr.mxu0 0.0
        %5873 = vmatpush1.xpose.msra.mxu0 0.0
        %5874 = vmatprep.subr.mxu0 0.0
        %5875 = vmatpush1.xpose.msra.mxu0 0.0
        %5876 = vmatprep.mubr.f32.mxu0 0.0
        %5877 = vmatmul.mubr.f32.gmra.mrb[0].mxu0 %v5808
        %v5878 = vpop.f32.mrb[0].mxu0
        %v5879 = vadd.f32 0.0, %v5878
        %v5880 = vpop.f32.mrb[0].mxu0
        %5881 = vdwg.mxu0
        %v5882 = vsel %vm2163, %v5879, -inf
        %5883 = vmax.xlane.f32.xlu0 %v5882
        %v5884 = vpop.xlane.xlu0 %5883
        %v5885 = vsub.f32 %v5879, %v5884
        %v5886 = vmul.f32 %v5885, 1.442695
        %v5887 = vpow.pop %v5886
        %v5888 = vsel %vm2163, %v5887, 0.0
        %5889 = vadd.xlane.f32.xlu0 %v5888
        %v5890 = vpop.xlane.xlu0 %5889
        %v5891 = vrcp.pop %v5890
        %v5892 = vmul.f32 %v5887, %v5891
        %5893 = vrot.lane.b32.xlu0 %v5308, 72
        %v5894 = vpop.permute.xlu0 %5893
        %v5897 = vsel %vm2163, %v5892, 0
        %5899 = vmatprep.subr.mxu0 0.0
        %5900 = vmatpush1.msra.mxu0 %v5894
        %5901 = vmatprep.subr.mxu0 0.0
        %5902 = vmatpush1.msra.mxu0 0.0
        %5903 = vmatprep.subr.mxu0 0.0
        %5904 = vmatpush1.msra.mxu0 0.0
        %5905 = vmatprep.subr.mxu0 0.0
        %5906 = vmatpush1.msra.mxu0 0.0
        %5907 = vmatprep.subr.mxu0 0.0
        %5908 = vmatpush1.msra.mxu0 0.0
        %5909 = vmatprep.subr.mxu0 0.0
        %5910 = vmatpush1.msra.mxu0 0.0
        %5911 = vmatprep.subr.mxu0 0.0
        %5912 = vmatpush1.msra.mxu0 0.0
        %5913 = vmatprep.subr.mxu0 0.0
        %5914 = vmatpush1.msra.mxu0 0.0
        %5915 = vmatprep.subr.mxu0 0.0
        %5916 = vmatpush1.msra.mxu0 0.0
        %5917 = vmatprep.subr.mxu0 0.0
        %5918 = vmatpush1.msra.mxu0 0.0
        %5919 = vmatprep.subr.mxu0 0.0
        %5920 = vmatpush1.msra.mxu0 0.0
        %5921 = vmatprep.subr.mxu0 0.0
        %5922 = vmatpush1.msra.mxu0 0.0
        %5923 = vmatprep.subr.mxu0 0.0
        %5924 = vmatpush1.msra.mxu0 0.0
        %5925 = vmatprep.subr.mxu0 0.0
        %5926 = vmatpush1.msra.mxu0 0.0
        %5927 = vmatprep.subr.mxu0 0.0
        %5928 = vmatpush1.msra.mxu0 0.0
        %5929 = vmatprep.subr.mxu0 0.0
        %5930 = vmatpush1.msra.mxu0 0.0
        %5931 = vmatprep.subr.mxu0 0.0
        %5932 = vmatpush1.msra.mxu0 0.0
        %5933 = vmatprep.subr.mxu0 0.0
        %5934 = vmatpush1.msra.mxu0 0.0
        %5935 = vmatprep.subr.mxu0 0.0
        %5936 = vmatpush1.msra.mxu0 0.0
        %5937 = vmatprep.subr.mxu0 0.0
        %5938 = vmatpush1.msra.mxu0 0.0
        %5939 = vmatprep.subr.mxu0 0.0
        %5940 = vmatpush1.msra.mxu0 0.0
        %5941 = vmatprep.subr.mxu0 0.0
        %5942 = vmatpush1.msra.mxu0 0.0
        %5943 = vmatprep.subr.mxu0 0.0
        %5944 = vmatpush1.msra.mxu0 0.0
        %5945 = vmatprep.subr.mxu0 0.0
        %5946 = vmatpush1.msra.mxu0 0.0
        %5947 = vmatprep.subr.mxu0 0.0
        %5948 = vmatpush1.msra.mxu0 0.0
        %5949 = vmatprep.subr.mxu0 0.0
        %5950 = vmatpush1.msra.mxu0 0.0
        %5951 = vmatprep.subr.mxu0 0.0
        %5952 = vmatpush1.msra.mxu0 0.0
        %5953 = vmatprep.subr.mxu0 0.0
        %5954 = vmatpush1.msra.mxu0 0.0
        %5955 = vmatprep.subr.mxu0 0.0
        %5956 = vmatpush1.msra.mxu0 0.0
        %5957 = vmatprep.subr.mxu0 0.0
        %5958 = vmatpush1.msra.mxu0 0.0
        %5959 = vmatprep.subr.mxu0 0.0
        %5960 = vmatpush1.msra.mxu0 0.0
        %5961 = vmatprep.subr.mxu0 0.0
        %5962 = vmatpush1.msra.mxu0 0.0
        %5963 = vmatprep.mubr.f32.mxu0 0.0
        %5964 = vmatmul.mubr.f32.gmra.mrb[0].mxu0 %v5897
        %v5965 = vpop.f32.mrb[0].mxu0
        %v5966 = vadd.f32 0.0, %v5965
        %v5967 = vpop.f32.mrb[0].mxu0
        %5968 = vdwg.mxu0
        %5970 = vrot.lane.b32.xlu0 %v5636, 8
        %v5971 = vpop.permute.xlu0 %5970
        %5974 = vrot.lane.b32.xlu0 %v5801, 16
        %v5975 = vpop.permute.xlu0 %5974
        %5978 = vrot.lane.b32.xlu0 %v5966, 24
        %v5979 = vpop.permute.xlu0 %5978
        %v5981 = vsel %vm2163, %v5471, %v5971
        %v5982 = vsel %vm1772, %v5981, %v5975
        %v5983 = vsel %vm2834, %v5982, %v5979
        %v5984 = vld [vmem:[%s63] sm:$0xff]
        %v5985 = vld [vmem:[%s63 + $0x8] sm:$0xff]
        %v5986 = vld [vmem:[%s63 + $0x10] sm:$0xff]
        %v5987 = vld [vmem:[%s63 + $0x18] sm:$0xff]
        %v5988 = vld [vmem:[#allocation25] sm:$0x1]
        %v5990 = vlaneseq
        %v5991 = vshrl.u32 %v5990, 7
        %v5992 = vsub.s32 0, %v5991
        %v5993 = vrot.slane %v5988, %v5992
        %v5996 = vsel %vm2086, %v5983, 0
        %5998 = vmatprep.subr.mxu0 0.0
        %5999 = vmatpush1.msra.mxu0 %v5984
        %6000 = vmatprep.subr.mxu0 0.0
        %6001 = vmatpush1.msra.mxu0 %v5985
        %6002 = vmatprep.subr.mxu0 0.0
        %6003 = vmatpush1.msra.mxu0 %v5986
        %6004 = vmatprep.subr.mxu0 0.0
        %6005 = vmatpush1.msra.mxu0 %v5987
        %6006 = vmatprep.subr.mxu0 0.0
        %6007 = vmatpush1.msra.mxu0 0.0
        %6008 = vmatprep.subr.mxu0 0.0
        %6009 = vmatpush1.msra.mxu0 0.0
        %6010 = vmatprep.subr.mxu0 0.0
        %6011 = vmatpush1.msra.mxu0 0.0
        %6012 = vmatprep.subr.mxu0 0.0
        %6013 = vmatpush1.msra.mxu0 0.0
        %6014 = vmatprep.subr.mxu0 0.0
        %6015 = vmatpush1.msra.mxu0 0.0
        %6016 = vmatprep.subr.mxu0 0.0
        %6017 = vmatpush1.msra.mxu0 0.0
        %6018 = vmatprep.subr.mxu0 0.0
        %6019 = vmatpush1.msra.mxu0 0.0
        %6020 = vmatprep.subr.mxu0 0.0
        %6021 = vmatpush1.msra.mxu0 0.0
        %6022 = vmatprep.subr.mxu0 0.0
        %6023 = vmatpush1.msra.mxu0 0.0
        %6024 = vmatprep.subr.mxu0 0.0
        %6025 = vmatpush1.msra.mxu0 0.0
        %6026 = vmatprep.subr.mxu0 0.0
        %6027 = vmatpush1.msra.mxu0 0.0
        %6028 = vmatprep.subr.mxu0 0.0
        %6029 = vmatpush1.msra.mxu0 0.0
        %6030 = vmatprep.subr.mxu0 0.0
        %6031 = vmatpush1.msra.mxu0 0.0
        %6032 = vmatprep.subr.mxu0 0.0
        %6033 = vmatpush1.msra.mxu0 0.0
        %6034 = vmatprep.subr.mxu0 0.0
        %6035 = vmatpush1.msra.mxu0 0.0
        %6036 = vmatprep.subr.mxu0 0.0
        %6037 = vmatpush1.msra.mxu0 0.0
        %6038 = vmatprep.subr.mxu0 0.0
        %6039 = vmatpush1.msra.mxu0 0.0
        %6040 = vmatprep.subr.mxu0 0.0
        %6041 = vmatpush1.msra.mxu0 0.0
        %6042 = vmatprep.subr.mxu0 0.0
        %6043 = vmatpush1.msra.mxu0 0.0
        %6044 = vmatprep.subr.mxu0 0.0
        %6045 = vmatpush1.msra.mxu0 0.0
        %6046 = vmatprep.subr.mxu0 0.0
        %6047 = vmatpush1.msra.mxu0 0.0
        %6048 = vmatprep.subr.mxu0 0.0
        %6049 = vmatpush1.msra.mxu0 0.0
        %6050 = vmatprep.subr.mxu0 0.0
        %6051 = vmatpush1.msra.mxu0 0.0
        %6052 = vmatprep.subr.mxu0 0.0
        %6053 = vmatpush1.msra.mxu0 0.0
        %6054 = vmatprep.subr.mxu0 0.0
        %6055 = vmatpush1.msra.mxu0 0.0
        %6056 = vmatprep.subr.mxu0 0.0
        %6057 = vmatpush1.msra.mxu0 0.0
        %6058 = vmatprep.subr.mxu0 0.0
        %6059 = vmatpush1.msra.mxu0 0.0
        %6060 = vmatprep.subr.mxu0 0.0
        %6061 = vmatpush1.msra.mxu0 0.0
        %6062 = vmatprep.mubr.f32.mxu0 0.0
        %6063 = vmatmul.mubr.f32.gmra.mrb[0].mxu0 %v5996
        %v6064 = vpop.f32.mrb[0].mxu0
        %v6065 = vadd.f32 %v5993, %v6064
        %v6066 = vpop.f32.mrb[0].mxu0
        %6067 = vdwg.mxu0
        %v6068 = vadd.f32 %v5142, %v6065
        %v6069 = vld [vmem:[#allocation26] sm:$0x1]
        %v6070 = vld [vmem:[#allocation28] sm:$0x1]
        %v6071 = vsel %vm2086, %v6068, 0.0
        %6072 = vadd.xlane.f32.xlu0 %v6071
        %v6073 = vpop.xlane.xlu0 %6072
        %v6074 = vmul.f32 %v6073, %v2926
        %v6075 = vsub.f32 %v6068, %v6074
        %v6076 = vmul.f32 %v6075, %v6075
        %v6077 = vsel %vm2086, %v6076, 0.0
        %6078 = vadd.xlane.f32.xlu0 %v6077
        %v6079 = vpop.xlane.xlu0 %6078
        %v6080 = vmul.f32 %v6079, %v2926
        %v6081 = vadd.f32 %v6080, 1e-05
        %v6082 = vrsqrt.pop %v6081
        %v6083 = vmul.f32 %v6075, %v6082
        %v6085 = vlaneseq
        %v6086 = vshrl.u32 %v6085, 7
        %v6087 = vsub.s32 0, %v6086
        %v6088 = vrot.slane %v6069, %v6087
        %v6090 = vmul.f32 %v6083, %v6088
        %v6092 = vlaneseq
        %v6093 = vshrl.u32 %v6092, 7
        %v6094 = vsub.s32 0, %v6093
        %v6095 = vrot.slane %v6070, %v6094
        %v6097 = vadd.f32 %v6090, %v6095
        %v6098 = vld [vmem:[#allocation29] sm:$0xff]
        %v6099 = vld [vmem:[#allocation29 + $0x8] sm:$0xff]
        %v6100 = vld [vmem:[#allocation29 + $0x10] sm:$0xff]
        %v6101 = vld [vmem:[#allocation29 + $0x18] sm:$0xff]
        %v6102 = vld [vmem:[#allocation31] sm:$0x1]
        %v6104 = vlaneseq
        %v6105 = vshrl.u32 %v6104, 7
        %v6106 = vsub.s32 0, %v6105
        %v6107 = vrot.slane %v6102, %v6106
        %v6110 = vsel %vm2086, %v6097, 0
        %6112 = vmatprep.subr.mxu0 0.0
        %6113 = vmatpush1.msra.mxu0 %v6098
        %6114 = vmatprep.subr.mxu0 0.0
        %6115 = vmatpush1.msra.mxu0 %v6099
        %6116 = vmatprep.subr.mxu0 0.0
        %6117 = vmatpush1.msra.mxu0 %v6100
        %6118 = vmatprep.subr.mxu0 0.0
        %6119 = vmatpush1.msra.mxu0 %v6101
        %6120 = vmatprep.subr.mxu0 0.0
        %6121 = vmatpush1.msra.mxu0 0.0
        %6122 = vmatprep.subr.mxu0 0.0
        %6123 = vmatpush1.msra.mxu0 0.0
        %6124 = vmatprep.subr.mxu0 0.0
        %6125 = vmatpush1.msra.mxu0 0.0
        %6126 = vmatprep.subr.mxu0 0.0
        %6127 = vmatpush1.msra.mxu0 0.0
        %6128 = vmatprep.subr.mxu0 0.0
        %6129 = vmatpush1.msra.mxu0 0.0
        %6130 = vmatprep.subr.mxu0 0.0
        %6131 = vmatpush1.msra.mxu0 0.0
        %6132 = vmatprep.subr.mxu0 0.0
        %6133 = vmatpush1.msra.mxu0 0.0
        %6134 = vmatprep.subr.mxu0 0.0
        %6135 = vmatpush1.msra.mxu0 0.0
        %6136 = vmatprep.subr.mxu0 0.0
        %6137 = vmatpush1.msra.mxu0 0.0
        %6138 = vmatprep.subr.mxu0 0.0
        %6139 = vmatpush1.msra.mxu0 0.0
        %6140 = vmatprep.subr.mxu0 0.0
        %6141 = vmatpush1.msra.mxu0 0.0
        %6142 = vmatprep.subr.mxu0 0.0
        %6143 = vmatpush1.msra.mxu0 0.0
        %6144 = vmatprep.subr.mxu0 0.0
        %6145 = vmatpush1.msra.mxu0 0.0
        %6146 = vmatprep.subr.mxu0 0.0
        %6147 = vmatpush1.msra.mxu0 0.0
        %6148 = vmatprep.subr.mxu0 0.0
        %6149 = vmatpush1.msra.mxu0 0.0
        %6150 = vmatprep.subr.mxu0 0.0
        %6151 = vmatpush1.msra.mxu0 0.0
        %6152 = vmatprep.subr.mxu0 0.0
        %6153 = vmatpush1.msra.mxu0 0.0
        %6154 = vmatprep.subr.mxu0 0.0
        %6155 = vmatpush1.msra.mxu0 0.0
        %6156 = vmatprep.subr.mxu0 0.0
        %6157 = vmatpush1.msra.mxu0 0.0
        %6158 = vmatprep.subr.mxu0 0.0
        %6159 = vmatpush1.msra.mxu0 0.0
        %6160 = vmatprep.subr.mxu0 0.0
        %6161 = vmatpush1.msra.mxu0 0.0
        %6162 = vmatprep.subr.mxu0 0.0
        %6163 = vmatpush1.msra.mxu0 0.0
        %6164 = vmatprep.subr.mxu0 0.0
        %6165 = vmatpush1.msra.mxu0 0.0
        %6166 = vmatprep.subr.mxu0 0.0
        %6167 = vmatpush1.msra.mxu0 0.0
        %6168 = vmatprep.subr.mxu0 0.0
        %6169 = vmatpush1.msra.mxu0 0.0
        %6170 = vmatprep.subr.mxu0 0.0
        %6171 = vmatpush1.msra.mxu0 0.0
        %6172 = vmatprep.subr.mxu0 0.0
        %6173 = vmatpush1.msra.mxu0 0.0
        %6174 = vmatprep.subr.mxu0 0.0
        %6175 = vmatpush1.msra.mxu0 0.0
        %6176 = vmatprep.mubr.f32.mxu0 0.0
        %6177 = vmatmul.mubr.f32.gmra.mrb[0].mxu0 %v6110
        %v6178 = vpop.f32.mrb[0].mxu0
        %v6179 = vadd.f32 %v6107, %v6178
        %v6180 = vpop.f32.mrb[0].mxu0
        %6181 = vdwg.mxu0
        %v6182 = vmax.f32 %v6179, 0.0
        %v6183 = vld [vmem:[%s75] sm:$0xff]
        %v6184 = vld [vmem:[%s75 + $0x8] sm:$0xff]
        %v6185 = vld [vmem:[%s75 + $0x10] sm:$0xff]
        %v6186 = vld [vmem:[%s75 + $0x18] sm:$0xff]
        %v6187 = vld [vmem:[%s75 + $0x20] sm:$0xff]
        %v6188 = vld [vmem:[%s75 + $0x28] sm:$0xff]
        %v6189 = vld [vmem:[%s75 + $0x30] sm:$0xff]
        %v6190 = vld [vmem:[%s75 + $0x38] sm:$0xff]
        %v6191 = vld [vmem:[#allocation32] sm:$0x1]
        %v6193 = vlaneseq
        %v6194 = vshrl.u32 %v6193, 7
        %v6195 = vsub.s32 0, %v6194
        %v6196 = vrot.slane %v6191, %v6195
        %v6199 = vsel %vm3051, %v6182, 0
        %6201 = vmatprep.subr.mxu0 0.0
        %6202 = vmatpush1.msra.mxu0 %v6183
        %6203 = vmatprep.subr.mxu0 0.0
        %6204 = vmatpush1.msra.mxu0 %v6184
        %6205 = vmatprep.subr.mxu0 0.0
        %6206 = vmatpush1.msra.mxu0 %v6185
        %6207 = vmatprep.subr.mxu0 0.0
        %6208 = vmatpush1.msra.mxu0 %v6186
        %6209 = vmatprep.subr.mxu0 0.0
        %6210 = vmatpush1.msra.mxu0 %v6187
        %6211 = vmatprep.subr.mxu0 0.0
        %6212 = vmatpush1.msra.mxu0 %v6188
        %6213 = vmatprep.subr.mxu0 0.0
        %6214 = vmatpush1.msra.mxu0 %v6189
        %6215 = vmatprep.subr.mxu0 0.0
        %6216 = vmatpush1.msra.mxu0 %v6190
        %6217 = vmatprep.subr.mxu0 0.0
        %6218 = vmatpush1.msra.mxu0 0.0
        %6219 = vmatprep.subr.mxu0 0.0
        %6220 = vmatpush1.msra.mxu0 0.0
        %6221 = vmatprep.subr.mxu0 0.0
        %6222 = vmatpush1.msra.mxu0 0.0
        %6223 = vmatprep.subr.mxu0 0.0
        %6224 = vmatpush1.msra.mxu0 0.0
        %6225 = vmatprep.subr.mxu0 0.0
        %6226 = vmatpush1.msra.mxu0 0.0
        %6227 = vmatprep.subr.mxu0 0.0
        %6228 = vmatpush1.msra.mxu0 0.0
        %6229 = vmatprep.subr.mxu0 0.0
        %6230 = vmatpush1.msra.mxu0 0.0
        %6231 = vmatprep.subr.mxu0 0.0
        %6232 = vmatpush1.msra.mxu0 0.0
        %6233 = vmatprep.subr.mxu0 0.0
        %6234 = vmatpush1.msra.mxu0 0.0
        %6235 = vmatprep.subr.mxu0 0.0
        %6236 = vmatpush1.msra.mxu0 0.0
        %6237 = vmatprep.subr.mxu0 0.0
        %6238 = vmatpush1.msra.mxu0 0.0
        %6239 = vmatprep.subr.mxu0 0.0
        %6240 = vmatpush1.msra.mxu0 0.0
        %6241 = vmatprep.subr.mxu0 0.0
        %6242 = vmatpush1.msra.mxu0 0.0
        %6243 = vmatprep.subr.mxu0 0.0
        %6244 = vmatpush1.msra.mxu0 0.0
        %6245 = vmatprep.subr.mxu0 0.0
        %6246 = vmatpush1.msra.mxu0 0.0
        %6247 = vmatprep.subr.mxu0 0.0
        %6248 = vmatpush1.msra.mxu0 0.0
        %6249 = vmatprep.subr.mxu0 0.0
        %6250 = vmatpush1.msra.mxu0 0.0
        %6251 = vmatprep.subr.mxu0 0.0
        %6252 = vmatpush1.msra.mxu0 0.0
        %6253 = vmatprep.subr.mxu0 0.0
        %6254 = vmatpush1.msra.mxu0 0.0
        %6255 = vmatprep.subr.mxu0 0.0
        %6256 = vmatpush1.msra.mxu0 0.0
        %6257 = vmatprep.subr.mxu0 0.0
        %6258 = vmatpush1.msra.mxu0 0.0
        %6259 = vmatprep.subr.mxu0 0.0
        %6260 = vmatpush1.msra.mxu0 0.0
        %6261 = vmatprep.subr.mxu0 0.0
        %6262 = vmatpush1.msra.mxu0 0.0
        %6263 = vmatprep.subr.mxu0 0.0
        %6264 = vmatpush1.msra.mxu0 0.0
        %6265 = vmatprep.mubr.f32.mxu0 0.0
        %6266 = vmatmul.mubr.f32.gmra.mrb[0].mxu0 %v6199
        %v6267 = vpop.f32.mrb[0].mxu0
        %v6268 = vadd.f32 %v6196, %v6267
        %v6269 = vpop.f32.mrb[0].mxu0
        %6270 = vdwg.mxu0
        %v6271 = vadd.f32 %v6097, %v6268
        %v6272 = vld [vmem:[#allocation34] sm:$0x1]
        %v6273 = vld [vmem:[#allocation35] sm:$0x1]
        %v6274 = vsel %vm2086, %v6271, 0.0
        %6275 = vadd.xlane.f32.xlu0 %v6274
        %v6276 = vpop.xlane.xlu0 %6275
        %v6277 = vmul.f32 %v6276, %v2926
        %v6278 = vsub.f32 %v6271, %v6277
        %v6279 = vmul.f32 %v6278, %v6278
        %v6280 = vsel %vm2086, %v6279, 0.0
        %6281 = vadd.xlane.f32.xlu0 %v6280
        %v6282 = vpop.xlane.xlu0 %6281
        %v6283 = vmul.f32 %v6282, %v2926
        %v6284 = vadd.f32 %v6283, 1e-05
        %v6285 = vrsqrt.pop %v6284
        %v6286 = vmul.f32 %v6278, %v6285
        %v6288 = vlaneseq
        %v6289 = vshrl.u32 %v6288, 7
        %v6290 = vsub.s32 0, %v6289
        %v6291 = vrot.slane %v6272, %v6290
        %v6293 = vmul.f32 %v6286, %v6291
        %v6295 = vlaneseq
        %v6296 = vshrl.u32 %v6295, 7
        %v6297 = vsub.s32 0, %v6296
        %v6298 = vrot.slane %v6273, %v6297
        %v6300 = vadd.f32 %v6293, %v6298
        %s6301 = scalar_lea.vmem %s43, 32
        %v6302 = vld [vmem:[%s6301] sm:$0xff]
        %v6303 = vld [vmem:[%s6301 + $0x8] sm:$0xff]
        %v6304 = vld [vmem:[%s6301 + $0x10] sm:$0xff]
        %v6305 = vld [vmem:[%s6301 + $0x18] sm:$0xff]
        %s6306 = scalar_lea.vmem [#allocation16], 1
        %v6307 = vld [vmem:[%s6306] sm:$0x1]
        %v6309 = vlaneseq
        %v6310 = vshrl.u32 %v6309, 7
        %v6311 = vsub.s32 0, %v6310
        %v6312 = vrot.slane %v6307, %v6311
        %v6315 = vsel %vm2086, %v6300, 0
        %6317 = vmatprep.subr.mxu0 0.0
        %6318 = vmatpush1.msra.mxu0 %v6302
        %6319 = vmatprep.subr.mxu0 0.0
        %6320 = vmatpush1.msra.mxu0 %v6303
        %6321 = vmatprep.subr.mxu0 0.0
        %6322 = vmatpush1.msra.mxu0 %v6304
        %6323 = vmatprep.subr.mxu0 0.0
        %6324 = vmatpush1.msra.mxu0 %v6305
        %6325 = vmatprep.subr.mxu0 0.0
        %6326 = vmatpush1.msra.mxu0 0.0
        %6327 = vmatprep.subr.mxu0 0.0
        %6328 = vmatpush1.msra.mxu0 0.0
        %6329 = vmatprep.subr.mxu0 0.0
        %6330 = vmatpush1.msra.mxu0 0.0
        %6331 = vmatprep.subr.mxu0 0.0
        %6332 = vmatpush1.msra.mxu0 0.0
        %6333 = vmatprep.subr.mxu0 0.0
        %6334 = vmatpush1.msra.mxu0 0.0
        %6335 = vmatprep.subr.mxu0 0.0
        %6336 = vmatpush1.msra.mxu0 0.0
        %6337 = vmatprep.subr.mxu0 0.0
        %6338 = vmatpush1.msra.mxu0 0.0
        %6339 = vmatprep.subr.mxu0 0.0
        %6340 = vmatpush1.msra.mxu0 0.0
        %6341 = vmatprep.subr.mxu0 0.0
        %6342 = vmatpush1.msra.mxu0 0.0
        %6343 = vmatprep.subr.mxu0 0.0
        %6344 = vmatpush1.msra.mxu0 0.0
        %6345 = vmatprep.subr.mxu0 0.0
        %6346 = vmatpush1.msra.mxu0 0.0
        %6347 = vmatprep.subr.mxu0 0.0
        %6348 = vmatpush1.msra.mxu0 0.0
        %6349 = vmatprep.subr.mxu0 0.0
        %6350 = vmatpush1.msra.mxu0 0.0
        %6351 = vmatprep.subr.mxu0 0.0
        %6352 = vmatpush1.msra.mxu0 0.0
        %6353 = vmatprep.subr.mxu0 0.0
        %6354 = vmatpush1.msra.mxu0 0.0
        %6355 = vmatprep.subr.mxu0 0.0
        %6356 = vmatpush1.msra.mxu0 0.0
        %6357 = vmatprep.subr.mxu0 0.0
        %6358 = vmatpush1.msra.mxu0 0.0
        %6359 = vmatprep.subr.mxu0 0.0
        %6360 = vmatpush1.msra.mxu0 0.0
        %6361 = vmatprep.subr.mxu0 0.0
        %6362 = vmatpush1.msra.mxu0 0.0
        %6363 = vmatprep.subr.mxu0 0.0
        %6364 = vmatpush1.msra.mxu0 0.0
        %6365 = vmatprep.subr.mxu0 0.0
        %6366 = vmatpush1.msra.mxu0 0.0
        %6367 = vmatprep.subr.mxu0 0.0
        %6368 = vmatpush1.msra.mxu0 0.0
        %6369 = vmatprep.subr.mxu0 0.0
        %6370 = vmatpush1.msra.mxu0 0.0
        %6371 = vmatprep.subr.mxu0 0.0
        %6372 = vmatpush1.msra.mxu0 0.0
        %6373 = vmatprep.subr.mxu0 0.0
        %6374 = vmatpush1.msra.mxu0 0.0
        %6375 = vmatprep.subr.mxu0 0.0
        %6376 = vmatpush1.msra.mxu0 0.0
        %6377 = vmatprep.subr.mxu0 0.0
        %6378 = vmatpush1.msra.mxu0 0.0
        %6379 = vmatprep.subr.mxu0 0.0
        %6380 = vmatpush1.msra.mxu0 0.0
        %6381 = vmatprep.mubr.f32.mxu0 0.0
        %6382 = vmatmul.mubr.f32.gmra.mrb[0].mxu0 %v6315
        %v6383 = vpop.f32.mrb[0].mxu0
        %v6384 = vadd.f32 %v6312, %v6383
        %v6385 = vpop.f32.mrb[0].mxu0
        %6386 = vdwg.mxu0
        %6388 = vrot.lane.b32.xlu0 %v6384, 96
        %v6389 = vpop.permute.xlu0 %6388
        %v6390 = vsel %vm2163, %v6384, 0
        %v6392 = vsel %vm2163, %v6389, 0
        %6394 = vmatprep.subr.mxu0 0.0
        %6395 = vmatpush1.xpose.msra.mxu0 %v6392
        %6396 = vmatprep.subr.mxu0 0.0
        %6397 = vmatpush1.xpose.msra.mxu0 0.0
        %6398 = vmatprep.subr.mxu0 0.0
        %6399 = vmatpush1.xpose.msra.mxu0 0.0
        %6400 = vmatprep.subr.mxu0 0.0
        %6401 = vmatpush1.xpose.msra.mxu0 0.0
        %6402 = vmatprep.subr.mxu0 0.0
        %6403 = vmatpush1.xpose.msra.mxu0 0.0
        %6404 = vmatprep.subr.mxu0 0.0
        %6405 = vmatpush1.xpose.msra.mxu0 0.0
        %6406 = vmatprep.subr.mxu0 0.0
        %6407 = vmatpush1.xpose.msra.mxu0 0.0
        %6408 = vmatprep.subr.mxu0 0.0
        %6409 = vmatpush1.xpose.msra.mxu0 0.0
        %6410 = vmatprep.subr.mxu0 0.0
        %6411 = vmatpush1.xpose.msra.mxu0 0.0
        %6412 = vmatprep.subr.mxu0 0.0
        %6413 = vmatpush1.xpose.msra.mxu0 0.0
        %6414 = vmatprep.subr.mxu0 0.0
        %6415 = vmatpush1.xpose.msra.mxu0 0.0
        %6416 = vmatprep.subr.mxu0 0.0
        %6417 = vmatpush1.xpose.msra.mxu0 0.0
        %6418 = vmatprep.subr.mxu0 0.0
        %6419 = vmatpush1.xpose.msra.mxu0 0.0
        %6420 = vmatprep.subr.mxu0 0.0
        %6421 = vmatpush1.xpose.msra.mxu0 0.0
        %6422 = vmatprep.subr.mxu0 0.0
        %6423 = vmatpush1.xpose.msra.mxu0 0.0
        %6424 = vmatprep.subr.mxu0 0.0
        %6425 = vmatpush1.xpose.msra.mxu0 0.0
        %6426 = vmatprep.subr.mxu0 0.0
        %6427 = vmatpush1.xpose.msra.mxu0 0.0
        %6428 = vmatprep.subr.mxu0 0.0
        %6429 = vmatpush1.xpose.msra.mxu0 0.0
        %6430 = vmatprep.subr.mxu0 0.0
        %6431 = vmatpush1.xpose.msra.mxu0 0.0
        %6432 = vmatprep.subr.mxu0 0.0
        %6433 = vmatpush1.xpose.msra.mxu0 0.0
        %6434 = vmatprep.subr.mxu0 0.0
        %6435 = vmatpush1.xpose.msra.mxu0 0.0
        %6436 = vmatprep.subr.mxu0 0.0
        %6437 = vmatpush1.xpose.msra.mxu0 0.0
        %6438 = vmatprep.subr.mxu0 0.0
        %6439 = vmatpush1.xpose.msra.mxu0 0.0
        %6440 = vmatprep.subr.mxu0 0.0
        %6441 = vmatpush1.xpose.msra.mxu0 0.0
        %6442 = vmatprep.subr.mxu0 0.0
        %6443 = vmatpush1.xpose.msra.mxu0 0.0
        %6444 = vmatprep.subr.mxu0 0.0
        %6445 = vmatpush1.xpose.msra.mxu0 0.0
        %6446 = vmatprep.subr.mxu0 0.0
        %6447 = vmatpush1.xpose.msra.mxu0 0.0
        %6448 = vmatprep.subr.mxu0 0.0
        %6449 = vmatpush1.xpose.msra.mxu0 0.0
        %6450 = vmatprep.subr.mxu0 0.0
        %6451 = vmatpush1.xpose.msra.mxu0 0.0
        %6452 = vmatprep.subr.mxu0 0.0
        %6453 = vmatpush1.xpose.msra.mxu0 0.0
        %6454 = vmatprep.subr.mxu0 0.0
        %6455 = vmatpush1.xpose.msra.mxu0 0.0
        %6456 = vmatprep.subr.mxu0 0.0
        %6457 = vmatpush1.xpose.msra.mxu0 0.0
        %6458 = vmatprep.mubr.f32.mxu0 0.0
        %6459 = vmatmul.mubr.f32.gmra.mrb[0].mxu0 %v6390
        %v6460 = vpop.f32.mrb[0].mxu0
        %v6461 = vadd.f32 0.0, %v6460
        %v6462 = vpop.f32.mrb[0].mxu0
        %6463 = vdwg.mxu0
        %v6464 = vsel %vm2163, %v6461, -inf
        %6465 = vmax.xlane.f32.xlu0 %v6464
        %v6466 = vpop.xlane.xlu0 %6465
        %v6467 = vsub.f32 %v6461, %v6466
        %v6468 = vmul.f32 %v6467, 1.442695
        %v6469 = vpow.pop %v6468
        %v6470 = vsel %vm2163, %v6469, 0.0
        %6471 = vadd.xlane.f32.xlu0 %v6470
        %v6472 = vpop.xlane.xlu0 %6471
        %v6473 = vrcp.pop %v6472
        %v6474 = vmul.f32 %v6469, %v6473
        %6475 = vrot.lane.b32.xlu0 %v6384, 64
        %v6476 = vpop.permute.xlu0 %6475
        %v6479 = vsel %vm2163, %v6474, 0
        %6481 = vmatprep.subr.mxu0 0.0
        %6482 = vmatpush1.msra.mxu0 %v6476
        %6483 = vmatprep.subr.mxu0 0.0
        %6484 = vmatpush1.msra.mxu0 0.0
        %6485 = vmatprep.subr.mxu0 0.0
        %6486 = vmatpush1.msra.mxu0 0.0
        %6487 = vmatprep.subr.mxu0 0.0
        %6488 = vmatpush1.msra.mxu0 0.0
        %6489 = vmatprep.subr.mxu0 0.0
        %6490 = vmatpush1.msra.mxu0 0.0
        %6491 = vmatprep.subr.mxu0 0.0
        %6492 = vmatpush1.msra.mxu0 0.0
        %6493 = vmatprep.subr.mxu0 0.0
        %6494 = vmatpush1.msra.mxu0 0.0
        %6495 = vmatprep.subr.mxu0 0.0
        %6496 = vmatpush1.msra.mxu0 0.0
        %6497 = vmatprep.subr.mxu0 0.0
        %6498 = vmatpush1.msra.mxu0 0.0
        %6499 = vmatprep.subr.mxu0 0.0
        %6500 = vmatpush1.msra.mxu0 0.0
        %6501 = vmatprep.subr.mxu0 0.0
        %6502 = vmatpush1.msra.mxu0 0.0
        %6503 = vmatprep.subr.mxu0 0.0
        %6504 = vmatpush1.msra.mxu0 0.0
        %6505 = vmatprep.subr.mxu0 0.0
        %6506 = vmatpush1.msra.mxu0 0.0
        %6507 = vmatprep.subr.mxu0 0.0
        %6508 = vmatpush1.msra.mxu0 0.0
        %6509 = vmatprep.subr.mxu0 0.0
        %6510 = vmatpush1.msra.mxu0 0.0
        %6511 = vmatprep.subr.mxu0 0.0
        %6512 = vmatpush1.msra.mxu0 0.0
        %6513 = vmatprep.subr.mxu0 0.0
        %6514 = vmatpush1.msra.mxu0 0.0
        %6515 = vmatprep.subr.mxu0 0.0
        %6516 = vmatpush1.msra.mxu0 0.0
        %6517 = vmatprep.subr.mxu0 0.0
        %6518 = vmatpush1.msra.mxu0 0.0
        %6519 = vmatprep.subr.mxu0 0.0
        %6520 = vmatpush1.msra.mxu0 0.0
        %6521 = vmatprep.subr.mxu0 0.0
        %6522 = vmatpush1.msra.mxu0 0.0
        %6523 = vmatprep.subr.mxu0 0.0
        %6524 = vmatpush1.msra.mxu0 0.0
        %6525 = vmatprep.subr.mxu0 0.0
        %6526 = vmatpush1.msra.mxu0 0.0
        %6527 = vmatprep.subr.mxu0 0.0
        %6528 = vmatpush1.msra.mxu0 0.0
        %6529 = vmatprep.subr.mxu0 0.0
        %6530 = vmatpush1.msra.mxu0 0.0
        %6531 = vmatprep.subr.mxu0 0.0
        %6532 = vmatpush1.msra.mxu0 0.0
        %6533 = vmatprep.subr.mxu0 0.0
        %6534 = vmatpush1.msra.mxu0 0.0
        %6535 = vmatprep.subr.mxu0 0.0
        %6536 = vmatpush1.msra.mxu0 0.0
        %6537 = vmatprep.subr.mxu0 0.0
        %6538 = vmatpush1.msra.mxu0 0.0
        %6539 = vmatprep.subr.mxu0 0.0
        %6540 = vmatpush1.msra.mxu0 0.0
        %6541 = vmatprep.subr.mxu0 0.0
        %6542 = vmatpush1.msra.mxu0 0.0
        %6543 = vmatprep.subr.mxu0 0.0
        %6544 = vmatpush1.msra.mxu0 0.0
        %6545 = vmatprep.mubr.f32.mxu0 0.0
        %6546 = vmatmul.mubr.f32.gmra.mrb[0].mxu0 %v6479
        %v6547 = vpop.f32.mrb[0].mxu0
        %v6548 = vadd.f32 0.0, %v6547
        %v6549 = vpop.f32.mrb[0].mxu0
        %6550 = vdwg.mxu0
        %6551 = vrot.lane.b32.xlu0 %v6384, 120
        %v6552 = vpop.permute.xlu0 %6551
        %6553 = vrot.lane.b32.xlu0 %v6384, 88
        %v6554 = vpop.permute.xlu0 %6553
        %v6555 = vsel %vm2163, %v6552, 0
        %v6557 = vsel %vm2163, %v6554, 0
        %6559 = vmatprep.subr.mxu0 0.0
        %6560 = vmatpush1.xpose.msra.mxu0 %v6557
        %6561 = vmatprep.subr.mxu0 0.0
        %6562 = vmatpush1.xpose.msra.mxu0 0.0
        %6563 = vmatprep.subr.mxu0 0.0
        %6564 = vmatpush1.xpose.msra.mxu0 0.0
        %6565 = vmatprep.subr.mxu0 0.0
        %6566 = vmatpush1.xpose.msra.mxu0 0.0
        %6567 = vmatprep.subr.mxu0 0.0
        %6568 = vmatpush1.xpose.msra.mxu0 0.0
        %6569 = vmatprep.subr.mxu0 0.0
        %6570 = vmatpush1.xpose.msra.mxu0 0.0
        %6571 = vmatprep.subr.mxu0 0.0
        %6572 = vmatpush1.xpose.msra.mxu0 0.0
        %6573 = vmatprep.subr.mxu0 0.0
        %6574 = vmatpush1.xpose.msra.mxu0 0.0
        %6575 = vmatprep.subr.mxu0 0.0
        %6576 = vmatpush1.xpose.msra.mxu0 0.0
        %6577 = vmatprep.subr.mxu0 0.0
        %6578 = vmatpush1.xpose.msra.mxu0 0.0
        %6579 = vmatprep.subr.mxu0 0.0
        %6580 = vmatpush1.xpose.msra.mxu0 0.0
        %6581 = vmatprep.subr.mxu0 0.0
        %6582 = vmatpush1.xpose.msra.mxu0 0.0
        %6583 = vmatprep.subr.mxu0 0.0
        %6584 = vmatpush1.xpose.msra.mxu0 0.0
        %6585 = vmatprep.subr.mxu0 0.0
        %6586 = vmatpush1.xpose.msra.mxu0 0.0
        %6587 = vmatprep.subr.mxu0 0.0
        %6588 = vmatpush1.xpose.msra.mxu0 0.0
        %6589 = vmatprep.subr.mxu0 0.0
        %6590 = vmatpush1.xpose.msra.mxu0 0.0
        %6591 = vmatprep.subr.mxu0 0.0
        %6592 = vmatpush1.xpose.msra.mxu0 0.0
        %6593 = vmatprep.subr.mxu0 0.0
        %6594 = vmatpush1.xpose.msra.mxu0 0.0
        %6595 = vmatprep.subr.mxu0 0.0
        %6596 = vmatpush1.xpose.msra.mxu0 0.0
        %6597 = vmatprep.subr.mxu0 0.0
        %6598 = vmatpush1.xpose.msra.mxu0 0.0
        %6599 = vmatprep.subr.mxu0 0.0
        %6600 = vmatpush1.xpose.msra.mxu0 0.0
        %6601 = vmatprep.subr.mxu0 0.0
        %6602 = vmatpush1.xpose.msra.mxu0 0.0
        %6603 = vmatprep.subr.mxu0 0.0
        %6604 = vmatpush1.xpose.msra.mxu0 0.0
        %6605 = vmatprep.subr.mxu0 0.0
        %6606 = vmatpush1.xpose.msra.mxu0 0.0
        %6607 = vmatprep.subr.mxu0 0.0
        %6608 = vmatpush1.xpose.msra.mxu0 0.0
        %6609 = vmatprep.subr.mxu0 0.0
        %6610 = vmatpush1.xpose.msra.mxu0 0.0
        %6611 = vmatprep.subr.mxu0 0.0
        %6612 = vmatpush1.xpose.msra.mxu0 0.0
        %6613 = vmatprep.subr.mxu0 0.0
        %6614 = vmatpush1.xpose.msra.mxu0 0.0
        %6615 = vmatprep.subr.mxu0 0.0
        %6616 = vmatpush1.xpose.msra.mxu0 0.0
        %6617 = vmatprep.subr.mxu0 0.0
        %6618 = vmatpush1.xpose.msra.mxu0 0.0
        %6619 = vmatprep.subr.mxu0 0.0
        %6620 = vmatpush1.xpose.msra.mxu0 0.0
        %6621 = vmatprep.subr.mxu0 0.0
        %6622 = vmatpush1.xpose.msra.mxu0 0.0
        %6623 = vmatprep.mubr.f32.mxu0 0.0
        %6624 = vmatmul.mubr.f32.gmra.mrb[0].mxu0 %v6555
        %v6625 = vpop.f32.mrb[0].mxu0
        %v6626 = vadd.f32 0.0, %v6625
        %v6627 = vpop.f32.mrb[0].mxu0
        %6628 = vdwg.mxu0
        %v6629 = vsel %vm2163, %v6626, -inf
        %6630 = vmax.xlane.f32.xlu0 %v6629
        %v6631 = vpop.xlane.xlu0 %6630
        %v6632 = vsub.f32 %v6626, %v6631
        %v6633 = vmul.f32 %v6632, 1.442695
        %v6634 = vpow.pop %v6633
        %v6635 = vsel %vm2163, %v6634, 0.0
        %6636 = vadd.xlane.f32.xlu0 %v6635
        %v6637 = vpop.xlane.xlu0 %6636
        %v6638 = vrcp.pop %v6637
        %v6639 = vmul.f32 %v6634, %v6638
        %6640 = vrot.lane.b32.xlu0 %v6384, 56
        %v6641 = vpop.permute.xlu0 %6640
        %v6644 = vsel %vm2163, %v6639, 0
        %6646 = vmatprep.subr.mxu0 0.0
        %6647 = vmatpush1.msra.mxu0 %v6641
        %6648 = vmatprep.subr.mxu0 0.0
        %6649 = vmatpush1.msra.mxu0 0.0
        %6650 = vmatprep.subr.mxu0 0.0
        %6651 = vmatpush1.msra.mxu0 0.0
        %6652 = vmatprep.subr.mxu0 0.0
        %6653 = vmatpush1.msra.mxu0 0.0
        %6654 = vmatprep.subr.mxu0 0.0
        %6655 = vmatpush1.msra.mxu0 0.0
        %6656 = vmatprep.subr.mxu0 0.0
        %6657 = vmatpush1.msra.mxu0 0.0
        %6658 = vmatprep.subr.mxu0 0.0
        %6659 = vmatpush1.msra.mxu0 0.0
        %6660 = vmatprep.subr.mxu0 0.0
        %6661 = vmatpush1.msra.mxu0 0.0
        %6662 = vmatprep.subr.mxu0 0.0
        %6663 = vmatpush1.msra.mxu0 0.0
        %6664 = vmatprep.subr.mxu0 0.0
        %6665 = vmatpush1.msra.mxu0 0.0
        %6666 = vmatprep.subr.mxu0 0.0
        %6667 = vmatpush1.msra.mxu0 0.0
        %6668 = vmatprep.subr.mxu0 0.0
        %6669 = vmatpush1.msra.mxu0 0.0
        %6670 = vmatprep.subr.mxu0 0.0
        %6671 = vmatpush1.msra.mxu0 0.0
        %6672 = vmatprep.subr.mxu0 0.0
        %6673 = vmatpush1.msra.mxu0 0.0
        %6674 = vmatprep.subr.mxu0 0.0
        %6675 = vmatpush1.msra.mxu0 0.0
        %6676 = vmatprep.subr.mxu0 0.0
        %6677 = vmatpush1.msra.mxu0 0.0
        %6678 = vmatprep.subr.mxu0 0.0
        %6679 = vmatpush1.msra.mxu0 0.0
        %6680 = vmatprep.subr.mxu0 0.0
        %6681 = vmatpush1.msra.mxu0 0.0
        %6682 = vmatprep.subr.mxu0 0.0
        %6683 = vmatpush1.msra.mxu0 0.0
        %6684 = vmatprep.subr.mxu0 0.0
        %6685 = vmatpush1.msra.mxu0 0.0
        %6686 = vmatprep.subr.mxu0 0.0
        %6687 = vmatpush1.msra.mxu0 0.0
        %6688 = vmatprep.subr.mxu0 0.0
        %6689 = vmatpush1.msra.mxu0 0.0
        %6690 = vmatprep.subr.mxu0 0.0
        %6691 = vmatpush1.msra.mxu0 0.0
        %6692 = vmatprep.subr.mxu0 0.0
        %6693 = vmatpush1.msra.mxu0 0.0
        %6694 = vmatprep.subr.mxu0 0.0
        %6695 = vmatpush1.msra.mxu0 0.0
        %6696 = vmatprep.subr.mxu0 0.0
        %6697 = vmatpush1.msra.mxu0 0.0
        %6698 = vmatprep.subr.mxu0 0.0
        %6699 = vmatpush1.msra.mxu0 0.0
        %6700 = vmatprep.subr.mxu0 0.0
        %6701 = vmatpush1.msra.mxu0 0.0
        %6702 = vmatprep.subr.mxu0 0.0
        %6703 = vmatpush1.msra.mxu0 0.0
        %6704 = vmatprep.subr.mxu0 0.0
        %6705 = vmatpush1.msra.mxu0 0.0
        %6706 = vmatprep.subr.mxu0 0.0
        %6707 = vmatpush1.msra.mxu0 0.0
        %6708 = vmatprep.subr.mxu0 0.0
        %6709 = vmatpush1.msra.mxu0 0.0
        %6710 = vmatprep.mubr.f32.mxu0 0.0
        %6711 = vmatmul.mubr.f32.gmra.mrb[0].mxu0 %v6644
        %v6712 = vpop.f32.mrb[0].mxu0
        %v6713 = vadd.f32 0.0, %v6712
        %v6714 = vpop.f32.mrb[0].mxu0
        %6715 = vdwg.mxu0
        %6716 = vrot.lane.b32.xlu0 %v6384, 112
        %v6717 = vpop.permute.xlu0 %6716
        %6718 = vrot.lane.b32.xlu0 %v6384, 80
        %v6719 = vpop.permute.xlu0 %6718
        %v6720 = vsel %vm2163, %v6717, 0
        %v6722 = vsel %vm2163, %v6719, 0
        %6724 = vmatprep.subr.mxu0 0.0
        %6725 = vmatpush1.xpose.msra.mxu0 %v6722
        %6726 = vmatprep.subr.mxu0 0.0
        %6727 = vmatpush1.xpose.msra.mxu0 0.0
        %6728 = vmatprep.subr.mxu0 0.0
        %6729 = vmatpush1.xpose.msra.mxu0 0.0
        %6730 = vmatprep.subr.mxu0 0.0
        %6731 = vmatpush1.xpose.msra.mxu0 0.0
        %6732 = vmatprep.subr.mxu0 0.0
        %6733 = vmatpush1.xpose.msra.mxu0 0.0
        %6734 = vmatprep.subr.mxu0 0.0
        %6735 = vmatpush1.xpose.msra.mxu0 0.0
        %6736 = vmatprep.subr.mxu0 0.0
        %6737 = vmatpush1.xpose.msra.mxu0 0.0
        %6738 = vmatprep.subr.mxu0 0.0
        %6739 = vmatpush1.xpose.msra.mxu0 0.0
        %6740 = vmatprep.subr.mxu0 0.0
        %6741 = vmatpush1.xpose.msra.mxu0 0.0
        %6742 = vmatprep.subr.mxu0 0.0
        %6743 = vmatpush1.xpose.msra.mxu0 0.0
        %6744 = vmatprep.subr.mxu0 0.0
        %6745 = vmatpush1.xpose.msra.mxu0 0.0
        %6746 = vmatprep.subr.mxu0 0.0
        %6747 = vmatpush1.xpose.msra.mxu0 0.0
        %6748 = vmatprep.subr.mxu0 0.0
        %6749 = vmatpush1.xpose.msra.mxu0 0.0
        %6750 = vmatprep.subr.mxu0 0.0
        %6751 = vmatpush1.xpose.msra.mxu0 0.0
        %6752 = vmatprep.subr.mxu0 0.0
        %6753 = vmatpush1.xpose.msra.mxu0 0.0
        %6754 = vmatprep.subr.mxu0 0.0
        %6755 = vmatpush1.xpose.msra.mxu0 0.0
        %6756 = vmatprep.subr.mxu0 0.0
        %6757 = vmatpush1.xpose.msra.mxu0 0.0
        %6758 = vmatprep.subr.mxu0 0.0
        %6759 = vmatpush1.xpose.msra.mxu0 0.0
        %6760 = vmatprep.subr.mxu0 0.0
        %6761 = vmatpush1.xpose.msra.mxu0 0.0
        %6762 = vmatprep.subr.mxu0 0.0
        %6763 = vmatpush1.xpose.msra.mxu0 0.0
        %6764 = vmatprep.subr.mxu0 0.0
        %6765 = vmatpush1.xpose.msra.mxu0 0.0
        %6766 = vmatprep.subr.mxu0 0.0
        %6767 = vmatpush1.xpose.msra.mxu0 0.0
        %6768 = vmatprep.subr.mxu0 0.0
        %6769 = vmatpush1.xpose.msra.mxu0 0.0
        %6770 = vmatprep.subr.mxu0 0.0
        %6771 = vmatpush1.xpose.msra.mxu0 0.0
        %6772 = vmatprep.subr.mxu0 0.0
        %6773 = vmatpush1.xpose.msra.mxu0 0.0
        %6774 = vmatprep.subr.mxu0 0.0
        %6775 = vmatpush1.xpose.msra.mxu0 0.0
        %6776 = vmatprep.subr.mxu0 0.0
        %6777 = vmatpush1.xpose.msra.mxu0 0.0
        %6778 = vmatprep.subr.mxu0 0.0
        %6779 = vmatpush1.xpose.msra.mxu0 0.0
        %6780 = vmatprep.subr.mxu0 0.0
        %6781 = vmatpush1.xpose.msra.mxu0 0.0
        %6782 = vmatprep.subr.mxu0 0.0
        %6783 = vmatpush1.xpose.msra.mxu0 0.0
        %6784 = vmatprep.subr.mxu0 0.0
        %6785 = vmatpush1.xpose.msra.mxu0 0.0
        %6786 = vmatprep.subr.mxu0 0.0
        %6787 = vmatpush1.xpose.msra.mxu0 0.0
        %6788 = vmatprep.mubr.f32.mxu0 0.0
        %6789 = vmatmul.mubr.f32.gmra.mrb[0].mxu0 %v6720
        %v6790 = vpop.f32.mrb[0].mxu0
        %v6791 = vadd.f32 0.0, %v6790
        %v6792 = vpop.f32.mrb[0].mxu0
        %6793 = vdwg.mxu0
        %v6794 = vsel %vm2163, %v6791, -inf
        %6795 = vmax.xlane.f32.xlu0 %v6794
        %v6796 = vpop.xlane.xlu0 %6795
        %v6797 = vsub.f32 %v6791, %v6796
        %v6798 = vmul.f32 %v6797, 1.442695
        %v6799 = vpow.pop %v6798
        %v6800 = vsel %vm2163, %v6799, 0.0
        %6801 = vadd.xlane.f32.xlu0 %v6800
        %v6802 = vpop.xlane.xlu0 %6801
        %v6803 = vrcp.pop %v6802
        %v6804 = vmul.f32 %v6799, %v6803
        %6805 = vrot.lane.b32.xlu0 %v6384, 48
        %v6806 = vpop.permute.xlu0 %6805
        %v6809 = vsel %vm2163, %v6804, 0
        %6811 = vmatprep.subr.mxu0 0.0
        %6812 = vmatpush1.msra.mxu0 %v6806
        %6813 = vmatprep.subr.mxu0 0.0
        %6814 = vmatpush1.msra.mxu0 0.0
        %6815 = vmatprep.subr.mxu0 0.0
        %6816 = vmatpush1.msra.mxu0 0.0
        %6817 = vmatprep.subr.mxu0 0.0
        %6818 = vmatpush1.msra.mxu0 0.0
        %6819 = vmatprep.subr.mxu0 0.0
        %6820 = vmatpush1.msra.mxu0 0.0
        %6821 = vmatprep.subr.mxu0 0.0
        %6822 = vmatpush1.msra.mxu0 0.0
        %6823 = vmatprep.subr.mxu0 0.0
        %6824 = vmatpush1.msra.mxu0 0.0
        %6825 = vmatprep.subr.mxu0 0.0
        %6826 = vmatpush1.msra.mxu0 0.0
        %6827 = vmatprep.subr.mxu0 0.0
        %6828 = vmatpush1.msra.mxu0 0.0
        %6829 = vmatprep.subr.mxu0 0.0
        %6830 = vmatpush1.msra.mxu0 0.0
        %6831 = vmatprep.subr.mxu0 0.0
        %6832 = vmatpush1.msra.mxu0 0.0
        %6833 = vmatprep.subr.mxu0 0.0
        %6834 = vmatpush1.msra.mxu0 0.0
        %6835 = vmatprep.subr.mxu0 0.0
        %6836 = vmatpush1.msra.mxu0 0.0
        %6837 = vmatprep.subr.mxu0 0.0
        %6838 = vmatpush1.msra.mxu0 0.0
        %6839 = vmatprep.subr.mxu0 0.0
        %6840 = vmatpush1.msra.mxu0 0.0
        %6841 = vmatprep.subr.mxu0 0.0
        %6842 = vmatpush1.msra.mxu0 0.0
        %6843 = vmatprep.subr.mxu0 0.0
        %6844 = vmatpush1.msra.mxu0 0.0
        %6845 = vmatprep.subr.mxu0 0.0
        %6846 = vmatpush1.msra.mxu0 0.0
        %6847 = vmatprep.subr.mxu0 0.0
        %6848 = vmatpush1.msra.mxu0 0.0
        %6849 = vmatprep.subr.mxu0 0.0
        %6850 = vmatpush1.msra.mxu0 0.0
        %6851 = vmatprep.subr.mxu0 0.0
        %6852 = vmatpush1.msra.mxu0 0.0
        %6853 = vmatprep.subr.mxu0 0.0
        %6854 = vmatpush1.msra.mxu0 0.0
        %6855 = vmatprep.subr.mxu0 0.0
        %6856 = vmatpush1.msra.mxu0 0.0
        %6857 = vmatprep.subr.mxu0 0.0
        %6858 = vmatpush1.msra.mxu0 0.0
        %6859 = vmatprep.subr.mxu0 0.0
        %6860 = vmatpush1.msra.mxu0 0.0
        %6861 = vmatprep.subr.mxu0 0.0
        %6862 = vmatpush1.msra.mxu0 0.0
        %6863 = vmatprep.subr.mxu0 0.0
        %6864 = vmatpush1.msra.mxu0 0.0
        %6865 = vmatprep.subr.mxu0 0.0
        %6866 = vmatpush1.msra.mxu0 0.0
        %6867 = vmatprep.subr.mxu0 0.0
        %6868 = vmatpush1.msra.mxu0 0.0
        %6869 = vmatprep.subr.mxu0 0.0
        %6870 = vmatpush1.msra.mxu0 0.0
        %6871 = vmatprep.subr.mxu0 0.0
        %6872 = vmatpush1.msra.mxu0 0.0
        %6873 = vmatprep.subr.mxu0 0.0
        %6874 = vmatpush1.msra.mxu0 0.0
        %6875 = vmatprep.mubr.f32.mxu0 0.0
        %6876 = vmatmul.mubr.f32.gmra.mrb[0].mxu0 %v6809
        %v6877 = vpop.f32.mrb[0].mxu0
        %v6878 = vadd.f32 0.0, %v6877
        %v6879 = vpop.f32.mrb[0].mxu0
        %6880 = vdwg.mxu0
        %6881 = vrot.lane.b32.xlu0 %v6384, 104
        %v6882 = vpop.permute.xlu0 %6881
        %6883 = vrot.lane.b32.xlu0 %v6384, 72
        %v6884 = vpop.permute.xlu0 %6883
        %v6885 = vsel %vm2163, %v6882, 0
        %v6887 = vsel %vm2163, %v6884, 0
        %6889 = vmatprep.subr.mxu0 0.0
        %6890 = vmatpush1.xpose.msra.mxu0 %v6887
        %6891 = vmatprep.subr.mxu0 0.0
        %6892 = vmatpush1.xpose.msra.mxu0 0.0
        %6893 = vmatprep.subr.mxu0 0.0
        %6894 = vmatpush1.xpose.msra.mxu0 0.0
        %6895 = vmatprep.subr.mxu0 0.0
        %6896 = vmatpush1.xpose.msra.mxu0 0.0
        %6897 = vmatprep.subr.mxu0 0.0
        %6898 = vmatpush1.xpose.msra.mxu0 0.0
        %6899 = vmatprep.subr.mxu0 0.0
        %6900 = vmatpush1.xpose.msra.mxu0 0.0
        %6901 = vmatprep.subr.mxu0 0.0
        %6902 = vmatpush1.xpose.msra.mxu0 0.0
        %6903 = vmatprep.subr.mxu0 0.0
        %6904 = vmatpush1.xpose.msra.mxu0 0.0
        %6905 = vmatprep.subr.mxu0 0.0
        %6906 = vmatpush1.xpose.msra.mxu0 0.0
        %6907 = vmatprep.subr.mxu0 0.0
        %6908 = vmatpush1.xpose.msra.mxu0 0.0
        %6909 = vmatprep.subr.mxu0 0.0
        %6910 = vmatpush1.xpose.msra.mxu0 0.0
        %6911 = vmatprep.subr.mxu0 0.0
        %6912 = vmatpush1.xpose.msra.mxu0 0.0
        %6913 = vmatprep.subr.mxu0 0.0
        %6914 = vmatpush1.xpose.msra.mxu0 0.0
        %6915 = vmatprep.subr.mxu0 0.0
        %6916 = vmatpush1.xpose.msra.mxu0 0.0
        %6917 = vmatprep.subr.mxu0 0.0
        %6918 = vmatpush1.xpose.msra.mxu0 0.0
        %6919 = vmatprep.subr.mxu0 0.0
        %6920 = vmatpush1.xpose.msra.mxu0 0.0
        %6921 = vmatprep.subr.mxu0 0.0
        %6922 = vmatpush1.xpose.msra.mxu0 0.0
        %6923 = vmatprep.subr.mxu0 0.0
        %6924 = vmatpush1.xpose.msra.mxu0 0.0
        %6925 = vmatprep.subr.mxu0 0.0
        %6926 = vmatpush1.xpose.msra.mxu0 0.0
        %6927 = vmatprep.subr.mxu0 0.0
        %6928 = vmatpush1.xpose.msra.mxu0 0.0
        %6929 = vmatprep.subr.mxu0 0.0
        %6930 = vmatpush1.xpose.msra.mxu0 0.0
        %6931 = vmatprep.subr.mxu0 0.0
        %6932 = vmatpush1.xpose.msra.mxu0 0.0
        %6933 = vmatprep.subr.mxu0 0.0
        %6934 = vmatpush1.xpose.msra.mxu0 0.0
        %6935 = vmatprep.subr.mxu0 0.0
        %6936 = vmatpush1.xpose.msra.mxu0 0.0
        %6937 = vmatprep.subr.mxu0 0.0
        %6938 = vmatpush1.xpose.msra.mxu0 0.0
        %6939 = vmatprep.subr.mxu0 0.0
        %6940 = vmatpush1.xpose.msra.mxu0 0.0
        %6941 = vmatprep.subr.mxu0 0.0
        %6942 = vmatpush1.xpose.msra.mxu0 0.0
        %6943 = vmatprep.subr.mxu0 0.0
        %6944 = vmatpush1.xpose.msra.mxu0 0.0
        %6945 = vmatprep.subr.mxu0 0.0
        %6946 = vmatpush1.xpose.msra.mxu0 0.0
        %6947 = vmatprep.subr.mxu0 0.0
        %6948 = vmatpush1.xpose.msra.mxu0 0.0
        %6949 = vmatprep.subr.mxu0 0.0
        %6950 = vmatpush1.xpose.msra.mxu0 0.0
        %6951 = vmatprep.subr.mxu0 0.0
        %6952 = vmatpush1.xpose.msra.mxu0 0.0
        %6953 = vmatprep.mubr.f32.mxu0 0.0
        %6954 = vmatmul.mubr.f32.gmra.mrb[0].mxu0 %v6885
        %v6955 = vpop.f32.mrb[0].mxu0
        %v6956 = vadd.f32 0.0, %v6955
        %v6957 = vpop.f32.mrb[0].mxu0
        %6958 = vdwg.mxu0
        %v6959 = vsel %vm2163, %v6956, -inf
        %6960 = vmax.xlane.f32.xlu0 %v6959
        %v6961 = vpop.xlane.xlu0 %6960
        %v6962 = vsub.f32 %v6956, %v6961
        %v6963 = vmul.f32 %v6962, 1.442695
        %v6964 = vpow.pop %v6963
        %v6965 = vsel %vm2163, %v6964, 0.0
        %6966 = vadd.xlane.f32.xlu0 %v6965
        %v6967 = vpop.xlane.xlu0 %6966
        %v6968 = vrcp.pop %v6967
        %v6969 = vmul.f32 %v6964, %v6968
        %6970 = vrot.lane.b32.xlu0 %v6384, 40
        %v6971 = vpop.permute.xlu0 %6970
        %v6974 = vsel %vm2163, %v6969, 0
        %6976 = vmatprep.subr.mxu0 0.0
        %6977 = vmatpush1.msra.mxu0 %v6971
        %6978 = vmatprep.subr.mxu0 0.0
        %6979 = vmatpush1.msra.mxu0 0.0
        %6980 = vmatprep.subr.mxu0 0.0
        %6981 = vmatpush1.msra.mxu0 0.0
        %6982 = vmatprep.subr.mxu0 0.0
        %6983 = vmatpush1.msra.mxu0 0.0
        %6984 = vmatprep.subr.mxu0 0.0
        %6985 = vmatpush1.msra.mxu0 0.0
        %6986 = vmatprep.subr.mxu0 0.0
        %6987 = vmatpush1.msra.mxu0 0.0
        %6988 = vmatprep.subr.mxu0 0.0
        %6989 = vmatpush1.msra.mxu0 0.0
        %6990 = vmatprep.subr.mxu0 0.0
        %6991 = vmatpush1.msra.mxu0 0.0
        %6992 = vmatprep.subr.mxu0 0.0
        %6993 = vmatpush1.msra.mxu0 0.0
        %6994 = vmatprep.subr.mxu0 0.0
        %6995 = vmatpush1.msra.mxu0 0.0
        %6996 = vmatprep.subr.mxu0 0.0
        %6997 = vmatpush1.msra.mxu0 0.0
        %6998 = vmatprep.subr.mxu0 0.0
        %6999 = vmatpush1.msra.mxu0 0.0
        %7000 = vmatprep.subr.mxu0 0.0
        %7001 = vmatpush1.msra.mxu0 0.0
        %7002 = vmatprep.subr.mxu0 0.0
        %7003 = vmatpush1.msra.mxu0 0.0
        %7004 = vmatprep.subr.mxu0 0.0
        %7005 = vmatpush1.msra.mxu0 0.0
        %7006 = vmatprep.subr.mxu0 0.0
        %7007 = vmatpush1.msra.mxu0 0.0
        %7008 = vmatprep.subr.mxu0 0.0
        %7009 = vmatpush1.msra.mxu0 0.0
        %7010 = vmatprep.subr.mxu0 0.0
        %7011 = vmatpush1.msra.mxu0 0.0
        %7012 = vmatprep.subr.mxu0 0.0
        %7013 = vmatpush1.msra.mxu0 0.0
        %7014 = vmatprep.subr.mxu0 0.0
        %7015 = vmatpush1.msra.mxu0 0.0
        %7016 = vmatprep.subr.mxu0 0.0
        %7017 = vmatpush1.msra.mxu0 0.0
        %7018 = vmatprep.subr.mxu0 0.0
        %7019 = vmatpush1.msra.mxu0 0.0
        %7020 = vmatprep.subr.mxu0 0.0
        %7021 = vmatpush1.msra.mxu0 0.0
        %7022 = vmatprep.subr.mxu0 0.0
        %7023 = vmatpush1.msra.mxu0 0.0
        %7024 = vmatprep.subr.mxu0 0.0
        %7025 = vmatpush1.msra.mxu0 0.0
        %7026 = vmatprep.subr.mxu0 0.0
        %7027 = vmatpush1.msra.mxu0 0.0
        %7028 = vmatprep.subr.mxu0 0.0
        %7029 = vmatpush1.msra.mxu0 0.0
        %7030 = vmatprep.subr.mxu0 0.0
        %7031 = vmatpush1.msra.mxu0 0.0
        %7032 = vmatprep.subr.mxu0 0.0
        %7033 = vmatpush1.msra.mxu0 0.0
        %7034 = vmatprep.subr.mxu0 0.0
        %7035 = vmatpush1.msra.mxu0 0.0
        %7036 = vmatprep.subr.mxu0 0.0
        %7037 = vmatpush1.msra.mxu0 0.0
        %7038 = vmatprep.subr.mxu0 0.0
        %7039 = vmatpush1.msra.mxu0 0.0
        %7040 = vmatprep.mubr.f32.mxu0 0.0
        %7041 = vmatmul.mubr.f32.gmra.mrb[0].mxu0 %v6974
        %v7042 = vpop.f32.mrb[0].mxu0
        %v7043 = vadd.f32 0.0, %v7042
        %v7044 = vpop.f32.mrb[0].mxu0
        %7045 = vdwg.mxu0
        %7047 = vrot.lane.b32.xlu0 %v6713, 8
        %v7048 = vpop.permute.xlu0 %7047
        %7051 = vrot.lane.b32.xlu0 %v6878, 16
        %v7052 = vpop.permute.xlu0 %7051
        %7055 = vrot.lane.b32.xlu0 %v7043, 24
        %v7056 = vpop.permute.xlu0 %7055
        %v7058 = vsel %vm2163, %v6548, %v7048
        %v7059 = vsel %vm1772, %v7058, %v7052
        %v7060 = vsel %vm2834, %v7059, %v7056
        %s7061 = scalar_lea.vmem %s47, 32
        %v7062 = vld [vmem:[%s7061] sm:$0xff]
        %v7063 = vld [vmem:[%s7061 + $0x8] sm:$0xff]
        %v7064 = vld [vmem:[%s7061 + $0x10] sm:$0xff]
        %v7065 = vld [vmem:[%s7061 + $0x18] sm:$0xff]
        %s7066 = scalar_lea.vmem [#allocation17], 1
        %v7067 = vld [vmem:[%s7066] sm:$0x1]
        %v7069 = vlaneseq
        %v7070 = vshrl.u32 %v7069, 7
        %v7071 = vsub.s32 0, %v7070
        %v7072 = vrot.slane %v7067, %v7071
        %v7075 = vsel %vm2086, %v7060, 0
        %7077 = vmatprep.subr.mxu0 0.0
        %7078 = vmatpush1.msra.mxu0 %v7062
        %7079 = vmatprep.subr.mxu0 0.0
        %7080 = vmatpush1.msra.mxu0 %v7063
        %7081 = vmatprep.subr.mxu0 0.0
        %7082 = vmatpush1.msra.mxu0 %v7064
        %7083 = vmatprep.subr.mxu0 0.0
        %7084 = vmatpush1.msra.mxu0 %v7065
        %7085 = vmatprep.subr.mxu0 0.0
        %7086 = vmatpush1.msra.mxu0 0.0
        %7087 = vmatprep.subr.mxu0 0.0
        %7088 = vmatpush1.msra.mxu0 0.0
        %7089 = vmatprep.subr.mxu0 0.0
        %7090 = vmatpush1.msra.mxu0 0.0
        %7091 = vmatprep.subr.mxu0 0.0
        %7092 = vmatpush1.msra.mxu0 0.0
        %7093 = vmatprep.subr.mxu0 0.0
        %7094 = vmatpush1.msra.mxu0 0.0
        %7095 = vmatprep.subr.mxu0 0.0
        %7096 = vmatpush1.msra.mxu0 0.0
        %7097 = vmatprep.subr.mxu0 0.0
        %7098 = vmatpush1.msra.mxu0 0.0
        %7099 = vmatprep.subr.mxu0 0.0
        %7100 = vmatpush1.msra.mxu0 0.0
        %7101 = vmatprep.subr.mxu0 0.0
        %7102 = vmatpush1.msra.mxu0 0.0
        %7103 = vmatprep.subr.mxu0 0.0
        %7104 = vmatpush1.msra.mxu0 0.0
        %7105 = vmatprep.subr.mxu0 0.0
        %7106 = vmatpush1.msra.mxu0 0.0
        %7107 = vmatprep.subr.mxu0 0.0
        %7108 = vmatpush1.msra.mxu0 0.0
        %7109 = vmatprep.subr.mxu0 0.0
        %7110 = vmatpush1.msra.mxu0 0.0
        %7111 = vmatprep.subr.mxu0 0.0
        %7112 = vmatpush1.msra.mxu0 0.0
        %7113 = vmatprep.subr.mxu0 0.0
        %7114 = vmatpush1.msra.mxu0 0.0
        %7115 = vmatprep.subr.mxu0 0.0
        %7116 = vmatpush1.msra.mxu0 0.0
        %7117 = vmatprep.subr.mxu0 0.0
        %7118 = vmatpush1.msra.mxu0 0.0
        %7119 = vmatprep.subr.mxu0 0.0
        %7120 = vmatpush1.msra.mxu0 0.0
        %7121 = vmatprep.subr.mxu0 0.0
        %7122 = vmatpush1.msra.mxu0 0.0
        %7123 = vmatprep.subr.mxu0 0.0
        %7124 = vmatpush1.msra.mxu0 0.0
        %7125 = vmatprep.subr.mxu0 0.0
        %7126 = vmatpush1.msra.mxu0 0.0
        %7127 = vmatprep.subr.mxu0 0.0
        %7128 = vmatpush1.msra.mxu0 0.0
        %7129 = vmatprep.subr.mxu0 0.0
        %7130 = vmatpush1.msra.mxu0 0.0
        %7131 = vmatprep.subr.mxu0 0.0
        %7132 = vmatpush1.msra.mxu0 0.0
        %7133 = vmatprep.subr.mxu0 0.0
        %7134 = vmatpush1.msra.mxu0 0.0
        %7135 = vmatprep.subr.mxu0 0.0
        %7136 = vmatpush1.msra.mxu0 0.0
        %7137 = vmatprep.subr.mxu0 0.0
        %7138 = vmatpush1.msra.mxu0 0.0
        %7139 = vmatprep.subr.mxu0 0.0
        %7140 = vmatpush1.msra.mxu0 0.0
        %7141 = vmatprep.mubr.f32.mxu0 0.0
        %7142 = vmatmul.mubr.f32.gmra.mrb[0].mxu0 %v7075
        %v7143 = vpop.f32.mrb[0].mxu0
        %v7144 = vadd.f32 %v7072, %v7143
        %v7145 = vpop.f32.mrb[0].mxu0
        %7146 = vdwg.mxu0
        %v7147 = vadd.f32 %v6300, %v7144
        %s7148 = scalar_lea.vmem [#allocation19], 1
        %v7149 = vld [vmem:[%s7148] sm:$0x1]
        %s7150 = scalar_lea.vmem [#allocation20], 1
        %v7151 = vld [vmem:[%s7150] sm:$0x1]
        %v7152 = vsel %vm2086, %v7147, 0.0
        %7153 = vadd.xlane.f32.xlu0 %v7152
        %v7154 = vpop.xlane.xlu0 %7153
        %v7155 = vmul.f32 %v7154, %v2926
        %v7156 = vsub.f32 %v7147, %v7155
        %v7157 = vmul.f32 %v7156, %v7156
        %v7158 = vsel %vm2086, %v7157, 0.0
        %7159 = vadd.xlane.f32.xlu0 %v7158
        %v7160 = vpop.xlane.xlu0 %7159
        %v7161 = vmul.f32 %v7160, %v2926
        %v7162 = vadd.f32 %v7161, 1e-05
        %v7163 = vrsqrt.pop %v7162
        %v7164 = vmul.f32 %v7156, %v7163
        %v7166 = vlaneseq
        %v7167 = vshrl.u32 %v7166, 7
        %v7168 = vsub.s32 0, %v7167
        %v7169 = vrot.slane %v7149, %v7168
        %v7171 = vmul.f32 %v7164, %v7169
        %v7173 = vlaneseq
        %v7174 = vshrl.u32 %v7173, 7
        %v7175 = vsub.s32 0, %v7174
        %v7176 = vrot.slane %v7151, %v7175
        %v7178 = vadd.f32 %v7171, %v7176
        %s7179 = scalar_lea.vmem %s55, 32
        %v7180 = vld [vmem:[%s7179] sm:$0xff]
        %v7181 = vld [vmem:[%s7179 + $0x8] sm:$0xff]
        %v7182 = vld [vmem:[%s7179 + $0x10] sm:$0xff]
        %v7183 = vld [vmem:[%s7179 + $0x18] sm:$0xff]
        %s7184 = scalar_lea.vmem [#allocation22], 1
        %v7185 = vld [vmem:[%s7184] sm:$0x1]
        %v7187 = vlaneseq
        %v7188 = vshrl.u32 %v7187, 7
        %v7189 = vsub.s32 0, %v7188
        %v7190 = vrot.slane %v7185, %v7189
        %v7193 = vsel %vm2086, %v7178, 0
        %7195 = vmatprep.subr.mxu0 0.0
        %7196 = vmatpush1.msra.mxu0 %v7180
        %7197 = vmatprep.subr.mxu0 0.0
        %7198 = vmatpush1.msra.mxu0 %v7181
        %7199 = vmatprep.subr.mxu0 0.0
        %7200 = vmatpush1.msra.mxu0 %v7182
        %7201 = vmatprep.subr.mxu0 0.0
        %7202 = vmatpush1.msra.mxu0 %v7183
        %7203 = vmatprep.subr.mxu0 0.0
        %7204 = vmatpush1.msra.mxu0 0.0
        %7205 = vmatprep.subr.mxu0 0.0
        %7206 = vmatpush1.msra.mxu0 0.0
        %7207 = vmatprep.subr.mxu0 0.0
        %7208 = vmatpush1.msra.mxu0 0.0
        %7209 = vmatprep.subr.mxu0 0.0
        %7210 = vmatpush1.msra.mxu0 0.0
        %7211 = vmatprep.subr.mxu0 0.0
        %7212 = vmatpush1.msra.mxu0 0.0
        %7213 = vmatprep.subr.mxu0 0.0
        %7214 = vmatpush1.msra.mxu0 0.0
        %7215 = vmatprep.subr.mxu0 0.0
        %7216 = vmatpush1.msra.mxu0 0.0
        %7217 = vmatprep.subr.mxu0 0.0
        %7218 = vmatpush1.msra.mxu0 0.0
        %7219 = vmatprep.subr.mxu0 0.0
        %7220 = vmatpush1.msra.mxu0 0.0
        %7221 = vmatprep.subr.mxu0 0.0
        %7222 = vmatpush1.msra.mxu0 0.0
        %7223 = vmatprep.subr.mxu0 0.0
        %7224 = vmatpush1.msra.mxu0 0.0
        %7225 = vmatprep.subr.mxu0 0.0
        %7226 = vmatpush1.msra.mxu0 0.0
        %7227 = vmatprep.subr.mxu0 0.0
        %7228 = vmatpush1.msra.mxu0 0.0
        %7229 = vmatprep.subr.mxu0 0.0
        %7230 = vmatpush1.msra.mxu0 0.0
        %7231 = vmatprep.subr.mxu0 0.0
        %7232 = vmatpush1.msra.mxu0 0.0
        %7233 = vmatprep.subr.mxu0 0.0
        %7234 = vmatpush1.msra.mxu0 0.0
        %7235 = vmatprep.subr.mxu0 0.0
        %7236 = vmatpush1.msra.mxu0 0.0
        %7237 = vmatprep.subr.mxu0 0.0
        %7238 = vmatpush1.msra.mxu0 0.0
        %7239 = vmatprep.subr.mxu0 0.0
        %7240 = vmatpush1.msra.mxu0 0.0
        %7241 = vmatprep.subr.mxu0 0.0
        %7242 = vmatpush1.msra.mxu0 0.0
        %7243 = vmatprep.subr.mxu0 0.0
        %7244 = vmatpush1.msra.mxu0 0.0
        %7245 = vmatprep.subr.mxu0 0.0
        %7246 = vmatpush1.msra.mxu0 0.0
        %7247 = vmatprep.subr.mxu0 0.0
        %7248 = vmatpush1.msra.mxu0 0.0
        %7249 = vmatprep.subr.mxu0 0.0
        %7250 = vmatpush1.msra.mxu0 0.0
        %7251 = vmatprep.subr.mxu0 0.0
        %7252 = vmatpush1.msra.mxu0 0.0
        %7253 = vmatprep.subr.mxu0 0.0
        %7254 = vmatpush1.msra.mxu0 0.0
        %7255 = vmatprep.subr.mxu0 0.0
        %7256 = vmatpush1.msra.mxu0 0.0
        %7257 = vmatprep.subr.mxu0 0.0
        %7258 = vmatpush1.msra.mxu0 0.0
        %7259 = vmatprep.mubr.f32.mxu0 0.0
        %7260 = vmatmul.mubr.f32.gmra.mrb[0].mxu0 %v7193
        %v7261 = vpop.f32.mrb[0].mxu0
        %v7262 = vadd.f32 %v7190, %v7261
        %v7263 = vpop.f32.mrb[0].mxu0
        %7264 = vdwg.mxu0
        %s7265 = scalar_lea.vmem %s59, 32
        %v7266 = vld [vmem:[%s7265] sm:$0xff]
        %v7267 = vld [vmem:[%s7265 + $0x8] sm:$0xff]
        %v7268 = vld [vmem:[%s7265 + $0x10] sm:$0xff]
        %v7269 = vld [vmem:[%s7265 + $0x18] sm:$0xff]
        %s7270 = scalar_lea.vmem [#allocation23], 1
        %v7271 = vld [vmem:[%s7270] sm:$0x1]
        %v7273 = vlaneseq
        %v7274 = vshrl.u32 %v7273, 7
        %v7275 = vsub.s32 0, %v7274
        %v7276 = vrot.slane %v7271, %v7275
        %7278 = vmatprep.subr.mxu0 0.0
        %7279 = vmatpush1.msra.mxu0 %v7266
        %7280 = vmatprep.subr.mxu0 0.0
        %7281 = vmatpush1.msra.mxu0 %v7267
        %7282 = vmatprep.subr.mxu0 0.0
        %7283 = vmatpush1.msra.mxu0 %v7268
        %7284 = vmatprep.subr.mxu0 0.0
        %7285 = vmatpush1.msra.mxu0 %v7269
        %7286 = vmatprep.subr.mxu0 0.0
        %7287 = vmatpush1.msra.mxu0 0.0
        %7288 = vmatprep.subr.mxu0 0.0
        %7289 = vmatpush1.msra.mxu0 0.0
        %7290 = vmatprep.subr.mxu0 0.0
        %7291 = vmatpush1.msra.mxu0 0.0
        %7292 = vmatprep.subr.mxu0 0.0
        %7293 = vmatpush1.msra.mxu0 0.0
        %7294 = vmatprep.subr.mxu0 0.0
        %7295 = vmatpush1.msra.mxu0 0.0
        %7296 = vmatprep.subr.mxu0 0.0
        %7297 = vmatpush1.msra.mxu0 0.0
        %7298 = vmatprep.subr.mxu0 0.0
        %7299 = vmatpush1.msra.mxu0 0.0
        %7300 = vmatprep.subr.mxu0 0.0
        %7301 = vmatpush1.msra.mxu0 0.0
        %7302 = vmatprep.subr.mxu0 0.0
        %7303 = vmatpush1.msra.mxu0 0.0
        %7304 = vmatprep.subr.mxu0 0.0
        %7305 = vmatpush1.msra.mxu0 0.0
        %7306 = vmatprep.subr.mxu0 0.0
        %7307 = vmatpush1.msra.mxu0 0.0
        %7308 = vmatprep.subr.mxu0 0.0
        %7309 = vmatpush1.msra.mxu0 0.0
        %7310 = vmatprep.subr.mxu0 0.0
        %7311 = vmatpush1.msra.mxu0 0.0
        %7312 = vmatprep.subr.mxu0 0.0
        %7313 = vmatpush1.msra.mxu0 0.0
        %7314 = vmatprep.subr.mxu0 0.0
        %7315 = vmatpush1.msra.mxu0 0.0
        %7316 = vmatprep.subr.mxu0 0.0
        %7317 = vmatpush1.msra.mxu0 0.0
        %7318 = vmatprep.subr.mxu0 0.0
        %7319 = vmatpush1.msra.mxu0 0.0
        %7320 = vmatprep.subr.mxu0 0.0
        %7321 = vmatpush1.msra.mxu0 0.0
        %7322 = vmatprep.subr.mxu0 0.0
        %7323 = vmatpush1.msra.mxu0 0.0
        %7324 = vmatprep.subr.mxu0 0.0
        %7325 = vmatpush1.msra.mxu0 0.0
        %7326 = vmatprep.subr.mxu0 0.0
        %7327 = vmatpush1.msra.mxu0 0.0
        %7328 = vmatprep.subr.mxu0 0.0
        %7329 = vmatpush1.msra.mxu0 0.0
        %7330 = vmatprep.subr.mxu0 0.0
        %7331 = vmatpush1.msra.mxu0 0.0
        %7332 = vmatprep.subr.mxu0 0.0
        %7333 = vmatpush1.msra.mxu0 0.0
        %7334 = vmatprep.subr.mxu0 0.0
        %7335 = vmatpush1.msra.mxu0 0.0
        %7336 = vmatprep.subr.mxu0 0.0
        %7337 = vmatpush1.msra.mxu0 0.0
        %7338 = vmatprep.subr.mxu0 0.0
        %7339 = vmatpush1.msra.mxu0 0.0
        %7340 = vmatprep.subr.mxu0 0.0
        %7341 = vmatpush1.msra.mxu0 0.0
        %7342 = vmatprep.mubr.f32.mxu0 0.0
        %7343 = vmatmul.mubr.f32.gmra.mrb[0].mxu0 %v5239
        %v7344 = vpop.f32.mrb[0].mxu0
        %v7345 = vadd.f32 %v7276, %v7344
        %v7346 = vpop.f32.mrb[0].mxu0
        %7347 = vdwg.mxu0
        %v7349 = vsel %vm2163, %v7262, 0
        %v7352 = vsel %vm2163, %v7345, 0
        %7354 = vmatprep.subr.mxu0 0.0
        %7355 = vmatpush1.xpose.msra.mxu0 %v7352
        %7356 = vmatprep.subr.mxu0 0.0
        %7357 = vmatpush1.xpose.msra.mxu0 0.0
        %7358 = vmatprep.subr.mxu0 0.0
        %7359 = vmatpush1.xpose.msra.mxu0 0.0
        %7360 = vmatprep.subr.mxu0 0.0
        %7361 = vmatpush1.xpose.msra.mxu0 0.0
        %7362 = vmatprep.subr.mxu0 0.0
        %7363 = vmatpush1.xpose.msra.mxu0 0.0
        %7364 = vmatprep.subr.mxu0 0.0
        %7365 = vmatpush1.xpose.msra.mxu0 0.0
        %7366 = vmatprep.subr.mxu0 0.0
        %7367 = vmatpush1.xpose.msra.mxu0 0.0
        %7368 = vmatprep.subr.mxu0 0.0
        %7369 = vmatpush1.xpose.msra.mxu0 0.0
        %7370 = vmatprep.subr.mxu0 0.0
        %7371 = vmatpush1.xpose.msra.mxu0 0.0
        %7372 = vmatprep.subr.mxu0 0.0
        %7373 = vmatpush1.xpose.msra.mxu0 0.0
        %7374 = vmatprep.subr.mxu0 0.0
        %7375 = vmatpush1.xpose.msra.mxu0 0.0
        %7376 = vmatprep.subr.mxu0 0.0
        %7377 = vmatpush1.xpose.msra.mxu0 0.0
        %7378 = vmatprep.subr.mxu0 0.0
        %7379 = vmatpush1.xpose.msra.mxu0 0.0
        %7380 = vmatprep.subr.mxu0 0.0
        %7381 = vmatpush1.xpose.msra.mxu0 0.0
        %7382 = vmatprep.subr.mxu0 0.0
        %7383 = vmatpush1.xpose.msra.mxu0 0.0
        %7384 = vmatprep.subr.mxu0 0.0
        %7385 = vmatpush1.xpose.msra.mxu0 0.0
        %7386 = vmatprep.subr.mxu0 0.0
        %7387 = vmatpush1.xpose.msra.mxu0 0.0
        %7388 = vmatprep.subr.mxu0 0.0
        %7389 = vmatpush1.xpose.msra.mxu0 0.0
        %7390 = vmatprep.subr.mxu0 0.0
        %7391 = vmatpush1.xpose.msra.mxu0 0.0
        %7392 = vmatprep.subr.mxu0 0.0
        %7393 = vmatpush1.xpose.msra.mxu0 0.0
        %7394 = vmatprep.subr.mxu0 0.0
        %7395 = vmatpush1.xpose.msra.mxu0 0.0
        %7396 = vmatprep.subr.mxu0 0.0
        %7397 = vmatpush1.xpose.msra.mxu0 0.0
        %7398 = vmatprep.subr.mxu0 0.0
        %7399 = vmatpush1.xpose.msra.mxu0 0.0
        %7400 = vmatprep.subr.mxu0 0.0
        %7401 = vmatpush1.xpose.msra.mxu0 0.0
        %7402 = vmatprep.subr.mxu0 0.0
        %7403 = vmatpush1.xpose.msra.mxu0 0.0
        %7404 = vmatprep.subr.mxu0 0.0
        %7405 = vmatpush1.xpose.msra.mxu0 0.0
        %7406 = vmatprep.subr.mxu0 0.0
        %7407 = vmatpush1.xpose.msra.mxu0 0.0
        %7408 = vmatprep.subr.mxu0 0.0
        %7409 = vmatpush1.xpose.msra.mxu0 0.0
        %7410 = vmatprep.subr.mxu0 0.0
        %7411 = vmatpush1.xpose.msra.mxu0 0.0
        %7412 = vmatprep.subr.mxu0 0.0
        %7413 = vmatpush1.xpose.msra.mxu0 0.0
        %7414 = vmatprep.subr.mxu0 0.0
        %7415 = vmatpush1.xpose.msra.mxu0 0.0
        %7416 = vmatprep.subr.mxu0 0.0
        %7417 = vmatpush1.xpose.msra.mxu0 0.0
        %7418 = vmatprep.mubr.f32.mxu0 0.0
        %7419 = vmatmul.mubr.f32.gmra.mrb[0].mxu0 %v7349
        %v7420 = vpop.f32.mrb[0].mxu0
        %v7421 = vadd.f32 0.0, %v7420
        %v7422 = vpop.f32.mrb[0].mxu0
        %7423 = vdwg.mxu0
        %v7424 = vsel %vm2163, %v7421, -inf
        %7425 = vmax.xlane.f32.xlu0 %v7424
        %v7426 = vpop.xlane.xlu0 %7425
        %v7427 = vsub.f32 %v7421, %v7426
        %v7428 = vmul.f32 %v7427, 1.442695
        %v7429 = vpow.pop %v7428
        %v7430 = vsel %vm2163, %v7429, 0.0
        %7431 = vadd.xlane.f32.xlu0 %v7430
        %v7432 = vpop.xlane.xlu0 %7431
        %v7433 = vrcp.pop %v7432
        %v7434 = vmul.f32 %v7429, %v7433
        %7435 = vrot.lane.b32.xlu0 %v7345, 96
        %v7436 = vpop.permute.xlu0 %7435
        %v7439 = vsel %vm2163, %v7434, 0
        %7441 = vmatprep.subr.mxu0 0.0
        %7442 = vmatpush1.msra.mxu0 %v7436
        %7443 = vmatprep.subr.mxu0 0.0
        %7444 = vmatpush1.msra.mxu0 0.0
        %7445 = vmatprep.subr.mxu0 0.0
        %7446 = vmatpush1.msra.mxu0 0.0
        %7447 = vmatprep.subr.mxu0 0.0
        %7448 = vmatpush1.msra.mxu0 0.0
        %7449 = vmatprep.subr.mxu0 0.0
        %7450 = vmatpush1.msra.mxu0 0.0
        %7451 = vmatprep.subr.mxu0 0.0
        %7452 = vmatpush1.msra.mxu0 0.0
        %7453 = vmatprep.subr.mxu0 0.0
        %7454 = vmatpush1.msra.mxu0 0.0
        %7455 = vmatprep.subr.mxu0 0.0
        %7456 = vmatpush1.msra.mxu0 0.0
        %7457 = vmatprep.subr.mxu0 0.0
        %7458 = vmatpush1.msra.mxu0 0.0
        %7459 = vmatprep.subr.mxu0 0.0
        %7460 = vmatpush1.msra.mxu0 0.0
        %7461 = vmatprep.subr.mxu0 0.0
        %7462 = vmatpush1.msra.mxu0 0.0
        %7463 = vmatprep.subr.mxu0 0.0
        %7464 = vmatpush1.msra.mxu0 0.0
        %7465 = vmatprep.subr.mxu0 0.0
        %7466 = vmatpush1.msra.mxu0 0.0
        %7467 = vmatprep.subr.mxu0 0.0
        %7468 = vmatpush1.msra.mxu0 0.0
        %7469 = vmatprep.subr.mxu0 0.0
        %7470 = vmatpush1.msra.mxu0 0.0
        %7471 = vmatprep.subr.mxu0 0.0
        %7472 = vmatpush1.msra.mxu0 0.0
        %7473 = vmatprep.subr.mxu0 0.0
        %7474 = vmatpush1.msra.mxu0 0.0
        %7475 = vmatprep.subr.mxu0 0.0
        %7476 = vmatpush1.msra.mxu0 0.0
        %7477 = vmatprep.subr.mxu0 0.0
        %7478 = vmatpush1.msra.mxu0 0.0
        %7479 = vmatprep.subr.mxu0 0.0
        %7480 = vmatpush1.msra.mxu0 0.0
        %7481 = vmatprep.subr.mxu0 0.0
        %7482 = vmatpush1.msra.mxu0 0.0
        %7483 = vmatprep.subr.mxu0 0.0
        %7484 = vmatpush1.msra.mxu0 0.0
        %7485 = vmatprep.subr.mxu0 0.0
        %7486 = vmatpush1.msra.mxu0 0.0
        %7487 = vmatprep.subr.mxu0 0.0
        %7488 = vmatpush1.msra.mxu0 0.0
        %7489 = vmatprep.subr.mxu0 0.0
        %7490 = vmatpush1.msra.mxu0 0.0
        %7491 = vmatprep.subr.mxu0 0.0
        %7492 = vmatpush1.msra.mxu0 0.0
        %7493 = vmatprep.subr.mxu0 0.0
        %7494 = vmatpush1.msra.mxu0 0.0
        %7495 = vmatprep.subr.mxu0 0.0
        %7496 = vmatpush1.msra.mxu0 0.0
        %7497 = vmatprep.subr.mxu0 0.0
        %7498 = vmatpush1.msra.mxu0 0.0
        %7499 = vmatprep.subr.mxu0 0.0
        %7500 = vmatpush1.msra.mxu0 0.0
        %7501 = vmatprep.subr.mxu0 0.0
        %7502 = vmatpush1.msra.mxu0 0.0
        %7503 = vmatprep.subr.mxu0 0.0
        %7504 = vmatpush1.msra.mxu0 0.0
        %7505 = vmatprep.mubr.f32.mxu0 0.0
        %7506 = vmatmul.mubr.f32.gmra.mrb[0].mxu0 %v7439
        %v7507 = vpop.f32.mrb[0].mxu0
        %v7508 = vadd.f32 0.0, %v7507
        %v7509 = vpop.f32.mrb[0].mxu0
        %7510 = vdwg.mxu0
        %7511 = vrot.lane.b32.xlu0 %v7262, 120
        %v7512 = vpop.permute.xlu0 %7511
        %7513 = vrot.lane.b32.xlu0 %v7345, 120
        %v7514 = vpop.permute.xlu0 %7513
        %v7515 = vsel %vm2163, %v7512, 0
        %v7517 = vsel %vm2163, %v7514, 0
        %7519 = vmatprep.subr.mxu0 0.0
        %7520 = vmatpush1.xpose.msra.mxu0 %v7517
        %7521 = vmatprep.subr.mxu0 0.0
        %7522 = vmatpush1.xpose.msra.mxu0 0.0
        %7523 = vmatprep.subr.mxu0 0.0
        %7524 = vmatpush1.xpose.msra.mxu0 0.0
        %7525 = vmatprep.subr.mxu0 0.0
        %7526 = vmatpush1.xpose.msra.mxu0 0.0
        %7527 = vmatprep.subr.mxu0 0.0
        %7528 = vmatpush1.xpose.msra.mxu0 0.0
        %7529 = vmatprep.subr.mxu0 0.0
        %7530 = vmatpush1.xpose.msra.mxu0 0.0
        %7531 = vmatprep.subr.mxu0 0.0
        %7532 = vmatpush1.xpose.msra.mxu0 0.0
        %7533 = vmatprep.subr.mxu0 0.0
        %7534 = vmatpush1.xpose.msra.mxu0 0.0
        %7535 = vmatprep.subr.mxu0 0.0
        %7536 = vmatpush1.xpose.msra.mxu0 0.0
        %7537 = vmatprep.subr.mxu0 0.0
        %7538 = vmatpush1.xpose.msra.mxu0 0.0
        %7539 = vmatprep.subr.mxu0 0.0
        %7540 = vmatpush1.xpose.msra.mxu0 0.0
        %7541 = vmatprep.subr.mxu0 0.0
        %7542 = vmatpush1.xpose.msra.mxu0 0.0
        %7543 = vmatprep.subr.mxu0 0.0
        %7544 = vmatpush1.xpose.msra.mxu0 0.0
        %7545 = vmatprep.subr.mxu0 0.0
        %7546 = vmatpush1.xpose.msra.mxu0 0.0
        %7547 = vmatprep.subr.mxu0 0.0
        %7548 = vmatpush1.xpose.msra.mxu0 0.0
        %7549 = vmatprep.subr.mxu0 0.0
        %7550 = vmatpush1.xpose.msra.mxu0 0.0
        %7551 = vmatprep.subr.mxu0 0.0
        %7552 = vmatpush1.xpose.msra.mxu0 0.0
        %7553 = vmatprep.subr.mxu0 0.0
        %7554 = vmatpush1.xpose.msra.mxu0 0.0
        %7555 = vmatprep.subr.mxu0 0.0
        %7556 = vmatpush1.xpose.msra.mxu0 0.0
        %7557 = vmatprep.subr.mxu0 0.0
        %7558 = vmatpush1.xpose.msra.mxu0 0.0
        %7559 = vmatprep.subr.mxu0 0.0
        %7560 = vmatpush1.xpose.msra.mxu0 0.0
        %7561 = vmatprep.subr.mxu0 0.0
        %7562 = vmatpush1.xpose.msra.mxu0 0.0
        %7563 = vmatprep.subr.mxu0 0.0
        %7564 = vmatpush1.xpose.msra.mxu0 0.0
        %7565 = vmatprep.subr.mxu0 0.0
        %7566 = vmatpush1.xpose.msra.mxu0 0.0
        %7567 = vmatprep.subr.mxu0 0.0
        %7568 = vmatpush1.xpose.msra.mxu0 0.0
        %7569 = vmatprep.subr.mxu0 0.0
        %7570 = vmatpush1.xpose.msra.mxu0 0.0
        %7571 = vmatprep.subr.mxu0 0.0
        %7572 = vmatpush1.xpose.msra.mxu0 0.0
        %7573 = vmatprep.subr.mxu0 0.0
        %7574 = vmatpush1.xpose.msra.mxu0 0.0
        %7575 = vmatprep.subr.mxu0 0.0
        %7576 = vmatpush1.xpose.msra.mxu0 0.0
        %7577 = vmatprep.subr.mxu0 0.0
        %7578 = vmatpush1.xpose.msra.mxu0 0.0
        %7579 = vmatprep.subr.mxu0 0.0
        %7580 = vmatpush1.xpose.msra.mxu0 0.0
        %7581 = vmatprep.subr.mxu0 0.0
        %7582 = vmatpush1.xpose.msra.mxu0 0.0
        %7583 = vmatprep.mubr.f32.mxu0 0.0
        %7584 = vmatmul.mubr.f32.gmra.mrb[0].mxu0 %v7515
        %v7585 = vpop.f32.mrb[0].mxu0
        %v7586 = vadd.f32 0.0, %v7585
        %v7587 = vpop.f32.mrb[0].mxu0
        %7588 = vdwg.mxu0
        %v7589 = vsel %vm2163, %v7586, -inf
        %7590 = vmax.xlane.f32.xlu0 %v7589
        %v7591 = vpop.xlane.xlu0 %7590
        %v7592 = vsub.f32 %v7586, %v7591
        %v7593 = vmul.f32 %v7592, 1.442695
        %v7594 = vpow.pop %v7593
        %v7595 = vsel %vm2163, %v7594, 0.0
        %7596 = vadd.xlane.f32.xlu0 %v7595
        %v7597 = vpop.xlane.xlu0 %7596
        %v7598 = vrcp.pop %v7597
        %v7599 = vmul.f32 %v7594, %v7598
        %7600 = vrot.lane.b32.xlu0 %v7345, 88
        %v7601 = vpop.permute.xlu0 %7600
        %v7604 = vsel %vm2163, %v7599, 0
        %7606 = vmatprep.subr.mxu0 0.0
        %7607 = vmatpush1.msra.mxu0 %v7601
        %7608 = vmatprep.subr.mxu0 0.0
        %7609 = vmatpush1.msra.mxu0 0.0
        %7610 = vmatprep.subr.mxu0 0.0
        %7611 = vmatpush1.msra.mxu0 0.0
        %7612 = vmatprep.subr.mxu0 0.0
        %7613 = vmatpush1.msra.mxu0 0.0
        %7614 = vmatprep.subr.mxu0 0.0
        %7615 = vmatpush1.msra.mxu0 0.0
        %7616 = vmatprep.subr.mxu0 0.0
        %7617 = vmatpush1.msra.mxu0 0.0
        %7618 = vmatprep.subr.mxu0 0.0
        %7619 = vmatpush1.msra.mxu0 0.0
        %7620 = vmatprep.subr.mxu0 0.0
        %7621 = vmatpush1.msra.mxu0 0.0
        %7622 = vmatprep.subr.mxu0 0.0
        %7623 = vmatpush1.msra.mxu0 0.0
        %7624 = vmatprep.subr.mxu0 0.0
        %7625 = vmatpush1.msra.mxu0 0.0
        %7626 = vmatprep.subr.mxu0 0.0
        %7627 = vmatpush1.msra.mxu0 0.0
        %7628 = vmatprep.subr.mxu0 0.0
        %7629 = vmatpush1.msra.mxu0 0.0
        %7630 = vmatprep.subr.mxu0 0.0
        %7631 = vmatpush1.msra.mxu0 0.0
        %7632 = vmatprep.subr.mxu0 0.0
        %7633 = vmatpush1.msra.mxu0 0.0
        %7634 = vmatprep.subr.mxu0 0.0
        %7635 = vmatpush1.msra.mxu0 0.0
        %7636 = vmatprep.subr.mxu0 0.0
        %7637 = vmatpush1.msra.mxu0 0.0
        %7638 = vmatprep.subr.mxu0 0.0
        %7639 = vmatpush1.msra.mxu0 0.0
        %7640 = vmatprep.subr.mxu0 0.0
        %7641 = vmatpush1.msra.mxu0 0.0
        %7642 = vmatprep.subr.mxu0 0.0
        %7643 = vmatpush1.msra.mxu0 0.0
        %7644 = vmatprep.subr.mxu0 0.0
        %7645 = vmatpush1.msra.mxu0 0.0
        %7646 = vmatprep.subr.mxu0 0.0
        %7647 = vmatpush1.msra.mxu0 0.0
        %7648 = vmatprep.subr.mxu0 0.0
        %7649 = vmatpush1.msra.mxu0 0.0
        %7650 = vmatprep.subr.mxu0 0.0
        %7651 = vmatpush1.msra.mxu0 0.0
        %7652 = vmatprep.subr.mxu0 0.0
        %7653 = vmatpush1.msra.mxu0 0.0
        %7654 = vmatprep.subr.mxu0 0.0
        %7655 = vmatpush1.msra.mxu0 0.0
        %7656 = vmatprep.subr.mxu0 0.0
        %7657 = vmatpush1.msra.mxu0 0.0
        %7658 = vmatprep.subr.mxu0 0.0
        %7659 = vmatpush1.msra.mxu0 0.0
        %7660 = vmatprep.subr.mxu0 0.0
        %7661 = vmatpush1.msra.mxu0 0.0
        %7662 = vmatprep.subr.mxu0 0.0
        %7663 = vmatpush1.msra.mxu0 0.0
        %7664 = vmatprep.subr.mxu0 0.0
        %7665 = vmatpush1.msra.mxu0 0.0
        %7666 = vmatprep.subr.mxu0 0.0
        %7667 = vmatpush1.msra.mxu0 0.0
        %7668 = vmatprep.subr.mxu0 0.0
        %7669 = vmatpush1.msra.mxu0 0.0
        %7670 = vmatprep.mubr.f32.mxu0 0.0
        %7671 = vmatmul.mubr.f32.gmra.mrb[0].mxu0 %v7604
        %v7672 = vpop.f32.mrb[0].mxu0
        %v7673 = vadd.f32 0.0, %v7672
        %v7674 = vpop.f32.mrb[0].mxu0
        %7675 = vdwg.mxu0
        %7676 = vrot.lane.b32.xlu0 %v7262, 112
        %v7677 = vpop.permute.xlu0 %7676
        %7678 = vrot.lane.b32.xlu0 %v7345, 112
        %v7679 = vpop.permute.xlu0 %7678
        %v7680 = vsel %vm2163, %v7677, 0
        %v7682 = vsel %vm2163, %v7679, 0
        %7684 = vmatprep.subr.mxu0 0.0
        %7685 = vmatpush1.xpose.msra.mxu0 %v7682
        %7686 = vmatprep.subr.mxu0 0.0
        %7687 = vmatpush1.xpose.msra.mxu0 0.0
        %7688 = vmatprep.subr.mxu0 0.0
        %7689 = vmatpush1.xpose.msra.mxu0 0.0
        %7690 = vmatprep.subr.mxu0 0.0
        %7691 = vmatpush1.xpose.msra.mxu0 0.0
        %7692 = vmatprep.subr.mxu0 0.0
        %7693 = vmatpush1.xpose.msra.mxu0 0.0
        %7694 = vmatprep.subr.mxu0 0.0
        %7695 = vmatpush1.xpose.msra.mxu0 0.0
        %7696 = vmatprep.subr.mxu0 0.0
        %7697 = vmatpush1.xpose.msra.mxu0 0.0
        %7698 = vmatprep.subr.mxu0 0.0
        %7699 = vmatpush1.xpose.msra.mxu0 0.0
        %7700 = vmatprep.subr.mxu0 0.0
        %7701 = vmatpush1.xpose.msra.mxu0 0.0
        %7702 = vmatprep.subr.mxu0 0.0
        %7703 = vmatpush1.xpose.msra.mxu0 0.0
        %7704 = vmatprep.subr.mxu0 0.0
        %7705 = vmatpush1.xpose.msra.mxu0 0.0
        %7706 = vmatprep.subr.mxu0 0.0
        %7707 = vmatpush1.xpose.msra.mxu0 0.0
        %7708 = vmatprep.subr.mxu0 0.0
        %7709 = vmatpush1.xpose.msra.mxu0 0.0
        %7710 = vmatprep.subr.mxu0 0.0
        %7711 = vmatpush1.xpose.msra.mxu0 0.0
        %7712 = vmatprep.subr.mxu0 0.0
        %7713 = vmatpush1.xpose.msra.mxu0 0.0
        %7714 = vmatprep.subr.mxu0 0.0
        %7715 = vmatpush1.xpose.msra.mxu0 0.0
        %7716 = vmatprep.subr.mxu0 0.0
        %7717 = vmatpush1.xpose.msra.mxu0 0.0
        %7718 = vmatprep.subr.mxu0 0.0
        %7719 = vmatpush1.xpose.msra.mxu0 0.0
        %7720 = vmatprep.subr.mxu0 0.0
        %7721 = vmatpush1.xpose.msra.mxu0 0.0
        %7722 = vmatprep.subr.mxu0 0.0
        %7723 = vmatpush1.xpose.msra.mxu0 0.0
        %7724 = vmatprep.subr.mxu0 0.0
        %7725 = vmatpush1.xpose.msra.mxu0 0.0
        %7726 = vmatprep.subr.mxu0 0.0
        %7727 = vmatpush1.xpose.msra.mxu0 0.0
        %7728 = vmatprep.subr.mxu0 0.0
        %7729 = vmatpush1.xpose.msra.mxu0 0.0
        %7730 = vmatprep.subr.mxu0 0.0
        %7731 = vmatpush1.xpose.msra.mxu0 0.0
        %7732 = vmatprep.subr.mxu0 0.0
        %7733 = vmatpush1.xpose.msra.mxu0 0.0
        %7734 = vmatprep.subr.mxu0 0.0
        %7735 = vmatpush1.xpose.msra.mxu0 0.0
        %7736 = vmatprep.subr.mxu0 0.0
        %7737 = vmatpush1.xpose.msra.mxu0 0.0
        %7738 = vmatprep.subr.mxu0 0.0
        %7739 = vmatpush1.xpose.msra.mxu0 0.0
        %7740 = vmatprep.subr.mxu0 0.0
        %7741 = vmatpush1.xpose.msra.mxu0 0.0
        %7742 = vmatprep.subr.mxu0 0.0
        %7743 = vmatpush1.xpose.msra.mxu0 0.0
        %7744 = vmatprep.subr.mxu0 0.0
        %7745 = vmatpush1.xpose.msra.mxu0 0.0
        %7746 = vmatprep.subr.mxu0 0.0
        %7747 = vmatpush1.xpose.msra.mxu0 0.0
        %7748 = vmatprep.mubr.f32.mxu0 0.0
        %7749 = vmatmul.mubr.f32.gmra.mrb[0].mxu0 %v7680
        %v7750 = vpop.f32.mrb[0].mxu0
        %v7751 = vadd.f32 0.0, %v7750
        %v7752 = vpop.f32.mrb[0].mxu0
        %7753 = vdwg.mxu0
        %v7754 = vsel %vm2163, %v7751, -inf
        %7755 = vmax.xlane.f32.xlu0 %v7754
        %v7756 = vpop.xlane.xlu0 %7755
        %v7757 = vsub.f32 %v7751, %v7756
        %v7758 = vmul.f32 %v7757, 1.442695
        %v7759 = vpow.pop %v7758
        %v7760 = vsel %vm2163, %v7759, 0.0
        %7761 = vadd.xlane.f32.xlu0 %v7760
        %v7762 = vpop.xlane.xlu0 %7761
        %v7763 = vrcp.pop %v7762
        %v7764 = vmul.f32 %v7759, %v7763
        %7765 = vrot.lane.b32.xlu0 %v7345, 80
        %v7766 = vpop.permute.xlu0 %7765
        %v7769 = vsel %vm2163, %v7764, 0
        %7771 = vmatprep.subr.mxu0 0.0
        %7772 = vmatpush1.msra.mxu0 %v7766
        %7773 = vmatprep.subr.mxu0 0.0
        %7774 = vmatpush1.msra.mxu0 0.0
        %7775 = vmatprep.subr.mxu0 0.0
        %7776 = vmatpush1.msra.mxu0 0.0
        %7777 = vmatprep.subr.mxu0 0.0
        %7778 = vmatpush1.msra.mxu0 0.0
        %7779 = vmatprep.subr.mxu0 0.0
        %7780 = vmatpush1.msra.mxu0 0.0
        %7781 = vmatprep.subr.mxu0 0.0
        %7782 = vmatpush1.msra.mxu0 0.0
        %7783 = vmatprep.subr.mxu0 0.0
        %7784 = vmatpush1.msra.mxu0 0.0
        %7785 = vmatprep.subr.mxu0 0.0
        %7786 = vmatpush1.msra.mxu0 0.0
        %7787 = vmatprep.subr.mxu0 0.0
        %7788 = vmatpush1.msra.mxu0 0.0
        %7789 = vmatprep.subr.mxu0 0.0
        %7790 = vmatpush1.msra.mxu0 0.0
        %7791 = vmatprep.subr.mxu0 0.0
        %7792 = vmatpush1.msra.mxu0 0.0
        %7793 = vmatprep.subr.mxu0 0.0
        %7794 = vmatpush1.msra.mxu0 0.0
        %7795 = vmatprep.subr.mxu0 0.0
        %7796 = vmatpush1.msra.mxu0 0.0
        %7797 = vmatprep.subr.mxu0 0.0
        %7798 = vmatpush1.msra.mxu0 0.0
        %7799 = vmatprep.subr.mxu0 0.0
        %7800 = vmatpush1.msra.mxu0 0.0
        %7801 = vmatprep.subr.mxu0 0.0
        %7802 = vmatpush1.msra.mxu0 0.0
        %7803 = vmatprep.subr.mxu0 0.0
        %7804 = vmatpush1.msra.mxu0 0.0
        %7805 = vmatprep.subr.mxu0 0.0
        %7806 = vmatpush1.msra.mxu0 0.0
        %7807 = vmatprep.subr.mxu0 0.0
        %7808 = vmatpush1.msra.mxu0 0.0
        %7809 = vmatprep.subr.mxu0 0.0
        %7810 = vmatpush1.msra.mxu0 0.0
        %7811 = vmatprep.subr.mxu0 0.0
        %7812 = vmatpush1.msra.mxu0 0.0
        %7813 = vmatprep.subr.mxu0 0.0
        %7814 = vmatpush1.msra.mxu0 0.0
        %7815 = vmatprep.subr.mxu0 0.0
        %7816 = vmatpush1.msra.mxu0 0.0
        %7817 = vmatprep.subr.mxu0 0.0
        %7818 = vmatpush1.msra.mxu0 0.0
        %7819 = vmatprep.subr.mxu0 0.0
        %7820 = vmatpush1.msra.mxu0 0.0
        %7821 = vmatprep.subr.mxu0 0.0
        %7822 = vmatpush1.msra.mxu0 0.0
        %7823 = vmatprep.subr.mxu0 0.0
        %7824 = vmatpush1.msra.mxu0 0.0
        %7825 = vmatprep.subr.mxu0 0.0
        %7826 = vmatpush1.msra.mxu0 0.0
        %7827 = vmatprep.subr.mxu0 0.0
        %7828 = vmatpush1.msra.mxu0 0.0
        %7829 = vmatprep.subr.mxu0 0.0
        %7830 = vmatpush1.msra.mxu0 0.0
        %7831 = vmatprep.subr.mxu0 0.0
        %7832 = vmatpush1.msra.mxu0 0.0
        %7833 = vmatprep.subr.mxu0 0.0
        %7834 = vmatpush1.msra.mxu0 0.0
        %7835 = vmatprep.mubr.f32.mxu0 0.0
        %7836 = vmatmul.mubr.f32.gmra.mrb[0].mxu0 %v7769
        %v7837 = vpop.f32.mrb[0].mxu0
        %v7838 = vadd.f32 0.0, %v7837
        %v7839 = vpop.f32.mrb[0].mxu0
        %7840 = vdwg.mxu0
        %7841 = vrot.lane.b32.xlu0 %v7262, 104
        %v7842 = vpop.permute.xlu0 %7841
        %7843 = vrot.lane.b32.xlu0 %v7345, 104
        %v7844 = vpop.permute.xlu0 %7843
        %v7845 = vsel %vm2163, %v7842, 0
        %v7847 = vsel %vm2163, %v7844, 0
        %7849 = vmatprep.subr.mxu0 0.0
        %7850 = vmatpush1.xpose.msra.mxu0 %v7847
        %7851 = vmatprep.subr.mxu0 0.0
        %7852 = vmatpush1.xpose.msra.mxu0 0.0
        %7853 = vmatprep.subr.mxu0 0.0
        %7854 = vmatpush1.xpose.msra.mxu0 0.0
        %7855 = vmatprep.subr.mxu0 0.0
        %7856 = vmatpush1.xpose.msra.mxu0 0.0
        %7857 = vmatprep.subr.mxu0 0.0
        %7858 = vmatpush1.xpose.msra.mxu0 0.0
        %7859 = vmatprep.subr.mxu0 0.0
        %7860 = vmatpush1.xpose.msra.mxu0 0.0
        %7861 = vmatprep.subr.mxu0 0.0
        %7862 = vmatpush1.xpose.msra.mxu0 0.0
        %7863 = vmatprep.subr.mxu0 0.0
        %7864 = vmatpush1.xpose.msra.mxu0 0.0
        %7865 = vmatprep.subr.mxu0 0.0
        %7866 = vmatpush1.xpose.msra.mxu0 0.0
        %7867 = vmatprep.subr.mxu0 0.0
        %7868 = vmatpush1.xpose.msra.mxu0 0.0
        %7869 = vmatprep.subr.mxu0 0.0
        %7870 = vmatpush1.xpose.msra.mxu0 0.0
        %7871 = vmatprep.subr.mxu0 0.0
        %7872 = vmatpush1.xpose.msra.mxu0 0.0
        %7873 = vmatprep.subr.mxu0 0.0
        %7874 = vmatpush1.xpose.msra.mxu0 0.0
        %7875 = vmatprep.subr.mxu0 0.0
        %7876 = vmatpush1.xpose.msra.mxu0 0.0
        %7877 = vmatprep.subr.mxu0 0.0
        %7878 = vmatpush1.xpose.msra.mxu0 0.0
        %7879 = vmatprep.subr.mxu0 0.0
        %7880 = vmatpush1.xpose.msra.mxu0 0.0
        %7881 = vmatprep.subr.mxu0 0.0
        %7882 = vmatpush1.xpose.msra.mxu0 0.0
        %7883 = vmatprep.subr.mxu0 0.0
        %7884 = vmatpush1.xpose.msra.mxu0 0.0
        %7885 = vmatprep.subr.mxu0 0.0
        %7886 = vmatpush1.xpose.msra.mxu0 0.0
        %7887 = vmatprep.subr.mxu0 0.0
        %7888 = vmatpush1.xpose.msra.mxu0 0.0
        %7889 = vmatprep.subr.mxu0 0.0
        %7890 = vmatpush1.xpose.msra.mxu0 0.0
        %7891 = vmatprep.subr.mxu0 0.0
        %7892 = vmatpush1.xpose.msra.mxu0 0.0
        %7893 = vmatprep.subr.mxu0 0.0
        %7894 = vmatpush1.xpose.msra.mxu0 0.0
        %7895 = vmatprep.subr.mxu0 0.0
        %7896 = vmatpush1.xpose.msra.mxu0 0.0
        %7897 = vmatprep.subr.mxu0 0.0
        %7898 = vmatpush1.xpose.msra.mxu0 0.0
        %7899 = vmatprep.subr.mxu0 0.0
        %7900 = vmatpush1.xpose.msra.mxu0 0.0
        %7901 = vmatprep.subr.mxu0 0.0
        %7902 = vmatpush1.xpose.msra.mxu0 0.0
        %7903 = vmatprep.subr.mxu0 0.0
        %7904 = vmatpush1.xpose.msra.mxu0 0.0
        %7905 = vmatprep.subr.mxu0 0.0
        %7906 = vmatpush1.xpose.msra.mxu0 0.0
        %7907 = vmatprep.subr.mxu0 0.0
        %7908 = vmatpush1.xpose.msra.mxu0 0.0
        %7909 = vmatprep.subr.mxu0 0.0
        %7910 = vmatpush1.xpose.msra.mxu0 0.0
        %7911 = vmatprep.subr.mxu0 0.0
        %7912 = vmatpush1.xpose.msra.mxu0 0.0
        %7913 = vmatprep.mubr.f32.mxu0 0.0
        %7914 = vmatmul.mubr.f32.gmra.mrb[0].mxu0 %v7845
        %v7915 = vpop.f32.mrb[0].mxu0
        %v7916 = vadd.f32 0.0, %v7915
        %v7917 = vpop.f32.mrb[0].mxu0
        %7918 = vdwg.mxu0
        %v7919 = vsel %vm2163, %v7916, -inf
        %7920 = vmax.xlane.f32.xlu0 %v7919
        %v7921 = vpop.xlane.xlu0 %7920
        %v7922 = vsub.f32 %v7916, %v7921
        %v7923 = vmul.f32 %v7922, 1.442695
        %v7924 = vpow.pop %v7923
        %v7925 = vsel %vm2163, %v7924, 0.0
        %7926 = vadd.xlane.f32.xlu0 %v7925
        %v7927 = vpop.xlane.xlu0 %7926
        %v7928 = vrcp.pop %v7927
        %v7929 = vmul.f32 %v7924, %v7928
        %7930 = vrot.lane.b32.xlu0 %v7345, 72
        %v7931 = vpop.permute.xlu0 %7930
        %v7934 = vsel %vm2163, %v7929, 0
        %7936 = vmatprep.subr.mxu0 0.0
        %7937 = vmatpush1.msra.mxu0 %v7931
        %7938 = vmatprep.subr.mxu0 0.0
        %7939 = vmatpush1.msra.mxu0 0.0
        %7940 = vmatprep.subr.mxu0 0.0
        %7941 = vmatpush1.msra.mxu0 0.0
        %7942 = vmatprep.subr.mxu0 0.0
        %7943 = vmatpush1.msra.mxu0 0.0
        %7944 = vmatprep.subr.mxu0 0.0
        %7945 = vmatpush1.msra.mxu0 0.0
        %7946 = vmatprep.subr.mxu0 0.0
        %7947 = vmatpush1.msra.mxu0 0.0
        %7948 = vmatprep.subr.mxu0 0.0
        %7949 = vmatpush1.msra.mxu0 0.0
        %7950 = vmatprep.subr.mxu0 0.0
        %7951 = vmatpush1.msra.mxu0 0.0
        %7952 = vmatprep.subr.mxu0 0.0
        %7953 = vmatpush1.msra.mxu0 0.0
        %7954 = vmatprep.subr.mxu0 0.0
        %7955 = vmatpush1.msra.mxu0 0.0
        %7956 = vmatprep.subr.mxu0 0.0
        %7957 = vmatpush1.msra.mxu0 0.0
        %7958 = vmatprep.subr.mxu0 0.0
        %7959 = vmatpush1.msra.mxu0 0.0
        %7960 = vmatprep.subr.mxu0 0.0
        %7961 = vmatpush1.msra.mxu0 0.0
        %7962 = vmatprep.subr.mxu0 0.0
        %7963 = vmatpush1.msra.mxu0 0.0
        %7964 = vmatprep.subr.mxu0 0.0
        %7965 = vmatpush1.msra.mxu0 0.0
        %7966 = vmatprep.subr.mxu0 0.0
        %7967 = vmatpush1.msra.mxu0 0.0
        %7968 = vmatprep.subr.mxu0 0.0
        %7969 = vmatpush1.msra.mxu0 0.0
        %7970 = vmatprep.subr.mxu0 0.0
        %7971 = vmatpush1.msra.mxu0 0.0
        %7972 = vmatprep.subr.mxu0 0.0
        %7973 = vmatpush1.msra.mxu0 0.0
        %7974 = vmatprep.subr.mxu0 0.0
        %7975 = vmatpush1.msra.mxu0 0.0
        %7976 = vmatprep.subr.mxu0 0.0
        %7977 = vmatpush1.msra.mxu0 0.0
        %7978 = vmatprep.subr.mxu0 0.0
        %7979 = vmatpush1.msra.mxu0 0.0
        %7980 = vmatprep.subr.mxu0 0.0
        %7981 = vmatpush1.msra.mxu0 0.0
        %7982 = vmatprep.subr.mxu0 0.0
        %7983 = vmatpush1.msra.mxu0 0.0
        %7984 = vmatprep.subr.mxu0 0.0
        %7985 = vmatpush1.msra.mxu0 0.0
        %7986 = vmatprep.subr.mxu0 0.0
        %7987 = vmatpush1.msra.mxu0 0.0
        %7988 = vmatprep.subr.mxu0 0.0
        %7989 = vmatpush1.msra.mxu0 0.0
        %7990 = vmatprep.subr.mxu0 0.0
        %7991 = vmatpush1.msra.mxu0 0.0
        %7992 = vmatprep.subr.mxu0 0.0
        %7993 = vmatpush1.msra.mxu0 0.0
        %7994 = vmatprep.subr.mxu0 0.0
        %7995 = vmatpush1.msra.mxu0 0.0
        %7996 = vmatprep.subr.mxu0 0.0
        %7997 = vmatpush1.msra.mxu0 0.0
        %7998 = vmatprep.subr.mxu0 0.0
        %7999 = vmatpush1.msra.mxu0 0.0
        %8000 = vmatprep.mubr.f32.mxu0 0.0
        %8001 = vmatmul.mubr.f32.gmra.mrb[0].mxu0 %v7934
        %v8002 = vpop.f32.mrb[0].mxu0
        %v8003 = vadd.f32 0.0, %v8002
        %v8004 = vpop.f32.mrb[0].mxu0
        %8005 = vdwg.mxu0
        %8007 = vrot.lane.b32.xlu0 %v7673, 8
        %v8008 = vpop.permute.xlu0 %8007
        %8011 = vrot.lane.b32.xlu0 %v7838, 16
        %v8012 = vpop.permute.xlu0 %8011
        %8015 = vrot.lane.b32.xlu0 %v8003, 24
        %v8016 = vpop.permute.xlu0 %8015
        %v8018 = vsel %vm2163, %v7508, %v8008
        %v8019 = vsel %vm1772, %v8018, %v8012
        %v8020 = vsel %vm2834, %v8019, %v8016
        %s8021 = scalar_lea.vmem %s63, 32
        %v8022 = vld [vmem:[%s8021] sm:$0xff]
        %v8023 = vld [vmem:[%s8021 + $0x8] sm:$0xff]
        %v8024 = vld [vmem:[%s8021 + $0x10] sm:$0xff]
        %v8025 = vld [vmem:[%s8021 + $0x18] sm:$0xff]
        %s8026 = scalar_lea.vmem [#allocation25], 1
        %v8027 = vld [vmem:[%s8026] sm:$0x1]
        %v8029 = vlaneseq
        %v8030 = vshrl.u32 %v8029, 7
        %v8031 = vsub.s32 0, %v8030
        %v8032 = vrot.slane %v8027, %v8031
        %v8035 = vsel %vm2086, %v8020, 0
        %8037 = vmatprep.subr.mxu0 0.0
        %8038 = vmatpush1.msra.mxu0 %v8022
        %8039 = vmatprep.subr.mxu0 0.0
        %8040 = vmatpush1.msra.mxu0 %v8023
        %8041 = vmatprep.subr.mxu0 0.0
        %8042 = vmatpush1.msra.mxu0 %v8024
        %8043 = vmatprep.subr.mxu0 0.0
        %8044 = vmatpush1.msra.mxu0 %v8025
        %8045 = vmatprep.subr.mxu0 0.0
        %8046 = vmatpush1.msra.mxu0 0.0
        %8047 = vmatprep.subr.mxu0 0.0
        %8048 = vmatpush1.msra.mxu0 0.0
        %8049 = vmatprep.subr.mxu0 0.0
        %8050 = vmatpush1.msra.mxu0 0.0
        %8051 = vmatprep.subr.mxu0 0.0
        %8052 = vmatpush1.msra.mxu0 0.0
        %8053 = vmatprep.subr.mxu0 0.0
        %8054 = vmatpush1.msra.mxu0 0.0
        %8055 = vmatprep.subr.mxu0 0.0
        %8056 = vmatpush1.msra.mxu0 0.0
        %8057 = vmatprep.subr.mxu0 0.0
        %8058 = vmatpush1.msra.mxu0 0.0
        %8059 = vmatprep.subr.mxu0 0.0
        %8060 = vmatpush1.msra.mxu0 0.0
        %8061 = vmatprep.subr.mxu0 0.0
        %8062 = vmatpush1.msra.mxu0 0.0
        %8063 = vmatprep.subr.mxu0 0.0
        %8064 = vmatpush1.msra.mxu0 0.0
        %8065 = vmatprep.subr.mxu0 0.0
        %8066 = vmatpush1.msra.mxu0 0.0
        %8067 = vmatprep.subr.mxu0 0.0
        %8068 = vmatpush1.msra.mxu0 0.0
        %8069 = vmatprep.subr.mxu0 0.0
        %8070 = vmatpush1.msra.mxu0 0.0
        %8071 = vmatprep.subr.mxu0 0.0
        %8072 = vmatpush1.msra.mxu0 0.0
        %8073 = vmatprep.subr.mxu0 0.0
        %8074 = vmatpush1.msra.mxu0 0.0
        %8075 = vmatprep.subr.mxu0 0.0
        %8076 = vmatpush1.msra.mxu0 0.0
        %8077 = vmatprep.subr.mxu0 0.0
        %8078 = vmatpush1.msra.mxu0 0.0
        %8079 = vmatprep.subr.mxu0 0.0
        %8080 = vmatpush1.msra.mxu0 0.0
        %8081 = vmatprep.subr.mxu0 0.0
        %8082 = vmatpush1.msra.mxu0 0.0
        %8083 = vmatprep.subr.mxu0 0.0
        %8084 = vmatpush1.msra.mxu0 0.0
        %8085 = vmatprep.subr.mxu0 0.0
        %8086 = vmatpush1.msra.mxu0 0.0
        %8087 = vmatprep.subr.mxu0 0.0
        %8088 = vmatpush1.msra.mxu0 0.0
        %8089 = vmatprep.subr.mxu0 0.0
        %8090 = vmatpush1.msra.mxu0 0.0
        %8091 = vmatprep.subr.mxu0 0.0
        %8092 = vmatpush1.msra.mxu0 0.0
        %8093 = vmatprep.subr.mxu0 0.0
        %8094 = vmatpush1.msra.mxu0 0.0
        %8095 = vmatprep.subr.mxu0 0.0
        %8096 = vmatpush1.msra.mxu0 0.0
        %8097 = vmatprep.subr.mxu0 0.0
        %8098 = vmatpush1.msra.mxu0 0.0
        %8099 = vmatprep.subr.mxu0 0.0
        %8100 = vmatpush1.msra.mxu0 0.0
        %8101 = vmatprep.mubr.f32.mxu0 0.0
        %8102 = vmatmul.mubr.f32.gmra.mrb[0].mxu0 %v8035
        %v8103 = vpop.f32.mrb[0].mxu0
        %v8104 = vadd.f32 %v8032, %v8103
        %v8105 = vpop.f32.mrb[0].mxu0
        %8106 = vdwg.mxu0
        %v8107 = vadd.f32 %v7178, %v8104
        %s8108 = scalar_lea.vmem [#allocation26], 1
        %v8109 = vld [vmem:[%s8108] sm:$0x1]
        %s8110 = scalar_lea.vmem [#allocation28], 1
        %v8111 = vld [vmem:[%s8110] sm:$0x1]
        %v8112 = vsel %vm2086, %v8107, 0.0
        %8113 = vadd.xlane.f32.xlu0 %v8112
        %v8114 = vpop.xlane.xlu0 %8113
        %v8115 = vmul.f32 %v8114, %v2926
        %v8116 = vsub.f32 %v8107, %v8115
        %v8117 = vmul.f32 %v8116, %v8116
        %v8118 = vsel %vm2086, %v8117, 0.0
        %8119 = vadd.xlane.f32.xlu0 %v8118
        %v8120 = vpop.xlane.xlu0 %8119
        %v8121 = vmul.f32 %v8120, %v2926
        %v8122 = vadd.f32 %v8121, 1e-05
        %v8123 = vrsqrt.pop %v8122
        %v8124 = vmul.f32 %v8116, %v8123
        %v8126 = vlaneseq
        %v8127 = vshrl.u32 %v8126, 7
        %v8128 = vsub.s32 0, %v8127
        %v8129 = vrot.slane %v8109, %v8128
        %v8131 = vmul.f32 %v8124, %v8129
        %v8133 = vlaneseq
        %v8134 = vshrl.u32 %v8133, 7
        %v8135 = vsub.s32 0, %v8134
        %v8136 = vrot.slane %v8111, %v8135
        %v8138 = vadd.f32 %v8131, %v8136
        %s8139 = scalar_lea.vmem [#allocation29], 32
        %v8140 = vld [vmem:[%s8139] sm:$0xff]
        %v8141 = vld [vmem:[%s8139 + $0x8] sm:$0xff]
        %v8142 = vld [vmem:[%s8139 + $0x10] sm:$0xff]
        %v8143 = vld [vmem:[%s8139 + $0x18] sm:$0xff]
        %s8144 = scalar_lea.vmem [#allocation31], 1
        %v8145 = vld [vmem:[%s8144] sm:$0x1]
        %v8147 = vlaneseq
        %v8148 = vshrl.u32 %v8147, 7
        %v8149 = vsub.s32 0, %v8148
        %v8150 = vrot.slane %v8145, %v8149
        %v8153 = vsel %vm2086, %v8138, 0
        %8155 = vmatprep.subr.mxu0 0.0
        %8156 = vmatpush1.msra.mxu0 %v8140
        %8157 = vmatprep.subr.mxu0 0.0
        %8158 = vmatpush1.msra.mxu0 %v8141
        %8159 = vmatprep.subr.mxu0 0.0
        %8160 = vmatpush1.msra.mxu0 %v8142
        %8161 = vmatprep.subr.mxu0 0.0
        %8162 = vmatpush1.msra.mxu0 %v8143
        %8163 = vmatprep.subr.mxu0 0.0
        %8164 = vmatpush1.msra.mxu0 0.0
        %8165 = vmatprep.subr.mxu0 0.0
        %8166 = vmatpush1.msra.mxu0 0.0
        %8167 = vmatprep.subr.mxu0 0.0
        %8168 = vmatpush1.msra.mxu0 0.0
        %8169 = vmatprep.subr.mxu0 0.0
        %8170 = vmatpush1.msra.mxu0 0.0
        %8171 = vmatprep.subr.mxu0 0.0
        %8172 = vmatpush1.msra.mxu0 0.0
        %8173 = vmatprep.subr.mxu0 0.0
        %8174 = vmatpush1.msra.mxu0 0.0
        %8175 = vmatprep.subr.mxu0 0.0
        %8176 = vmatpush1.msra.mxu0 0.0
        %8177 = vmatprep.subr.mxu0 0.0
        %8178 = vmatpush1.msra.mxu0 0.0
        %8179 = vmatprep.subr.mxu0 0.0
        %8180 = vmatpush1.msra.mxu0 0.0
        %8181 = vmatprep.subr.mxu0 0.0
        %8182 = vmatpush1.msra.mxu0 0.0
        %8183 = vmatprep.subr.mxu0 0.0
        %8184 = vmatpush1.msra.mxu0 0.0
        %8185 = vmatprep.subr.mxu0 0.0
        %8186 = vmatpush1.msra.mxu0 0.0
        %8187 = vmatprep.subr.mxu0 0.0
        %8188 = vmatpush1.msra.mxu0 0.0
        %8189 = vmatprep.subr.mxu0 0.0
        %8190 = vmatpush1.msra.mxu0 0.0
        %8191 = vmatprep.subr.mxu0 0.0
        %8192 = vmatpush1.msra.mxu0 0.0
        %8193 = vmatprep.subr.mxu0 0.0
        %8194 = vmatpush1.msra.mxu0 0.0
        %8195 = vmatprep.subr.mxu0 0.0
        %8196 = vmatpush1.msra.mxu0 0.0
        %8197 = vmatprep.subr.mxu0 0.0
        %8198 = vmatpush1.msra.mxu0 0.0
        %8199 = vmatprep.subr.mxu0 0.0
        %8200 = vmatpush1.msra.mxu0 0.0
        %8201 = vmatprep.subr.mxu0 0.0
        %8202 = vmatpush1.msra.mxu0 0.0
        %8203 = vmatprep.subr.mxu0 0.0
        %8204 = vmatpush1.msra.mxu0 0.0
        %8205 = vmatprep.subr.mxu0 0.0
        %8206 = vmatpush1.msra.mxu0 0.0
        %8207 = vmatprep.subr.mxu0 0.0
        %8208 = vmatpush1.msra.mxu0 0.0
        %8209 = vmatprep.subr.mxu0 0.0
        %8210 = vmatpush1.msra.mxu0 0.0
        %8211 = vmatprep.subr.mxu0 0.0
        %8212 = vmatpush1.msra.mxu0 0.0
        %8213 = vmatprep.subr.mxu0 0.0
        %8214 = vmatpush1.msra.mxu0 0.0
        %8215 = vmatprep.subr.mxu0 0.0
        %8216 = vmatpush1.msra.mxu0 0.0
        %8217 = vmatprep.subr.mxu0 0.0
        %8218 = vmatpush1.msra.mxu0 0.0
        %8219 = vmatprep.mubr.f32.mxu0 0.0
        %8220 = vmatmul.mubr.f32.gmra.mrb[0].mxu0 %v8153
        %v8221 = vpop.f32.mrb[0].mxu0
        %v8222 = vadd.f32 %v8150, %v8221
        %v8223 = vpop.f32.mrb[0].mxu0
        %8224 = vdwg.mxu0
        %v8225 = vmax.f32 %v8222, 0.0
        %s8226 = scalar_lea.vmem %s75, 64
        %v8227 = vld [vmem:[%s8226] sm:$0xff]
        %v8228 = vld [vmem:[%s8226 + $0x8] sm:$0xff]
        %v8229 = vld [vmem:[%s8226 + $0x10] sm:$0xff]
        %v8230 = vld [vmem:[%s8226 + $0x18] sm:$0xff]
        %v8231 = vld [vmem:[%s8226 + $0x20] sm:$0xff]
        %v8232 = vld [vmem:[%s8226 + $0x28] sm:$0xff]
        %v8233 = vld [vmem:[%s8226 + $0x30] sm:$0xff]
        %v8234 = vld [vmem:[%s8226 + $0x38] sm:$0xff]
        %s8235 = scalar_lea.vmem [#allocation32], 1
        %v8236 = vld [vmem:[%s8235] sm:$0x1]
        %v8238 = vlaneseq
        %v8239 = vshrl.u32 %v8238, 7
        %v8240 = vsub.s32 0, %v8239
        %v8241 = vrot.slane %v8236, %v8240
        %v8244 = vsel %vm3051, %v8225, 0
        %8246 = vmatprep.subr.mxu0 0.0
        %8247 = vmatpush1.msra.mxu0 %v8227
        %8248 = vmatprep.subr.mxu0 0.0
        %8249 = vmatpush1.msra.mxu0 %v8228
        %8250 = vmatprep.subr.mxu0 0.0
        %8251 = vmatpush1.msra.mxu0 %v8229
        %8252 = vmatprep.subr.mxu0 0.0
        %8253 = vmatpush1.msra.mxu0 %v8230
        %8254 = vmatprep.subr.mxu0 0.0
        %8255 = vmatpush1.msra.mxu0 %v8231
        %8256 = vmatprep.subr.mxu0 0.0
        %8257 = vmatpush1.msra.mxu0 %v8232
        %8258 = vmatprep.subr.mxu0 0.0
        %8259 = vmatpush1.msra.mxu0 %v8233
        %8260 = vmatprep.subr.mxu0 0.0
        %8261 = vmatpush1.msra.mxu0 %v8234
        %8262 = vmatprep.subr.mxu0 0.0
        %8263 = vmatpush1.msra.mxu0 0.0
        %8264 = vmatprep.subr.mxu0 0.0
        %8265 = vmatpush1.msra.mxu0 0.0
        %8266 = vmatprep.subr.mxu0 0.0
        %8267 = vmatpush1.msra.mxu0 0.0
        %8268 = vmatprep.subr.mxu0 0.0
        %8269 = vmatpush1.msra.mxu0 0.0
        %8270 = vmatprep.subr.mxu0 0.0
        %8271 = vmatpush1.msra.mxu0 0.0
        %8272 = vmatprep.subr.mxu0 0.0
        %8273 = vmatpush1.msra.mxu0 0.0
        %8274 = vmatprep.subr.mxu0 0.0
        %8275 = vmatpush1.msra.mxu0 0.0
        %8276 = vmatprep.subr.mxu0 0.0
        %8277 = vmatpush1.msra.mxu0 0.0
        %8278 = vmatprep.subr.mxu0 0.0
        %8279 = vmatpush1.msra.mxu0 0.0
        %8280 = vmatprep.subr.mxu0 0.0
        %8281 = vmatpush1.msra.mxu0 0.0
        %8282 = vmatprep.subr.mxu0 0.0
        %8283 = vmatpush1.msra.mxu0 0.0
        %8284 = vmatprep.subr.mxu0 0.0
        %8285 = vmatpush1.msra.mxu0 0.0
        %8286 = vmatprep.subr.mxu0 0.0
        %8287 = vmatpush1.msra.mxu0 0.0
        %8288 = vmatprep.subr.mxu0 0.0
        %8289 = vmatpush1.msra.mxu0 0.0
        %8290 = vmatprep.subr.mxu0 0.0
        %8291 = vmatpush1.msra.mxu0 0.0
        %8292 = vmatprep.subr.mxu0 0.0
        %8293 = vmatpush1.msra.mxu0 0.0
        %8294 = vmatprep.subr.mxu0 0.0
        %8295 = vmatpush1.msra.mxu0 0.0
        %8296 = vmatprep.subr.mxu0 0.0
        %8297 = vmatpush1.msra.mxu0 0.0
        %8298 = vmatprep.subr.mxu0 0.0
        %8299 = vmatpush1.msra.mxu0 0.0
        %8300 = vmatprep.subr.mxu0 0.0
        %8301 = vmatpush1.msra.mxu0 0.0
        %8302 = vmatprep.subr.mxu0 0.0
        %8303 = vmatpush1.msra.mxu0 0.0
        %8304 = vmatprep.subr.mxu0 0.0
        %8305 = vmatpush1.msra.mxu0 0.0
        %8306 = vmatprep.subr.mxu0 0.0
        %8307 = vmatpush1.msra.mxu0 0.0
        %8308 = vmatprep.subr.mxu0 0.0
        %8309 = vmatpush1.msra.mxu0 0.0
        %8310 = vmatprep.mubr.f32.mxu0 0.0
        %8311 = vmatmul.mubr.f32.gmra.mrb[0].mxu0 %v8244
        %v8312 = vpop.f32.mrb[0].mxu0
        %v8313 = vadd.f32 %v8241, %v8312
        %v8314 = vpop.f32.mrb[0].mxu0
        %8315 = vdwg.mxu0
        %v8316 = vadd.f32 %v8138, %v8313
        %s8317 = scalar_lea.vmem [#allocation34], 1
        %v8318 = vld [vmem:[%s8317] sm:$0x1]
        %s8319 = scalar_lea.vmem [#allocation35], 1
        %v8320 = vld [vmem:[%s8319] sm:$0x1]
        %v8321 = vsel %vm2086, %v8316, 0.0
        %8322 = vadd.xlane.f32.xlu0 %v8321
        %v8323 = vpop.xlane.xlu0 %8322
        %v8324 = vmul.f32 %v8323, %v2926
        %v8325 = vsub.f32 %v8316, %v8324
        %v8326 = vmul.f32 %v8325, %v8325
        %v8327 = vsel %vm2086, %v8326, 0.0
        %8328 = vadd.xlane.f32.xlu0 %v8327
        %v8329 = vpop.xlane.xlu0 %8328
        %v8330 = vmul.f32 %v8329, %v2926
        %v8331 = vadd.f32 %v8330, 1e-05
        %v8332 = vrsqrt.pop %v8331
        %v8333 = vmul.f32 %v8325, %v8332
        %v8335 = vlaneseq
        %v8336 = vshrl.u32 %v8335, 7
        %v8337 = vsub.s32 0, %v8336
        %v8338 = vrot.slane %v8318, %v8337
        %v8340 = vmul.f32 %v8333, %v8338
        %v8342 = vlaneseq
        %v8343 = vshrl.u32 %v8342, 7
        %v8344 = vsub.s32 0, %v8343
        %v8345 = vrot.slane %v8320, %v8344
        %v8347 = vadd.f32 %v8340, %v8345
        %v8348 = vld [vmem:[#allocation37] sm:$0x1]
        %v8349 = vld [vmem:[#allocation38] sm:$0x1]
        %v8350 = vsel %vm2086, %v8347, 0.0
        %8351 = vadd.xlane.f32.xlu0 %v8350
        %v8352 = vpop.xlane.xlu0 %8351
        %v8353 = vmul.f32 %v8352, %v2926
        %v8354 = vsub.f32 %v8347, %v8353
        %v8355 = vmul.f32 %v8354, %v8354
        %v8356 = vsel %vm2086, %v8355, 0.0
        %8357 = vadd.xlane.f32.xlu0 %v8356
        %v8358 = vpop.xlane.xlu0 %8357
        %v8359 = vmul.f32 %v8358, %v2926
        %v8360 = vadd.f32 %v8359, 1e-05
        %v8361 = vrsqrt.pop %v8360
        %v8362 = vmul.f32 %v8354, %v8361
        %v8364 = vlaneseq
        %v8365 = vshrl.u32 %v8364, 7
        %v8366 = vsub.s32 0, %v8365
        %v8367 = vrot.slane %v8348, %v8366
        %v8369 = vmul.f32 %v8362, %v8367
        %v8371 = vlaneseq
        %v8372 = vshrl.u32 %v8371, 7
        %v8373 = vsub.s32 0, %v8372
        %v8374 = vrot.slane %v8349, %v8373
        %v8376 = vadd.f32 %v8369, %v8374
        %v8377 = vld [vmem:[%s87] sm:$0xff]
        %v8378 = vld [vmem:[%s87 + $0x8] sm:$0xff]
        %v8379 = vld [vmem:[%s87 + $0x10] sm:$0xff]
        %v8380 = vld [vmem:[%s87 + $0x18] sm:$0xff]
        %v8381 = vld [vmem:[%s89] sm:$0x1]
        %v8383 = vlaneseq
        %v8384 = vshrl.u32 %v8383, 7
        %v8385 = vsub.s32 0, %v8384
        %v8386 = vrot.slane %v8381, %v8385
        %v8389 = vsel %vm2086, %v8376, 0
        %8391 = vmatprep.subr.mxu0 0.0
        %8392 = vmatpush1.msra.mxu0 %v8377
        %8393 = vmatprep.subr.mxu0 0.0
        %8394 = vmatpush1.msra.mxu0 %v8378
        %8395 = vmatprep.subr.mxu0 0.0
        %8396 = vmatpush1.msra.mxu0 %v8379
        %8397 = vmatprep.subr.mxu0 0.0
        %8398 = vmatpush1.msra.mxu0 %v8380
        %8399 = vmatprep.subr.mxu0 0.0
        %8400 = vmatpush1.msra.mxu0 0.0
        %8401 = vmatprep.subr.mxu0 0.0
        %8402 = vmatpush1.msra.mxu0 0.0
        %8403 = vmatprep.subr.mxu0 0.0
        %8404 = vmatpush1.msra.mxu0 0.0
        %8405 = vmatprep.subr.mxu0 0.0
        %8406 = vmatpush1.msra.mxu0 0.0
        %8407 = vmatprep.subr.mxu0 0.0
        %8408 = vmatpush1.msra.mxu0 0.0
        %8409 = vmatprep.subr.mxu0 0.0
        %8410 = vmatpush1.msra.mxu0 0.0
        %8411 = vmatprep.subr.mxu0 0.0
        %8412 = vmatpush1.msra.mxu0 0.0
        %8413 = vmatprep.subr.mxu0 0.0
        %8414 = vmatpush1.msra.mxu0 0.0
        %8415 = vmatprep.subr.mxu0 0.0
        %8416 = vmatpush1.msra.mxu0 0.0
        %8417 = vmatprep.subr.mxu0 0.0
        %8418 = vmatpush1.msra.mxu0 0.0
        %8419 = vmatprep.subr.mxu0 0.0
        %8420 = vmatpush1.msra.mxu0 0.0
        %8421 = vmatprep.subr.mxu0 0.0
        %8422 = vmatpush1.msra.mxu0 0.0
        %8423 = vmatprep.subr.mxu0 0.0
        %8424 = vmatpush1.msra.mxu0 0.0
        %8425 = vmatprep.subr.mxu0 0.0
        %8426 = vmatpush1.msra.mxu0 0.0
        %8427 = vmatprep.subr.mxu0 0.0
        %8428 = vmatpush1.msra.mxu0 0.0
        %8429 = vmatprep.subr.mxu0 0.0
        %8430 = vmatpush1.msra.mxu0 0.0
        %8431 = vmatprep.subr.mxu0 0.0
        %8432 = vmatpush1.msra.mxu0 0.0
        %8433 = vmatprep.subr.mxu0 0.0
        %8434 = vmatpush1.msra.mxu0 0.0
        %8435 = vmatprep.subr.mxu0 0.0
        %8436 = vmatpush1.msra.mxu0 0.0
        %8437 = vmatprep.subr.mxu0 0.0
        %8438 = vmatpush1.msra.mxu0 0.0
        %8439 = vmatprep.subr.mxu0 0.0
        %8440 = vmatpush1.msra.mxu0 0.0
        %8441 = vmatprep.subr.mxu0 0.0
        %8442 = vmatpush1.msra.mxu0 0.0
        %8443 = vmatprep.subr.mxu0 0.0
        %8444 = vmatpush1.msra.mxu0 0.0
        %8445 = vmatprep.subr.mxu0 0.0
        %8446 = vmatpush1.msra.mxu0 0.0
        %8447 = vmatprep.subr.mxu0 0.0
        %8448 = vmatpush1.msra.mxu0 0.0
        %8449 = vmatprep.subr.mxu0 0.0
        %8450 = vmatpush1.msra.mxu0 0.0
        %8451 = vmatprep.subr.mxu0 0.0
        %8452 = vmatpush1.msra.mxu0 0.0
        %8453 = vmatprep.subr.mxu0 0.0
        %8454 = vmatpush1.msra.mxu0 0.0
        %8455 = vmatprep.mubr.f32.mxu0 0.0
        %8456 = vmatmul.mubr.f32.gmra.mrb[0].mxu0 %v8389
        %v8457 = vpop.f32.mrb[0].mxu0
        %v8458 = vadd.f32 %v8386, %v8457
        %v8459 = vpop.f32.mrb[0].mxu0
        %8460 = vdwg.mxu0
        %8461 = vst [vmem:[%s1721] sm:$0xff] %v8458
        %s8462 = sand.u32 %s1091, 1
        %s8463 = scalar_lea.sflag [#allocation4], %s8462
        %s8464 = sand.u32 %s1091, 1
        %s8465 = smul.addr %s8464, 8
        %s8466 = scalar_lea.vmem [#allocation40], %s8465
        // Predicated region
        $region297: #{transformer_forward.1} parent=199 // pred_check
          %p8467 = pneg %p1101
        $region298: #{transformer_forward.1} parent=199 // pred_check_branch
          %8469 = sbr.rel (%p8467) target = $region300
        $region299: #{transformer_forward.1} parent=199 // pred_region
          %s8471 = ssub.s32 128, 128
          %8472 = vsyncadd %s8463, %s8471
          %s8473 = smul.addr %s118, 128
          %s8474 = scalar_lea.hbm %s91, %s8473
          %s8476 = sshll.u32 %s8466, 4
          %s8477 = int_to_ptr.vmem [resolvable:$true] %s8476
          %8479 = dma.vmem_to_hbm [thread:$0]  %s8477, 128, %s8474, %s8463
        $region300: #{transformer_forward.1} parent=199 // pred_fallthru
          _
      $region200: #{transformer_forward.1} parent=5 // pred_fallthru
        _
      %p8480 = scmp.le.s32.totalorder 2, %s113
      // Predicated region
      $region301: #{transformer_forward.1} parent=5 // pred_check
        %p8481 = pneg %p8480
      $region302: #{transformer_forward.1} parent=5 // pred_check_branch
        %8483 = sbr.rel (%p8481) target = $region304
      $region303: #{transformer_forward.1} parent=5 // pred_region
        %s8484 = ssub.s32 %s113, 2
        // Predicated region
        $region305: #{transformer_forward.1} parent=303 // pred_check
          %p8485 = pneg %p1107
        $region306: #{transformer_forward.1} parent=303 // pred_check_branch
          %8487 = sbr.rel (%p8485) target = $region308
        $region307: #{transformer_forward.1} parent=303 // pred_region
          %s8488 = sand.u32 %s1092, 1
          %s8489 = scalar_lea.sflag [#allocation4], %s8488
          %s8490 = sand.u32 %s1092, 1
          %s8491 = smul.addr %s8490, 8
          %s8492 = scalar_lea.vmem [#allocation40], %s8491
          %8493 = dma.done %s8489, 128
        $region308: #{transformer_forward.1} parent=303 // pred_fallthru
          _
      $region304: #{transformer_forward.1} parent=5 // pred_fallthru
        _
    $region6: #{transformer_forward.1} parent=1 // loop_footer
      %s117 = sadd.s32 1, %s113
    $region7: #{transformer_forward.1} parent=1 // loop_footer_branch
      %112 = sbr.rel target = $region3
    $region8: #{transformer_forward.1} parent=1 // loop_exit
      _
    %8494 = vsyncpa [#allocation3], 1
    %s8495 = scalar_lea.sflag [#allocation3], 1
    %8496 = vsyncpa %s8495, 1
    %8497 = vsyncpa [#allocation6], 1
    %8498 = vsyncpa [#allocation9], 1
    %8499 = vsyncpa [#allocation12], 1
    %8500 = vsyncpa [#allocation15], 1
    %8501 = vsyncpa [#allocation18], 1
    %8502 = vsyncpa [#allocation21], 1
    %8503 = vsyncpa [#allocation24], 1
    %8504 = vsyncpa [#allocation27], 1
    %8505 = vsyncpa [#allocation30], 1
    %8506 = vsyncpa [#allocation33], 1
    %8507 = vsyncpa [#allocation36], 1
    %8508 = vsyncpa [#allocation39], 1
    %8509 = vsyncpa [#allocation4], 1
    %s8510 = scalar_lea.sflag [#allocation4], 1
    %8511 = vsyncpa %s8510, 1

</llo_original>
